<compile_context>
chip_gen: v6e
topology: v6e:2x2x1
jax: 0.10.0
libtpu: 0.0.40
codegen_flags: <defaults>
</compile_context>

<pallas_src>
import functools

import numpy as np
import jax
import jax.numpy as jnp
from jax.experimental import pallas as pl
from jax.experimental.pallas import tpu as pltpu


KERNEL_SET = (2, 3, 6, 7)          # dilated_inception kernel set

CFG = dict(
    B=2,
    in_dim=2,
    num_nodes=16,
    seq_length=12,
    layers=3,
    kernel_size=7,
    residual_channels=16,
    conv_channels=16,              # divisible by len(KERNEL_SET)
    skip_channels=32,
    end_channels=32,
    out_dim=12,
    gcn_depth=2,
    propalpha=0.05,
    tanhalpha=3.0,
    node_dim=16,
    subgraph_size=8,
)
CFG["receptive_field"] = CFG["layers"] * (CFG["kernel_size"] - 1) + 1   # = 19

_VMEM = pl.BlockSpec(memory_space=pltpu.MemorySpace.VMEM)
_F32 = jnp.float32


# ----------------------------------------------------------------------------
# Pallas kernel 1: graph_constructor matmuls (up to the pre-top-k adjacency)
# ----------------------------------------------------------------------------
def _graph_adj_kernel(alpha, e1_ref, e2_ref, w1t_ref, b1_ref, w2t_ref, b2_ref,
                      adj_ref):
    nv1 = jnp.tanh(alpha * (jnp.dot(e1_ref[...], w1t_ref[...],
                                    preferred_element_type=_F32) + b1_ref[...]))
    nv2 = jnp.tanh(alpha * (jnp.dot(e2_ref[...], w2t_ref[...],
                                    preferred_element_type=_F32) + b2_ref[...]))
    a = (jnp.dot(nv1, nv2.T, preferred_element_type=_F32)
         - jnp.dot(nv2, nv1.T, preferred_element_type=_F32))
    adj_ref[...] = jnp.maximum(jnp.tanh(alpha * a), 0.0)


def graph_construct(gcp, alpha, k, n):
    adj0 = pl.pallas_call(
        functools.partial(_graph_adj_kernel, float(alpha)),
        out_shape=jax.ShapeDtypeStruct((n, n), _F32),
        in_specs=[_VMEM] * 6,
        out_specs=_VMEM,
    )(gcp["emb1"], gcp["emb2"], gcp["w1t"], gcp["b1"], gcp["w2t"], gcp["b2"])
    # TODO(synk): per-row top-k + scatter mask is data-dependent; kept in JAX.
    _, t1 = jax.lax.top_k(adj0, k)
    mask = jnp.sum(jax.nn.one_hot(t1, n, dtype=adj0.dtype), axis=1)
    return adj0 * mask


# ----------------------------------------------------------------------------
# Pallas kernel 2: the whole MTGNN forward, fused
#
# Activation layout: 2D (channels, T*B*N), column index = t*B*N + b*N + n.
# ----------------------------------------------------------------------------
def _mtgnn_fused_kernel(names, *refs):
    c = CFG
    B, N = c["B"], c["num_nodes"]
    Cr, Cc = c["residual_channels"], c["conv_channels"]
    BN = B * N
    kmax = KERNEL_SET[-1]
    alpha = c["propalpha"]
    gdep = c["gcn_depth"]
    eps = 1e-5

    r = dict(zip(names, refs[:len(names)]))
    out_ref = refs[len(names)]

    # ---- start conv (1x1) and skip0 (time-collapsing conv): one matmul each.
    x = jnp.dot(r["w_start"][...], r["x0"][...],
                preferred_element_type=_F32) + r["b_start"][...]
    skip = jnp.dot(r["w_skip0"][...], r["x0_im"][...],
                   preferred_element_type=_F32) + r["b_skip0"][...]

    T = c["receptive_field"]
    for i in range(c["layers"]):
        Tout = T - (kmax - 1)
        TBN = Tout * BN
        residual = x                                        # (Cr, T*BN)

        # ---- dilated inception (all kernel sizes) + filter/gate as ONE block
        #      matmul; tanh*sigmoid gate fused into the epilogue.
        xim = jnp.concatenate(
            [x[:, dk * BN: dk * BN + TBN] for dk in range(kmax)], axis=0)
        y = jnp.dot(r[f"w_fg_{i}"][...], xim,
                    preferred_element_type=_F32) + r[f"b_fg_{i}"][...]
        xg = jnp.tanh(y[:Cc, :]) * jax.nn.sigmoid(y[Cc:, :])   # (Cc, TBN)

        # ---- skip conv (kernel width == Tout -> collapses time): one matmul,
        #      skip accumulated in-register (no HBM round trip).
        sim = jnp.concatenate(
            [xg[:, t * BN:(t + 1) * BN] for t in range(Tout)], axis=0)
        skip = (skip
                + jnp.dot(r[f"w_skip_{i}"][...], sim,
                          preferred_element_type=_F32)
                + r[f"b_skip_{i}"][...])

        # ---- mixprop over both adjacency directions.  Node propagation is a
        #      single matmul against the precomputed block-diagonal operator;
        #      the two output 1x1 convs are merged into one matmul.
        hos = []
        for pname in ("p1", "p2"):
            prop = r[pname][:TBN, :TBN]
            h = xg
            parts = [xg]
            for _ in range(gdep):
                h = alpha * xg + (1.0 - alpha) * jnp.dot(
                    h, prop, preferred_element_type=_F32)
                parts.append(h)
            hos.append(jnp.concatenate(parts, axis=0))       # ((gdep+1)*Cc, TBN)
        ho = jnp.concatenate(hos, axis=0)                    # (2*(gdep+1)*Cc, TBN)
        xg = jnp.dot(r[f"w_gmlp_{i}"][...], ho,
                     preferred_element_type=_F32) + r[f"b_gmlp_{i}"][...]

        # ---- residual add + LayerNorm over (C, N, T) per batch element.
        x = xg + residual[:, (T - Tout) * BN:]
        inv_cnt = 1.0 / float(Cr * N * Tout)
        mean_col = None
        inv_col = None
        for b in range(B):
            mb = r["bmask"][b:b + 1, :TBN]                   # (1, TBN)
            xm = x * mb
            sb = jnp.sum(jnp.sum(xm, axis=1, keepdims=True),
                         axis=0, keepdims=True) * inv_cnt
            sqb = jnp.sum(jnp.sum(xm * x, axis=1, keepdims=True),
                          axis=0, keepdims=True) * inv_cnt
            var = jnp.maximum(sqb - sb * sb, 0.0)
            ib = jax.lax.rsqrt(var + eps)
            mt = sb * mb
            it = ib * mb
            mean_col = mt if mean_col is None else mean_col + mt
            inv_col = it if inv_col is None else inv_col + it
        x = (x - mean_col) * inv_col * r[f"w_ln_{i}"][...] + r[f"b_ln_{i}"][...]
        T = Tout

    # ---- output head: skipE + relu + end convs + mlp_8.
    skip = (skip
            + jnp.dot(r["w_skipE"][...], x, preferred_element_type=_F32)
            + r["b_skipE"][...])
    z = jnp.maximum(skip, 0.0)
    z = jnp.maximum(jnp.dot(r["w_end1"][...], z,
                            preferred_element_type=_F32) + r["b_end1"][...], 0.0)
    z = jnp.dot(r["w_end2"][...], z,
                preferred_element_type=_F32) + r["b_end2"][...]   # (out_dim, B*N)
    for b in range(B):
        zb = z[:, b * N:(b + 1) * N]                              # (out_dim, N)
        out_ref[b] = jnp.dot(zb, r["w8t"][...],
                             preferred_element_type=_F32) + r["b8"][...]


# ----------------------------------------------------------------------------
# One-time parameter preprocessing (all reshapes/transposes hoisted here)
# ----------------------------------------------------------------------------
def _build_inception_block(fw, fb, gw, gb, cin):
    """Merge the 4 dilated_inception convs (filter+gate) into a single block
    weight of shape (2*Cc, kmax*cin); rows are zero where a kernel has no tap.
    im2col row layout: tap*cin + ci, output rows: [filter(Cc), gate(Cc)]."""
    kmax = KERNEL_SET[-1]
    cok = fw[0].shape[0]
    cc = cok * len(KERNEL_SET)
    w = jnp.zeros((2 * cc, kmax * cin), _F32)
    for ki, k in enumerate(KERNEL_SET):
        wf = fw[ki][:, :, 0, :]          # (cok, cin, k)
        wg = gw[ki][:, :, 0, :]
        for dk in range(k):
            da = kmax - k + dk           # absolute tap index (last k of kmax)
            w = w.at[ki * cok:(ki + 1) * cok,
                     da * cin:(da + 1) * cin].set(wf[:, :, dk])
            w = w.at[cc + ki * cok:cc + (ki + 1) * cok,
                     da * cin:(da + 1) * cin].set(wg[:, :, dk])
    b = jnp.concatenate([jnp.concatenate(fb), jnp.concatenate(gb)])[:, None]
    return w, b


def _expand_ln(w, b_dim):
    """(C, N, T) affine -> (C, T*B*N) in the kernel's (t, b, n) column order."""
    cch, n, t = w.shape
    wt = jnp.transpose(w, (0, 2, 1))[:, :, None, :]            # (C, T, 1, N)
    return jnp.broadcast_to(wt, (cch, t, b_dim, n)).reshape(cch, t * b_dim * n)


def prepare_params(p):
    c = CFG
    B, N, Cin = c["B"], c["num_nodes"], c["in_dim"]
    Cr, Cc, Cs = c["residual_channels"], c["conv_channels"], c["skip_channels"]
    T0 = c["receptive_field"]
    kmax = KERNEL_SET[-1]
    BN = B * N

    ka = {}
    ka["w_start"] = p["start_w"]                               # (Cr, Cin)
    ka["b_start"] = p["start_b"][:, None]
    # skip0: (Cs, Cin, 1, T0) -> (Cs, T0*Cin), columns ordered (t, ci)
    ka["w_skip0"] = jnp.transpose(
        p["skip0_w"][:, :, 0, :], (0, 2, 1)).reshape(Cs, T0 * Cin)
    ka["b_skip0"] = p["skip0_b"][:, None]

    T = T0
    for i in range(c["layers"]):
        Tout = T - (kmax - 1)
        wfg, bfg = _build_inception_block(p["filter_w"][i], p["filter_b"][i],
                                          p["gate_w"][i], p["gate_b"][i], Cr)
        ka[f"w_fg_{i}"] = wfg                                  # (2*Cc, 7*Cr)
        ka[f"b_fg_{i}"] = bfg
        ka[f"w_skip_{i}"] = jnp.transpose(
            p["skipconv_w"][i][:, :, 0, :], (0, 2, 1)).reshape(Cs, Tout * Cc)
        ka[f"b_skip_{i}"] = p["skipconv_b"][i][:, None]
        ka[f"w_gmlp_{i}"] = jnp.concatenate(
            [p["g1_w"][i], p["g2_w"][i]], axis=1)              # (Cr, 2*3*Cc)
        ka[f"b_gmlp_{i}"] = (p["g1_b"][i] + p["g2_b"][i])[:, None]
        ka[f"w_ln_{i}"] = _expand_ln(p["norm_w"][i], B)
        ka[f"b_ln_{i}"] = _expand_ln(p["norm_b"][i], B)
        T = Tout

    ka["w_skipE"] = p["skipE_w"]
    ka["b_skipE"] = p["skipE_b"][:, None]
    ka["w_end1"] = p["end1_w"]
    ka["b_end1"] = p["end1_b"][:, None]
    ka["w_end2"] = p["end2_w"]
    ka["b_end2"] = p["end2_b"][:, None]
    ka["w8t"] = p["mlp8_w"].T                                  # (N, 8)
    ka["b8"] = p["mlp8_b"][None, :]                            # (1, 8)

    # Constant per-batch column mask for the in-kernel LayerNorm reduction
    # (period B*N, so slicing the first T*B*N columns stays valid).
    t1 = T0 - (kmax - 1)
    cols = np.arange(t1 * BN)
    bid = (cols % BN) // N
    ka["bmask"] = jnp.asarray(
        np.stack([(bid == b).astype(np.float32) for b in range(B)], axis=0))

    gc = p["gc"]
    gcp = dict(emb1=gc["emb1"], emb2=gc["emb2"],
               w1t=gc["W1"].T, b1=gc["b1"][None, :],
               w2t=gc["W2"].T, b2=gc["b2"][None, :])

    names = tuple(["x0", "x0_im", "p1", "p2"] + sorted(ka.keys()))
    return dict(kargs={k: v.astype(_F32) for k, v in ka.items()},
                gc={k: v.astype(_F32) for k, v in gcp.items()},
                names=names)


# ----------------------------------------------------------------------------
# Parameter init (deterministic, synthetic; mirrors the nn.Module layout)
# ----------------------------------------------------------------------------
def init_params(key):
    c = CFG
    N, nd = c["num_nodes"], c["node_dim"]
    Cr, Cc, Cs, Ce = (c["residual_channels"], c["conv_channels"],
                      c["skip_channels"], c["end_channels"])
    rf, gd, ks = c["receptive_field"], c["gcn_depth"], c["kernel_size"]
    keys = iter(jax.random.split(key, 512))

    def nrm(shape, s=0.1):
        return (s * jax.random.normal(next(keys), shape)).astype(_F32)

    p = {}
    p["gc"] = dict(emb1=nrm((N, nd), 1.0), emb2=nrm((N, nd), 1.0),
                   W1=nrm((nd, nd)), b1=nrm((nd,)),
                   W2=nrm((nd, nd)), b2=nrm((nd,)))
    p["start_w"], p["start_b"] = nrm((Cr, c["in_dim"])), nrm((Cr,))
    p["skip0_w"], p["skip0_b"] = nrm((Cs, c["in_dim"], 1, rf)), nrm((Cs,))

    Cok = Cc // len(KERNEL_SET)
    t_after = [rf - j * (ks - 1) for j in range(1, c["layers"] + 1)]   # 13,7,1
    skip_w = [rf - (1 + j * (ks - 1)) + 1 for j in range(1, c["layers"] + 1)]

    for name in ("filter_w", "filter_b", "gate_w", "gate_b", "skipconv_w",
                 "skipconv_b", "g1_w", "g1_b", "g2_w", "g2_b",
                 "norm_w", "norm_b"):
        p[name] = []
    for i in range(c["layers"]):
        p["filter_w"].append([nrm((Cok, Cr, 1, k)) for k in KERNEL_SET])
        p["filter_b"].append([nrm((Cok,)) for _ in KERNEL_SET])
        p["gate_w"].append([nrm((Cok, Cr, 1, k)) for k in KERNEL_SET])
        p["gate_b"].append([nrm((Cok,)) for _ in KERNEL_SET])
        p["skipconv_w"].append(nrm((Cs, Cc, 1, skip_w[i])))
        p["skipconv_b"].append(nrm((Cs,)))
        p["g1_w"].append(nrm((Cr, (gd + 1) * Cc)))
        p["g1_b"].append(nrm((Cr,)))
        p["g2_w"].append(nrm((Cr, (gd + 1) * Cc)))
        p["g2_b"].append(nrm((Cr,)))
        p["norm_w"].append(1.0 + nrm((Cr, N, t_after[i])))
        p["norm_b"].append(nrm((Cr, N, t_after[i])))

    p["skipE_w"], p["skipE_b"] = nrm((Cs, Cr)), nrm((Cs,))
    p["end1_w"], p["end1_b"] = nrm((Ce, Cs)), nrm((Ce,))
    p["end2_w"], p["end2_b"] = nrm((c["out_dim"], Ce)), nrm((c["out_dim"],))
    p["mlp8_w"], p["mlp8_b"] = nrm((8, N)), nrm((8,))
    return p


# ----------------------------------------------------------------------------
# MTGNN forward (JAX wrapper: input layout prep + adjacency prep + 2 kernels)
# ----------------------------------------------------------------------------
def mtgnn_forward(prep, x_in, input_static):
    del input_static                       # num_static_features == 0 -> mlp_8
    c = CFG
    B, Cin, N, L = x_in.shape
    assert L == c["seq_length"]
    T0 = c["receptive_field"]
    BN = B * N
    kmax = KERNEL_SET[-1]

    # One-time input layout transforms (left time pad + the two kernel views).
    xp = jnp.pad(x_in.astype(_F32), ((0, 0), (0, 0), (0, 0), (T0 - L, 0)))
    x0 = jnp.transpose(xp, (1, 3, 0, 2)).reshape(Cin, T0 * BN)      # (Cin, T*B*N)
    x0_im = jnp.transpose(xp, (3, 1, 0, 2)).reshape(T0 * Cin, BN)   # (T*Cin, B*N)

    # Adaptive adjacency (Pallas matmuls + JAX top-k mask).
    adp = graph_construct(prep["gc"], c["tanhalpha"], c["subgraph_size"], N)

    # Adjacency normalization + block-diagonal propagation operators, hoisted
    # out of the layer loop (loop invariant, computed once per forward).
    eye_n = jnp.eye(N, dtype=_F32)

    def norm_adj(a):
        a = a + eye_n
        return a / jnp.sum(a, axis=1, keepdims=True)

    a1 = norm_adj(adp)
    a2 = norm_adj(adp.T)
    tb_max = (T0 - (kmax - 1)) * B
    eye_tb = jnp.eye(tb_max, dtype=_F32)
    p1 = jnp.kron(eye_tb, a1.T)        # (TBmax*N, TBmax*N); sliced per layer
    p2 = jnp.kron(eye_tb, a2.T)

    names = prep["names"]
    vals = dict(prep["kargs"])
    vals.update(x0=x0, x0_im=x0_im, p1=p1, p2=p2)
    flat = [vals[n] for n in names]

    out = pl.pallas_call(
        functools.partial(_mtgnn_fused_kernel, names),
        out_shape=jax.ShapeDtypeStruct((B, c["out_dim"], 8), _F32),
        in_specs=[_VMEM] * len(names),
        out_specs=_VMEM,
    )(*flat)
    return out


# ----------------------------------------------------------------------------
# Main
# ----------------------------------------------------------------------------
if __name__ == "__main__":
    key = jax.random.PRNGKey(0)
    k_param, k_x = jax.random.split(key)

    params = init_params(k_param)
    prep = prepare_params(params)          # all weight prep hoisted out of jit

    x = jax.random.normal(
        k_x, (CFG["B"], CFG["in_dim"], CFG["num_nodes"], CFG["seq_length"]),
        dtype=_F32)
    x_static = jnp.zeros((CFG["B"], 0), _F32)   # unused (0 static features)

    fwd = jax.jit(functools.partial(mtgnn_forward, prep))
    out = fwd(x, x_static)
    out = jax.block_until_ready(out)

    assert out.shape == (CFG["B"], CFG["out_dim"], 8), out.shape
    assert bool(jnp.all(jnp.isfinite(out)))
    print("KERNEL_OK")
</pallas_src>

<mosaic_0001>
module attributes {stable_mosaic.version = 11 : i64} {
  func.func @_graph_adj_kernel(%arg0: memref<16x16xf32, #tpu.memory_space<vmem>>, %arg1: memref<16x16xf32, #tpu.memory_space<vmem>>, %arg2: memref<16x16xf32, #tpu.memory_space<vmem>>, %arg3: memref<1x16xf32, #tpu.memory_space<vmem>>, %arg4: memref<16x16xf32, #tpu.memory_space<vmem>>, %arg5: memref<1x16xf32, #tpu.memory_space<vmem>>, %arg6: memref<16x16xf32, #tpu.memory_space<vmem>>) attributes {dimension_semantics = [], scalar_prefetch = 0 : i64, scratch_operands = 0 : i64, tpu.core_type = #tpu.core_type<tc>} {
    %c0 = arith.constant 0 : index
    %c0_0 = arith.constant 0 : index
    %0 = vector.load %arg0[%c0, %c0_0] : memref<16x16xf32, #tpu.memory_space<vmem>>, vector<16x16xf32>
    %c0_1 = arith.constant 0 : index
    %c0_2 = arith.constant 0 : index
    %1 = vector.load %arg2[%c0_1, %c0_2] : memref<16x16xf32, #tpu.memory_space<vmem>>, vector<16x16xf32>
    %cst = arith.constant dense<0.000000e+00> : vector<16x16xf32>
    %2 = tpu.matmul %0, %1, %cst {dimension_numbers = #tpu.dot_dimension_numbers<[1], [0], [0], [1], [0, 0, 1, 1], [], []>} : vector<16x16xf32>, vector<16x16xf32>, vector<16x16xf32> -> vector<16x16xf32>
    %c0_3 = arith.constant 0 : index
    %c0_4 = arith.constant 0 : index
    %3 = vector.load %arg3[%c0_3, %c0_4] : memref<1x16xf32, #tpu.memory_space<vmem>>, vector<1x16xf32>
    %4 = vector.broadcast %3 : vector<1x16xf32> to vector<16x16xf32>
    %5 = arith.addf %2, %4 : vector<16x16xf32>
    %cst_5 = arith.constant 3.000000e+00 : f32
    %6 = vector.broadcast %cst_5 : f32 to vector<16x16xf32>
    %7 = arith.mulf %6, %5 : vector<16x16xf32>
    %8 = math.tanh %7 : vector<16x16xf32>
    %c0_6 = arith.constant 0 : index
    %c0_7 = arith.constant 0 : index
    %9 = vector.load %arg1[%c0_6, %c0_7] : memref<16x16xf32, #tpu.memory_space<vmem>>, vector<16x16xf32>
    %c0_8 = arith.constant 0 : index
    %c0_9 = arith.constant 0 : index
    %10 = vector.load %arg4[%c0_8, %c0_9] : memref<16x16xf32, #tpu.memory_space<vmem>>, vector<16x16xf32>
    %cst_10 = arith.constant dense<0.000000e+00> : vector<16x16xf32>
    %11 = tpu.matmul %9, %10, %cst_10 {dimension_numbers = #tpu.dot_dimension_numbers<[1], [0], [0], [1], [0, 0, 1, 1], [], []>} : vector<16x16xf32>, vector<16x16xf32>, vector<16x16xf32> -> vector<16x16xf32>
    %c0_11 = arith.constant 0 : index
    %c0_12 = arith.constant 0 : index
    %12 = vector.load %arg5[%c0_11, %c0_12] : memref<1x16xf32, #tpu.memory_space<vmem>>, vector<1x16xf32>
    %13 = vector.broadcast %12 : vector<1x16xf32> to vector<16x16xf32>
    %14 = arith.addf %11, %13 : vector<16x16xf32>
    %cst_13 = arith.constant 3.000000e+00 : f32
    %15 = vector.broadcast %cst_13 : f32 to vector<16x16xf32>
    %16 = arith.mulf %15, %14 : vector<16x16xf32>
    %17 = math.tanh %16 : vector<16x16xf32>
    %18 = tpu.transpose %17, [1, 0] : vector<16x16xf32> -> vector<16x16xf32>
    %cst_14 = arith.constant dense<0.000000e+00> : vector<16x16xf32>
    %19 = tpu.matmul %8, %18, %cst_14 {dimension_numbers = #tpu.dot_dimension_numbers<[1], [0], [0], [1], [0, 0, 1, 1], [], []>} : vector<16x16xf32>, vector<16x16xf32>, vector<16x16xf32> -> vector<16x16xf32>
    %20 = tpu.transpose %8, [1, 0] : vector<16x16xf32> -> vector<16x16xf32>
    %cst_15 = arith.constant dense<0.000000e+00> : vector<16x16xf32>
    %21 = tpu.matmul %17, %20, %cst_15 {dimension_numbers = #tpu.dot_dimension_numbers<[1], [0], [0], [1], [0, 0, 1, 1], [], []>} : vector<16x16xf32>, vector<16x16xf32>, vector<16x16xf32> -> vector<16x16xf32>
    %22 = arith.subf %19, %21 : vector<16x16xf32>
    %cst_16 = arith.constant 3.000000e+00 : f32
    %23 = vector.broadcast %cst_16 : f32 to vector<16x16xf32>
    %24 = arith.mulf %23, %22 : vector<16x16xf32>
    %25 = math.tanh %24 : vector<16x16xf32>
    %cst_17 = arith.constant 0.000000e+00 : f32
    %26 = vector.broadcast %cst_17 : f32 to vector<16x16xf32>
    %27 = arith.maximumf %25, %26 : vector<16x16xf32>
    %c0_18 = arith.constant 0 : index
    %c0_19 = arith.constant 0 : index
    %28 = vector.load %arg6[%c0_18, %c0_19] : memref<16x16xf32, #tpu.memory_space<vmem>>, vector<16x16xf32>
    tpu.vector_store %arg6[%c0_18, %c0_19], %27 {strides = array<i32>} : memref<16x16xf32, #tpu.memory_space<vmem>>, vector<16x16xf32>,
    return
  }
}

module attributes {stable_mosaic.version = 11 : i64} {
  func.func @_mtgnn_fused_kernel(%arg0: memref<2x608xf32, #tpu.memory_space<vmem>>, %arg1: memref<38x32xf32, #tpu.memory_space<vmem>>, %arg2: memref<416x416xf32, #tpu.memory_space<vmem>>, %arg3: memref<416x416xf32, #tpu.memory_space<vmem>>, %arg4: memref<1x8xf32, #tpu.memory_space<vmem>>, %arg5: memref<32x1xf32, #tpu.memory_space<vmem>>, %arg6: memref<12x1xf32, #tpu.memory_space<vmem>>, %arg7: memref<32x1xf32, #tpu.memory_space<vmem>>, %arg8: memref<32x1xf32, #tpu.memory_space<vmem>>, %arg9: memref<32x1xf32, #tpu.memory_space<vmem>>, %arg10: memref<16x1xf32, #tpu.memory_space<vmem>>, %arg11: memref<16x1xf32, #tpu.memory_space<vmem>>, %arg12: memref<16x1xf32, #tpu.memory_space<vmem>>, %arg13: memref<16x416xf32, #tpu.memory_space<vmem>>, %arg14: memref<16x224xf32, #tpu.memory_space<vmem>>, %arg15: memref<16x32xf32, #tpu.memory_space<vmem>>, %arg16: memref<32x1xf32, #tpu.memory_space<vmem>>, %arg17: memref<32x1xf32, #tpu.memory_space<vmem>>, %arg18: memref<32x1xf32, #tpu.memory_space<vmem>>, %arg19: memref<32x1xf32, #tpu.memory_space<vmem>>, %arg20: memref<32x1xf32, #tpu.memory_space<vmem>>, %arg21: memref<16x1xf32, #tpu.memory_space<vmem>>, %arg22: memref<2x416xf32, #tpu.memory_space<vmem>>, %arg23: memref<16x8xf32, #tpu.memory_space<vmem>>, %arg24: memref<32x32xf32, #tpu.memory_space<vmem>>, %arg25: memref<12x32xf32, #tpu.memory_space<vmem>>, %arg26: memref<32x112xf32, #tpu.memory_space<vmem>>, %arg27: memref<32x112xf32, #tpu.memory_space<vmem>>, %arg28: memref<32x112xf32, #tpu.memory_space<vmem>>, %arg29: memref<16x96xf32, #tpu.memory_space<vmem>>, %arg30: memref<16x96xf32, #tpu.memory_space<vmem>>, %arg31: memref<16x96xf32, #tpu.memory_space<vmem>>, %arg32: memref<16x416xf32, #tpu.memory_space<vmem>>, %arg33: memref<16x224xf32, #tpu.memory_space<vmem>>, %arg34: memref<16x32xf32, #tpu.memory_space<vmem>>, %arg35: memref<32x38xf32, #tpu.memory_space<vmem>>, %arg36: memref<32x16xf32, #tpu.memory_space<vmem>>, %arg37: memref<32x208xf32, #tpu.memory_space<vmem>>, %arg38: memref<32x112xf32, #tpu.memory_space<vmem>>, %arg39: memref<32x16xf32, #tpu.memory_space<vmem>>, %arg40: memref<16x2xf32, #tpu.memory_space<vmem>>, %arg41: memref<2x12x8xf32, #tpu.memory_space<vmem>>) attributes {dimension_semantics = [], scalar_prefetch = 0 : i64, scratch_operands = 0 : i64, tpu.core_type = #tpu.core_type<tc>} {
    %c0 = arith.constant 0 : index
    %c0_0 = arith.constant 0 : index
    %0 = vector.load %arg40[%c0, %c0_0] : memref<16x2xf32, #tpu.memory_space<vmem>>, vector<16x2xf32>
    %c0_1 = arith.constant 0 : index
    %c0_2 = arith.constant 0 : index
    %1 = vector.load %arg0[%c0_1, %c0_2] : memref<2x608xf32, #tpu.memory_space<vmem>>, vector<2x608xf32>
    %cst = arith.constant dense<0.000000e+00> : vector<16x608xf32>
    %2 = tpu.matmul %0, %1, %cst {dimension_numbers = #tpu.dot_dimension_numbers<[1], [0], [0], [1], [0, 0, 1, 1], [], []>} : vector<16x2xf32>, vector<2x608xf32>, vector<16x608xf32> -> vector<16x608xf32>
    %c0_3 = arith.constant 0 : index
    %c0_4 = arith.constant 0 : index
    %3 = vector.load %arg21[%c0_3, %c0_4] : memref<16x1xf32, #tpu.memory_space<vmem>>, vector<16x1xf32>
    %4 = vector.broadcast %3 : vector<16x1xf32> to vector<16x608xf32>
    %5 = arith.addf %2, %4 : vector<16x608xf32>
    %c0_5 = arith.constant 0 : index
    %c0_6 = arith.constant 0 : index
    %6 = vector.load %arg35[%c0_5, %c0_6] : memref<32x38xf32, #tpu.memory_space<vmem>>, vector<32x38xf32>
    %c0_7 = arith.constant 0 : index
    %c0_8 = arith.constant 0 : index
    %7 = vector.load %arg1[%c0_7, %c0_8] : memref<38x32xf32, #tpu.memory_space<vmem>>, vector<38x32xf32>
    %cst_9 = arith.constant dense<0.000000e+00> : vector<32x32xf32>
    %8 = tpu.matmul %6, %7, %cst_9 {dimension_numbers = #tpu.dot_dimension_numbers<[1], [0], [0], [1], [0, 0, 1, 1], [], []>} : vector<32x38xf32>, vector<38x32xf32>, vector<32x32xf32> -> vector<32x32xf32>
    %c0_10 = arith.constant 0 : index
    %c0_11 = arith.constant 0 : index
    %9 = vector.load %arg16[%c0_10, %c0_11] : memref<32x1xf32, #tpu.memory_space<vmem>>, vector<32x1xf32>
    %10 = vector.broadcast %9 : vector<32x1xf32> to vector<32x32xf32>
    %11 = arith.addf %8, %10 : vector<32x32xf32>
    %12 = vector.extract_strided_slice %5 {offsets = [0, 0], sizes = [16, 416], strides = [1, 1]} : vector<16x608xf32> to vector<16x416xf32>
    %13 = vector.extract_strided_slice %5 {offsets = [0, 32], sizes = [16, 416], strides = [1, 1]} : vector<16x608xf32> to vector<16x416xf32>
    %14 = vector.extract_strided_slice %5 {offsets = [0, 64], sizes = [16, 416], strides = [1, 1]} : vector<16x608xf32> to vector<16x416xf32>
    %15 = vector.extract_strided_slice %5 {offsets = [0, 96], sizes = [16, 416], strides = [1, 1]} : vector<16x608xf32> to vector<16x416xf32>
    %16 = vector.extract_strided_slice %5 {offsets = [0, 128], sizes = [16, 416], strides = [1, 1]} : vector<16x608xf32> to vector<16x416xf32>
    %17 = vector.extract_strided_slice %5 {offsets = [0, 160], sizes = [16, 416], strides = [1, 1]} : vector<16x608xf32> to vector<16x416xf32>
    %18 = vector.extract_strided_slice %5 {offsets = [0, 192], sizes = [16, 416], strides = [1, 1]} : vector<16x608xf32> to vector<16x416xf32>
    %19 = tpu.concatenate %12, %13, %14, %15, %16, %17, %18 in 0 : vector<16x416xf32>, vector<16x416xf32>, vector<16x416xf32>, vector<16x416xf32>, vector<16x416xf32>, vector<16x416xf32>, vector<16x416xf32> -> vector<112x416xf32>
    %c0_12 = arith.constant 0 : index
    %c0_13 = arith.constant 0 : index
    %20 = vector.load %arg26[%c0_12, %c0_13] : memref<32x112xf32, #tpu.memory_space<vmem>>, vector<32x112xf32>
    %cst_14 = arith.constant dense<0.000000e+00> : vector<32x416xf32>
    %21 = tpu.matmul %20, %19, %cst_14 {dimension_numbers = #tpu.dot_dimension_numbers<[1], [0], [0], [1], [0, 0, 1, 1], [], []>} : vector<32x112xf32>, vector<112x416xf32>, vector<32x416xf32> -> vector<32x416xf32>
    %c0_15 = arith.constant 0 : index
    %c0_16 = arith.constant 0 : index
    %22 = vector.load %arg7[%c0_15, %c0_16] : memref<32x1xf32, #tpu.memory_space<vmem>>, vector<32x1xf32>
    %23 = vector.broadcast %22 : vector<32x1xf32> to vector<32x416xf32>
    %24 = arith.addf %21, %23 : vector<32x416xf32>
    %25 = vector.extract_strided_slice %24 {offsets = [0, 0], sizes = [16, 416], strides = [1, 1]} : vector<32x416xf32> to vector<16x416xf32>
    %26 = math.tanh %25 : vector<16x416xf32>
    %27 = vector.extract_strided_slice %24 {offsets = [16, 0], sizes = [16, 416], strides = [1, 1]} : vector<32x416xf32> to vector<16x416xf32>
    %28 = arith.negf %27 : vector<16x416xf32>
    %29 = math.exp %28 : vector<16x416xf32>
    %cst_17 = arith.constant 1.000000e+00 : f32
    %30 = vector.broadcast %cst_17 : f32 to vector<16x416xf32>
    %31 = arith.addf %30, %29 : vector<16x416xf32>
    %32 = arith.divf %30, %31 : vector<16x416xf32>
    %33 = arith.mulf %26, %32 : vector<16x416xf32>
    %34 = vector.extract_strided_slice %33 {offsets = [0, 0], sizes = [16, 32], strides = [1, 1]} : vector<16x416xf32> to vector<16x32xf32>
    %35 = vector.extract_strided_slice %33 {offsets = [0, 32], sizes = [16, 32], strides = [1, 1]} : vector<16x416xf32> to vector<16x32xf32>
    %36 = vector.extract_strided_slice %33 {offsets = [0, 64], sizes = [16, 32], strides = [1, 1]} : vector<16x416xf32> to vector<16x32xf32>
    %37 = vector.extract_strided_slice %33 {offsets = [0, 96], sizes = [16, 32], strides = [1, 1]} : vector<16x416xf32> to vector<16x32xf32>
    %38 = vector.extract_strided_slice %33 {offsets = [0, 128], sizes = [16, 32], strides = [1, 1]} : vector<16x416xf32> to vector<16x32xf32>
    %39 = vector.extract_strided_slice %33 {offsets = [0, 160], sizes = [16, 32], strides = [1, 1]} : vector<16x416xf32> to vector<16x32xf32>
    %40 = vector.extract_strided_slice %33 {offsets = [0, 192], sizes = [16, 32], strides = [1, 1]} : vector<16x416xf32> to vector<16x32xf32>
    %41 = vector.extract_strided_slice %33 {offsets = [0, 224], sizes = [16, 32], strides = [1, 1]} : vector<16x416xf32> to vector<16x32xf32>
    %42 = vector.extract_strided_slice %33 {offsets = [0, 256], sizes = [16, 32], strides = [1, 1]} : vector<16x416xf32> to vector<16x32xf32>
    %43 = vector.extract_strided_slice %33 {offsets = [0, 288], sizes = [16, 32], strides = [1, 1]} : vector<16x416xf32> to vector<16x32xf32>
    %44 = vector.extract_strided_slice %33 {offsets = [0, 320], sizes = [16, 32], strides = [1, 1]} : vector<16x416xf32> to vector<16x32xf32>
    %45 = vector.extract_strided_slice %33 {offsets = [0, 352], sizes = [16, 32], strides = [1, 1]} : vector<16x416xf32> to vector<16x32xf32>
    %46 = vector.extract_strided_slice %33 {offsets = [0, 384], sizes = [16, 32], strides = [1, 1]} : vector<16x416xf32> to vector<16x32xf32>
    %47 = tpu.concatenate %34, %35, %36, %37, %38, %39, %40, %41, %42, %43, %44, %45, %46 in 0 : vector<16x32xf32>, vector<16x32xf32>, vector<16x32xf32>, vector<16x32xf32>, vector<16x32xf32>, vector<16x32xf32>, vector<16x32xf32>, vector<16x32xf32>, vector<16x32xf32>, vector<16x32xf32>, vector<16x32xf32>, vector<16x32xf32>, vector<16x32xf32> -> vector<208x32xf32>
    %c0_18 = arith.constant 0 : index
    %c0_19 = arith.constant 0 : index
    %48 = vector.load %arg37[%c0_18, %c0_19] : memref<32x208xf32, #tpu.memory_space<vmem>>, vector<32x208xf32>
    %cst_20 = arith.constant dense<0.000000e+00> : vector<32x32xf32>
    %49 = tpu.matmul %48, %47, %cst_20 {dimension_numbers = #tpu.dot_dimension_numbers<[1], [0], [0], [1], [0, 0, 1, 1], [], []>} : vector<32x208xf32>, vector<208x32xf32>, vector<32x32xf32> -> vector<32x32xf32>
    %50 = arith.addf %11, %49 : vector<32x32xf32>
    %c0_21 = arith.constant 0 : index
    %c0_22 = arith.constant 0 : index
    %51 = vector.load %arg18[%c0_21, %c0_22] : memref<32x1xf32, #tpu.memory_space<vmem>>, vector<32x1xf32>
    %52 = vector.broadcast %51 : vector<32x1xf32> to vector<32x32xf32>
    %53 = arith.addf %50, %52 : vector<32x32xf32>
    %c0_23 = arith.constant 0 : index
    %c0_24 = arith.constant 0 : index
    %54 = vector.load %arg2[%c0_23, %c0_24] : memref<416x416xf32, #tpu.memory_space<vmem>>, vector<416x416xf32>
    %cst_25 = arith.constant 5.000000e-02 : f32
    %55 = vector.broadcast %cst_25 : f32 to vector<16x416xf32>
    %56 = arith.mulf %55, %33 : vector<16x416xf32>
    %cst_26 = arith.constant dense<0.000000e+00> : vector<16x416xf32>
    %57 = tpu.matmul %33, %54, %cst_26 {dimension_numbers = #tpu.dot_dimension_numbers<[1], [0], [0], [1], [0, 0, 1, 1], [], []>} : vector<16x416xf32>, vector<416x416xf32>, vector<16x416xf32> -> vector<16x416xf32>
    %cst_27 = arith.constant 0.949999988 : f32
    %58 = vector.broadcast %cst_27 : f32 to vector<16x416xf32>
    %59 = arith.mulf %58, %57 : vector<16x416xf32>
    %60 = arith.addf %56, %59 : vector<16x416xf32>
    %cst_28 = arith.constant 5.000000e-02 : f32
    %61 = vector.broadcast %cst_28 : f32 to vector<16x416xf32>
    %62 = arith.mulf %61, %33 : vector<16x416xf32>
    %cst_29 = arith.constant dense<0.000000e+00> : vector<16x416xf32>
    %63 = tpu.matmul %60, %54, %cst_29 {dimension_numbers = #tpu.dot_dimension_numbers<[1], [0], [0], [1], [0, 0, 1, 1], [], []>} : vector<16x416xf32>, vector<416x416xf32>, vector<16x416xf32> -> vector<16x416xf32>
    %cst_30 = arith.constant 0.949999988 : f32
    %64 = vector.broadcast %cst_30 : f32 to vector<16x416xf32>
    %65 = arith.mulf %64, %63 : vector<16x416xf32>
    %66 = arith.addf %62, %65 : vector<16x416xf32>
    %67 = tpu.concatenate %33, %60, %66 in 0 : vector<16x416xf32>, vector<16x416xf32>, vector<16x416xf32> -> vector<48x416xf32>
    %c0_31 = arith.constant 0 : index
    %c0_32 = arith.constant 0 : index
    %68 = vector.load %arg3[%c0_31, %c0_32] : memref<416x416xf32, #tpu.memory_space<vmem>>, vector<416x416xf32>
    %cst_33 = arith.constant 5.000000e-02 : f32
    %69 = vector.broadcast %cst_33 : f32 to vector<16x416xf32>
    %70 = arith.mulf %69, %33 : vector<16x416xf32>
    %cst_34 = arith.constant dense<0.000000e+00> : vector<16x416xf32>
    %71 = tpu.matmul %33, %68, %cst_34 {dimension_numbers = #tpu.dot_dimension_numbers<[1], [0], [0], [1], [0, 0, 1, 1], [], []>} : vector<16x416xf32>, vector<416x416xf32>, vector<16x416xf32> -> vector<16x416xf32>
    %cst_35 = arith.constant 0.949999988 : f32
    %72 = vector.broadcast %cst_35 : f32 to vector<16x416xf32>
    %73 = arith.mulf %72, %71 : vector<16x416xf32>
    %74 = arith.addf %70, %73 : vector<16x416xf32>
    %cst_36 = arith.constant 5.000000e-02 : f32
    %75 = vector.broadcast %cst_36 : f32 to vector<16x416xf32>
    %76 = arith.mulf %75, %33 : vector<16x416xf32>
    %cst_37 = arith.constant dense<0.000000e+00> : vector<16x416xf32>
    %77 = tpu.matmul %74, %68, %cst_37 {dimension_numbers = #tpu.dot_dimension_numbers<[1], [0], [0], [1], [0, 0, 1, 1], [], []>} : vector<16x416xf32>, vector<416x416xf32>, vector<16x416xf32> -> vector<16x416xf32>
    %cst_38 = arith.constant 0.949999988 : f32
    %78 = vector.broadcast %cst_38 : f32 to vector<16x416xf32>
    %79 = arith.mulf %78, %77 : vector<16x416xf32>
    %80 = arith.addf %76, %79 : vector<16x416xf32>
    %81 = tpu.concatenate %33, %74, %80 in 0 : vector<16x416xf32>, vector<16x416xf32>, vector<16x416xf32> -> vector<48x416xf32>
    %82 = tpu.concatenate %67, %81 in 0 : vector<48x416xf32>, vector<48x416xf32> -> vector<96x416xf32>
    %c0_39 = arith.constant 0 : index
    %c0_40 = arith.constant 0 : index
    %83 = vector.load %arg29[%c0_39, %c0_40] : memref<16x96xf32, #tpu.memory_space<vmem>>, vector<16x96xf32>
    %cst_41 = arith.constant dense<0.000000e+00> : vector<16x416xf32>
    %84 = tpu.matmul %83, %82, %cst_41 {dimension_numbers = #tpu.dot_dimension_numbers<[1], [0], [0], [1], [0, 0, 1, 1], [], []>} : vector<16x96xf32>, vector<96x416xf32>, vector<16x416xf32> -> vector<16x416xf32>
    %c0_42 = arith.constant 0 : index
    %c0_43 = arith.constant 0 : index
    %85 = vector.load %arg10[%c0_42, %c0_43] : memref<16x1xf32, #tpu.memory_space<vmem>>, vector<16x1xf32>
    %86 = vector.broadcast %85 : vector<16x1xf32> to vector<16x416xf32>
    %87 = arith.addf %84, %86 : vector<16x416xf32>
    %88 = vector.extract_strided_slice %5 {offsets = [0, 192], sizes = [16, 416], strides = [1, 1]} : vector<16x608xf32> to vector<16x416xf32>
    %89 = arith.addf %87, %88 : vector<16x416xf32>
    %c0_44 = arith.constant 0 : index
    %c0_45 = arith.constant 0 : index
    %90 = vector.load %arg22[%c0_44, %c0_45] : memref<2x416xf32, #tpu.memory_space<vmem>>, vector<1x416xf32>
    %91 = vector.broadcast %90 : vector<1x416xf32> to vector<16x416xf32>
    %92 = arith.mulf %89, %91 : vector<16x416xf32>
    %cst_46 = arith.constant dense<0.000000e+00> : vector<16xf32>
    %93 = vector.multi_reduction <add>, %92, %cst_46 [1] : vector<16x416xf32> to vector<16xf32>
    %94 = vector.shape_cast %93 : vector<16xf32> to vector<16x1xf32>
    %cst_47 = arith.constant dense<0.000000e+00> : vector<1xf32>
    %95 = vector.multi_reduction <add>, %94, %cst_47 [0] : vector<16x1xf32> to vector<1xf32>
    %96 = vector.shape_cast %95 : vector<1xf32> to vector<1x1xf32>
    %cst_48 = arith.constant 3.0048078E-4 : f32
    %97 = vector.broadcast %cst_48 : f32 to vector<1x1xf32>
    %98 = arith.mulf %96, %97 : vector<1x1xf32>
    %99 = arith.mulf %92, %89 : vector<16x416xf32>
    %cst_49 = arith.constant dense<0.000000e+00> : vector<16xf32>
    %100 = vector.multi_reduction <add>, %99, %cst_49 [1] : vector<16x416xf32> to vector<16xf32>
    %101 = vector.shape_cast %100 : vector<16xf32> to vector<16x1xf32>
    %cst_50 = arith.constant dense<0.000000e+00> : vector<1xf32>
    %102 = vector.multi_reduction <add>, %101, %cst_50 [0] : vector<16x1xf32> to vector<1xf32>
    %103 = vector.shape_cast %102 : vector<1xf32> to vector<1x1xf32>
    %cst_51 = arith.constant 3.0048078E-4 : f32
    %104 = vector.broadcast %cst_51 : f32 to vector<1x1xf32>
    %105 = arith.mulf %103, %104 : vector<1x1xf32>
    %106 = arith.mulf %98, %98 : vector<1x1xf32>
    %107 = arith.subf %105, %106 : vector<1x1xf32>
    %cst_52 = arith.constant 0.000000e+00 : f32
    %108 = vector.broadcast %cst_52 : f32 to vector<1x1xf32>
    %109 = arith.maximumf %107, %108 : vector<1x1xf32>
    %cst_53 = arith.constant 9.99999974E-6 : f32
    %110 = vector.broadcast %cst_53 : f32 to vector<1x1xf32>
    %111 = arith.addf %109, %110 : vector<1x1xf32>
    %112 = math.rsqrt %111 : vector<1x1xf32>
    %113 = vector.broadcast %98 : vector<1x1xf32> to vector<1x416xf32>
    %114 = arith.mulf %113, %90 : vector<1x416xf32>
    %115 = vector.broadcast %112 : vector<1x1xf32> to vector<1x416xf32>
    %116 = arith.mulf %115, %90 : vector<1x416xf32>
    %c1 = arith.constant 1 : index
    %c0_54 = arith.constant 0 : index
    %117 = vector.load %arg22[%c1, %c0_54] : memref<2x416xf32, #tpu.memory_space<vmem>>, vector<1x416xf32>
    %118 = vector.broadcast %117 : vector<1x416xf32> to vector<16x416xf32>
    %119 = arith.mulf %89, %118 : vector<16x416xf32>
    %cst_55 = arith.constant dense<0.000000e+00> : vector<16xf32>
    %120 = vector.multi_reduction <add>, %119, %cst_55 [1] : vector<16x416xf32> to vector<16xf32>
    %121 = vector.shape_cast %120 : vector<16xf32> to vector<16x1xf32>
    %cst_56 = arith.constant dense<0.000000e+00> : vector<1xf32>
    %122 = vector.multi_reduction <add>, %121, %cst_56 [0] : vector<16x1xf32> to vector<1xf32>
    %123 = vector.shape_cast %122 : vector<1xf32> to vector<1x1xf32>
    %cst_57 = arith.constant 3.0048078E-4 : f32
    %124 = vector.broadcast %cst_57 : f32 to vector<1x1xf32>
    %125 = arith.mulf %123, %124 : vector<1x1xf32>
    %126 = arith.mulf %119, %89 : vector<16x416xf32>
    %cst_58 = arith.constant dense<0.000000e+00> : vector<16xf32>
    %127 = vector.multi_reduction <add>, %126, %cst_58 [1] : vector<16x416xf32> to vector<16xf32>
    %128 = vector.shape_cast %127 : vector<16xf32> to vector<16x1xf32>
    %cst_59 = arith.constant dense<0.000000e+00> : vector<1xf32>
    %129 = vector.multi_reduction <add>, %128, %cst_59 [0] : vector<16x1xf32> to vector<1xf32>
    %130 = vector.shape_cast %129 : vector<1xf32> to vector<1x1xf32>
    %cst_60 = arith.constant 3.0048078E-4 : f32
    %131 = vector.broadcast %cst_60 : f32 to vector<1x1xf32>
    %132 = arith.mulf %130, %131 : vector<1x1xf32>
    %133 = arith.mulf %125, %125 : vector<1x1xf32>
    %134 = arith.subf %132, %133 : vector<1x1xf32>
    %cst_61 = arith.constant 0.000000e+00 : f32
    %135 = vector.broadcast %cst_61 : f32 to vector<1x1xf32>
    %136 = arith.maximumf %134, %135 : vector<1x1xf32>
    %cst_62 = arith.constant 9.99999974E-6 : f32
    %137 = vector.broadcast %cst_62 : f32 to vector<1x1xf32>
    %138 = arith.addf %136, %137 : vector<1x1xf32>
    %139 = math.rsqrt %138 : vector<1x1xf32>
    %140 = vector.broadcast %125 : vector<1x1xf32> to vector<1x416xf32>
    %141 = arith.mulf %140, %117 : vector<1x416xf32>
    %142 = vector.broadcast %139 : vector<1x1xf32> to vector<1x416xf32>
    %143 = arith.mulf %142, %117 : vector<1x416xf32>
    %144 = arith.addf %114, %141 : vector<1x416xf32>
    %145 = arith.addf %116, %143 : vector<1x416xf32>
    %146 = vector.broadcast %144 : vector<1x416xf32> to vector<16x416xf32>
    %147 = arith.subf %89, %146 : vector<16x416xf32>
    %148 = vector.broadcast %145 : vector<1x416xf32> to vector<16x416xf32>
    %149 = arith.mulf %147, %148 : vector<16x416xf32>
    %c0_63 = arith.constant 0 : index
    %c0_64 = arith.constant 0 : index
    %150 = vector.load %arg32[%c0_63, %c0_64] : memref<16x416xf32, #tpu.memory_space<vmem>>, vector<16x416xf32>
    %151 = arith.mulf %149, %150 : vector<16x416xf32>
    %c0_65 = arith.constant 0 : index
    %c0_66 = arith.constant 0 : index
    %152 = vector.load %arg13[%c0_65, %c0_66] : memref<16x416xf32, #tpu.memory_space<vmem>>, vector<16x416xf32>
    %153 = arith.addf %151, %152 : vector<16x416xf32>
    %154 = vector.extract_strided_slice %153 {offsets = [0, 0], sizes = [16, 224], strides = [1, 1]} : vector<16x416xf32> to vector<16x224xf32>
    %155 = vector.extract_strided_slice %153 {offsets = [0, 32], sizes = [16, 224], strides = [1, 1]} : vector<16x416xf32> to vector<16x224xf32>
    %156 = vector.extract_strided_slice %153 {offsets = [0, 64], sizes = [16, 224], strides = [1, 1]} : vector<16x416xf32> to vector<16x224xf32>
    %157 = vector.extract_strided_slice %153 {offsets = [0, 96], sizes = [16, 224], strides = [1, 1]} : vector<16x416xf32> to vector<16x224xf32>
    %158 = vector.extract_strided_slice %153 {offsets = [0, 128], sizes = [16, 224], strides = [1, 1]} : vector<16x416xf32> to vector<16x224xf32>
    %159 = vector.extract_strided_slice %153 {offsets = [0, 160], sizes = [16, 224], strides = [1, 1]} : vector<16x416xf32> to vector<16x224xf32>
    %160 = vector.extract_strided_slice %153 {offsets = [0, 192], sizes = [16, 224], strides = [1, 1]} : vector<16x416xf32> to vector<16x224xf32>
    %161 = tpu.concatenate %154, %155, %156, %157, %158, %159, %160 in 0 : vector<16x224xf32>, vector<16x224xf32>, vector<16x224xf32>, vector<16x224xf32>, vector<16x224xf32>, vector<16x224xf32>, vector<16x224xf32> -> vector<112x224xf32>
    %c0_67 = arith.constant 0 : index
    %c0_68 = arith.constant 0 : index
    %162 = vector.load %arg27[%c0_67, %c0_68] : memref<32x112xf32, #tpu.memory_space<vmem>>, vector<32x112xf32>
    %cst_69 = arith.constant dense<0.000000e+00> : vector<32x224xf32>
    %163 = tpu.matmul %162, %161, %cst_69 {dimension_numbers = #tpu.dot_dimension_numbers<[1], [0], [0], [1], [0, 0, 1, 1], [], []>} : vector<32x112xf32>, vector<112x224xf32>, vector<32x224xf32> -> vector<32x224xf32>
    %c0_70 = arith.constant 0 : index
    %c0_71 = arith.constant 0 : index
    %164 = vector.load %arg8[%c0_70, %c0_71] : memref<32x1xf32, #tpu.memory_space<vmem>>, vector<32x1xf32>
    %165 = vector.broadcast %164 : vector<32x1xf32> to vector<32x224xf32>
    %166 = arith.addf %163, %165 : vector<32x224xf32>
    %167 = vector.extract_strided_slice %166 {offsets = [0, 0], sizes = [16, 224], strides = [1, 1]} : vector<32x224xf32> to vector<16x224xf32>
    %168 = math.tanh %167 : vector<16x224xf32>
    %169 = vector.extract_strided_slice %166 {offsets = [16, 0], sizes = [16, 224], strides = [1, 1]} : vector<32x224xf32> to vector<16x224xf32>
    %170 = arith.negf %169 : vector<16x224xf32>
    %171 = math.exp %170 : vector<16x224xf32>
    %cst_72 = arith.constant 1.000000e+00 : f32
    %172 = vector.broadcast %cst_72 : f32 to vector<16x224xf32>
    %173 = arith.addf %172, %171 : vector<16x224xf32>
    %174 = arith.divf %172, %173 : vector<16x224xf32>
    %175 = arith.mulf %168, %174 : vector<16x224xf32>
    %176 = vector.extract_strided_slice %175 {offsets = [0, 0], sizes = [16, 32], strides = [1, 1]} : vector<16x224xf32> to vector<16x32xf32>
    %177 = vector.extract_strided_slice %175 {offsets = [0, 32], sizes = [16, 32], strides = [1, 1]} : vector<16x224xf32> to vector<16x32xf32>
    %178 = vector.extract_strided_slice %175 {offsets = [0, 64], sizes = [16, 32], strides = [1, 1]} : vector<16x224xf32> to vector<16x32xf32>
    %179 = vector.extract_strided_slice %175 {offsets = [0, 96], sizes = [16, 32], strides = [1, 1]} : vector<16x224xf32> to vector<16x32xf32>
    %180 = vector.extract_strided_slice %175 {offsets = [0, 128], sizes = [16, 32], strides = [1, 1]} : vector<16x224xf32> to vector<16x32xf32>
    %181 = vector.extract_strided_slice %175 {offsets = [0, 160], sizes = [16, 32], strides = [1, 1]} : vector<16x224xf32> to vector<16x32xf32>
    %182 = vector.extract_strided_slice %175 {offsets = [0, 192], sizes = [16, 32], strides = [1, 1]} : vector<16x224xf32> to vector<16x32xf32>
    %183 = tpu.concatenate %176, %177, %178, %179, %180, %181, %182 in 0 : vector<16x32xf32>, vector<16x32xf32>, vector<16x32xf32>, vector<16x32xf32>, vector<16x32xf32>, vector<16x32xf32>, vector<16x32xf32> -> vector<112x32xf32>
    %c0_73 = arith.constant 0 : index
    %c0_74 = arith.constant 0 : index
    %184 = vector.load %arg38[%c0_73, %c0_74] : memref<32x112xf32, #tpu.memory_space<vmem>>, vector<32x112xf32>
    %cst_75 = arith.constant dense<0.000000e+00> : vector<32x32xf32>
    %185 = tpu.matmul %184, %183, %cst_75 {dimension_numbers = #tpu.dot_dimension_numbers<[1], [0], [0], [1], [0, 0, 1, 1], [], []>} : vector<32x112xf32>, vector<112x32xf32>, vector<32x32xf32> -> vector<32x32xf32>
    %186 = arith.addf %53, %185 : vector<32x32xf32>
    %c0_76 = arith.constant 0 : index
    %c0_77 = arith.constant 0 : index
    %187 = vector.load %arg19[%c0_76, %c0_77] : memref<32x1xf32, #tpu.memory_space<vmem>>, vector<32x1xf32>
    %188 = vector.broadcast %187 : vector<32x1xf32> to vector<32x32xf32>
    %189 = arith.addf %186, %188 : vector<32x32xf32>
    %c0_78 = arith.constant 0 : index
    %c0_79 = arith.constant 0 : index
    %190 = vector.load %arg2[%c0_78, %c0_79] : memref<416x416xf32, #tpu.memory_space<vmem>>, vector<224x224xf32>
    %cst_80 = arith.constant 5.000000e-02 : f32
    %191 = vector.broadcast %cst_80 : f32 to vector<16x224xf32>
    %192 = arith.mulf %191, %175 : vector<16x224xf32>
    %cst_81 = arith.constant dense<0.000000e+00> : vector<16x224xf32>
    %193 = tpu.matmul %175, %190, %cst_81 {dimension_numbers = #tpu.dot_dimension_numbers<[1], [0], [0], [1], [0, 0, 1, 1], [], []>} : vector<16x224xf32>, vector<224x224xf32>, vector<16x224xf32> -> vector<16x224xf32>
    %cst_82 = arith.constant 0.949999988 : f32
    %194 = vector.broadcast %cst_82 : f32 to vector<16x224xf32>
    %195 = arith.mulf %194, %193 : vector<16x224xf32>
    %196 = arith.addf %192, %195 : vector<16x224xf32>
    %cst_83 = arith.constant 5.000000e-02 : f32
    %197 = vector.broadcast %cst_83 : f32 to vector<16x224xf32>
    %198 = arith.mulf %197, %175 : vector<16x224xf32>
    %cst_84 = arith.constant dense<0.000000e+00> : vector<16x224xf32>
    %199 = tpu.matmul %196, %190, %cst_84 {dimension_numbers = #tpu.dot_dimension_numbers<[1], [0], [0], [1], [0, 0, 1, 1], [], []>} : vector<16x224xf32>, vector<224x224xf32>, vector<16x224xf32> -> vector<16x224xf32>
    %cst_85 = arith.constant 0.949999988 : f32
    %200 = vector.broadcast %cst_85 : f32 to vector<16x224xf32>
    %201 = arith.mulf %200, %199 : vector<16x224xf32>
    %202 = arith.addf %198, %201 : vector<16x224xf32>
    %203 = tpu.concatenate %175, %196, %202 in 0 : vector<16x224xf32>, vector<16x224xf32>, vector<16x224xf32> -> vector<48x224xf32>
    %c0_86 = arith.constant 0 : index
    %c0_87 = arith.constant 0 : index
    %204 = vector.load %arg3[%c0_86, %c0_87] : memref<416x416xf32, #tpu.memory_space<vmem>>, vector<224x224xf32>
    %cst_88 = arith.constant 5.000000e-02 : f32
    %205 = vector.broadcast %cst_88 : f32 to vector<16x224xf32>
    %206 = arith.mulf %205, %175 : vector<16x224xf32>
    %cst_89 = arith.constant dense<0.000000e+00> : vector<16x224xf32>
    %207 = tpu.matmul %175, %204, %cst_89 {dimension_numbers = #tpu.dot_dimension_numbers<[1], [0], [0], [1], [0, 0, 1, 1], [], []>} : vector<16x224xf32>, vector<224x224xf32>, vector<16x224xf32> -> vector<16x224xf32>
    %cst_90 = arith.constant 0.949999988 : f32
    %208 = vector.broadcast %cst_90 : f32 to vector<16x224xf32>
    %209 = arith.mulf %208, %207 : vector<16x224xf32>
    %210 = arith.addf %206, %209 : vector<16x224xf32>
    %cst_91 = arith.constant 5.000000e-02 : f32
    %211 = vector.broadcast %cst_91 : f32 to vector<16x224xf32>
    %212 = arith.mulf %211, %175 : vector<16x224xf32>
    %cst_92 = arith.constant dense<0.000000e+00> : vector<16x224xf32>
    %213 = tpu.matmul %210, %204, %cst_92 {dimension_numbers = #tpu.dot_dimension_numbers<[1], [0], [0], [1], [0, 0, 1, 1], [], []>} : vector<16x224xf32>, vector<224x224xf32>, vector<16x224xf32> -> vector<16x224xf32>
    %cst_93 = arith.constant 0.949999988 : f32
    %214 = vector.broadcast %cst_93 : f32 to vector<16x224xf32>
    %215 = arith.mulf %214, %213 : vector<16x224xf32>
    %216 = arith.addf %212, %215 : vector<16x224xf32>
    %217 = tpu.concatenate %175, %210, %216 in 0 : vector<16x224xf32>, vector<16x224xf32>, vector<16x224xf32> -> vector<48x224xf32>
    %218 = tpu.concatenate %203, %217 in 0 : vector<48x224xf32>, vector<48x224xf32> -> vector<96x224xf32>
    %c0_94 = arith.constant 0 : index
    %c0_95 = arith.constant 0 : index
    %219 = vector.load %arg30[%c0_94, %c0_95] : memref<16x96xf32, #tpu.memory_space<vmem>>, vector<16x96xf32>
    %cst_96 = arith.constant dense<0.000000e+00> : vector<16x224xf32>
    %220 = tpu.matmul %219, %218, %cst_96 {dimension_numbers = #tpu.dot_dimension_numbers<[1], [0], [0], [1], [0, 0, 1, 1], [], []>} : vector<16x96xf32>, vector<96x224xf32>, vector<16x224xf32> -> vector<16x224xf32>
    %c0_97 = arith.constant 0 : index
    %c0_98 = arith.constant 0 : index
    %221 = vector.load %arg11[%c0_97, %c0_98] : memref<16x1xf32, #tpu.memory_space<vmem>>, vector<16x1xf32>
    %222 = vector.broadcast %221 : vector<16x1xf32> to vector<16x224xf32>
    %223 = arith.addf %220, %222 : vector<16x224xf32>
    %224 = vector.extract_strided_slice %153 {offsets = [0, 192], sizes = [16, 224], strides = [1, 1]} : vector<16x416xf32> to vector<16x224xf32>
    %225 = arith.addf %223, %224 : vector<16x224xf32>
    %c0_99 = arith.constant 0 : index
    %c0_100 = arith.constant 0 : index
    %226 = vector.load %arg22[%c0_99, %c0_100] : memref<2x416xf32, #tpu.memory_space<vmem>>, vector<1x224xf32>
    %227 = vector.broadcast %226 : vector<1x224xf32> to vector<16x224xf32>
    %228 = arith.mulf %225, %227 : vector<16x224xf32>
    %cst_101 = arith.constant dense<0.000000e+00> : vector<16xf32>
    %229 = vector.multi_reduction <add>, %228, %cst_101 [1] : vector<16x224xf32> to vector<16xf32>
    %230 = vector.shape_cast %229 : vector<16xf32> to vector<16x1xf32>
    %cst_102 = arith.constant dense<0.000000e+00> : vector<1xf32>
    %231 = vector.multi_reduction <add>, %230, %cst_102 [0] : vector<16x1xf32> to vector<1xf32>
    %232 = vector.shape_cast %231 : vector<1xf32> to vector<1x1xf32>
    %cst_103 = arith.constant 5.58035739E-4 : f32
    %233 = vector.broadcast %cst_103 : f32 to vector<1x1xf32>
    %234 = arith.mulf %232, %233 : vector<1x1xf32>
    %235 = arith.mulf %228, %225 : vector<16x224xf32>
    %cst_104 = arith.constant dense<0.000000e+00> : vector<16xf32>
    %236 = vector.multi_reduction <add>, %235, %cst_104 [1] : vector<16x224xf32> to vector<16xf32>
    %237 = vector.shape_cast %236 : vector<16xf32> to vector<16x1xf32>
    %cst_105 = arith.constant dense<0.000000e+00> : vector<1xf32>
    %238 = vector.multi_reduction <add>, %237, %cst_105 [0] : vector<16x1xf32> to vector<1xf32>
    %239 = vector.shape_cast %238 : vector<1xf32> to vector<1x1xf32>
    %cst_106 = arith.constant 5.58035739E-4 : f32
    %240 = vector.broadcast %cst_106 : f32 to vector<1x1xf32>
    %241 = arith.mulf %239, %240 : vector<1x1xf32>
    %242 = arith.mulf %234, %234 : vector<1x1xf32>
    %243 = arith.subf %241, %242 : vector<1x1xf32>
    %cst_107 = arith.constant 0.000000e+00 : f32
    %244 = vector.broadcast %cst_107 : f32 to vector<1x1xf32>
    %245 = arith.maximumf %243, %244 : vector<1x1xf32>
    %cst_108 = arith.constant 9.99999974E-6 : f32
    %246 = vector.broadcast %cst_108 : f32 to vector<1x1xf32>
    %247 = arith.addf %245, %246 : vector<1x1xf32>
    %248 = math.rsqrt %247 : vector<1x1xf32>
    %249 = vector.broadcast %234 : vector<1x1xf32> to vector<1x224xf32>
    %250 = arith.mulf %249, %226 : vector<1x224xf32>
    %251 = vector.broadcast %248 : vector<1x1xf32> to vector<1x224xf32>
    %252 = arith.mulf %251, %226 : vector<1x224xf32>
    %c1_109 = arith.constant 1 : index
    %c0_110 = arith.constant 0 : index
    %253 = vector.load %arg22[%c1_109, %c0_110] : memref<2x416xf32, #tpu.memory_space<vmem>>, vector<1x224xf32>
    %254 = vector.broadcast %253 : vector<1x224xf32> to vector<16x224xf32>
    %255 = arith.mulf %225, %254 : vector<16x224xf32>
    %cst_111 = arith.constant dense<0.000000e+00> : vector<16xf32>
    %256 = vector.multi_reduction <add>, %255, %cst_111 [1] : vector<16x224xf32> to vector<16xf32>
    %257 = vector.shape_cast %256 : vector<16xf32> to vector<16x1xf32>
    %cst_112 = arith.constant dense<0.000000e+00> : vector<1xf32>
    %258 = vector.multi_reduction <add>, %257, %cst_112 [0] : vector<16x1xf32> to vector<1xf32>
    %259 = vector.shape_cast %258 : vector<1xf32> to vector<1x1xf32>
    %cst_113 = arith.constant 5.58035739E-4 : f32
    %260 = vector.broadcast %cst_113 : f32 to vector<1x1xf32>
    %261 = arith.mulf %259, %260 : vector<1x1xf32>
    %262 = arith.mulf %255, %225 : vector<16x224xf32>
    %cst_114 = arith.constant dense<0.000000e+00> : vector<16xf32>
    %263 = vector.multi_reduction <add>, %262, %cst_114 [1] : vector<16x224xf32> to vector<16xf32>
    %264 = vector.shape_cast %263 : vector<16xf32> to vector<16x1xf32>
    %cst_115 = arith.constant dense<0.000000e+00> : vector<1xf32>
    %265 = vector.multi_reduction <add>, %264, %cst_115 [0] : vector<16x1xf32> to vector<1xf32>
    %266 = vector.shape_cast %265 : vector<1xf32> to vector<1x1xf32>
    %cst_116 = arith.constant 5.58035739E-4 : f32
    %267 = vector.broadcast %cst_116 : f32 to vector<1x1xf32>
    %268 = arith.mulf %266, %267 : vector<1x1xf32>
    %269 = arith.mulf %261, %261 : vector<1x1xf32>
    %270 = arith.subf %268, %269 : vector<1x1xf32>
    %cst_117 = arith.constant 0.000000e+00 : f32
    %271 = vector.broadcast %cst_117 : f32 to vector<1x1xf32>
    %272 = arith.maximumf %270, %271 : vector<1x1xf32>
    %cst_118 = arith.constant 9.99999974E-6 : f32
    %273 = vector.broadcast %cst_118 : f32 to vector<1x1xf32>
    %274 = arith.addf %272, %273 : vector<1x1xf32>
    %275 = math.rsqrt %274 : vector<1x1xf32>
    %276 = vector.broadcast %261 : vector<1x1xf32> to vector<1x224xf32>
    %277 = arith.mulf %276, %253 : vector<1x224xf32>
    %278 = vector.broadcast %275 : vector<1x1xf32> to vector<1x224xf32>
    %279 = arith.mulf %278, %253 : vector<1x224xf32>
    %280 = arith.addf %250, %277 : vector<1x224xf32>
    %281 = arith.addf %252, %279 : vector<1x224xf32>
    %282 = vector.broadcast %280 : vector<1x224xf32> to vector<16x224xf32>
    %283 = arith.subf %225, %282 : vector<16x224xf32>
    %284 = vector.broadcast %281 : vector<1x224xf32> to vector<16x224xf32>
    %285 = arith.mulf %283, %284 : vector<16x224xf32>
    %c0_119 = arith.constant 0 : index
    %c0_120 = arith.constant 0 : index
    %286 = vector.load %arg33[%c0_119, %c0_120] : memref<16x224xf32, #tpu.memory_space<vmem>>, vector<16x224xf32>
    %287 = arith.mulf %285, %286 : vector<16x224xf32>
    %c0_121 = arith.constant 0 : index
    %c0_122 = arith.constant 0 : index
    %288 = vector.load %arg14[%c0_121, %c0_122] : memref<16x224xf32, #tpu.memory_space<vmem>>, vector<16x224xf32>
    %289 = arith.addf %287, %288 : vector<16x224xf32>
    %290 = vector.extract_strided_slice %289 {offsets = [0, 0], sizes = [16, 32], strides = [1, 1]} : vector<16x224xf32> to vector<16x32xf32>
    %291 = vector.extract_strided_slice %289 {offsets = [0, 32], sizes = [16, 32], strides = [1, 1]} : vector<16x224xf32> to vector<16x32xf32>
    %292 = vector.extract_strided_slice %289 {offsets = [0, 64], sizes = [16, 32], strides = [1, 1]} : vector<16x224xf32> to vector<16x32xf32>
    %293 = vector.extract_strided_slice %289 {offsets = [0, 96], sizes = [16, 32], strides = [1, 1]} : vector<16x224xf32> to vector<16x32xf32>
    %294 = vector.extract_strided_slice %289 {offsets = [0, 128], sizes = [16, 32], strides = [1, 1]} : vector<16x224xf32> to vector<16x32xf32>
    %295 = vector.extract_strided_slice %289 {offsets = [0, 160], sizes = [16, 32], strides = [1, 1]} : vector<16x224xf32> to vector<16x32xf32>
    %296 = vector.extract_strided_slice %289 {offsets = [0, 192], sizes = [16, 32], strides = [1, 1]} : vector<16x224xf32> to vector<16x32xf32>
    %297 = tpu.concatenate %290, %291, %292, %293, %294, %295, %296 in 0 : vector<16x32xf32>, vector<16x32xf32>, vector<16x32xf32>, vector<16x32xf32>, vector<16x32xf32>, vector<16x32xf32>, vector<16x32xf32> -> vector<112x32xf32>
    %c0_123 = arith.constant 0 : index
    %c0_124 = arith.constant 0 : index
    %298 = vector.load %arg28[%c0_123, %c0_124] : memref<32x112xf32, #tpu.memory_space<vmem>>, vector<32x112xf32>
    %cst_125 = arith.constant dense<0.000000e+00> : vector<32x32xf32>
    %299 = tpu.matmul %298, %297, %cst_125 {dimension_numbers = #tpu.dot_dimension_numbers<[1], [0], [0], [1], [0, 0, 1, 1], [], []>} : vector<32x112xf32>, vector<112x32xf32>, vector<32x32xf32> -> vector<32x32xf32>
    %c0_126 = arith.constant 0 : index
    %c0_127 = arith.constant 0 : index
    %300 = vector.load %arg9[%c0_126, %c0_127] : memref<32x1xf32, #tpu.memory_space<vmem>>, vector<32x1xf32>
    %301 = vector.broadcast %300 : vector<32x1xf32> to vector<32x32xf32>
    %302 = arith.addf %299, %301 : vector<32x32xf32>
    %303 = vector.extract_strided_slice %302 {offsets = [0, 0], sizes = [16, 32], strides = [1, 1]} : vector<32x32xf32> to vector<16x32xf32>
    %304 = math.tanh %303 : vector<16x32xf32>
    %305 = vector.extract_strided_slice %302 {offsets = [16, 0], sizes = [16, 32], strides = [1, 1]} : vector<32x32xf32> to vector<16x32xf32>
    %306 = arith.negf %305 : vector<16x32xf32>
    %307 = math.exp %306 : vector<16x32xf32>
    %cst_128 = arith.constant 1.000000e+00 : f32
    %308 = vector.broadcast %cst_128 : f32 to vector<16x32xf32>
    %309 = arith.addf %308, %307 : vector<16x32xf32>
    %310 = arith.divf %308, %309 : vector<16x32xf32>
    %311 = arith.mulf %304, %310 : vector<16x32xf32>
    %c0_129 = arith.constant 0 : index
    %c0_130 = arith.constant 0 : index
    %312 = vector.load %arg39[%c0_129, %c0_130] : memref<32x16xf32, #tpu.memory_space<vmem>>, vector<32x16xf32>
    %cst_131 = arith.constant dense<0.000000e+00> : vector<32x32xf32>
    %313 = tpu.matmul %312, %311, %cst_131 {dimension_numbers = #tpu.dot_dimension_numbers<[1], [0], [0], [1], [0, 0, 1, 1], [], []>} : vector<32x16xf32>, vector<16x32xf32>, vector<32x32xf32> -> vector<32x32xf32>
    %314 = arith.addf %189, %313 : vector<32x32xf32>
    %c0_132 = arith.constant 0 : index
    %c0_133 = arith.constant 0 : index
    %315 = vector.load %arg20[%c0_132, %c0_133] : memref<32x1xf32, #tpu.memory_space<vmem>>, vector<32x1xf32>
    %316 = vector.broadcast %315 : vector<32x1xf32> to vector<32x32xf32>
    %317 = arith.addf %314, %316 : vector<32x32xf32>
    %c0_134 = arith.constant 0 : index
    %c0_135 = arith.constant 0 : index
    %318 = vector.load %arg2[%c0_134, %c0_135] : memref<416x416xf32, #tpu.memory_space<vmem>>, vector<32x32xf32>
    %cst_136 = arith.constant 5.000000e-02 : f32
    %319 = vector.broadcast %cst_136 : f32 to vector<16x32xf32>
    %320 = arith.mulf %319, %311 : vector<16x32xf32>
    %cst_137 = arith.constant dense<0.000000e+00> : vector<16x32xf32>
    %321 = tpu.matmul %311, %318, %cst_137 {dimension_numbers = #tpu.dot_dimension_numbers<[1], [0], [0], [1], [0, 0, 1, 1], [], []>} : vector<16x32xf32>, vector<32x32xf32>, vector<16x32xf32> -> vector<16x32xf32>
    %cst_138 = arith.constant 0.949999988 : f32
    %322 = vector.broadcast %cst_138 : f32 to vector<16x32xf32>
    %323 = arith.mulf %322, %321 : vector<16x32xf32>
    %324 = arith.addf %320, %323 : vector<16x32xf32>
    %cst_139 = arith.constant 5.000000e-02 : f32
    %325 = vector.broadcast %cst_139 : f32 to vector<16x32xf32>
    %326 = arith.mulf %325, %311 : vector<16x32xf32>
    %cst_140 = arith.constant dense<0.000000e+00> : vector<16x32xf32>
    %327 = tpu.matmul %324, %318, %cst_140 {dimension_numbers = #tpu.dot_dimension_numbers<[1], [0], [0], [1], [0, 0, 1, 1], [], []>} : vector<16x32xf32>, vector<32x32xf32>, vector<16x32xf32> -> vector<16x32xf32>
    %cst_141 = arith.constant 0.949999988 : f32
    %328 = vector.broadcast %cst_141 : f32 to vector<16x32xf32>
    %329 = arith.mulf %328, %327 : vector<16x32xf32>
    %330 = arith.addf %326, %329 : vector<16x32xf32>
    %331 = tpu.concatenate %311, %324, %330 in 0 : vector<16x32xf32>, vector<16x32xf32>, vector<16x32xf32> -> vector<48x32xf32>
    %c0_142 = arith.constant 0 : index
    %c0_143 = arith.constant 0 : index
    %332 = vector.load %arg3[%c0_142, %c0_143] : memref<416x416xf32, #tpu.memory_space<vmem>>, vector<32x32xf32>
    %cst_144 = arith.constant 5.000000e-02 : f32
    %333 = vector.broadcast %cst_144 : f32 to vector<16x32xf32>
    %334 = arith.mulf %333, %311 : vector<16x32xf32>
    %cst_145 = arith.constant dense<0.000000e+00> : vector<16x32xf32>
    %335 = tpu.matmul %311, %332, %cst_145 {dimension_numbers = #tpu.dot_dimension_numbers<[1], [0], [0], [1], [0, 0, 1, 1], [], []>} : vector<16x32xf32>, vector<32x32xf32>, vector<16x32xf32> -> vector<16x32xf32>
    %cst_146 = arith.constant 0.949999988 : f32
    %336 = vector.broadcast %cst_146 : f32 to vector<16x32xf32>
    %337 = arith.mulf %336, %335 : vector<16x32xf32>
    %338 = arith.addf %334, %337 : vector<16x32xf32>
    %cst_147 = arith.constant 5.000000e-02 : f32
    %339 = vector.broadcast %cst_147 : f32 to vector<16x32xf32>
    %340 = arith.mulf %339, %311 : vector<16x32xf32>
    %cst_148 = arith.constant dense<0.000000e+00> : vector<16x32xf32>
    %341 = tpu.matmul %338, %332, %cst_148 {dimension_numbers = #tpu.dot_dimension_numbers<[1], [0], [0], [1], [0, 0, 1, 1], [], []>} : vector<16x32xf32>, vector<32x32xf32>, vector<16x32xf32> -> vector<16x32xf32>
    %cst_149 = arith.constant 0.949999988 : f32
    %342 = vector.broadcast %cst_149 : f32 to vector<16x32xf32>
    %343 = arith.mulf %342, %341 : vector<16x32xf32>
    %344 = arith.addf %340, %343 : vector<16x32xf32>
    %345 = tpu.concatenate %311, %338, %344 in 0 : vector<16x32xf32>, vector<16x32xf32>, vector<16x32xf32> -> vector<48x32xf32>
    %346 = tpu.concatenate %331, %345 in 0 : vector<48x32xf32>, vector<48x32xf32> -> vector<96x32xf32>
    %c0_150 = arith.constant 0 : index
    %c0_151 = arith.constant 0 : index
    %347 = vector.load %arg31[%c0_150, %c0_151] : memref<16x96xf32, #tpu.memory_space<vmem>>, vector<16x96xf32>
    %cst_152 = arith.constant dense<0.000000e+00> : vector<16x32xf32>
    %348 = tpu.matmul %347, %346, %cst_152 {dimension_numbers = #tpu.dot_dimension_numbers<[1], [0], [0], [1], [0, 0, 1, 1], [], []>} : vector<16x96xf32>, vector<96x32xf32>, vector<16x32xf32> -> vector<16x32xf32>
    %c0_153 = arith.constant 0 : index
    %c0_154 = arith.constant 0 : index
    %349 = vector.load %arg12[%c0_153, %c0_154] : memref<16x1xf32, #tpu.memory_space<vmem>>, vector<16x1xf32>
    %350 = vector.broadcast %349 : vector<16x1xf32> to vector<16x32xf32>
    %351 = arith.addf %348, %350 : vector<16x32xf32>
    %352 = vector.extract_strided_slice %289 {offsets = [0, 192], sizes = [16, 32], strides = [1, 1]} : vector<16x224xf32> to vector<16x32xf32>
    %353 = arith.addf %351, %352 : vector<16x32xf32>
    %c0_155 = arith.constant 0 : index
    %c0_156 = arith.constant 0 : index
    %354 = vector.load %arg22[%c0_155, %c0_156] : memref<2x416xf32, #tpu.memory_space<vmem>>, vector<1x32xf32>
    %355 = vector.broadcast %354 : vector<1x32xf32> to vector<16x32xf32>
    %356 = arith.mulf %353, %355 : vector<16x32xf32>
    %cst_157 = arith.constant dense<0.000000e+00> : vector<16xf32>
    %357 = vector.multi_reduction <add>, %356, %cst_157 [1] : vector<16x32xf32> to vector<16xf32>
    %358 = vector.shape_cast %357 : vector<16xf32> to vector<16x1xf32>
    %cst_158 = arith.constant dense<0.000000e+00> : vector<1xf32>
    %359 = vector.multi_reduction <add>, %358, %cst_158 [0] : vector<16x1xf32> to vector<1xf32>
    %360 = vector.shape_cast %359 : vector<1xf32> to vector<1x1xf32>
    %cst_159 = arith.constant 3.906250e-03 : f32
    %361 = vector.broadcast %cst_159 : f32 to vector<1x1xf32>
    %362 = arith.mulf %360, %361 : vector<1x1xf32>
    %363 = arith.mulf %356, %353 : vector<16x32xf32>
    %cst_160 = arith.constant dense<0.000000e+00> : vector<16xf32>
    %364 = vector.multi_reduction <add>, %363, %cst_160 [1] : vector<16x32xf32> to vector<16xf32>
    %365 = vector.shape_cast %364 : vector<16xf32> to vector<16x1xf32>
    %cst_161 = arith.constant dense<0.000000e+00> : vector<1xf32>
    %366 = vector.multi_reduction <add>, %365, %cst_161 [0] : vector<16x1xf32> to vector<1xf32>
    %367 = vector.shape_cast %366 : vector<1xf32> to vector<1x1xf32>
    %cst_162 = arith.constant 3.906250e-03 : f32
    %368 = vector.broadcast %cst_162 : f32 to vector<1x1xf32>
    %369 = arith.mulf %367, %368 : vector<1x1xf32>
    %370 = arith.mulf %362, %362 : vector<1x1xf32>
    %371 = arith.subf %369, %370 : vector<1x1xf32>
    %cst_163 = arith.constant 0.000000e+00 : f32
    %372 = vector.broadcast %cst_163 : f32 to vector<1x1xf32>
    %373 = arith.maximumf %371, %372 : vector<1x1xf32>
    %cst_164 = arith.constant 9.99999974E-6 : f32
    %374 = vector.broadcast %cst_164 : f32 to vector<1x1xf32>
    %375 = arith.addf %373, %374 : vector<1x1xf32>
    %376 = math.rsqrt %375 : vector<1x1xf32>
    %377 = vector.broadcast %362 : vector<1x1xf32> to vector<1x32xf32>
    %378 = arith.mulf %377, %354 : vector<1x32xf32>
    %379 = vector.broadcast %376 : vector<1x1xf32> to vector<1x32xf32>
    %380 = arith.mulf %379, %354 : vector<1x32xf32>
    %c1_165 = arith.constant 1 : index
    %c0_166 = arith.constant 0 : index
    %381 = vector.load %arg22[%c1_165, %c0_166] : memref<2x416xf32, #tpu.memory_space<vmem>>, vector<1x32xf32>
    %382 = vector.broadcast %381 : vector<1x32xf32> to vector<16x32xf32>
    %383 = arith.mulf %353, %382 : vector<16x32xf32>
    %cst_167 = arith.constant dense<0.000000e+00> : vector<16xf32>
    %384 = vector.multi_reduction <add>, %383, %cst_167 [1] : vector<16x32xf32> to vector<16xf32>
    %385 = vector.shape_cast %384 : vector<16xf32> to vector<16x1xf32>
    %cst_168 = arith.constant dense<0.000000e+00> : vector<1xf32>
    %386 = vector.multi_reduction <add>, %385, %cst_168 [0] : vector<16x1xf32> to vector<1xf32>
    %387 = vector.shape_cast %386 : vector<1xf32> to vector<1x1xf32>
    %cst_169 = arith.constant 3.906250e-03 : f32
    %388 = vector.broadcast %cst_169 : f32 to vector<1x1xf32>
    %389 = arith.mulf %387, %388 : vector<1x1xf32>
    %390 = arith.mulf %383, %353 : vector<16x32xf32>
    %cst_170 = arith.constant dense<0.000000e+00> : vector<16xf32>
    %391 = vector.multi_reduction <add>, %390, %cst_170 [1] : vector<16x32xf32> to vector<16xf32>
    %392 = vector.shape_cast %391 : vector<16xf32> to vector<16x1xf32>
    %cst_171 = arith.constant dense<0.000000e+00> : vector<1xf32>
    %393 = vector.multi_reduction <add>, %392, %cst_171 [0] : vector<16x1xf32> to vector<1xf32>
    %394 = vector.shape_cast %393 : vector<1xf32> to vector<1x1xf32>
    %cst_172 = arith.constant 3.906250e-03 : f32
    %395 = vector.broadcast %cst_172 : f32 to vector<1x1xf32>
    %396 = arith.mulf %394, %395 : vector<1x1xf32>
    %397 = arith.mulf %389, %389 : vector<1x1xf32>
    %398 = arith.subf %396, %397 : vector<1x1xf32>
    %cst_173 = arith.constant 0.000000e+00 : f32
    %399 = vector.broadcast %cst_173 : f32 to vector<1x1xf32>
    %400 = arith.maximumf %398, %399 : vector<1x1xf32>
    %cst_174 = arith.constant 9.99999974E-6 : f32
    %401 = vector.broadcast %cst_174 : f32 to vector<1x1xf32>
    %402 = arith.addf %400, %401 : vector<1x1xf32>
    %403 = math.rsqrt %402 : vector<1x1xf32>
    %404 = vector.broadcast %389 : vector<1x1xf32> to vector<1x32xf32>
    %405 = arith.mulf %404, %381 : vector<1x32xf32>
    %406 = vector.broadcast %403 : vector<1x1xf32> to vector<1x32xf32>
    %407 = arith.mulf %406, %381 : vector<1x32xf32>
    %408 = arith.addf %378, %405 : vector<1x32xf32>
    %409 = arith.addf %380, %407 : vector<1x32xf32>
    %410 = vector.broadcast %408 : vector<1x32xf32> to vector<16x32xf32>
    %411 = arith.subf %353, %410 : vector<16x32xf32>
    %412 = vector.broadcast %409 : vector<1x32xf32> to vector<16x32xf32>
    %413 = arith.mulf %411, %412 : vector<16x32xf32>
    %c0_175 = arith.constant 0 : index
    %c0_176 = arith.constant 0 : index
    %414 = vector.load %arg34[%c0_175, %c0_176] : memref<16x32xf32, #tpu.memory_space<vmem>>, vector<16x32xf32>
    %415 = arith.mulf %413, %414 : vector<16x32xf32>
    %c0_177 = arith.constant 0 : index
    %c0_178 = arith.constant 0 : index
    %416 = vector.load %arg15[%c0_177, %c0_178] : memref<16x32xf32, #tpu.memory_space<vmem>>, vector<16x32xf32>
    %417 = arith.addf %415, %416 : vector<16x32xf32>
    %c0_179 = arith.constant 0 : index
    %c0_180 = arith.constant 0 : index
    %418 = vector.load %arg36[%c0_179, %c0_180] : memref<32x16xf32, #tpu.memory_space<vmem>>, vector<32x16xf32>
    %cst_181 = arith.constant dense<0.000000e+00> : vector<32x32xf32>
    %419 = tpu.matmul %418, %417, %cst_181 {dimension_numbers = #tpu.dot_dimension_numbers<[1], [0], [0], [1], [0, 0, 1, 1], [], []>} : vector<32x16xf32>, vector<16x32xf32>, vector<32x32xf32> -> vector<32x32xf32>
    %420 = arith.addf %317, %419 : vector<32x32xf32>
    %c0_182 = arith.constant 0 : index
    %c0_183 = arith.constant 0 : index
    %421 = vector.load %arg17[%c0_182, %c0_183] : memref<32x1xf32, #tpu.memory_space<vmem>>, vector<32x1xf32>
    %422 = vector.broadcast %421 : vector<32x1xf32> to vector<32x32xf32>
    %423 = arith.addf %420, %422 : vector<32x32xf32>
    %cst_184 = arith.constant 0.000000e+00 : f32
    %424 = vector.broadcast %cst_184 : f32 to vector<32x32xf32>
    %425 = arith.maximumf %423, %424 : vector<32x32xf32>
    %c0_185 = arith.constant 0 : index
    %c0_186 = arith.constant 0 : index
    %426 = vector.load %arg24[%c0_185, %c0_186] : memref<32x32xf32, #tpu.memory_space<vmem>>, vector<32x32xf32>
    %cst_187 = arith.constant dense<0.000000e+00> : vector<32x32xf32>
    %427 = tpu.matmul %426, %425, %cst_187 {dimension_numbers = #tpu.dot_dimension_numbers<[1], [0], [0], [1], [0, 0, 1, 1], [], []>} : vector<32x32xf32>, vector<32x32xf32>, vector<32x32xf32> -> vector<32x32xf32>
    %c0_188 = arith.constant 0 : index
    %c0_189 = arith.constant 0 : index
    %428 = vector.load %arg5[%c0_188, %c0_189] : memref<32x1xf32, #tpu.memory_space<vmem>>, vector<32x1xf32>
    %429 = vector.broadcast %428 : vector<32x1xf32> to vector<32x32xf32>
    %430 = arith.addf %427, %429 : vector<32x32xf32>
    %cst_190 = arith.constant 0.000000e+00 : f32
    %431 = vector.broadcast %cst_190 : f32 to vector<32x32xf32>
    %432 = arith.maximumf %430, %431 : vector<32x32xf32>
    %c0_191 = arith.constant 0 : index
    %c0_192 = arith.constant 0 : index
    %433 = vector.load %arg25[%c0_191, %c0_192] : memref<12x32xf32, #tpu.memory_space<vmem>>, vector<12x32xf32>
    %cst_193 = arith.constant dense<0.000000e+00> : vector<12x32xf32>
    %434 = tpu.matmul %433, %432, %cst_193 {dimension_numbers = #tpu.dot_dimension_numbers<[1], [0], [0], [1], [0, 0, 1, 1], [], []>} : vector<12x32xf32>, vector<32x32xf32>, vector<12x32xf32> -> vector<12x32xf32>
    %c0_194 = arith.constant 0 : index
    %c0_195 = arith.constant 0 : index
    %435 = vector.load %arg6[%c0_194, %c0_195] : memref<12x1xf32, #tpu.memory_space<vmem>>, vector<12x1xf32>
    %436 = vector.broadcast %435 : vector<12x1xf32> to vector<12x32xf32>
    %437 = arith.addf %434, %436 : vector<12x32xf32>
    %438 = vector.extract_strided_slice %437 {offsets = [0, 0], sizes = [12, 16], strides = [1, 1]} : vector<12x32xf32> to vector<12x16xf32>
    %c0_196 = arith.constant 0 : index
    %c0_197 = arith.constant 0 : index
    %439 = vector.load %arg23[%c0_196, %c0_197] : memref<16x8xf32, #tpu.memory_space<vmem>>, vector<16x8xf32>
    %cst_198 = arith.constant dense<0.000000e+00> : vector<12x8xf32>
    %440 = tpu.matmul %438, %439, %cst_198 {dimension_numbers = #tpu.dot_dimension_numbers<[1], [0], [0], [1], [0, 0, 1, 1], [], []>} : vector<12x16xf32>, vector<16x8xf32>, vector<12x8xf32> -> vector<12x8xf32>
    %c0_199 = arith.constant 0 : index
    %c0_200 = arith.constant 0 : index
    %441 = vector.load %arg4[%c0_199, %c0_200] : memref<1x8xf32, #tpu.memory_space<vmem>>, vector<1x8xf32>
    %442 = vector.broadcast %441 : vector<1x8xf32> to vector<12x8xf32>
    %443 = arith.addf %440, %442 : vector<12x8xf32>
    %c0_201 = arith.constant 0 : index
    %c0_202 = arith.constant 0 : index
    %c0_203 = arith.constant 0 : index
    %444 = vector.load %arg41[%c0_201, %c0_202, %c0_203] : memref<2x12x8xf32, #tpu.memory_space<vmem>>, vector<1x12x8xf32>
    %445 = vector.shape_cast %444 : vector<1x12x8xf32> to vector<12x8xf32>
    %446 = vector.shape_cast %443 : vector<12x8xf32> to vector<1x12x8xf32>
    tpu.vector_store %arg41[%c0_201, %c0_202, %c0_203], %446 {strides = array<i32>} : memref<2x12x8xf32, #tpu.memory_space<vmem>>, vector<1x12x8xf32>,
    %447 = vector.extract_strided_slice %437 {offsets = [0, 16], sizes = [12, 16], strides = [1, 1]} : vector<12x32xf32> to vector<12x16xf32>
    %c0_204 = arith.constant 0 : index
    %c0_205 = arith.constant 0 : index
    %448 = vector.load %arg23[%c0_204, %c0_205] : memref<16x8xf32, #tpu.memory_space<vmem>>, vector<16x8xf32>
    %cst_206 = arith.constant dense<0.000000e+00> : vector<12x8xf32>
    %449 = tpu.matmul %447, %448, %cst_206 {dimension_numbers = #tpu.dot_dimension_numbers<[1], [0], [0], [1], [0, 0, 1, 1], [], []>} : vector<12x16xf32>, vector<16x8xf32>, vector<12x8xf32> -> vector<12x8xf32>
    %c0_207 = arith.constant 0 : index
    %c0_208 = arith.constant 0 : index
    %450 = vector.load %arg4[%c0_207, %c0_208] : memref<1x8xf32, #tpu.memory_space<vmem>>, vector<1x8xf32>
    %451 = vector.broadcast %450 : vector<1x8xf32> to vector<12x8xf32>
    %452 = arith.addf %449, %451 : vector<12x8xf32>
    %c1_209 = arith.constant 1 : index
    %c0_210 = arith.constant 0 : index
    %c0_211 = arith.constant 0 : index
    %453 = vector.load %arg41[%c1_209, %c0_210, %c0_211] : memref<2x12x8xf32, #tpu.memory_space<vmem>>, vector<1x12x8xf32>
    %454 = vector.shape_cast %453 : vector<1x12x8xf32> to vector<12x8xf32>
    %455 = vector.shape_cast %452 : vector<12x8xf32> to vector<1x12x8xf32>
    tpu.vector_store %arg41[%c1_209, %c0_210, %c0_211], %455 {strides = array<i32>} : memref<2x12x8xf32, #tpu.memory_space<vmem>>, vector<1x12x8xf32>,
    return
  }
}

</mosaic_0001>

<llo_original>
// kernel: mtgnn_forward.2
$region0: #{mtgnn_forward.2}
  #allocation0 [shape = 'u32[]', space=smem, size = 0x4, offset = 0x4, fixed_abs, tag = 'smem constant byte address 0x4 - core index']
  #allocation1 [shape = 'u32[144,128]{1,0:T(1,128)}', space=vmem, size = 0x12000, scoped, tag = 'internal scratch']
  %s0 = inlined_call_operand.hbm [shape: f32[16,16], index: 0, kind: input, shape index: {}]
  %s1 = inlined_call_operand.hbm [shape: f32[16,16], index: 1, kind: input, shape index: {}]
  %s2 = inlined_call_operand.hbm [shape: f32[16,16], index: 2, kind: input, shape index: {}]
  %s3 = inlined_call_operand.hbm [shape: f32[1,16], index: 3, kind: input, shape index: {}]
  %s4 = inlined_call_operand.hbm [shape: f32[16,16], index: 4, kind: input, shape index: {}]
  %s5 = inlined_call_operand.hbm [shape: f32[1,16], index: 5, kind: input, shape index: {}]
  %s6 = inlined_call_operand.vmem [shape: f32[16,16], index: 6, kind: output, shape index: {}]
  %s7 = sld [smem:[#allocation0]]
  $region58: #{mtgnn_forward.2} parent=0
    _
  %s9 = ssub.s32 1, %s7
  %s10 = scalar_select 0, %s9, %s7
  $region1: #{mtgnn_forward.2} parent=0
    #allocation2 [shape = 'u8[8192]{0}', space=vmem, size = 0x2000, scoped, tag = 'input window, operand 0, single buffered']
    #allocation3 [shape = 's32[1]{0}', space=sflag, size = 0x4, scoped, tag = 'scoped memory for mtgnn_forward.2']
    #allocation4 [shape = 'u8[8192]{0}', space=vmem, size = 0x2000, scoped, tag = 'input window, operand 1, single buffered']
    #allocation5 [shape = 's32[1]{0}', space=sflag, size = 0x4, scoped, tag = 'scoped memory for mtgnn_forward.2']
    #allocation6 [shape = 'u8[8192]{0}', space=vmem, size = 0x2000, scoped, tag = 'input window, operand 2, single buffered']
    #allocation7 [shape = 'u8[512]{0}', space=vmem, size = 0x400, scoped, tag = 'input window, operand 3, single buffered']
    #allocation8 [shape = 's32[1]{0}', space=sflag, size = 0x4, scoped, tag = 'scoped memory for mtgnn_forward.2']
    #allocation9 [shape = 'u8[8192]{0}', space=vmem, size = 0x2000, scoped, tag = 'input window, operand 4, single buffered']
    #allocation10 [shape = 'u8[512]{0}', space=vmem, size = 0x400, scoped, tag = 'input window, operand 5, single buffered']
    #allocation11 [shape = 's32[1]{0}', space=sflag, size = 0x4, scoped, tag = 'scoped memory for mtgnn_forward.2']
    %11 = vsyncpa [#allocation3], 0
    %12 = vsyncpa [#allocation5], 0
    %13 = vsyncpa [#allocation8], 0
    %14 = vsyncpa [#allocation11], 0
    // Predicated region
    $region2: #{mtgnn_forward.2} parent=1 // pred_check
      _
    $region3: #{mtgnn_forward.2} parent=1 // pred_check_branch
      %16 = sbr.rel (0) target = $region5
    $region4: #{mtgnn_forward.2} parent=1 // pred_region
      %s18 = ssub.s32 256, 256
      %19 = vsyncadd [#allocation3], %s18
      %s20 = sshll.u32 [#allocation2], 4
      %s21 = int_to_ptr.vmem [resolvable:$true] %s20
      %26 = dma.hbm_to_vmem [thread:$0]  %s0, 256, %s21, [#allocation3], 128, 128, 8
    $region5: #{mtgnn_forward.2} parent=1 // pred_fallthru
      _
    // Predicated region
    $region6: #{mtgnn_forward.2} parent=1 // pred_check
      _
    $region7: #{mtgnn_forward.2} parent=1 // pred_check_branch
      %28 = sbr.rel (0) target = $region9
    $region8: #{mtgnn_forward.2} parent=1 // pred_region
      %s30 = ssub.s32 256, 256
      %31 = vsyncadd [#allocation5], %s30
      %s32 = sshll.u32 [#allocation4], 4
      %s33 = int_to_ptr.vmem [resolvable:$true] %s32
      %38 = dma.hbm_to_vmem [thread:$0]  %s1, 256, %s33, [#allocation5], 128, 128, 8
    $region9: #{mtgnn_forward.2} parent=1 // pred_fallthru
      _
    // Predicated region
    $region10: #{mtgnn_forward.2} parent=1 // pred_check
      _
    $region11: #{mtgnn_forward.2} parent=1 // pred_check_branch
      %40 = sbr.rel (0) target = $region13
    $region12: #{mtgnn_forward.2} parent=1 // pred_region
      %s42 = ssub.s32 256, 256
      %43 = vsyncadd [#allocation5], %s42
      %s44 = sshll.u32 [#allocation6], 4
      %s45 = int_to_ptr.vmem [resolvable:$true] %s44
      %50 = dma.hbm_to_vmem [thread:$0]  %s2, 256, %s45, [#allocation5], 128, 128, 8
    $region13: #{mtgnn_forward.2} parent=1 // pred_fallthru
      _
    // Predicated region
    $region14: #{mtgnn_forward.2} parent=1 // pred_check
      _
    $region15: #{mtgnn_forward.2} parent=1 // pred_check_branch
      %52 = sbr.rel (0) target = $region17
    $region16: #{mtgnn_forward.2} parent=1 // pred_region
      %s54 = ssub.s32 16, 16
      %55 = vsyncadd [#allocation8], %s54
      %s57 = sshll.u32 [#allocation7], 4
      %s58 = int_to_ptr.vmem [resolvable:$true] %s57
      %60 = dma.hbm_to_vmem [thread:$0]  %s3, 16, %s58, [#allocation8]
    $region17: #{mtgnn_forward.2} parent=1 // pred_fallthru
      _
    // Predicated region
    $region18: #{mtgnn_forward.2} parent=1 // pred_check
      _
    $region19: #{mtgnn_forward.2} parent=1 // pred_check_branch
      %62 = sbr.rel (0) target = $region21
    $region20: #{mtgnn_forward.2} parent=1 // pred_region
      %s64 = ssub.s32 256, 256
      %65 = vsyncadd [#allocation8], %s64
      %s66 = sshll.u32 [#allocation9], 4
      %s67 = int_to_ptr.vmem [resolvable:$true] %s66
      %72 = dma.hbm_to_vmem [thread:$0]  %s4, 256, %s67, [#allocation8], 128, 128, 8
    $region21: #{mtgnn_forward.2} parent=1 // pred_fallthru
      _
    // Predicated region
    $region22: #{mtgnn_forward.2} parent=1 // pred_check
      _
    $region23: #{mtgnn_forward.2} parent=1 // pred_check_branch
      %74 = sbr.rel (0) target = $region25
    $region24: #{mtgnn_forward.2} parent=1 // pred_region
      %s76 = ssub.s32 16, 16
      %77 = vsyncadd [#allocation11], %s76
      %s79 = sshll.u32 [#allocation10], 4
      %s80 = int_to_ptr.vmem [resolvable:$true] %s79
      %82 = dma.hbm_to_vmem [thread:$0]  %s5, 16, %s80, [#allocation11]
    $region25: #{mtgnn_forward.2} parent=1 // pred_fallthru
      _
    // Predicated region
    $region26: #{mtgnn_forward.2} parent=1 // pred_check
      _
    $region27: #{mtgnn_forward.2} parent=1 // pred_check_branch
      %84 = sbr.rel (0) target = $region29
    $region28: #{mtgnn_forward.2} parent=1 // pred_region
      %85 = dma.done [#allocation3], 256
    $region29: #{mtgnn_forward.2} parent=1 // pred_fallthru
      _
    // Predicated region
    $region30: #{mtgnn_forward.2} parent=1 // pred_check
      _
    $region31: #{mtgnn_forward.2} parent=1 // pred_check_branch
      %87 = sbr.rel (0) target = $region33
    $region32: #{mtgnn_forward.2} parent=1 // pred_region
      %88 = dma.done [#allocation5], 256
    $region33: #{mtgnn_forward.2} parent=1 // pred_fallthru
      _
    // Predicated region
    $region34: #{mtgnn_forward.2} parent=1 // pred_check
      _
    $region35: #{mtgnn_forward.2} parent=1 // pred_check_branch
      %90 = sbr.rel (0) target = $region37
    $region36: #{mtgnn_forward.2} parent=1 // pred_region
      %91 = dma.done [#allocation5], 256
    $region37: #{mtgnn_forward.2} parent=1 // pred_fallthru
      _
    // Predicated region
    $region38: #{mtgnn_forward.2} parent=1 // pred_check
      _
    $region39: #{mtgnn_forward.2} parent=1 // pred_check_branch
      %93 = sbr.rel (0) target = $region41
    $region40: #{mtgnn_forward.2} parent=1 // pred_region
      %94 = dma.done [#allocation8], 16
    $region41: #{mtgnn_forward.2} parent=1 // pred_fallthru
      _
    // Predicated region
    $region42: #{mtgnn_forward.2} parent=1 // pred_check
      _
    $region43: #{mtgnn_forward.2} parent=1 // pred_check_branch
      %96 = sbr.rel (0) target = $region45
    $region44: #{mtgnn_forward.2} parent=1 // pred_region
      %97 = dma.done [#allocation8], 256
    $region45: #{mtgnn_forward.2} parent=1 // pred_fallthru
      _
    // Predicated region
    $region46: #{mtgnn_forward.2} parent=1 // pred_check
      _
    $region47: #{mtgnn_forward.2} parent=1 // pred_check_branch
      %99 = sbr.rel (0) target = $region49
    $region48: #{mtgnn_forward.2} parent=1 // pred_region
      %100 = dma.done [#allocation11], 16
    $region49: #{mtgnn_forward.2} parent=1 // pred_fallthru
      _
    %v101 = vld [vmem:[#allocation2] sm:$0xff]
    %v102 = vld [vmem:[#allocation2 + $0x8] sm:$0xff]
    %v103 = vld [vmem:[#allocation6] sm:$0xff]
    %v104 = vld [vmem:[#allocation6 + $0x8] sm:$0xff]
    %v105 = vld [vmem:[#allocation7] sm:$0x1]
    %v107 = vlaneseq
    %v108 = vshrl.u32 %v107, 7
    %v109 = vsub.s32 0, %v108
    %v110 = vrot.slane %v105, %v109
    %vm112 = vcmask 130048
    %v114 = vsel %vm112, %v101, 0
    %v117 = vsel %vm112, %v102, 0
    %119 = vmatprep.subr.mxu0 0.0
    %120 = vmatpush1.msra.mxu0 0.0
    %121 = vmatprep.subr.mxu0 0.0
    %122 = vmatpush1.msra.mxu0 0.0
    %123 = vmatprep.subr.mxu0 0.0
    %124 = vmatpush1.msra.mxu0 0.0
    %125 = vmatprep.subr.mxu0 0.0
    %126 = vmatpush1.msra.mxu0 0.0
    %127 = vmatprep.subr.mxu0 0.0
    %128 = vmatpush1.msra.mxu0 0.0
    %129 = vmatprep.subr.mxu0 0.0
    %130 = vmatpush1.msra.mxu0 0.0
    %131 = vmatprep.subr.mxu0 0.0
    %132 = vmatpush1.msra.mxu0 0.0
    %133 = vmatprep.subr.mxu0 0.0
    %134 = vmatpush1.msra.mxu0 0.0
    %135 = vmatprep.subr.mxu0 0.0
    %136 = vmatpush1.msra.mxu0 0.0
    %137 = vmatprep.subr.mxu0 0.0
    %138 = vmatpush1.msra.mxu0 0.0
    %139 = vmatprep.subr.mxu0 0.0
    %140 = vmatpush1.msra.mxu0 0.0
    %141 = vmatprep.subr.mxu0 0.0
    %142 = vmatpush1.msra.mxu0 0.0
    %143 = vmatprep.subr.mxu0 0.0
    %144 = vmatpush1.msra.mxu0 0.0
    %145 = vmatprep.subr.mxu0 0.0
    %146 = vmatpush1.msra.mxu0 0.0
    %147 = vmatprep.subr.mxu0 0.0
    %148 = vmatpush1.msra.mxu0 %v104
    %149 = vmatprep.subr.mxu0 0.0
    %150 = vmatpush1.msra.mxu0 %v103
    %151 = vmatprep.subr.mxu0 0.0
    %152 = vmatpush2.msra.mxu0 0.0
    %153 = vmatprep.subr.mxu0 0.0
    %154 = vmatpush2.msra.mxu0 0.0
    %155 = vmatprep.subr.mxu0 0.0
    %156 = vmatpush2.msra.mxu0 0.0
    %157 = vmatprep.subr.mxu0 0.0
    %158 = vmatpush2.msra.mxu0 0.0
    %159 = vmatprep.subr.mxu0 0.0
    %160 = vmatpush2.msra.mxu0 0.0
    %161 = vmatprep.subr.mxu0 0.0
    %162 = vmatpush2.msra.mxu0 0.0
    %163 = vmatprep.subr.mxu0 0.0
    %164 = vmatpush2.msra.mxu0 0.0
    %165 = vmatprep.subr.mxu0 0.0
    %166 = vmatpush2.msra.mxu0 0.0
    %167 = vmatprep.subr.mxu0 0.0
    %168 = vmatpush2.msra.mxu0 0.0
    %169 = vmatprep.subr.mxu0 0.0
    %170 = vmatpush2.msra.mxu0 0.0
    %171 = vmatprep.subr.mxu0 0.0
    %172 = vmatpush2.msra.mxu0 0.0
    %173 = vmatprep.subr.mxu0 0.0
    %174 = vmatpush2.msra.mxu0 0.0
    %175 = vmatprep.subr.mxu0 0.0
    %176 = vmatpush2.msra.mxu0 0.0
    %177 = vmatprep.subr.mxu0 0.0
    %178 = vmatpush2.msra.mxu0 0.0
    %179 = vmatprep.subr.mxu0 0.0
    %180 = vmatpush2.msra.mxu0 0.0
    %181 = vmatprep.subr.mxu0 0.0
    %182 = vmatpush2.msra.mxu0 0.0
    %183 = vmatprep.mubr.f32.mxu0 0.0
    %184 = vmatmul.mubr.f32.gmra.mxu0 %v114
    %v185 = vpop.f32.mrf.mxu0
    %v186 = vadd.f32 %v110, %v185
    %v187 = vpop.f32.mrf.mxu0
    %188 = vmatprep.mubr.f32.mxu0 0.0
    %189 = vmatmul.mubr.f32.gmra.mxu0 %v117
    %v190 = vpop.f32.mrf.mxu0
    %v191 = vadd.f32 %v110, %v190
    %v192 = vpop.f32.mrf.mxu0
    %193 = vdwg.mxu0
    %v194 = vmul.f32 %v186, 3.0
    %v195 = vmul.f32 %v191, 3.0
    %v196 = vtanh.pop %v194
    %v197 = vtanh.pop %v195
    %v198 = vld [vmem:[#allocation4] sm:$0xff]
    %v199 = vld [vmem:[#allocation4 + $0x8] sm:$0xff]
    %v200 = vld [vmem:[#allocation9] sm:$0xff]
    %v201 = vld [vmem:[#allocation9 + $0x8] sm:$0xff]
    %v202 = vld [vmem:[#allocation10] sm:$0x1]
    %v204 = vlaneseq
    %v205 = vshrl.u32 %v204, 7
    %v206 = vsub.s32 0, %v205
    %v207 = vrot.slane %v202, %v206
    %v210 = vsel %vm112, %v198, 0
    %v213 = vsel %vm112, %v199, 0
    %215 = vmatprep.subr.mxu0 0.0
    %216 = vmatpush1.msra.mxu0 0.0
    %217 = vmatprep.subr.mxu0 0.0
    %218 = vmatpush1.msra.mxu0 0.0
    %219 = vmatprep.subr.mxu0 0.0
    %220 = vmatpush1.msra.mxu0 0.0
    %221 = vmatprep.subr.mxu0 0.0
    %222 = vmatpush1.msra.mxu0 0.0
    %223 = vmatprep.subr.mxu0 0.0
    %224 = vmatpush1.msra.mxu0 0.0
    %225 = vmatprep.subr.mxu0 0.0
    %226 = vmatpush1.msra.mxu0 0.0
    %227 = vmatprep.subr.mxu0 0.0
    %228 = vmatpush1.msra.mxu0 0.0
    %229 = vmatprep.subr.mxu0 0.0
    %230 = vmatpush1.msra.mxu0 0.0
    %231 = vmatprep.subr.mxu0 0.0
    %232 = vmatpush1.msra.mxu0 0.0
    %233 = vmatprep.subr.mxu0 0.0
    %234 = vmatpush1.msra.mxu0 0.0
    %235 = vmatprep.subr.mxu0 0.0
    %236 = vmatpush1.msra.mxu0 0.0
    %237 = vmatprep.subr.mxu0 0.0
    %238 = vmatpush1.msra.mxu0 0.0
    %239 = vmatprep.subr.mxu0 0.0
    %240 = vmatpush1.msra.mxu0 0.0
    %241 = vmatprep.subr.mxu0 0.0
    %242 = vmatpush1.msra.mxu0 0.0
    %243 = vmatprep.subr.mxu0 0.0
    %244 = vmatpush1.msra.mxu0 %v201
    %245 = vmatprep.subr.mxu0 0.0
    %246 = vmatpush1.msra.mxu0 %v200
    %247 = vmatprep.subr.mxu0 0.0
    %248 = vmatpush2.msra.mxu0 0.0
    %249 = vmatprep.subr.mxu0 0.0
    %250 = vmatpush2.msra.mxu0 0.0
    %251 = vmatprep.subr.mxu0 0.0
    %252 = vmatpush2.msra.mxu0 0.0
    %253 = vmatprep.subr.mxu0 0.0
    %254 = vmatpush2.msra.mxu0 0.0
    %255 = vmatprep.subr.mxu0 0.0
    %256 = vmatpush2.msra.mxu0 0.0
    %257 = vmatprep.subr.mxu0 0.0
    %258 = vmatpush2.msra.mxu0 0.0
    %259 = vmatprep.subr.mxu0 0.0
    %260 = vmatpush2.msra.mxu0 0.0
    %261 = vmatprep.subr.mxu0 0.0
    %262 = vmatpush2.msra.mxu0 0.0
    %263 = vmatprep.subr.mxu0 0.0
    %264 = vmatpush2.msra.mxu0 0.0
    %265 = vmatprep.subr.mxu0 0.0
    %266 = vmatpush2.msra.mxu0 0.0
    %267 = vmatprep.subr.mxu0 0.0
    %268 = vmatpush2.msra.mxu0 0.0
    %269 = vmatprep.subr.mxu0 0.0
    %270 = vmatpush2.msra.mxu0 0.0
    %271 = vmatprep.subr.mxu0 0.0
    %272 = vmatpush2.msra.mxu0 0.0
    %273 = vmatprep.subr.mxu0 0.0
    %274 = vmatpush2.msra.mxu0 0.0
    %275 = vmatprep.subr.mxu0 0.0
    %276 = vmatpush2.msra.mxu0 0.0
    %277 = vmatprep.subr.mxu0 0.0
    %278 = vmatpush2.msra.mxu0 0.0
    %279 = vmatprep.mubr.f32.mxu0 0.0
    %280 = vmatmul.mubr.f32.gmra.mxu0 %v210
    %v281 = vpop.f32.mrf.mxu0
    %v282 = vadd.f32 %v207, %v281
    %v283 = vpop.f32.mrf.mxu0
    %284 = vmatprep.mubr.f32.mxu0 0.0
    %285 = vmatmul.mubr.f32.gmra.mxu0 %v213
    %v286 = vpop.f32.mrf.mxu0
    %v287 = vadd.f32 %v207, %v286
    %v288 = vpop.f32.mrf.mxu0
    %289 = vdwg.mxu0
    %v290 = vmul.f32 %v282, 3.0
    %v291 = vmul.f32 %v287, 3.0
    %v292 = vtanh.pop %v290
    %v293 = vtanh.pop %v291
    %v295 = vsel %vm112, %v196, 0
    %v298 = vsel %vm112, %v197, 0
    %v301 = vsel %vm112, %v292, 0
    %v304 = vsel %vm112, %v293, 0
    %306 = vmatprep.subr.mxu0 0.0
    %307 = vmatpush1.xpose.msra.mxu0 0.0
    %308 = vmatprep.subr.mxu0 0.0
    %309 = vmatpush1.xpose.msra.mxu0 0.0
    %310 = vmatprep.subr.mxu0 0.0
    %311 = vmatpush1.xpose.msra.mxu0 0.0
    %312 = vmatprep.subr.mxu0 0.0
    %313 = vmatpush1.xpose.msra.mxu0 0.0
    %314 = vmatprep.subr.mxu0 0.0
    %315 = vmatpush1.xpose.msra.mxu0 0.0
    %316 = vmatprep.subr.mxu0 0.0
    %317 = vmatpush1.xpose.msra.mxu0 0.0
    %318 = vmatprep.subr.mxu0 0.0
    %319 = vmatpush1.xpose.msra.mxu0 0.0
    %320 = vmatprep.subr.mxu0 0.0
    %321 = vmatpush1.xpose.msra.mxu0 0.0
    %322 = vmatprep.subr.mxu0 0.0
    %323 = vmatpush1.xpose.msra.mxu0 0.0
    %324 = vmatprep.subr.mxu0 0.0
    %325 = vmatpush1.xpose.msra.mxu0 0.0
    %326 = vmatprep.subr.mxu0 0.0
    %327 = vmatpush1.xpose.msra.mxu0 0.0
    %328 = vmatprep.subr.mxu0 0.0
    %329 = vmatpush1.xpose.msra.mxu0 0.0
    %330 = vmatprep.subr.mxu0 0.0
    %331 = vmatpush1.xpose.msra.mxu0 0.0
    %332 = vmatprep.subr.mxu0 0.0
    %333 = vmatpush1.xpose.msra.mxu0 0.0
    %334 = vmatprep.subr.mxu0 0.0
    %335 = vmatpush1.xpose.msra.mxu0 %v304
    %336 = vmatprep.subr.mxu0 0.0
    %337 = vmatpush1.xpose.msra.mxu0 %v301
    %338 = vmatprep.subr.mxu0 0.0
    %339 = vmatpush2.xpose.msra.mxu0 0.0
    %340 = vmatprep.subr.mxu0 0.0
    %341 = vmatpush2.xpose.msra.mxu0 0.0
    %342 = vmatprep.subr.mxu0 0.0
    %343 = vmatpush2.xpose.msra.mxu0 0.0
    %344 = vmatprep.subr.mxu0 0.0
    %345 = vmatpush2.xpose.msra.mxu0 0.0
    %346 = vmatprep.subr.mxu0 0.0
    %347 = vmatpush2.xpose.msra.mxu0 0.0
    %348 = vmatprep.subr.mxu0 0.0
    %349 = vmatpush2.xpose.msra.mxu0 0.0
    %350 = vmatprep.subr.mxu0 0.0
    %351 = vmatpush2.xpose.msra.mxu0 0.0
    %352 = vmatprep.subr.mxu0 0.0
    %353 = vmatpush2.xpose.msra.mxu0 0.0
    %354 = vmatprep.subr.mxu0 0.0
    %355 = vmatpush2.xpose.msra.mxu0 0.0
    %356 = vmatprep.subr.mxu0 0.0
    %357 = vmatpush2.xpose.msra.mxu0 0.0
    %358 = vmatprep.subr.mxu0 0.0
    %359 = vmatpush2.xpose.msra.mxu0 0.0
    %360 = vmatprep.subr.mxu0 0.0
    %361 = vmatpush2.xpose.msra.mxu0 0.0
    %362 = vmatprep.subr.mxu0 0.0
    %363 = vmatpush2.xpose.msra.mxu0 0.0
    %364 = vmatprep.subr.mxu0 0.0
    %365 = vmatpush2.xpose.msra.mxu0 0.0
    %366 = vmatprep.subr.mxu0 0.0
    %367 = vmatpush2.xpose.msra.mxu0 0.0
    %368 = vmatprep.subr.mxu0 0.0
    %369 = vmatpush2.xpose.msra.mxu0 0.0
    %370 = vmatprep.mubr.f32.mxu0 0.0
    %371 = vmatmul.mubr.f32.gmra.mxu0 %v295
    %v372 = vpop.f32.mrf.mxu0
    %v373 = vadd.f32 0.0, %v372
    %v374 = vpop.f32.mrf.mxu0
    %375 = vmatprep.mubr.f32.mxu0 0.0
    %376 = vmatmul.mubr.f32.gmra.mxu0 %v298
    %v377 = vpop.f32.mrf.mxu0
    %v378 = vadd.f32 0.0, %v377
    %v379 = vpop.f32.mrf.mxu0
    %380 = vdwg.mxu0
    %381 = vmatprep.subr.mxu0 0.0
    %382 = vmatpush1.xpose.msra.mxu0 0.0
    %383 = vmatprep.subr.mxu0 0.0
    %384 = vmatpush1.xpose.msra.mxu0 0.0
    %385 = vmatprep.subr.mxu0 0.0
    %386 = vmatpush1.xpose.msra.mxu0 0.0
    %387 = vmatprep.subr.mxu0 0.0
    %388 = vmatpush1.xpose.msra.mxu0 0.0
    %389 = vmatprep.subr.mxu0 0.0
    %390 = vmatpush1.xpose.msra.mxu0 0.0
    %391 = vmatprep.subr.mxu0 0.0
    %392 = vmatpush1.xpose.msra.mxu0 0.0
    %393 = vmatprep.subr.mxu0 0.0
    %394 = vmatpush1.xpose.msra.mxu0 0.0
    %395 = vmatprep.subr.mxu0 0.0
    %396 = vmatpush1.xpose.msra.mxu0 0.0
    %397 = vmatprep.subr.mxu0 0.0
    %398 = vmatpush1.xpose.msra.mxu0 0.0
    %399 = vmatprep.subr.mxu0 0.0
    %400 = vmatpush1.xpose.msra.mxu0 0.0
    %401 = vmatprep.subr.mxu0 0.0
    %402 = vmatpush1.xpose.msra.mxu0 0.0
    %403 = vmatprep.subr.mxu0 0.0
    %404 = vmatpush1.xpose.msra.mxu0 0.0
    %405 = vmatprep.subr.mxu0 0.0
    %406 = vmatpush1.xpose.msra.mxu0 0.0
    %407 = vmatprep.subr.mxu0 0.0
    %408 = vmatpush1.xpose.msra.mxu0 0.0
    %409 = vmatprep.subr.mxu0 0.0
    %410 = vmatpush1.xpose.msra.mxu0 %v298
    %411 = vmatprep.subr.mxu0 0.0
    %412 = vmatpush1.xpose.msra.mxu0 %v295
    %413 = vmatprep.subr.mxu0 0.0
    %414 = vmatpush2.xpose.msra.mxu0 0.0
    %415 = vmatprep.subr.mxu0 0.0
    %416 = vmatpush2.xpose.msra.mxu0 0.0
    %417 = vmatprep.subr.mxu0 0.0
    %418 = vmatpush2.xpose.msra.mxu0 0.0
    %419 = vmatprep.subr.mxu0 0.0
    %420 = vmatpush2.xpose.msra.mxu0 0.0
    %421 = vmatprep.subr.mxu0 0.0
    %422 = vmatpush2.xpose.msra.mxu0 0.0
    %423 = vmatprep.subr.mxu0 0.0
    %424 = vmatpush2.xpose.msra.mxu0 0.0
    %425 = vmatprep.subr.mxu0 0.0
    %426 = vmatpush2.xpose.msra.mxu0 0.0
    %427 = vmatprep.subr.mxu0 0.0
    %428 = vmatpush2.xpose.msra.mxu0 0.0
    %429 = vmatprep.subr.mxu0 0.0
    %430 = vmatpush2.xpose.msra.mxu0 0.0
    %431 = vmatprep.subr.mxu0 0.0
    %432 = vmatpush2.xpose.msra.mxu0 0.0
    %433 = vmatprep.subr.mxu0 0.0
    %434 = vmatpush2.xpose.msra.mxu0 0.0
    %435 = vmatprep.subr.mxu0 0.0
    %436 = vmatpush2.xpose.msra.mxu0 0.0
    %437 = vmatprep.subr.mxu0 0.0
    %438 = vmatpush2.xpose.msra.mxu0 0.0
    %439 = vmatprep.subr.mxu0 0.0
    %440 = vmatpush2.xpose.msra.mxu0 0.0
    %441 = vmatprep.subr.mxu0 0.0
    %442 = vmatpush2.xpose.msra.mxu0 0.0
    %443 = vmatprep.subr.mxu0 0.0
    %444 = vmatpush2.xpose.msra.mxu0 0.0
    %445 = vmatprep.mubr.f32.mxu0 0.0
    %446 = vmatmul.mubr.f32.gmra.mxu0 %v301
    %v447 = vpop.f32.mrf.mxu0
    %v448 = vadd.f32 0.0, %v447
    %v449 = vpop.f32.mrf.mxu0
    %450 = vmatprep.mubr.f32.mxu0 0.0
    %451 = vmatmul.mubr.f32.gmra.mxu0 %v304
    %v452 = vpop.f32.mrf.mxu0
    %v453 = vadd.f32 0.0, %v452
    %v454 = vpop.f32.mrf.mxu0
    %455 = vdwg.mxu0
    %v456 = vsub.f32 %v373, %v448
    %v457 = vsub.f32 %v378, %v453
    %v458 = vmul.f32 %v456, 3.0
    %v459 = vmul.f32 %v457, 3.0
    %v460 = vtanh.pop %v458
    %v461 = vtanh.pop %v459
    %v462 = vmax.f32 %v460, 0.0
    %v463 = vmax.f32 %v461, 0.0
    %464 = vst.msk [vmem:[%s6] sm:$0xff] %vm112, %v462
    %465 = vst.msk [vmem:[%s6 + $0x8] sm:$0xff] %vm112, %v463
    // Predicated region
    $region50: #{mtgnn_forward.2} parent=1 // pred_check
      _
    $region51: #{mtgnn_forward.2} parent=1 // pred_check_branch
      %467 = sbr.rel (0) target = $region53
    $region52: #{mtgnn_forward.2} parent=1 // pred_region
      _
    $region53: #{mtgnn_forward.2} parent=1 // pred_fallthru
      _
    // Predicated region
    $region54: #{mtgnn_forward.2} parent=1 // pred_check
      _
    $region55: #{mtgnn_forward.2} parent=1 // pred_check_branch
      %469 = sbr.rel (0) target = $region57
    $region56: #{mtgnn_forward.2} parent=1 // pred_region
      _
    $region57: #{mtgnn_forward.2} parent=1 // pred_fallthru
      _
    %470 = vsyncpa [#allocation3], 1
    %471 = vsyncpa [#allocation5], 1
    %472 = vsyncpa [#allocation8], 1
    %473 = vsyncpa [#allocation11], 1

// kernel: mtgnn_forward.3
$region0: #{mtgnn_forward.3}
  #allocation0 [shape = 'u32[]', space=smem, size = 0x4, offset = 0x4, fixed_abs, tag = 'smem constant byte address 0x4 - core index']
  #allocation1 [shape = 'u32[144,128]{1,0:T(1,128)}', space=vmem, size = 0x12000, scoped, tag = 'internal scratch']
  %s0 = inlined_call_operand.smem [shape: u32[42], index: -1, kind: input, shape index: {}]
  %s1 = sld [smem:[%s0]]
  %s2 = scalar_lea.smem %s0, 1
  %s3 = sld [smem:[%s2]]
  %s4 = scalar_lea.smem %s0, 2
  %s5 = sld [smem:[%s4]]
  %s6 = scalar_lea.smem %s0, 3
  %s7 = sld [smem:[%s6]]
  %s8 = scalar_lea.smem %s0, 4
  %s9 = sld [smem:[%s8]]
  %s10 = scalar_lea.smem %s0, 5
  %s11 = sld [smem:[%s10]]
  %s12 = scalar_lea.smem %s0, 6
  %s13 = sld [smem:[%s12]]
  %s14 = scalar_lea.smem %s0, 7
  %s15 = sld [smem:[%s14]]
  %s16 = scalar_lea.smem %s0, 8
  %s17 = sld [smem:[%s16]]
  %s18 = scalar_lea.smem %s0, 9
  %s19 = sld [smem:[%s18]]
  %s20 = scalar_lea.smem %s0, 10
  %s21 = sld [smem:[%s20]]
  %s22 = scalar_lea.smem %s0, 11
  %s23 = sld [smem:[%s22]]
  %s24 = scalar_lea.smem %s0, 12
  %s25 = sld [smem:[%s24]]
  %s26 = scalar_lea.smem %s0, 13
  %s27 = sld [smem:[%s26]]
  %s28 = scalar_lea.smem %s0, 14
  %s29 = sld [smem:[%s28]]
  %s30 = scalar_lea.smem %s0, 15
  %s31 = sld [smem:[%s30]]
  %s32 = scalar_lea.smem %s0, 16
  %s33 = sld [smem:[%s32]]
  %s34 = scalar_lea.smem %s0, 17
  %s35 = sld [smem:[%s34]]
  %s36 = scalar_lea.smem %s0, 18
  %s37 = sld [smem:[%s36]]
  %s38 = scalar_lea.smem %s0, 19
  %s39 = sld [smem:[%s38]]
  %s40 = scalar_lea.smem %s0, 20
  %s41 = sld [smem:[%s40]]
  %s42 = scalar_lea.smem %s0, 21
  %s43 = sld [smem:[%s42]]
  %s44 = scalar_lea.smem %s0, 22
  %s45 = sld [smem:[%s44]]
  %s46 = scalar_lea.smem %s0, 23
  %s47 = sld [smem:[%s46]]
  %s48 = scalar_lea.smem %s0, 24
  %s49 = sld [smem:[%s48]]
  %s50 = scalar_lea.smem %s0, 25
  %s51 = sld [smem:[%s50]]
  %s52 = scalar_lea.smem %s0, 26
  %s53 = sld [smem:[%s52]]
  %s54 = scalar_lea.smem %s0, 27
  %s55 = sld [smem:[%s54]]
  %s56 = scalar_lea.smem %s0, 28
  %s57 = sld [smem:[%s56]]
  %s58 = scalar_lea.smem %s0, 29
  %s59 = sld [smem:[%s58]]
  %s60 = scalar_lea.smem %s0, 30
  %s61 = sld [smem:[%s60]]
  %s62 = scalar_lea.smem %s0, 31
  %s63 = sld [smem:[%s62]]
  %s64 = scalar_lea.smem %s0, 32
  %s65 = sld [smem:[%s64]]
  %s66 = scalar_lea.smem %s0, 33
  %s67 = sld [smem:[%s66]]
  %s68 = scalar_lea.smem %s0, 34
  %s69 = sld [smem:[%s68]]
  %s70 = scalar_lea.smem %s0, 35
  %s71 = sld [smem:[%s70]]
  %s72 = scalar_lea.smem %s0, 36
  %s73 = sld [smem:[%s72]]
  %s74 = scalar_lea.smem %s0, 37
  %s75 = sld [smem:[%s74]]
  %s76 = scalar_lea.smem %s0, 38
  %s77 = sld [smem:[%s76]]
  %s78 = scalar_lea.smem %s0, 39
  %s79 = sld [smem:[%s78]]
  %s80 = scalar_lea.smem %s0, 40
  %s81 = sld [smem:[%s80]]
  %s82 = scalar_lea.smem %s0, 41
  %s83 = sld [smem:[%s82]]
  %s84 = sld [smem:[#allocation0]]
  $region174: #{mtgnn_forward.3} parent=0
    _
  %s86 = ssub.s32 1, %s84
  %s87 = scalar_select 0, %s86, %s84
  // Predicated region
  $region2: #{mtgnn_forward.3} parent=0 // pred_check
    _
  $region3: #{mtgnn_forward.3} parent=0 // pred_check_branch
    %89 = sbr.rel (0) target = $region5
  $region4: #{mtgnn_forward.3} parent=0 // pred_region
    _
  $region5: #{mtgnn_forward.3} parent=0 // pred_fallthru
    _
  // Predicated region
  $region6: #{mtgnn_forward.3} parent=0 // pred_check
    _
  $region7: #{mtgnn_forward.3} parent=0 // pred_check_branch
    %91 = sbr.rel (0) target = $region9
  $region8: #{mtgnn_forward.3} parent=0 // pred_region
    _
  $region9: #{mtgnn_forward.3} parent=0 // pred_fallthru
    _
  // Predicated region
  $region10: #{mtgnn_forward.3} parent=0 // pred_check
    _
  $region11: #{mtgnn_forward.3} parent=0 // pred_check_branch
    %93 = sbr.rel (0) target = $region13
  $region12: #{mtgnn_forward.3} parent=0 // pred_region
    _
  $region13: #{mtgnn_forward.3} parent=0 // pred_fallthru
    _
  // Predicated region
  $region14: #{mtgnn_forward.3} parent=0 // pred_check
    _
  $region15: #{mtgnn_forward.3} parent=0 // pred_check_branch
    %95 = sbr.rel (0) target = $region17
  $region16: #{mtgnn_forward.3} parent=0 // pred_region
    _
  $region17: #{mtgnn_forward.3} parent=0 // pred_fallthru
    _
  // Predicated region
  $region18: #{mtgnn_forward.3} parent=0 // pred_check
    _
  $region19: #{mtgnn_forward.3} parent=0 // pred_check_branch
    %97 = sbr.rel (0) target = $region21
  $region20: #{mtgnn_forward.3} parent=0 // pred_region
    _
  $region21: #{mtgnn_forward.3} parent=0 // pred_fallthru
    _
  // Predicated region
  $region22: #{mtgnn_forward.3} parent=0 // pred_check
    _
  $region23: #{mtgnn_forward.3} parent=0 // pred_check_branch
    %99 = sbr.rel (0) target = $region25
  $region24: #{mtgnn_forward.3} parent=0 // pred_region
    _
  $region25: #{mtgnn_forward.3} parent=0 // pred_fallthru
    _
  // Predicated region
  $region26: #{mtgnn_forward.3} parent=0 // pred_check
    _
  $region27: #{mtgnn_forward.3} parent=0 // pred_check_branch
    %101 = sbr.rel (0) target = $region29
  $region28: #{mtgnn_forward.3} parent=0 // pred_region
    _
  $region29: #{mtgnn_forward.3} parent=0 // pred_fallthru
    _
  // Predicated region
  $region30: #{mtgnn_forward.3} parent=0 // pred_check
    _
  $region31: #{mtgnn_forward.3} parent=0 // pred_check_branch
    %103 = sbr.rel (0) target = $region33
  $region32: #{mtgnn_forward.3} parent=0 // pred_region
    _
  $region33: #{mtgnn_forward.3} parent=0 // pred_fallthru
    _
  // Predicated region
  $region34: #{mtgnn_forward.3} parent=0 // pred_check
    _
  $region35: #{mtgnn_forward.3} parent=0 // pred_check_branch
    %105 = sbr.rel (0) target = $region37
  $region36: #{mtgnn_forward.3} parent=0 // pred_region
    _
  $region37: #{mtgnn_forward.3} parent=0 // pred_fallthru
    _
  // Predicated region
  $region38: #{mtgnn_forward.3} parent=0 // pred_check
    _
  $region39: #{mtgnn_forward.3} parent=0 // pred_check_branch
    %107 = sbr.rel (0) target = $region41
  $region40: #{mtgnn_forward.3} parent=0 // pred_region
    _
  $region41: #{mtgnn_forward.3} parent=0 // pred_fallthru
    _
  // Predicated region
  $region42: #{mtgnn_forward.3} parent=0 // pred_check
    _
  $region43: #{mtgnn_forward.3} parent=0 // pred_check_branch
    %109 = sbr.rel (0) target = $region45
  $region44: #{mtgnn_forward.3} parent=0 // pred_region
    _
  $region45: #{mtgnn_forward.3} parent=0 // pred_fallthru
    _
  // Predicated region
  $region46: #{mtgnn_forward.3} parent=0 // pred_check
    _
  $region47: #{mtgnn_forward.3} parent=0 // pred_check_branch
    %111 = sbr.rel (0) target = $region49
  $region48: #{mtgnn_forward.3} parent=0 // pred_region
    _
  $region49: #{mtgnn_forward.3} parent=0 // pred_fallthru
    _
  // Predicated region
  $region50: #{mtgnn_forward.3} parent=0 // pred_check
    _
  $region51: #{mtgnn_forward.3} parent=0 // pred_check_branch
    %113 = sbr.rel (0) target = $region53
  $region52: #{mtgnn_forward.3} parent=0 // pred_region
    _
  $region53: #{mtgnn_forward.3} parent=0 // pred_fallthru
    _
  // Predicated region
  $region54: #{mtgnn_forward.3} parent=0 // pred_check
    _
  $region55: #{mtgnn_forward.3} parent=0 // pred_check_branch
    %115 = sbr.rel (0) target = $region57
  $region56: #{mtgnn_forward.3} parent=0 // pred_region
    _
  $region57: #{mtgnn_forward.3} parent=0 // pred_fallthru
    _
  // Predicated region
  $region58: #{mtgnn_forward.3} parent=0 // pred_check
    _
  $region59: #{mtgnn_forward.3} parent=0 // pred_check_branch
    %117 = sbr.rel (0) target = $region61
  $region60: #{mtgnn_forward.3} parent=0 // pred_region
    _
  $region61: #{mtgnn_forward.3} parent=0 // pred_fallthru
    _
  // Predicated region
  $region62: #{mtgnn_forward.3} parent=0 // pred_check
    _
  $region63: #{mtgnn_forward.3} parent=0 // pred_check_branch
    %119 = sbr.rel (0) target = $region65
  $region64: #{mtgnn_forward.3} parent=0 // pred_region
    _
  $region65: #{mtgnn_forward.3} parent=0 // pred_fallthru
    _
  // Predicated region
  $region66: #{mtgnn_forward.3} parent=0 // pred_check
    _
  $region67: #{mtgnn_forward.3} parent=0 // pred_check_branch
    %121 = sbr.rel (0) target = $region69
  $region68: #{mtgnn_forward.3} parent=0 // pred_region
    _
  $region69: #{mtgnn_forward.3} parent=0 // pred_fallthru
    _
  // Predicated region
  $region70: #{mtgnn_forward.3} parent=0 // pred_check
    _
  $region71: #{mtgnn_forward.3} parent=0 // pred_check_branch
    %123 = sbr.rel (0) target = $region73
  $region72: #{mtgnn_forward.3} parent=0 // pred_region
    _
  $region73: #{mtgnn_forward.3} parent=0 // pred_fallthru
    _
  // Predicated region
  $region74: #{mtgnn_forward.3} parent=0 // pred_check
    _
  $region75: #{mtgnn_forward.3} parent=0 // pred_check_branch
    %125 = sbr.rel (0) target = $region77
  $region76: #{mtgnn_forward.3} parent=0 // pred_region
    _
  $region77: #{mtgnn_forward.3} parent=0 // pred_fallthru
    _
  // Predicated region
  $region78: #{mtgnn_forward.3} parent=0 // pred_check
    _
  $region79: #{mtgnn_forward.3} parent=0 // pred_check_branch
    %127 = sbr.rel (0) target = $region81
  $region80: #{mtgnn_forward.3} parent=0 // pred_region
    _
  $region81: #{mtgnn_forward.3} parent=0 // pred_fallthru
    _
  // Predicated region
  $region82: #{mtgnn_forward.3} parent=0 // pred_check
    _
  $region83: #{mtgnn_forward.3} parent=0 // pred_check_branch
    %129 = sbr.rel (0) target = $region85
  $region84: #{mtgnn_forward.3} parent=0 // pred_region
    _
  $region85: #{mtgnn_forward.3} parent=0 // pred_fallthru
    _
  // Predicated region
  $region86: #{mtgnn_forward.3} parent=0 // pred_check
    _
  $region87: #{mtgnn_forward.3} parent=0 // pred_check_branch
    %131 = sbr.rel (0) target = $region89
  $region88: #{mtgnn_forward.3} parent=0 // pred_region
    _
  $region89: #{mtgnn_forward.3} parent=0 // pred_fallthru
    _
  // Predicated region
  $region90: #{mtgnn_forward.3} parent=0 // pred_check
    _
  $region91: #{mtgnn_forward.3} parent=0 // pred_check_branch
    %133 = sbr.rel (0) target = $region93
  $region92: #{mtgnn_forward.3} parent=0 // pred_region
    _
  $region93: #{mtgnn_forward.3} parent=0 // pred_fallthru
    _
  // Predicated region
  $region94: #{mtgnn_forward.3} parent=0 // pred_check
    _
  $region95: #{mtgnn_forward.3} parent=0 // pred_check_branch
    %135 = sbr.rel (0) target = $region97
  $region96: #{mtgnn_forward.3} parent=0 // pred_region
    _
  $region97: #{mtgnn_forward.3} parent=0 // pred_fallthru
    _
  // Predicated region
  $region98: #{mtgnn_forward.3} parent=0 // pred_check
    _
  $region99: #{mtgnn_forward.3} parent=0 // pred_check_branch
    %137 = sbr.rel (0) target = $region101
  $region100: #{mtgnn_forward.3} parent=0 // pred_region
    _
  $region101: #{mtgnn_forward.3} parent=0 // pred_fallthru
    _
  // Predicated region
  $region102: #{mtgnn_forward.3} parent=0 // pred_check
    _
  $region103: #{mtgnn_forward.3} parent=0 // pred_check_branch
    %139 = sbr.rel (0) target = $region105
  $region104: #{mtgnn_forward.3} parent=0 // pred_region
    _
  $region105: #{mtgnn_forward.3} parent=0 // pred_fallthru
    _
  // Predicated region
  $region106: #{mtgnn_forward.3} parent=0 // pred_check
    _
  $region107: #{mtgnn_forward.3} parent=0 // pred_check_branch
    %141 = sbr.rel (0) target = $region109
  $region108: #{mtgnn_forward.3} parent=0 // pred_region
    _
  $region109: #{mtgnn_forward.3} parent=0 // pred_fallthru
    _
  // Predicated region
  $region110: #{mtgnn_forward.3} parent=0 // pred_check
    _
  $region111: #{mtgnn_forward.3} parent=0 // pred_check_branch
    %143 = sbr.rel (0) target = $region113
  $region112: #{mtgnn_forward.3} parent=0 // pred_region
    _
  $region113: #{mtgnn_forward.3} parent=0 // pred_fallthru
    _
  // Predicated region
  $region114: #{mtgnn_forward.3} parent=0 // pred_check
    _
  $region115: #{mtgnn_forward.3} parent=0 // pred_check_branch
    %145 = sbr.rel (0) target = $region117
  $region116: #{mtgnn_forward.3} parent=0 // pred_region
    _
  $region117: #{mtgnn_forward.3} parent=0 // pred_fallthru
    _
  // Predicated region
  $region118: #{mtgnn_forward.3} parent=0 // pred_check
    _
  $region119: #{mtgnn_forward.3} parent=0 // pred_check_branch
    %147 = sbr.rel (0) target = $region121
  $region120: #{mtgnn_forward.3} parent=0 // pred_region
    _
  $region121: #{mtgnn_forward.3} parent=0 // pred_fallthru
    _
  // Predicated region
  $region122: #{mtgnn_forward.3} parent=0 // pred_check
    _
  $region123: #{mtgnn_forward.3} parent=0 // pred_check_branch
    %149 = sbr.rel (0) target = $region125
  $region124: #{mtgnn_forward.3} parent=0 // pred_region
    _
  $region125: #{mtgnn_forward.3} parent=0 // pred_fallthru
    _
  // Predicated region
  $region126: #{mtgnn_forward.3} parent=0 // pred_check
    _
  $region127: #{mtgnn_forward.3} parent=0 // pred_check_branch
    %151 = sbr.rel (0) target = $region129
  $region128: #{mtgnn_forward.3} parent=0 // pred_region
    _
  $region129: #{mtgnn_forward.3} parent=0 // pred_fallthru
    _
  // Predicated region
  $region130: #{mtgnn_forward.3} parent=0 // pred_check
    _
  $region131: #{mtgnn_forward.3} parent=0 // pred_check_branch
    %153 = sbr.rel (0) target = $region133
  $region132: #{mtgnn_forward.3} parent=0 // pred_region
    _
  $region133: #{mtgnn_forward.3} parent=0 // pred_fallthru
    _
  // Predicated region
  $region134: #{mtgnn_forward.3} parent=0 // pred_check
    _
  $region135: #{mtgnn_forward.3} parent=0 // pred_check_branch
    %155 = sbr.rel (0) target = $region137
  $region136: #{mtgnn_forward.3} parent=0 // pred_region
    _
  $region137: #{mtgnn_forward.3} parent=0 // pred_fallthru
    _
  // Predicated region
  $region138: #{mtgnn_forward.3} parent=0 // pred_check
    _
  $region139: #{mtgnn_forward.3} parent=0 // pred_check_branch
    %157 = sbr.rel (0) target = $region141
  $region140: #{mtgnn_forward.3} parent=0 // pred_region
    _
  $region141: #{mtgnn_forward.3} parent=0 // pred_fallthru
    _
  // Predicated region
  $region142: #{mtgnn_forward.3} parent=0 // pred_check
    _
  $region143: #{mtgnn_forward.3} parent=0 // pred_check_branch
    %159 = sbr.rel (0) target = $region145
  $region144: #{mtgnn_forward.3} parent=0 // pred_region
    _
  $region145: #{mtgnn_forward.3} parent=0 // pred_fallthru
    _
  // Predicated region
  $region146: #{mtgnn_forward.3} parent=0 // pred_check
    _
  $region147: #{mtgnn_forward.3} parent=0 // pred_check_branch
    %161 = sbr.rel (0) target = $region149
  $region148: #{mtgnn_forward.3} parent=0 // pred_region
    _
  $region149: #{mtgnn_forward.3} parent=0 // pred_fallthru
    _
  // Predicated region
  $region150: #{mtgnn_forward.3} parent=0 // pred_check
    _
  $region151: #{mtgnn_forward.3} parent=0 // pred_check_branch
    %163 = sbr.rel (0) target = $region153
  $region152: #{mtgnn_forward.3} parent=0 // pred_region
    _
  $region153: #{mtgnn_forward.3} parent=0 // pred_fallthru
    _
  // Predicated region
  $region154: #{mtgnn_forward.3} parent=0 // pred_check
    _
  $region155: #{mtgnn_forward.3} parent=0 // pred_check_branch
    %165 = sbr.rel (0) target = $region157
  $region156: #{mtgnn_forward.3} parent=0 // pred_region
    _
  $region157: #{mtgnn_forward.3} parent=0 // pred_fallthru
    _
  // Predicated region
  $region158: #{mtgnn_forward.3} parent=0 // pred_check
    _
  $region159: #{mtgnn_forward.3} parent=0 // pred_check_branch
    %167 = sbr.rel (0) target = $region161
  $region160: #{mtgnn_forward.3} parent=0 // pred_region
    _
  $region161: #{mtgnn_forward.3} parent=0 // pred_fallthru
    _
  // Predicated region
  $region162: #{mtgnn_forward.3} parent=0 // pred_check
    _
  $region163: #{mtgnn_forward.3} parent=0 // pred_check_branch
    %169 = sbr.rel (0) target = $region165
  $region164: #{mtgnn_forward.3} parent=0 // pred_region
    _
  $region165: #{mtgnn_forward.3} parent=0 // pred_fallthru
    _
  %v170 = vld [vmem:[%s81] sm:$0xff]
  %v171 = vld [vmem:[%s81 + $0x8] sm:$0xff]
  %v172 = vld [vmem:[%s1] sm:$0xff]
  %v173 = vld [vmem:[%s1 + $0x8] sm:$0x3]
  %v174 = vld [vmem:[%s43] sm:$0xff]
  %v175 = vld [vmem:[%s43 + $0x8] sm:$0xff]
  %177 = vset.pattern.permute.xlu0 0
  %178 = vperm.xlu0 %177, %v174
  %v179 = vpop.permute.xlu0 %178
  %182 = vset.pattern.permute.xlu0 0
  %183 = vperm.xlu0 %182, %v175
  %v184 = vpop.permute.xlu0 %183
  %v188 = vcombine.high %v172, %v172
  %v190 = vunpack.c.l.s4 1983009808
  %v191 = vunpack.c.0.s8 %v190
  %v192 = vlaneseq
  %v193 = vshrl.u32 %v192, 7
  %v194 = vsub.s32 %v191, %v193
  %v195 = vrot.slane %v172, %v194
  %v197 = vunpack.c.l.s4 1983009808
  %v198 = vunpack.c.0.s8 %v197
  %v199 = vlaneseq
  %v200 = vshrl.u32 %v199, 7
  %v201 = vsub.s32 %v198, %v200
  %v202 = vrot.slane %v188, %v201
  %v203 = vcombine.high %v195, %v195
  %v204 = vcombine.high %v202, %v202
  %v206 = vunpack.c.l.s4 1983009808
  %v207 = vunpack.c.0.s8 %v206
  %v208 = vlaneseq
  %v209 = vshrl.u32 %v208, 7
  %v210 = vsub.s32 %v207, %v209
  %v211 = vrot.slane %v173, %v210
  %vm212 = vcmask 15360
  %v214 = vsel %vm212, %v170, 0
  %v217 = vsel %vm212, %v171, 0
  %vm219 = vcmask 1041408
  %v220 = vsel %vm219, %v195, 0
  %v222 = vsel %vm219, %v203, 0
  %v224 = vsel %vm219, %v202, 0
  %v226 = vsel %vm219, %v204, 0
  %v228 = vsel %vm219, %v211, 0
  %230 = vmatprep.subr.mxu0 0.0
  %231 = vmatpush1.msra.mxu0 0.0
  %232 = vmatprep.subr.mxu0 0.0
  %233 = vmatpush1.msra.mxu0 0.0
  %234 = vmatprep.subr.mxu0 0.0
  %235 = vmatpush1.msra.mxu0 0.0
  %236 = vmatprep.subr.mxu0 0.0
  %237 = vmatpush1.msra.mxu0 0.0
  %238 = vmatprep.subr.mxu0 0.0
  %239 = vmatpush1.msra.mxu0 0.0
  %240 = vmatprep.subr.mxu0 0.0
  %241 = vmatpush1.msra.mxu0 0.0
  %242 = vmatprep.subr.mxu0 0.0
  %243 = vmatpush1.msra.mxu0 0.0
  %244 = vmatprep.subr.mxu0 0.0
  %245 = vmatpush1.msra.mxu0 0.0
  %246 = vmatprep.subr.mxu0 0.0
  %247 = vmatpush1.msra.mxu0 0.0
  %248 = vmatprep.subr.mxu0 0.0
  %249 = vmatpush1.msra.mxu0 0.0
  %250 = vmatprep.subr.mxu0 0.0
  %251 = vmatpush1.msra.mxu0 0.0
  %252 = vmatprep.subr.mxu0 0.0
  %253 = vmatpush1.msra.mxu0 0.0
  %254 = vmatprep.subr.mxu0 0.0
  %255 = vmatpush1.msra.mxu0 0.0
  %256 = vmatprep.subr.mxu0 0.0
  %257 = vmatpush1.msra.mxu0 0.0
  %258 = vmatprep.subr.mxu0 0.0
  %259 = vmatpush1.msra.mxu0 0.0
  %260 = vmatprep.subr.mxu0 %v222
  %261 = vmatpush1.msra.mxu0 %v220
  %262 = vmatprep.subr.mxu0 0.0
  %263 = vmatpush2.msra.mxu0 0.0
  %264 = vmatprep.subr.mxu0 0.0
  %265 = vmatpush2.msra.mxu0 0.0
  %266 = vmatprep.subr.mxu0 0.0
  %267 = vmatpush2.msra.mxu0 0.0
  %268 = vmatprep.subr.mxu0 0.0
  %269 = vmatpush2.msra.mxu0 0.0
  %270 = vmatprep.subr.mxu0 0.0
  %271 = vmatpush2.msra.mxu0 0.0
  %272 = vmatprep.subr.mxu0 0.0
  %273 = vmatpush2.msra.mxu0 0.0
  %274 = vmatprep.subr.mxu0 0.0
  %275 = vmatpush2.msra.mxu0 0.0
  %276 = vmatprep.subr.mxu0 0.0
  %277 = vmatpush2.msra.mxu0 0.0
  %278 = vmatprep.subr.mxu0 0.0
  %279 = vmatpush2.msra.mxu0 0.0
  %280 = vmatprep.subr.mxu0 0.0
  %281 = vmatpush2.msra.mxu0 0.0
  %282 = vmatprep.subr.mxu0 0.0
  %283 = vmatpush2.msra.mxu0 0.0
  %284 = vmatprep.subr.mxu0 0.0
  %285 = vmatpush2.msra.mxu0 0.0
  %286 = vmatprep.subr.mxu0 0.0
  %287 = vmatpush2.msra.mxu0 0.0
  %288 = vmatprep.subr.mxu0 0.0
  %289 = vmatpush2.msra.mxu0 0.0
  %290 = vmatprep.subr.mxu0 0.0
  %291 = vmatpush2.msra.mxu0 0.0
  %292 = vmatprep.subr.mxu0 0.0
  %293 = vmatpush2.msra.mxu0 0.0
  %294 = vmatprep.mubr.f32.mxu0 0.0
  %295 = vmatmul.mubr.f32.gmra.mxu0 %v214
  %v296 = vpop.f32.mrf.mxu0
  %v297 = vadd.f32 %v179, %v296
  %v298 = vpop.f32.mrf.mxu0
  %v299 = vadd.f32 %v179, %v298
  %300 = vmatprep.mubr.f32.mxu0 0.0
  %301 = vmatmul.mubr.f32.gmra.mxu0 %v217
  %v302 = vpop.f32.mrf.mxu0
  %v303 = vadd.f32 %v184, %v302
  %v304 = vpop.f32.mrf.mxu0
  %v305 = vadd.f32 %v184, %v304
  %306 = vdwg.mxu0
  %307 = vmatprep.subr.mxu0 0.0
  %308 = vmatpush1.msra.mxu0 0.0
  %309 = vmatprep.subr.mxu0 0.0
  %310 = vmatpush1.msra.mxu0 0.0
  %311 = vmatprep.subr.mxu0 0.0
  %312 = vmatpush1.msra.mxu0 0.0
  %313 = vmatprep.subr.mxu0 0.0
  %314 = vmatpush1.msra.mxu0 0.0
  %315 = vmatprep.subr.mxu0 0.0
  %316 = vmatpush1.msra.mxu0 0.0
  %317 = vmatprep.subr.mxu0 0.0
  %318 = vmatpush1.msra.mxu0 0.0
  %319 = vmatprep.subr.mxu0 0.0
  %320 = vmatpush1.msra.mxu0 0.0
  %321 = vmatprep.subr.mxu0 0.0
  %322 = vmatpush1.msra.mxu0 0.0
  %323 = vmatprep.subr.mxu0 0.0
  %324 = vmatpush1.msra.mxu0 0.0
  %325 = vmatprep.subr.mxu0 0.0
  %326 = vmatpush1.msra.mxu0 0.0
  %327 = vmatprep.subr.mxu0 0.0
  %328 = vmatpush1.msra.mxu0 0.0
  %329 = vmatprep.subr.mxu0 0.0
  %330 = vmatpush1.msra.mxu0 0.0
  %331 = vmatprep.subr.mxu0 0.0
  %332 = vmatpush1.msra.mxu0 0.0
  %333 = vmatprep.subr.mxu0 0.0
  %334 = vmatpush1.msra.mxu0 0.0
  %335 = vmatprep.subr.mxu0 0.0
  %336 = vmatpush1.msra.mxu0 0.0
  %337 = vmatprep.subr.mxu0 %v226
  %338 = vmatpush1.msra.mxu0 %v224
  %339 = vmatprep.subr.mxu0 0.0
  %340 = vmatpush2.msra.mxu0 0.0
  %341 = vmatprep.subr.mxu0 0.0
  %342 = vmatpush2.msra.mxu0 0.0
  %343 = vmatprep.subr.mxu0 0.0
  %344 = vmatpush2.msra.mxu0 0.0
  %345 = vmatprep.subr.mxu0 0.0
  %346 = vmatpush2.msra.mxu0 0.0
  %347 = vmatprep.subr.mxu0 0.0
  %348 = vmatpush2.msra.mxu0 0.0
  %349 = vmatprep.subr.mxu0 0.0
  %350 = vmatpush2.msra.mxu0 0.0
  %351 = vmatprep.subr.mxu0 0.0
  %352 = vmatpush2.msra.mxu0 0.0
  %353 = vmatprep.subr.mxu0 0.0
  %354 = vmatpush2.msra.mxu0 0.0
  %355 = vmatprep.subr.mxu0 0.0
  %356 = vmatpush2.msra.mxu0 0.0
  %357 = vmatprep.subr.mxu0 0.0
  %358 = vmatpush2.msra.mxu0 0.0
  %359 = vmatprep.subr.mxu0 0.0
  %360 = vmatpush2.msra.mxu0 0.0
  %361 = vmatprep.subr.mxu0 0.0
  %362 = vmatpush2.msra.mxu0 0.0
  %363 = vmatprep.subr.mxu0 0.0
  %364 = vmatpush2.msra.mxu0 0.0
  %365 = vmatprep.subr.mxu0 0.0
  %366 = vmatpush2.msra.mxu0 0.0
  %367 = vmatprep.subr.mxu0 0.0
  %368 = vmatpush2.msra.mxu0 0.0
  %369 = vmatprep.subr.mxu0 0.0
  %370 = vmatpush2.msra.mxu0 0.0
  %371 = vmatprep.mubr.f32.mxu0 0.0
  %372 = vmatmul.mubr.f32.gmra.mxu0 %v214
  %v373 = vpop.f32.mrf.mxu0
  %v374 = vadd.f32 %v179, %v373
  %v375 = vpop.f32.mrf.mxu0
  %v376 = vadd.f32 %v179, %v375
  %377 = vmatprep.mubr.f32.mxu0 0.0
  %378 = vmatmul.mubr.f32.gmra.mxu0 %v217
  %v379 = vpop.f32.mrf.mxu0
  %v380 = vadd.f32 %v184, %v379
  %v381 = vpop.f32.mrf.mxu0
  %v382 = vadd.f32 %v184, %v381
  %383 = vdwg.mxu0
  %384 = vmatprep.subr.mxu0 0.0
  %385 = vmatpush1.msra.mxu0 0.0
  %386 = vmatprep.subr.mxu0 0.0
  %387 = vmatpush1.msra.mxu0 0.0
  %388 = vmatprep.subr.mxu0 0.0
  %389 = vmatpush1.msra.mxu0 0.0
  %390 = vmatprep.subr.mxu0 0.0
  %391 = vmatpush1.msra.mxu0 0.0
  %392 = vmatprep.subr.mxu0 0.0
  %393 = vmatpush1.msra.mxu0 0.0
  %394 = vmatprep.subr.mxu0 0.0
  %395 = vmatpush1.msra.mxu0 0.0
  %396 = vmatprep.subr.mxu0 0.0
  %397 = vmatpush1.msra.mxu0 0.0
  %398 = vmatprep.subr.mxu0 0.0
  %399 = vmatpush1.msra.mxu0 0.0
  %400 = vmatprep.subr.mxu0 0.0
  %401 = vmatpush1.msra.mxu0 0.0
  %402 = vmatprep.subr.mxu0 0.0
  %403 = vmatpush1.msra.mxu0 0.0
  %404 = vmatprep.subr.mxu0 0.0
  %405 = vmatpush1.msra.mxu0 0.0
  %406 = vmatprep.subr.mxu0 0.0
  %407 = vmatpush1.msra.mxu0 0.0
  %408 = vmatprep.subr.mxu0 0.0
  %409 = vmatpush1.msra.mxu0 0.0
  %410 = vmatprep.subr.mxu0 0.0
  %411 = vmatpush1.msra.mxu0 0.0
  %412 = vmatprep.subr.mxu0 0.0
  %413 = vmatpush1.msra.mxu0 0.0
  %414 = vmatprep.subr.mxu0 0.0
  %415 = vmatpush1.msra.mxu0 %v228
  %416 = vmatprep.subr.mxu0 0.0
  %417 = vmatpush2.msra.mxu0 0.0
  %418 = vmatprep.subr.mxu0 0.0
  %419 = vmatpush2.msra.mxu0 0.0
  %420 = vmatprep.subr.mxu0 0.0
  %421 = vmatpush2.msra.mxu0 0.0
  %422 = vmatprep.subr.mxu0 0.0
  %423 = vmatpush2.msra.mxu0 0.0
  %424 = vmatprep.subr.mxu0 0.0
  %425 = vmatpush2.msra.mxu0 0.0
  %426 = vmatprep.subr.mxu0 0.0
  %427 = vmatpush2.msra.mxu0 0.0
  %428 = vmatprep.subr.mxu0 0.0
  %429 = vmatpush2.msra.mxu0 0.0
  %430 = vmatprep.subr.mxu0 0.0
  %431 = vmatpush2.msra.mxu0 0.0
  %432 = vmatprep.subr.mxu0 0.0
  %433 = vmatpush2.msra.mxu0 0.0
  %434 = vmatprep.subr.mxu0 0.0
  %435 = vmatpush2.msra.mxu0 0.0
  %436 = vmatprep.subr.mxu0 0.0
  %437 = vmatpush2.msra.mxu0 0.0
  %438 = vmatprep.subr.mxu0 0.0
  %439 = vmatpush2.msra.mxu0 0.0
  %440 = vmatprep.subr.mxu0 0.0
  %441 = vmatpush2.msra.mxu0 0.0
  %442 = vmatprep.subr.mxu0 0.0
  %443 = vmatpush2.msra.mxu0 0.0
  %444 = vmatprep.subr.mxu0 0.0
  %445 = vmatpush2.msra.mxu0 0.0
  %446 = vmatprep.subr.mxu0 0.0
  %447 = vmatpush2.msra.mxu0 0.0
  %448 = vmatprep.mubr.f32.mxu0 0.0
  %449 = vmatmul.mubr.f32.gmra.mxu0 %v214
  %v450 = vpop.f32.mrf.mxu0
  %v451 = vadd.f32 %v179, %v450
  %v452 = vpop.f32.mrf.mxu0
  %453 = vmatprep.mubr.f32.mxu0 0.0
  %454 = vmatmul.mubr.f32.gmra.mxu0 %v217
  %v455 = vpop.f32.mrf.mxu0
  %v456 = vadd.f32 %v184, %v455
  %v457 = vpop.f32.mrf.mxu0
  %458 = vdwg.mxu0
  %v459 = vld [vmem:[%s71] sm:$0xff]
  %v460 = vld [vmem:[%s71 + $0x8] sm:$0xff]
  %v461 = vld [vmem:[%s71 + $0x10] sm:$0xff]
  %v462 = vld [vmem:[%s71 + $0x18] sm:$0xff]
  %v463 = vld [vmem:[%s3] sm:$0xff]
  %v464 = vld [vmem:[%s3 + $0x8] sm:$0xff]
  %v465 = vld [vmem:[%s3 + $0x10] sm:$0xff]
  %v466 = vld [vmem:[%s3 + $0x18] sm:$0xff]
  %v467 = vld [vmem:[%s3 + $0x20] sm:$0x3f]
  %v468 = vld [vmem:[%s33] sm:$0xff]
  %v469 = vld [vmem:[%s33 + $0x8] sm:$0xff]
  %v470 = vld [vmem:[%s33 + $0x10] sm:$0xff]
  %v471 = vld [vmem:[%s33 + $0x18] sm:$0xff]
  %473 = vset.pattern.permute.xlu0 0
  %474 = vperm.xlu0 %473, %v468
  %v475 = vpop.permute.xlu0 %474
  %478 = vset.pattern.permute.xlu0 0
  %479 = vperm.xlu0 %478, %v469
  %v480 = vpop.permute.xlu0 %479
  %483 = vset.pattern.permute.xlu0 0
  %484 = vperm.xlu0 %483, %v470
  %v485 = vpop.permute.xlu0 %484
  %488 = vset.pattern.permute.xlu0 0
  %489 = vperm.xlu0 %488, %v471
  %v490 = vpop.permute.xlu0 %489
  %vm492 = vcmask 310272
  %v494 = vsel %vm492, %v459, 0
  %v497 = vsel %vm492, %v460, 0
  %v500 = vsel %vm492, %v461, 0
  %v503 = vsel %vm492, %v462, 0
  %vm505 = vcmask 1045504
  %v507 = vsel %vm505, %v467, 0
  %509 = vmatprep.subr.mxu0 0.0
  %510 = vmatpush1.msra.mxu0 0.0
  %511 = vmatprep.subr.mxu0 0.0
  %512 = vmatpush1.msra.mxu0 0.0
  %513 = vmatprep.subr.mxu0 0.0
  %514 = vmatpush1.msra.mxu0 0.0
  %515 = vmatprep.subr.mxu0 0.0
  %516 = vmatpush1.msra.mxu0 0.0
  %517 = vmatprep.subr.mxu0 0.0
  %518 = vmatpush1.msra.mxu0 0.0
  %519 = vmatprep.subr.mxu0 0.0
  %520 = vmatpush1.msra.mxu0 0.0
  %521 = vmatprep.subr.mxu0 0.0
  %522 = vmatpush1.msra.mxu0 0.0
  %523 = vmatprep.subr.mxu0 0.0
  %524 = vmatpush1.msra.mxu0 0.0
  %525 = vmatprep.subr.mxu0 0.0
  %526 = vmatpush1.msra.mxu0 0.0
  %527 = vmatprep.subr.mxu0 0.0
  %528 = vmatpush1.msra.mxu0 0.0
  %529 = vmatprep.subr.mxu0 0.0
  %530 = vmatpush1.msra.mxu0 0.0
  %531 = vmatprep.subr.mxu0 0.0
  %532 = vmatpush1.msra.mxu0 %v507
  %533 = vmatprep.subr.mxu0 0.0
  %534 = vmatpush1.msra.mxu0 %v466
  %535 = vmatprep.subr.mxu0 0.0
  %536 = vmatpush1.msra.mxu0 %v465
  %537 = vmatprep.subr.mxu0 0.0
  %538 = vmatpush1.msra.mxu0 %v464
  %539 = vmatprep.subr.mxu0 0.0
  %540 = vmatpush1.msra.mxu0 %v463
  %541 = vmatprep.subr.mxu0 0.0
  %542 = vmatpush2.msra.mxu0 0.0
  %543 = vmatprep.subr.mxu0 0.0
  %544 = vmatpush2.msra.mxu0 0.0
  %545 = vmatprep.subr.mxu0 0.0
  %546 = vmatpush2.msra.mxu0 0.0
  %547 = vmatprep.subr.mxu0 0.0
  %548 = vmatpush2.msra.mxu0 0.0
  %549 = vmatprep.subr.mxu0 0.0
  %550 = vmatpush2.msra.mxu0 0.0
  %551 = vmatprep.subr.mxu0 0.0
  %552 = vmatpush2.msra.mxu0 0.0
  %553 = vmatprep.subr.mxu0 0.0
  %554 = vmatpush2.msra.mxu0 0.0
  %555 = vmatprep.subr.mxu0 0.0
  %556 = vmatpush2.msra.mxu0 0.0
  %557 = vmatprep.subr.mxu0 0.0
  %558 = vmatpush2.msra.mxu0 0.0
  %559 = vmatprep.subr.mxu0 0.0
  %560 = vmatpush2.msra.mxu0 0.0
  %561 = vmatprep.subr.mxu0 0.0
  %562 = vmatpush2.msra.mxu0 0.0
  %563 = vmatprep.subr.mxu0 0.0
  %564 = vmatpush2.msra.mxu0 0.0
  %565 = vmatprep.subr.mxu0 0.0
  %566 = vmatpush2.msra.mxu0 0.0
  %567 = vmatprep.subr.mxu0 0.0
  %568 = vmatpush2.msra.mxu0 0.0
  %569 = vmatprep.subr.mxu0 0.0
  %570 = vmatpush2.msra.mxu0 0.0
  %571 = vmatprep.subr.mxu0 0.0
  %572 = vmatpush2.msra.mxu0 0.0
  %573 = vmatprep.mubr.f32.mxu0 0.0
  %574 = vmatmul.mubr.f32.gmra.mxu0 %v494
  %v575 = vpop.f32.mrf.mxu0
  %v576 = vadd.f32 %v475, %v575
  %v577 = vpop.f32.mrf.mxu0
  %578 = vmatprep.mubr.f32.mxu0 0.0
  %579 = vmatmul.mubr.f32.gmra.mxu0 %v497
  %v580 = vpop.f32.mrf.mxu0
  %v581 = vadd.f32 %v480, %v580
  %v582 = vpop.f32.mrf.mxu0
  %583 = vmatprep.mubr.f32.mxu0 0.0
  %584 = vmatmul.mubr.f32.gmra.mxu0 %v500
  %v585 = vpop.f32.mrf.mxu0
  %v586 = vadd.f32 %v485, %v585
  %v587 = vpop.f32.mrf.mxu0
  %588 = vmatprep.mubr.f32.mxu0 0.0
  %589 = vmatmul.mubr.f32.gmra.mxu0 %v503
  %v590 = vpop.f32.mrf.mxu0
  %v591 = vadd.f32 %v490, %v590
  %v592 = vpop.f32.mrf.mxu0
  %593 = vdwg.mxu0
  %602 = vrot.lane.b32.xlu0 %v297, 96
  %v603 = vpop.permute.xlu0 %602
  %604 = vrot.lane.b32.xlu0 %v299, 96
  %v605 = vpop.permute.xlu0 %604
  %606 = vrot.lane.b32.xlu0 %v374, 96
  %v607 = vpop.permute.xlu0 %606
  %608 = vrot.lane.b32.xlu0 %v376, 96
  %v609 = vpop.permute.xlu0 %608
  %610 = vrot.lane.b32.xlu0 %v303, 96
  %v611 = vpop.permute.xlu0 %610
  %612 = vrot.lane.b32.xlu0 %v305, 96
  %v613 = vpop.permute.xlu0 %612
  %614 = vrot.lane.b32.xlu0 %v380, 96
  %v615 = vpop.permute.xlu0 %614
  %616 = vrot.lane.b32.xlu0 %v382, 96
  %v617 = vpop.permute.xlu0 %616
  %vm618 = vcmask 785408
  %v619 = vsel %vm618, %v603, %v605
  %v620 = vsel %vm618, %v605, %v607
  %v621 = vsel %vm618, %v607, %v609
  %v622 = vsel %vm618, %v611, %v613
  %v623 = vsel %vm618, %v613, %v615
  %v624 = vsel %vm618, %v615, %v617
  %633 = vrot.lane.b32.xlu0 %v297, 64
  %v634 = vpop.permute.xlu0 %633
  %635 = vrot.lane.b32.xlu0 %v299, 64
  %v636 = vpop.permute.xlu0 %635
  %637 = vrot.lane.b32.xlu0 %v374, 64
  %v638 = vpop.permute.xlu0 %637
  %639 = vrot.lane.b32.xlu0 %v376, 64
  %v640 = vpop.permute.xlu0 %639
  %641 = vrot.lane.b32.xlu0 %v303, 64
  %v642 = vpop.permute.xlu0 %641
  %643 = vrot.lane.b32.xlu0 %v305, 64
  %v644 = vpop.permute.xlu0 %643
  %645 = vrot.lane.b32.xlu0 %v380, 64
  %v646 = vpop.permute.xlu0 %645
  %647 = vrot.lane.b32.xlu0 %v382, 64
  %v648 = vpop.permute.xlu0 %647
  %vm649 = vcmask 523264
  %v650 = vsel %vm649, %v634, %v636
  %v651 = vsel %vm649, %v636, %v638
  %v652 = vsel %vm649, %v638, %v640
  %v653 = vsel %vm649, %v642, %v644
  %v654 = vsel %vm649, %v644, %v646
  %v655 = vsel %vm649, %v646, %v648
  %664 = vrot.lane.b32.xlu0 %v297, 32
  %v665 = vpop.permute.xlu0 %664
  %666 = vrot.lane.b32.xlu0 %v299, 32
  %v667 = vpop.permute.xlu0 %666
  %668 = vrot.lane.b32.xlu0 %v374, 32
  %v669 = vpop.permute.xlu0 %668
  %670 = vrot.lane.b32.xlu0 %v376, 32
  %v671 = vpop.permute.xlu0 %670
  %672 = vrot.lane.b32.xlu0 %v303, 32
  %v673 = vpop.permute.xlu0 %672
  %674 = vrot.lane.b32.xlu0 %v305, 32
  %v675 = vpop.permute.xlu0 %674
  %676 = vrot.lane.b32.xlu0 %v380, 32
  %v677 = vpop.permute.xlu0 %676
  %678 = vrot.lane.b32.xlu0 %v382, 32
  %v679 = vpop.permute.xlu0 %678
  %vm680 = vcmask 261120
  %v681 = vsel %vm680, %v665, %v667
  %v682 = vsel %vm680, %v667, %v669
  %v683 = vsel %vm680, %v669, %v671
  %v684 = vsel %vm680, %v673, %v675
  %v685 = vsel %vm680, %v675, %v677
  %v686 = vsel %vm680, %v677, %v679
  %697 = vrot.lane.b32.xlu0 %v451, 96
  %v698 = vpop.permute.xlu0 %697
  %699 = vrot.lane.b32.xlu0 %v456, 96
  %v700 = vpop.permute.xlu0 %699
  %v701 = vsel %vm618, %v609, %v698
  %v702 = vsel %vm618, %v617, %v700
  %707 = vrot.lane.b32.xlu0 %v451, 64
  %v708 = vpop.permute.xlu0 %707
  %709 = vrot.lane.b32.xlu0 %v456, 64
  %v710 = vpop.permute.xlu0 %709
  %v711 = vsel %vm649, %v640, %v708
  %v712 = vsel %vm649, %v648, %v710
  %v717 = vld [vmem:[%s53] sm:$0xff]
  %v718 = vld [vmem:[%s53 + $0x8] sm:$0xff]
  %v719 = vld [vmem:[%s53 + $0x10] sm:$0xff]
  %v720 = vld [vmem:[%s53 + $0x18] sm:$0xff]
  %v721 = vld [vmem:[%s15] sm:$0xff]
  %v722 = vld [vmem:[%s15 + $0x8] sm:$0xff]
  %v723 = vld [vmem:[%s15 + $0x10] sm:$0xff]
  %v724 = vld [vmem:[%s15 + $0x18] sm:$0xff]
  %726 = vset.pattern.permute.xlu0 0
  %727 = vperm.xlu0 %726, %v721
  %v728 = vpop.permute.xlu0 %727
  %731 = vset.pattern.permute.xlu0 0
  %732 = vperm.xlu0 %731, %v722
  %v733 = vpop.permute.xlu0 %732
  %736 = vset.pattern.permute.xlu0 0
  %737 = vperm.xlu0 %736, %v723
  %v738 = vpop.permute.xlu0 %737
  %741 = vset.pattern.permute.xlu0 0
  %742 = vperm.xlu0 %741, %v724
  %v743 = vpop.permute.xlu0 %742
  %vm745 = vcmask 916480
  %v747 = vsel %vm745, %v717, 0
  %v750 = vsel %vm745, %v718, 0
  %v753 = vsel %vm745, %v719, 0
  %v756 = vsel %vm745, %v720, 0
  %758 = vmatprep.subr.mxu0 0.0
  %759 = vmatpush1.msra.mxu0 0.0
  %760 = vmatprep.subr.mxu0 0.0
  %761 = vmatpush1.msra.mxu0 0.0
  %762 = vmatprep.subr.mxu0 %v655
  %763 = vmatpush1.msra.mxu0 %v654
  %764 = vmatprep.subr.mxu0 %v652
  %765 = vmatpush1.msra.mxu0 %v651
  %766 = vmatprep.subr.mxu0 %v624
  %767 = vmatpush1.msra.mxu0 %v623
  %768 = vmatprep.subr.mxu0 %v621
  %769 = vmatpush1.msra.mxu0 %v620
  %770 = vmatprep.subr.mxu0 %v380
  %771 = vmatpush1.msra.mxu0 %v305
  %772 = vmatprep.subr.mxu0 %v374
  %773 = vmatpush1.msra.mxu0 %v299
  %774 = vmatprep.subr.mxu0 %v685
  %775 = vmatpush1.msra.mxu0 %v684
  %776 = vmatprep.subr.mxu0 %v682
  %777 = vmatpush1.msra.mxu0 %v681
  %778 = vmatprep.subr.mxu0 %v654
  %779 = vmatpush1.msra.mxu0 %v653
  %780 = vmatprep.subr.mxu0 %v651
  %781 = vmatpush1.msra.mxu0 %v650
  %782 = vmatprep.subr.mxu0 %v623
  %783 = vmatpush1.msra.mxu0 %v622
  %784 = vmatprep.subr.mxu0 %v620
  %785 = vmatpush1.msra.mxu0 %v619
  %786 = vmatprep.subr.mxu0 %v305
  %787 = vmatpush1.msra.mxu0 %v303
  %788 = vmatprep.subr.mxu0 %v299
  %789 = vmatpush1.msra.mxu0 %v297
  %790 = vmatprep.subr.mxu0 0.0
  %791 = vmatpush2.msra.mxu0 0.0
  %792 = vmatprep.subr.mxu0 0.0
  %793 = vmatpush2.msra.mxu0 0.0
  %794 = vmatprep.subr.mxu0 0.0
  %795 = vmatpush2.msra.mxu0 0.0
  %796 = vmatprep.subr.mxu0 0.0
  %797 = vmatpush2.msra.mxu0 0.0
  %798 = vmatprep.subr.mxu0 0.0
  %799 = vmatpush2.msra.mxu0 0.0
  %800 = vmatprep.subr.mxu0 0.0
  %801 = vmatpush2.msra.mxu0 0.0
  %802 = vmatprep.subr.mxu0 0.0
  %803 = vmatpush2.msra.mxu0 0.0
  %804 = vmatprep.subr.mxu0 0.0
  %805 = vmatpush2.msra.mxu0 0.0
  %806 = vmatprep.subr.mxu0 0.0
  %807 = vmatpush2.msra.mxu0 0.0
  %808 = vmatprep.subr.mxu0 0.0
  %809 = vmatpush2.msra.mxu0 0.0
  %810 = vmatprep.subr.mxu0 0.0
  %811 = vmatpush2.msra.mxu0 0.0
  %812 = vmatprep.subr.mxu0 0.0
  %813 = vmatpush2.msra.mxu0 0.0
  %814 = vmatprep.subr.mxu0 0.0
  %815 = vmatpush2.msra.mxu0 0.0
  %816 = vmatprep.subr.mxu0 0.0
  %817 = vmatpush2.msra.mxu0 0.0
  %818 = vmatprep.subr.mxu0 0.0
  %819 = vmatpush2.msra.mxu0 0.0
  %820 = vmatprep.subr.mxu0 0.0
  %821 = vmatpush2.msra.mxu0 0.0
  %822 = vmatprep.mubr.f32.mxu0 0.0
  %823 = vmatmul.mubr.f32.gmra.mxu0 %v747
  %v824 = vpop.f32.mrf.mxu0
  %v825 = vadd.f32 %v728, %v824
  %v826 = vpop.f32.mrf.mxu0
  %v827 = vadd.f32 %v728, %v826
  %828 = vmatprep.mubr.f32.mxu0 0.0
  %829 = vmatmul.mubr.f32.gmra.mxu0 %v750
  %v830 = vpop.f32.mrf.mxu0
  %v831 = vadd.f32 %v733, %v830
  %v832 = vpop.f32.mrf.mxu0
  %v833 = vadd.f32 %v733, %v832
  %834 = vmatprep.mubr.f32.mxu0 0.0
  %835 = vmatmul.mubr.f32.gmra.mxu0 %v753
  %v836 = vpop.f32.mrf.mxu0
  %v837 = vadd.f32 %v738, %v836
  %v838 = vpop.f32.mrf.mxu0
  %v839 = vadd.f32 %v738, %v838
  %840 = vmatprep.mubr.f32.mxu0 0.0
  %841 = vmatmul.mubr.f32.gmra.mxu0 %v756
  %v842 = vpop.f32.mrf.mxu0
  %v843 = vadd.f32 %v743, %v842
  %v844 = vpop.f32.mrf.mxu0
  %v845 = vadd.f32 %v743, %v844
  %846 = vdwg.mxu0
  %847 = vmatprep.subr.mxu0 0.0
  %848 = vmatpush1.msra.mxu0 0.0
  %849 = vmatprep.subr.mxu0 0.0
  %850 = vmatpush1.msra.mxu0 0.0
  %851 = vmatprep.subr.mxu0 %v710
  %852 = vmatpush1.msra.mxu0 %v712
  %853 = vmatprep.subr.mxu0 %v708
  %854 = vmatpush1.msra.mxu0 %v711
  %855 = vmatprep.subr.mxu0 %v700
  %856 = vmatpush1.msra.mxu0 %v702
  %857 = vmatprep.subr.mxu0 %v698
  %858 = vmatpush1.msra.mxu0 %v701
  %859 = vmatprep.subr.mxu0 %v456
  %860 = vmatpush1.msra.mxu0 %v382
  %861 = vmatprep.subr.mxu0 %v451
  %862 = vmatpush1.msra.mxu0 %v376
  %863 = vmatprep.subr.mxu0 %v679
  %864 = vmatpush1.msra.mxu0 %v686
  %865 = vmatprep.subr.mxu0 %v671
  %866 = vmatpush1.msra.mxu0 %v683
  %867 = vmatprep.subr.mxu0 %v648
  %868 = vmatpush1.msra.mxu0 %v655
  %869 = vmatprep.subr.mxu0 %v640
  %870 = vmatpush1.msra.mxu0 %v652
  %871 = vmatprep.subr.mxu0 %v617
  %872 = vmatpush1.msra.mxu0 %v624
  %873 = vmatprep.subr.mxu0 %v609
  %874 = vmatpush1.msra.mxu0 %v621
  %875 = vmatprep.subr.mxu0 %v382
  %876 = vmatpush1.msra.mxu0 %v380
  %877 = vmatprep.subr.mxu0 %v376
  %878 = vmatpush1.msra.mxu0 %v374
  %879 = vmatprep.subr.mxu0 0.0
  %880 = vmatpush2.msra.mxu0 0.0
  %881 = vmatprep.subr.mxu0 0.0
  %882 = vmatpush2.msra.mxu0 0.0
  %883 = vmatprep.subr.mxu0 0.0
  %884 = vmatpush2.msra.mxu0 0.0
  %885 = vmatprep.subr.mxu0 0.0
  %886 = vmatpush2.msra.mxu0 0.0
  %887 = vmatprep.subr.mxu0 0.0
  %888 = vmatpush2.msra.mxu0 0.0
  %889 = vmatprep.subr.mxu0 0.0
  %890 = vmatpush2.msra.mxu0 0.0
  %891 = vmatprep.subr.mxu0 0.0
  %892 = vmatpush2.msra.mxu0 0.0
  %893 = vmatprep.subr.mxu0 0.0
  %894 = vmatpush2.msra.mxu0 0.0
  %895 = vmatprep.subr.mxu0 0.0
  %896 = vmatpush2.msra.mxu0 0.0
  %897 = vmatprep.subr.mxu0 0.0
  %898 = vmatpush2.msra.mxu0 0.0
  %899 = vmatprep.subr.mxu0 0.0
  %900 = vmatpush2.msra.mxu0 0.0
  %901 = vmatprep.subr.mxu0 0.0
  %902 = vmatpush2.msra.mxu0 0.0
  %903 = vmatprep.subr.mxu0 0.0
  %904 = vmatpush2.msra.mxu0 0.0
  %905 = vmatprep.subr.mxu0 0.0
  %906 = vmatpush2.msra.mxu0 0.0
  %907 = vmatprep.subr.mxu0 0.0
  %908 = vmatpush2.msra.mxu0 0.0
  %909 = vmatprep.subr.mxu0 0.0
  %910 = vmatpush2.msra.mxu0 0.0
  %911 = vmatprep.mubr.f32.mxu0 0.0
  %912 = vmatmul.mubr.f32.gmra.mxu0 %v747
  %v913 = vpop.f32.mrf.mxu0
  %v914 = vadd.f32 %v728, %v913
  %v915 = vpop.f32.mrf.mxu0
  %v916 = vadd.f32 %v728, %v915
  %917 = vmatprep.mubr.f32.mxu0 0.0
  %918 = vmatmul.mubr.f32.gmra.mxu0 %v750
  %v919 = vpop.f32.mrf.mxu0
  %v920 = vadd.f32 %v733, %v919
  %v921 = vpop.f32.mrf.mxu0
  %v922 = vadd.f32 %v733, %v921
  %923 = vmatprep.mubr.f32.mxu0 0.0
  %924 = vmatmul.mubr.f32.gmra.mxu0 %v753
  %v925 = vpop.f32.mrf.mxu0
  %v926 = vadd.f32 %v738, %v925
  %v927 = vpop.f32.mrf.mxu0
  %v928 = vadd.f32 %v738, %v927
  %929 = vmatprep.mubr.f32.mxu0 0.0
  %930 = vmatmul.mubr.f32.gmra.mxu0 %v756
  %v931 = vpop.f32.mrf.mxu0
  %v932 = vadd.f32 %v743, %v931
  %v933 = vpop.f32.mrf.mxu0
  %v934 = vadd.f32 %v743, %v933
  %935 = vdwg.mxu0
  %v936 = vtanh.pop %v825
  %v937 = vtanh.pop %v827
  %v938 = vtanh.pop %v914
  %v939 = vtanh.pop %v916
  %v940 = vtanh.pop %v831
  %v941 = vtanh.pop %v833
  %v942 = vtanh.pop %v920
  %v943 = vtanh.pop %v922
  %v944 = vxor.u32 %v837, 2147483648
  %v945 = vxor.u32 %v839, 2147483648
  %v946 = vxor.u32 %v926, 2147483648
  %v947 = vxor.u32 %v928, 2147483648
  %v948 = vxor.u32 %v843, 2147483648
  %v949 = vxor.u32 %v845, 2147483648
  %v950 = vxor.u32 %v932, 2147483648
  %v951 = vxor.u32 %v934, 2147483648
  %v952 = vmul.f32 %v944, 1.442695
  %v953 = vpow.pop %v952
  %v954 = vmul.f32 %v945, 1.442695
  %v955 = vpow.pop %v954
  %v956 = vmul.f32 %v946, 1.442695
  %v957 = vpow.pop %v956
  %v958 = vmul.f32 %v947, 1.442695
  %v959 = vpow.pop %v958
  %v960 = vmul.f32 %v948, 1.442695
  %v961 = vpow.pop %v960
  %v962 = vmul.f32 %v949, 1.442695
  %v963 = vpow.pop %v962
  %v964 = vmul.f32 %v950, 1.442695
  %v965 = vpow.pop %v964
  %v966 = vmul.f32 %v951, 1.442695
  %v967 = vpow.pop %v966
  %v968 = vadd.f32 %v953, 1.0
  %v969 = vadd.f32 %v955, 1.0
  %v970 = vadd.f32 %v957, 1.0
  %v971 = vadd.f32 %v959, 1.0
  %v972 = vadd.f32 %v961, 1.0
  %v973 = vadd.f32 %v963, 1.0
  %v974 = vadd.f32 %v965, 1.0
  %v975 = vadd.f32 %v967, 1.0
  %v976 = vrcp.pop %v968
  %v977 = vmul.f32 1.0, %v976
  %v978 = vrcp.pop %v969
  %v979 = vmul.f32 1.0, %v978
  %v980 = vrcp.pop %v970
  %v981 = vmul.f32 1.0, %v980
  %v982 = vrcp.pop %v971
  %v983 = vmul.f32 1.0, %v982
  %v984 = vrcp.pop %v972
  %v985 = vmul.f32 1.0, %v984
  %v986 = vrcp.pop %v973
  %v987 = vmul.f32 1.0, %v986
  %v988 = vrcp.pop %v974
  %v989 = vmul.f32 1.0, %v988
  %v990 = vrcp.pop %v975
  %v991 = vmul.f32 1.0, %v990
  %v992 = vmul.f32 %v936, %v977
  %v993 = vmul.f32 %v937, %v979
  %v994 = vmul.f32 %v938, %v981
  %v995 = vmul.f32 %v939, %v983
  %v996 = vmul.f32 %v940, %v985
  %v997 = vmul.f32 %v941, %v987
  %v998 = vmul.f32 %v942, %v989
  %v999 = vmul.f32 %v943, %v991
  %1002 = vrot.lane.b32.xlu0 %v992, 96
  %v1003 = vpop.permute.xlu0 %1002
  %1004 = vrot.lane.b32.xlu0 %v996, 96
  %v1005 = vpop.permute.xlu0 %1004
  %1008 = vrot.lane.b32.xlu0 %v992, 64
  %v1009 = vpop.permute.xlu0 %1008
  %1010 = vrot.lane.b32.xlu0 %v996, 64
  %v1011 = vpop.permute.xlu0 %1010
  %1014 = vrot.lane.b32.xlu0 %v992, 32
  %v1015 = vpop.permute.xlu0 %1014
  %1016 = vrot.lane.b32.xlu0 %v996, 32
  %v1017 = vpop.permute.xlu0 %1016
  %1022 = vrot.lane.b32.xlu0 %v993, 96
  %v1023 = vpop.permute.xlu0 %1022
  %1024 = vrot.lane.b32.xlu0 %v997, 96
  %v1025 = vpop.permute.xlu0 %1024
  %1028 = vrot.lane.b32.xlu0 %v993, 64
  %v1029 = vpop.permute.xlu0 %1028
  %1030 = vrot.lane.b32.xlu0 %v997, 64
  %v1031 = vpop.permute.xlu0 %1030
  %1034 = vrot.lane.b32.xlu0 %v993, 32
  %v1035 = vpop.permute.xlu0 %1034
  %1036 = vrot.lane.b32.xlu0 %v997, 32
  %v1037 = vpop.permute.xlu0 %1036
  %1042 = vrot.lane.b32.xlu0 %v994, 96
  %v1043 = vpop.permute.xlu0 %1042
  %1044 = vrot.lane.b32.xlu0 %v998, 96
  %v1045 = vpop.permute.xlu0 %1044
  %1048 = vrot.lane.b32.xlu0 %v994, 64
  %v1049 = vpop.permute.xlu0 %1048
  %1050 = vrot.lane.b32.xlu0 %v998, 64
  %v1051 = vpop.permute.xlu0 %1050
  %1054 = vrot.lane.b32.xlu0 %v994, 32
  %v1055 = vpop.permute.xlu0 %1054
  %1056 = vrot.lane.b32.xlu0 %v998, 32
  %v1057 = vpop.permute.xlu0 %1056
  %v1060 = vld [vmem:[%s75] sm:$0xff]
  %v1061 = vld [vmem:[%s75 + $0x8] sm:$0xff]
  %v1062 = vld [vmem:[%s75 + $0x10] sm:$0xff]
  %v1063 = vld [vmem:[%s75 + $0x18] sm:$0xff]
  %v1064 = vld [vmem:[%s75 + $0x20] sm:$0xff]
  %v1065 = vld [vmem:[%s75 + $0x28] sm:$0xff]
  %v1066 = vld [vmem:[%s75 + $0x30] sm:$0xff]
  %v1067 = vld [vmem:[%s75 + $0x38] sm:$0xff]
  %vm1068 = vcmask 654336
  %v1070 = vsel %vm1068, %v1061, 0
  %v1073 = vsel %vm1068, %v1063, 0
  %v1076 = vsel %vm1068, %v1065, 0
  %v1079 = vsel %vm1068, %v1067, 0
  %1081 = vmatprep.subr.mxu0 0.0
  %1082 = vmatpush1.msra.mxu0 %v1037
  %1083 = vmatprep.subr.mxu0 0.0
  %1084 = vmatpush1.msra.mxu0 %v1035
  %1085 = vmatprep.subr.mxu0 0.0
  %1086 = vmatpush1.msra.mxu0 %v1031
  %1087 = vmatprep.subr.mxu0 0.0
  %1088 = vmatpush1.msra.mxu0 %v1029
  %1089 = vmatprep.subr.mxu0 0.0
  %1090 = vmatpush1.msra.mxu0 %v1025
  %1091 = vmatprep.subr.mxu0 0.0
  %1092 = vmatpush1.msra.mxu0 %v1023
  %1093 = vmatprep.subr.mxu0 0.0
  %1094 = vmatpush1.msra.mxu0 %v997
  %1095 = vmatprep.subr.mxu0 0.0
  %1096 = vmatpush1.msra.mxu0 %v993
  %1097 = vmatprep.subr.mxu0 0.0
  %1098 = vmatpush1.msra.mxu0 %v1017
  %1099 = vmatprep.subr.mxu0 0.0
  %1100 = vmatpush1.msra.mxu0 %v1015
  %1101 = vmatprep.subr.mxu0 0.0
  %1102 = vmatpush1.msra.mxu0 %v1011
  %1103 = vmatprep.subr.mxu0 0.0
  %1104 = vmatpush1.msra.mxu0 %v1009
  %1105 = vmatprep.subr.mxu0 0.0
  %1106 = vmatpush1.msra.mxu0 %v1005
  %1107 = vmatprep.subr.mxu0 0.0
  %1108 = vmatpush1.msra.mxu0 %v1003
  %1109 = vmatprep.subr.mxu0 0.0
  %1110 = vmatpush1.msra.mxu0 %v996
  %1111 = vmatprep.subr.mxu0 0.0
  %1112 = vmatpush1.msra.mxu0 %v992
  %1113 = vmatprep.subr.mxu0 0.0
  %1114 = vmatpush2.msra.mxu0 0.0
  %1115 = vmatprep.subr.mxu0 0.0
  %1116 = vmatpush2.msra.mxu0 0.0
  %1117 = vmatprep.subr.mxu0 0.0
  %1118 = vmatpush2.msra.mxu0 0.0
  %1119 = vmatprep.subr.mxu0 0.0
  %1120 = vmatpush2.msra.mxu0 0.0
  %1121 = vmatprep.subr.mxu0 0.0
  %1122 = vmatpush2.msra.mxu0 0.0
  %1123 = vmatprep.subr.mxu0 0.0
  %1124 = vmatpush2.msra.mxu0 0.0
  %1125 = vmatprep.subr.mxu0 0.0
  %1126 = vmatpush2.msra.mxu0 %v999
  %1127 = vmatprep.subr.mxu0 0.0
  %1128 = vmatpush2.msra.mxu0 %v995
  %1129 = vmatprep.subr.mxu0 0.0
  %1130 = vmatpush2.msra.mxu0 %v1057
  %1131 = vmatprep.subr.mxu0 0.0
  %1132 = vmatpush2.msra.mxu0 %v1055
  %1133 = vmatprep.subr.mxu0 0.0
  %1134 = vmatpush2.msra.mxu0 %v1051
  %1135 = vmatprep.subr.mxu0 0.0
  %1136 = vmatpush2.msra.mxu0 %v1049
  %1137 = vmatprep.subr.mxu0 0.0
  %1138 = vmatpush2.msra.mxu0 %v1045
  %1139 = vmatprep.subr.mxu0 0.0
  %1140 = vmatpush2.msra.mxu0 %v1043
  %1141 = vmatprep.subr.mxu0 0.0
  %1142 = vmatpush2.msra.mxu0 %v998
  %1143 = vmatprep.subr.mxu0 0.0
  %1144 = vmatpush2.msra.mxu0 %v994
  %1145 = vmatprep.mubr.f32.mxu0 %v1070
  %1146 = vmatmul.mubr.f32.gmra.mxu0 %v1060
  %v1147 = vpop.f32.mrf.mxu0
  %v1148 = vadd.f32 0.0, %v1147
  %v1149 = vpop.f32.mrf.mxu0
  %1150 = vmatprep.mubr.f32.mxu0 %v1073
  %1151 = vmatmul.mubr.f32.gmra.mxu0 %v1062
  %v1152 = vpop.f32.mrf.mxu0
  %v1153 = vadd.f32 0.0, %v1152
  %v1154 = vpop.f32.mrf.mxu0
  %1155 = vmatprep.mubr.f32.mxu0 %v1076
  %1156 = vmatmul.mubr.f32.gmra.mxu0 %v1064
  %v1157 = vpop.f32.mrf.mxu0
  %v1158 = vadd.f32 0.0, %v1157
  %v1159 = vpop.f32.mrf.mxu0
  %1160 = vmatprep.mubr.f32.mxu0 %v1079
  %1161 = vmatmul.mubr.f32.gmra.mxu0 %v1066
  %v1162 = vpop.f32.mrf.mxu0
  %v1163 = vadd.f32 0.0, %v1162
  %v1164 = vpop.f32.mrf.mxu0
  %1165 = vdwg.mxu0
  %v1166 = vadd.f32 %v576, %v1148
  %v1167 = vadd.f32 %v581, %v1153
  %v1168 = vadd.f32 %v586, %v1158
  %v1169 = vadd.f32 %v591, %v1163
  %v1170 = vld [vmem:[%s37] sm:$0xff]
  %v1171 = vld [vmem:[%s37 + $0x8] sm:$0xff]
  %v1172 = vld [vmem:[%s37 + $0x10] sm:$0xff]
  %v1173 = vld [vmem:[%s37 + $0x18] sm:$0xff]
  %1175 = vset.pattern.permute.xlu0 0
  %1176 = vperm.xlu0 %1175, %v1170
  %v1177 = vpop.permute.xlu0 %1176
  %1180 = vset.pattern.permute.xlu0 0
  %1181 = vperm.xlu0 %1180, %v1171
  %v1182 = vpop.permute.xlu0 %1181
  %1185 = vset.pattern.permute.xlu0 0
  %1186 = vperm.xlu0 %1185, %v1172
  %v1187 = vpop.permute.xlu0 %1186
  %1190 = vset.pattern.permute.xlu0 0
  %1191 = vperm.xlu0 %1190, %v1173
  %v1192 = vpop.permute.xlu0 %1191
  %v1194 = vadd.f32 %v1166, %v1177
  %v1195 = vadd.f32 %v1167, %v1182
  %v1196 = vadd.f32 %v1168, %v1187
  %v1197 = vadd.f32 %v1169, %v1192
  %v1198 = vld [vmem:[%s5] sm:$0xff]
  %v1199 = vld [vmem:[%s5 + $0x8] sm:$0xff]
  %v1200 = vld [vmem:[%s5 + $0x10] sm:$0xff]
  %v1201 = vld [vmem:[%s5 + $0x18] sm:$0xff]
  %v1202 = vld [vmem:[%s5 + $0x20] sm:$0xff]
  %v1203 = vld [vmem:[%s5 + $0x28] sm:$0xff]
  %v1204 = vld [vmem:[%s5 + $0x30] sm:$0xff]
  %v1205 = vld [vmem:[%s5 + $0x38] sm:$0xff]
  %v1206 = vld [vmem:[%s5 + $0x40] sm:$0xff]
  %v1207 = vld [vmem:[%s5 + $0x48] sm:$0xff]
  %v1208 = vld [vmem:[%s5 + $0x50] sm:$0xff]
  %v1209 = vld [vmem:[%s5 + $0x58] sm:$0xff]
  %v1210 = vld [vmem:[%s5 + $0x60] sm:$0xff]
  %v1211 = vld [vmem:[%s5 + $0x68] sm:$0xff]
  %v1212 = vld [vmem:[%s5 + $0x70] sm:$0xff]
  %v1213 = vld [vmem:[%s5 + $0x78] sm:$0xff]
  %v1214 = vld [vmem:[%s5 + $0x80] sm:$0xff]
  %v1215 = vld [vmem:[%s5 + $0x88] sm:$0xff]
  %v1216 = vld [vmem:[%s5 + $0x90] sm:$0xff]
  %v1217 = vld [vmem:[%s5 + $0x98] sm:$0xff]
  %v1218 = vld [vmem:[%s5 + $0xa0] sm:$0xff]
  %v1219 = vld [vmem:[%s5 + $0xa8] sm:$0xff]
  %v1220 = vld [vmem:[%s5 + $0xb0] sm:$0xff]
  %v1221 = vld [vmem:[%s5 + $0xb8] sm:$0xff]
  %v1222 = vld [vmem:[%s5 + $0xc0] sm:$0xff]
  %v1223 = vld [vmem:[%s5 + $0xc8] sm:$0xff]
  %v1224 = vld [vmem:[%s5 + $0xd0] sm:$0xff]
  %v1225 = vld [vmem:[%s5 + $0xd8] sm:$0xff]
  %v1226 = vld [vmem:[%s5 + $0xe0] sm:$0xff]
  %v1227 = vld [vmem:[%s5 + $0xe8] sm:$0xff]
  %v1228 = vld [vmem:[%s5 + $0xf0] sm:$0xff]
  %v1229 = vld [vmem:[%s5 + $0xf8] sm:$0xff]
  %v1230 = vld [vmem:[%s5 + $0x100] sm:$0xff]
  %v1231 = vld [vmem:[%s5 + $0x108] sm:$0xff]
  %v1232 = vld [vmem:[%s5 + $0x110] sm:$0xff]
  %v1233 = vld [vmem:[%s5 + $0x118] sm:$0xff]
  %v1234 = vld [vmem:[%s5 + $0x120] sm:$0xff]
  %v1235 = vld [vmem:[%s5 + $0x128] sm:$0xff]
  %v1236 = vld [vmem:[%s5 + $0x130] sm:$0xff]
  %v1237 = vld [vmem:[%s5 + $0x138] sm:$0xff]
  %v1238 = vld [vmem:[%s5 + $0x140] sm:$0xff]
  %v1239 = vld [vmem:[%s5 + $0x148] sm:$0xff]
  %v1240 = vld [vmem:[%s5 + $0x150] sm:$0xff]
  %v1241 = vld [vmem:[%s5 + $0x158] sm:$0xff]
  %v1242 = vld [vmem:[%s5 + $0x160] sm:$0xff]
  %v1243 = vld [vmem:[%s5 + $0x168] sm:$0xff]
  %v1244 = vld [vmem:[%s5 + $0x170] sm:$0xff]
  %v1245 = vld [vmem:[%s5 + $0x178] sm:$0xff]
  %v1246 = vld [vmem:[%s5 + $0x180] sm:$0xff]
  %v1247 = vld [vmem:[%s5 + $0x188] sm:$0xff]
  %v1248 = vld [vmem:[%s5 + $0x190] sm:$0xff]
  %v1249 = vld [vmem:[%s5 + $0x198] sm:$0xff]
  %v1250 = vld [vmem:[%s5 + $0x1a0] sm:$0xff]
  %v1251 = vld [vmem:[%s5 + $0x1a8] sm:$0xff]
  %v1252 = vld [vmem:[%s5 + $0x1b0] sm:$0xff]
  %v1253 = vld [vmem:[%s5 + $0x1b8] sm:$0xff]
  %v1254 = vld [vmem:[%s5 + $0x1c0] sm:$0xff]
  %v1255 = vld [vmem:[%s5 + $0x1c8] sm:$0xff]
  %v1256 = vld [vmem:[%s5 + $0x1d0] sm:$0xff]
  %v1257 = vld [vmem:[%s5 + $0x1d8] sm:$0xff]
  %v1258 = vld [vmem:[%s5 + $0x1e0] sm:$0xff]
  %v1259 = vld [vmem:[%s5 + $0x1e8] sm:$0xff]
  %v1260 = vld [vmem:[%s5 + $0x1f0] sm:$0xff]
  %v1261 = vld [vmem:[%s5 + $0x1f8] sm:$0xff]
  %v1262 = vld [vmem:[%s5 + $0x200] sm:$0xff]
  %v1263 = vld [vmem:[%s5 + $0x208] sm:$0xff]
  %v1264 = vld [vmem:[%s5 + $0x210] sm:$0xff]
  %v1265 = vld [vmem:[%s5 + $0x218] sm:$0xff]
  %v1266 = vld [vmem:[%s5 + $0x220] sm:$0xff]
  %v1267 = vld [vmem:[%s5 + $0x228] sm:$0xff]
  %v1268 = vld [vmem:[%s5 + $0x230] sm:$0xff]
  %v1269 = vld [vmem:[%s5 + $0x238] sm:$0xff]
  %v1270 = vld [vmem:[%s5 + $0x240] sm:$0xff]
  %v1271 = vld [vmem:[%s5 + $0x248] sm:$0xff]
  %v1272 = vld [vmem:[%s5 + $0x250] sm:$0xff]
  %v1273 = vld [vmem:[%s5 + $0x258] sm:$0xff]
  %v1274 = vld [vmem:[%s5 + $0x260] sm:$0xff]
  %v1275 = vld [vmem:[%s5 + $0x268] sm:$0xff]
  %v1276 = vld [vmem:[%s5 + $0x270] sm:$0xff]
  %v1277 = vld [vmem:[%s5 + $0x278] sm:$0xff]
  %v1278 = vld [vmem:[%s5 + $0x280] sm:$0xff]
  %v1279 = vld [vmem:[%s5 + $0x288] sm:$0xff]
  %v1280 = vld [vmem:[%s5 + $0x290] sm:$0xff]
  %v1281 = vld [vmem:[%s5 + $0x298] sm:$0xff]
  %v1282 = vld [vmem:[%s5 + $0x2a0] sm:$0xff]
  %v1283 = vld [vmem:[%s5 + $0x2a8] sm:$0xff]
  %v1284 = vld [vmem:[%s5 + $0x2b0] sm:$0xff]
  %v1285 = vld [vmem:[%s5 + $0x2b8] sm:$0xff]
  %v1286 = vld [vmem:[%s5 + $0x2c0] sm:$0xff]
  %v1287 = vld [vmem:[%s5 + $0x2c8] sm:$0xff]
  %v1288 = vld [vmem:[%s5 + $0x2d0] sm:$0xff]
  %v1289 = vld [vmem:[%s5 + $0x2d8] sm:$0xff]
  %v1290 = vld [vmem:[%s5 + $0x2e0] sm:$0xff]
  %v1291 = vld [vmem:[%s5 + $0x2e8] sm:$0xff]
  %v1292 = vld [vmem:[%s5 + $0x2f0] sm:$0xff]
  %v1293 = vld [vmem:[%s5 + $0x2f8] sm:$0xff]
  %v1294 = vld [vmem:[%s5 + $0x300] sm:$0xff]
  %v1295 = vld [vmem:[%s5 + $0x308] sm:$0xff]
  %v1296 = vld [vmem:[%s5 + $0x310] sm:$0xff]
  %v1297 = vld [vmem:[%s5 + $0x318] sm:$0xff]
  %v1298 = vld [vmem:[%s5 + $0x320] sm:$0xff]
  %v1299 = vld [vmem:[%s5 + $0x328] sm:$0xff]
  %v1300 = vld [vmem:[%s5 + $0x330] sm:$0xff]
  %v1301 = vld [vmem:[%s5 + $0x338] sm:$0xff]
  %v1302 = vld [vmem:[%s5 + $0x340] sm:$0xff]
  %v1303 = vld [vmem:[%s5 + $0x348] sm:$0xff]
  %v1304 = vld [vmem:[%s5 + $0x350] sm:$0xff]
  %v1305 = vld [vmem:[%s5 + $0x358] sm:$0xff]
  %v1306 = vld [vmem:[%s5 + $0x360] sm:$0xff]
  %v1307 = vld [vmem:[%s5 + $0x368] sm:$0xff]
  %v1308 = vld [vmem:[%s5 + $0x370] sm:$0xff]
  %v1309 = vld [vmem:[%s5 + $0x378] sm:$0xff]
  %v1310 = vld [vmem:[%s5 + $0x380] sm:$0xff]
  %v1311 = vld [vmem:[%s5 + $0x388] sm:$0xff]
  %v1312 = vld [vmem:[%s5 + $0x390] sm:$0xff]
  %v1313 = vld [vmem:[%s5 + $0x398] sm:$0xff]
  %v1314 = vld [vmem:[%s5 + $0x3a0] sm:$0xff]
  %v1315 = vld [vmem:[%s5 + $0x3a8] sm:$0xff]
  %v1316 = vld [vmem:[%s5 + $0x3b0] sm:$0xff]
  %v1317 = vld [vmem:[%s5 + $0x3b8] sm:$0xff]
  %v1318 = vld [vmem:[%s5 + $0x3c0] sm:$0xff]
  %v1319 = vld [vmem:[%s5 + $0x3c8] sm:$0xff]
  %v1320 = vld [vmem:[%s5 + $0x3d0] sm:$0xff]
  %v1321 = vld [vmem:[%s5 + $0x3d8] sm:$0xff]
  %v1322 = vld [vmem:[%s5 + $0x3e0] sm:$0xff]
  %v1323 = vld [vmem:[%s5 + $0x3e8] sm:$0xff]
  %v1324 = vld [vmem:[%s5 + $0x3f0] sm:$0xff]
  %v1325 = vld [vmem:[%s5 + $0x3f8] sm:$0xff]
  %v1326 = vld [vmem:[%s5 + $0x400] sm:$0xff]
  %v1327 = vld [vmem:[%s5 + $0x408] sm:$0xff]
  %v1328 = vld [vmem:[%s5 + $0x410] sm:$0xff]
  %v1329 = vld [vmem:[%s5 + $0x418] sm:$0xff]
  %v1330 = vld [vmem:[%s5 + $0x420] sm:$0xff]
  %v1331 = vld [vmem:[%s5 + $0x428] sm:$0xff]
  %v1332 = vld [vmem:[%s5 + $0x430] sm:$0xff]
  %v1333 = vld [vmem:[%s5 + $0x438] sm:$0xff]
  %v1334 = vld [vmem:[%s5 + $0x440] sm:$0xff]
  %v1335 = vld [vmem:[%s5 + $0x448] sm:$0xff]
  %v1336 = vld [vmem:[%s5 + $0x450] sm:$0xff]
  %v1337 = vld [vmem:[%s5 + $0x458] sm:$0xff]
  %v1338 = vld [vmem:[%s5 + $0x460] sm:$0xff]
  %v1339 = vld [vmem:[%s5 + $0x468] sm:$0xff]
  %v1340 = vld [vmem:[%s5 + $0x470] sm:$0xff]
  %v1341 = vld [vmem:[%s5 + $0x478] sm:$0xff]
  %v1342 = vld [vmem:[%s5 + $0x480] sm:$0xff]
  %v1343 = vld [vmem:[%s5 + $0x488] sm:$0xff]
  %v1344 = vld [vmem:[%s5 + $0x490] sm:$0xff]
  %v1345 = vld [vmem:[%s5 + $0x498] sm:$0xff]
  %v1346 = vld [vmem:[%s5 + $0x4a0] sm:$0xff]
  %v1347 = vld [vmem:[%s5 + $0x4a8] sm:$0xff]
  %v1348 = vld [vmem:[%s5 + $0x4b0] sm:$0xff]
  %v1349 = vld [vmem:[%s5 + $0x4b8] sm:$0xff]
  %v1350 = vld [vmem:[%s5 + $0x4c0] sm:$0xff]
  %v1351 = vld [vmem:[%s5 + $0x4c8] sm:$0xff]
  %v1352 = vld [vmem:[%s5 + $0x4d0] sm:$0xff]
  %v1353 = vld [vmem:[%s5 + $0x4d8] sm:$0xff]
  %v1354 = vld [vmem:[%s5 + $0x4e0] sm:$0xff]
  %v1355 = vld [vmem:[%s5 + $0x4e8] sm:$0xff]
  %v1356 = vld [vmem:[%s5 + $0x4f0] sm:$0xff]
  %v1357 = vld [vmem:[%s5 + $0x4f8] sm:$0xff]
  %v1358 = vld [vmem:[%s5 + $0x500] sm:$0xff]
  %v1359 = vld [vmem:[%s5 + $0x508] sm:$0xff]
  %v1360 = vld [vmem:[%s5 + $0x510] sm:$0xff]
  %v1361 = vld [vmem:[%s5 + $0x518] sm:$0xff]
  %v1362 = vld [vmem:[%s5 + $0x520] sm:$0xff]
  %v1363 = vld [vmem:[%s5 + $0x528] sm:$0xff]
  %v1364 = vld [vmem:[%s5 + $0x530] sm:$0xff]
  %v1365 = vld [vmem:[%s5 + $0x538] sm:$0xff]
  %v1366 = vld [vmem:[%s5 + $0x540] sm:$0xff]
  %v1367 = vld [vmem:[%s5 + $0x548] sm:$0xff]
  %v1368 = vld [vmem:[%s5 + $0x550] sm:$0xff]
  %v1369 = vld [vmem:[%s5 + $0x558] sm:$0xff]
  %v1370 = vld [vmem:[%s5 + $0x560] sm:$0xff]
  %v1371 = vld [vmem:[%s5 + $0x568] sm:$0xff]
  %v1372 = vld [vmem:[%s5 + $0x570] sm:$0xff]
  %v1373 = vld [vmem:[%s5 + $0x578] sm:$0xff]
  %v1374 = vld [vmem:[%s5 + $0x580] sm:$0xff]
  %v1375 = vld [vmem:[%s5 + $0x588] sm:$0xff]
  %v1376 = vld [vmem:[%s5 + $0x590] sm:$0xff]
  %v1377 = vld [vmem:[%s5 + $0x598] sm:$0xff]
  %v1378 = vld [vmem:[%s5 + $0x5a0] sm:$0xff]
  %v1379 = vld [vmem:[%s5 + $0x5a8] sm:$0xff]
  %v1380 = vld [vmem:[%s5 + $0x5b0] sm:$0xff]
  %v1381 = vld [vmem:[%s5 + $0x5b8] sm:$0xff]
  %v1382 = vld [vmem:[%s5 + $0x5c0] sm:$0xff]
  %v1383 = vld [vmem:[%s5 + $0x5c8] sm:$0xff]
  %v1384 = vld [vmem:[%s5 + $0x5d0] sm:$0xff]
  %v1385 = vld [vmem:[%s5 + $0x5d8] sm:$0xff]
  %v1386 = vld [vmem:[%s5 + $0x5e0] sm:$0xff]
  %v1387 = vld [vmem:[%s5 + $0x5e8] sm:$0xff]
  %v1388 = vld [vmem:[%s5 + $0x5f0] sm:$0xff]
  %v1389 = vld [vmem:[%s5 + $0x5f8] sm:$0xff]
  %v1390 = vld [vmem:[%s5 + $0x600] sm:$0xff]
  %v1391 = vld [vmem:[%s5 + $0x608] sm:$0xff]
  %v1392 = vld [vmem:[%s5 + $0x610] sm:$0xff]
  %v1393 = vld [vmem:[%s5 + $0x618] sm:$0xff]
  %v1394 = vld [vmem:[%s5 + $0x620] sm:$0xff]
  %v1395 = vld [vmem:[%s5 + $0x628] sm:$0xff]
  %v1396 = vld [vmem:[%s5 + $0x630] sm:$0xff]
  %v1397 = vld [vmem:[%s5 + $0x638] sm:$0xff]
  %v1398 = vld [vmem:[%s5 + $0x640] sm:$0xff]
  %v1399 = vld [vmem:[%s5 + $0x648] sm:$0xff]
  %v1400 = vld [vmem:[%s5 + $0x650] sm:$0xff]
  %v1401 = vld [vmem:[%s5 + $0x658] sm:$0xff]
  %v1402 = vld [vmem:[%s5 + $0x660] sm:$0xff]
  %v1403 = vld [vmem:[%s5 + $0x668] sm:$0xff]
  %v1404 = vld [vmem:[%s5 + $0x670] sm:$0xff]
  %v1405 = vld [vmem:[%s5 + $0x678] sm:$0xff]
  %v1406 = vmul.f32 %v992, 0.05
  %v1407 = vmul.f32 %v993, 0.05
  %v1408 = vmul.f32 %v994, 0.05
  %v1409 = vmul.f32 %v995, 0.05
  %v1410 = vmul.f32 %v996, 0.05
  %v1411 = vmul.f32 %v997, 0.05
  %v1412 = vmul.f32 %v998, 0.05
  %v1413 = vmul.f32 %v999, 0.05
  %v1415 = vsel %vm680, %v995, 0
  %v1418 = vsel %vm680, %v999, 0
  %1420 = vmatprep.subr.mxu0 %v1259
  %1421 = vmatpush1.msra.mxu0 %v1258
  %1422 = vmatprep.subr.mxu0 %v1255
  %1423 = vmatpush1.msra.mxu0 %v1254
  %1424 = vmatprep.subr.mxu0 %v1251
  %1425 = vmatpush1.msra.mxu0 %v1250
  %1426 = vmatprep.subr.mxu0 %v1247
  %1427 = vmatpush1.msra.mxu0 %v1246
  %1428 = vmatprep.subr.mxu0 %v1243
  %1429 = vmatpush1.msra.mxu0 %v1242
  %1430 = vmatprep.subr.mxu0 %v1239
  %1431 = vmatpush1.msra.mxu0 %v1238
  %1432 = vmatprep.subr.mxu0 %v1235
  %1433 = vmatpush1.msra.mxu0 %v1234
  %1434 = vmatprep.subr.mxu0 %v1231
  %1435 = vmatpush1.msra.mxu0 %v1230
  %1436 = vmatprep.subr.mxu0 %v1227
  %1437 = vmatpush1.msra.mxu0 %v1226
  %1438 = vmatprep.subr.mxu0 %v1223
  %1439 = vmatpush1.msra.mxu0 %v1222
  %1440 = vmatprep.subr.mxu0 %v1219
  %1441 = vmatpush1.msra.mxu0 %v1218
  %1442 = vmatprep.subr.mxu0 %v1215
  %1443 = vmatpush1.msra.mxu0 %v1214
  %1444 = vmatprep.subr.mxu0 %v1211
  %1445 = vmatpush1.msra.mxu0 %v1210
  %1446 = vmatprep.subr.mxu0 %v1207
  %1447 = vmatpush1.msra.mxu0 %v1206
  %1448 = vmatprep.subr.mxu0 %v1203
  %1449 = vmatpush1.msra.mxu0 %v1202
  %1450 = vmatprep.subr.mxu0 %v1199
  %1451 = vmatpush1.msra.mxu0 %v1198
  %1452 = vmatprep.subr.mxu0 %v1323
  %1453 = vmatpush2.msra.mxu0 %v1322
  %1454 = vmatprep.subr.mxu0 %v1319
  %1455 = vmatpush2.msra.mxu0 %v1318
  %1456 = vmatprep.subr.mxu0 %v1315
  %1457 = vmatpush2.msra.mxu0 %v1314
  %1458 = vmatprep.subr.mxu0 %v1311
  %1459 = vmatpush2.msra.mxu0 %v1310
  %1460 = vmatprep.subr.mxu0 %v1307
  %1461 = vmatpush2.msra.mxu0 %v1306
  %1462 = vmatprep.subr.mxu0 %v1303
  %1463 = vmatpush2.msra.mxu0 %v1302
  %1464 = vmatprep.subr.mxu0 %v1299
  %1465 = vmatpush2.msra.mxu0 %v1298
  %1466 = vmatprep.subr.mxu0 %v1295
  %1467 = vmatpush2.msra.mxu0 %v1294
  %1468 = vmatprep.subr.mxu0 %v1291
  %1469 = vmatpush2.msra.mxu0 %v1290
  %1470 = vmatprep.subr.mxu0 %v1287
  %1471 = vmatpush2.msra.mxu0 %v1286
  %1472 = vmatprep.subr.mxu0 %v1283
  %1473 = vmatpush2.msra.mxu0 %v1282
  %1474 = vmatprep.subr.mxu0 %v1279
  %1475 = vmatpush2.msra.mxu0 %v1278
  %1476 = vmatprep.subr.mxu0 %v1275
  %1477 = vmatpush2.msra.mxu0 %v1274
  %1478 = vmatprep.subr.mxu0 %v1271
  %1479 = vmatpush2.msra.mxu0 %v1270
  %1480 = vmatprep.subr.mxu0 %v1267
  %1481 = vmatpush2.msra.mxu0 %v1266
  %1482 = vmatprep.subr.mxu0 %v1263
  %1483 = vmatpush2.msra.mxu0 %v1262
  %1484 = vmatprep.mubr.f32.mxu0 %v993
  %1485 = vmatmul.mubr.f32.gmra.mxu0 %v992
  %v1486 = vpop.f32.mrf.mxu0
  %v1487 = vadd.f32 0.0, %v1486
  %v1488 = vpop.f32.mrf.mxu0
  %v1489 = vadd.f32 0.0, %v1488
  %1490 = vmatprep.mubr.f32.mxu0 %v997
  %1491 = vmatmul.mubr.f32.gmra.mxu0 %v996
  %v1492 = vpop.f32.mrf.mxu0
  %v1493 = vadd.f32 0.0, %v1492
  %v1494 = vpop.f32.mrf.mxu0
  %v1495 = vadd.f32 0.0, %v1494
  %1496 = vdwg.mxu0
  %1497 = vmatprep.subr.mxu0 %v1387
  %1498 = vmatpush1.msra.mxu0 %v1386
  %1499 = vmatprep.subr.mxu0 %v1383
  %1500 = vmatpush1.msra.mxu0 %v1382
  %1501 = vmatprep.subr.mxu0 %v1379
  %1502 = vmatpush1.msra.mxu0 %v1378
  %1503 = vmatprep.subr.mxu0 %v1375
  %1504 = vmatpush1.msra.mxu0 %v1374
  %1505 = vmatprep.subr.mxu0 %v1371
  %1506 = vmatpush1.msra.mxu0 %v1370
  %1507 = vmatprep.subr.mxu0 %v1367
  %1508 = vmatpush1.msra.mxu0 %v1366
  %1509 = vmatprep.subr.mxu0 %v1363
  %1510 = vmatpush1.msra.mxu0 %v1362
  %1511 = vmatprep.subr.mxu0 %v1359
  %1512 = vmatpush1.msra.mxu0 %v1358
  %1513 = vmatprep.subr.mxu0 %v1355
  %1514 = vmatpush1.msra.mxu0 %v1354
  %1515 = vmatprep.subr.mxu0 %v1351
  %1516 = vmatpush1.msra.mxu0 %v1350
  %1517 = vmatprep.subr.mxu0 %v1347
  %1518 = vmatpush1.msra.mxu0 %v1346
  %1519 = vmatprep.subr.mxu0 %v1343
  %1520 = vmatpush1.msra.mxu0 %v1342
  %1521 = vmatprep.subr.mxu0 %v1339
  %1522 = vmatpush1.msra.mxu0 %v1338
  %1523 = vmatprep.subr.mxu0 %v1335
  %1524 = vmatpush1.msra.mxu0 %v1334
  %1525 = vmatprep.subr.mxu0 %v1331
  %1526 = vmatpush1.msra.mxu0 %v1330
  %1527 = vmatprep.subr.mxu0 %v1327
  %1528 = vmatpush1.msra.mxu0 %v1326
  %1529 = vmatprep.subr.mxu0 0.0
  %1530 = vmatpush2.msra.mxu0 0.0
  %1531 = vmatprep.subr.mxu0 0.0
  %1532 = vmatpush2.msra.mxu0 0.0
  %1533 = vmatprep.subr.mxu0 0.0
  %1534 = vmatpush2.msra.mxu0 0.0
  %1535 = vmatprep.subr.mxu0 0.0
  %1536 = vmatpush2.msra.mxu0 0.0
  %1537 = vmatprep.subr.mxu0 0.0
  %1538 = vmatpush2.msra.mxu0 0.0
  %1539 = vmatprep.subr.mxu0 0.0
  %1540 = vmatpush2.msra.mxu0 0.0
  %1541 = vmatprep.subr.mxu0 0.0
  %1542 = vmatpush2.msra.mxu0 0.0
  %1543 = vmatprep.subr.mxu0 0.0
  %1544 = vmatpush2.msra.mxu0 0.0
  %1545 = vmatprep.subr.mxu0 0.0
  %1546 = vmatpush2.msra.mxu0 0.0
  %1547 = vmatprep.subr.mxu0 0.0
  %1548 = vmatpush2.msra.mxu0 0.0
  %1549 = vmatprep.subr.mxu0 0.0
  %1550 = vmatpush2.msra.mxu0 0.0
  %1551 = vmatprep.subr.mxu0 0.0
  %1552 = vmatpush2.msra.mxu0 0.0
  %1553 = vmatprep.subr.mxu0 %v1403
  %1554 = vmatpush2.msra.mxu0 %v1402
  %1555 = vmatprep.subr.mxu0 %v1399
  %1556 = vmatpush2.msra.mxu0 %v1398
  %1557 = vmatprep.subr.mxu0 %v1395
  %1558 = vmatpush2.msra.mxu0 %v1394
  %1559 = vmatprep.subr.mxu0 %v1391
  %1560 = vmatpush2.msra.mxu0 %v1390
  %1561 = vmatprep.mubr.f32.mxu0 %v1415
  %1562 = vmatmul.mubr.f32.gmra.mxu0 %v994
  %v1563 = vpop.f32.mrf.mxu0
  %v1564 = vadd.f32 %v1487, %v1563
  %v1565 = vpop.f32.mrf.mxu0
  %v1566 = vadd.f32 %v1489, %v1565
  %1567 = vmatprep.mubr.f32.mxu0 %v1418
  %1568 = vmatmul.mubr.f32.gmra.mxu0 %v998
  %v1569 = vpop.f32.mrf.mxu0
  %v1570 = vadd.f32 %v1493, %v1569
  %v1571 = vpop.f32.mrf.mxu0
  %v1572 = vadd.f32 %v1495, %v1571
  %1573 = vdwg.mxu0
  %1574 = vmatprep.subr.mxu0 %v1261
  %1575 = vmatpush1.msra.mxu0 %v1260
  %1576 = vmatprep.subr.mxu0 %v1257
  %1577 = vmatpush1.msra.mxu0 %v1256
  %1578 = vmatprep.subr.mxu0 %v1253
  %1579 = vmatpush1.msra.mxu0 %v1252
  %1580 = vmatprep.subr.mxu0 %v1249
  %1581 = vmatpush1.msra.mxu0 %v1248
  %1582 = vmatprep.subr.mxu0 %v1245
  %1583 = vmatpush1.msra.mxu0 %v1244
  %1584 = vmatprep.subr.mxu0 %v1241
  %1585 = vmatpush1.msra.mxu0 %v1240
  %1586 = vmatprep.subr.mxu0 %v1237
  %1587 = vmatpush1.msra.mxu0 %v1236
  %1588 = vmatprep.subr.mxu0 %v1233
  %1589 = vmatpush1.msra.mxu0 %v1232
  %1590 = vmatprep.subr.mxu0 %v1229
  %1591 = vmatpush1.msra.mxu0 %v1228
  %1592 = vmatprep.subr.mxu0 %v1225
  %1593 = vmatpush1.msra.mxu0 %v1224
  %1594 = vmatprep.subr.mxu0 %v1221
  %1595 = vmatpush1.msra.mxu0 %v1220
  %1596 = vmatprep.subr.mxu0 %v1217
  %1597 = vmatpush1.msra.mxu0 %v1216
  %1598 = vmatprep.subr.mxu0 %v1213
  %1599 = vmatpush1.msra.mxu0 %v1212
  %1600 = vmatprep.subr.mxu0 %v1209
  %1601 = vmatpush1.msra.mxu0 %v1208
  %1602 = vmatprep.subr.mxu0 %v1205
  %1603 = vmatpush1.msra.mxu0 %v1204
  %1604 = vmatprep.subr.mxu0 %v1201
  %1605 = vmatpush1.msra.mxu0 %v1200
  %1606 = vmatprep.subr.mxu0 %v1325
  %1607 = vmatpush2.msra.mxu0 %v1324
  %1608 = vmatprep.subr.mxu0 %v1321
  %1609 = vmatpush2.msra.mxu0 %v1320
  %1610 = vmatprep.subr.mxu0 %v1317
  %1611 = vmatpush2.msra.mxu0 %v1316
  %1612 = vmatprep.subr.mxu0 %v1313
  %1613 = vmatpush2.msra.mxu0 %v1312
  %1614 = vmatprep.subr.mxu0 %v1309
  %1615 = vmatpush2.msra.mxu0 %v1308
  %1616 = vmatprep.subr.mxu0 %v1305
  %1617 = vmatpush2.msra.mxu0 %v1304
  %1618 = vmatprep.subr.mxu0 %v1301
  %1619 = vmatpush2.msra.mxu0 %v1300
  %1620 = vmatprep.subr.mxu0 %v1297
  %1621 = vmatpush2.msra.mxu0 %v1296
  %1622 = vmatprep.subr.mxu0 %v1293
  %1623 = vmatpush2.msra.mxu0 %v1292
  %1624 = vmatprep.subr.mxu0 %v1289
  %1625 = vmatpush2.msra.mxu0 %v1288
  %1626 = vmatprep.subr.mxu0 %v1285
  %1627 = vmatpush2.msra.mxu0 %v1284
  %1628 = vmatprep.subr.mxu0 %v1281
  %1629 = vmatpush2.msra.mxu0 %v1280
  %1630 = vmatprep.subr.mxu0 %v1277
  %1631 = vmatpush2.msra.mxu0 %v1276
  %1632 = vmatprep.subr.mxu0 %v1273
  %1633 = vmatpush2.msra.mxu0 %v1272
  %1634 = vmatprep.subr.mxu0 %v1269
  %1635 = vmatpush2.msra.mxu0 %v1268
  %1636 = vmatprep.subr.mxu0 %v1265
  %1637 = vmatpush2.msra.mxu0 %v1264
  %1638 = vmatprep.mubr.f32.mxu0 %v993
  %1639 = vmatmul.mubr.f32.gmra.mxu0 %v992
  %v1640 = vpop.f32.mrf.mxu0
  %v1641 = vadd.f32 0.0, %v1640
  %v1642 = vpop.f32.mrf.mxu0
  %v1643 = vadd.f32 0.0, %v1642
  %1644 = vmatprep.mubr.f32.mxu0 %v997
  %1645 = vmatmul.mubr.f32.gmra.mxu0 %v996
  %v1646 = vpop.f32.mrf.mxu0
  %v1647 = vadd.f32 0.0, %v1646
  %v1648 = vpop.f32.mrf.mxu0
  %v1649 = vadd.f32 0.0, %v1648
  %1650 = vdwg.mxu0
  %1651 = vmatprep.subr.mxu0 %v1389
  %1652 = vmatpush1.msra.mxu0 %v1388
  %1653 = vmatprep.subr.mxu0 %v1385
  %1654 = vmatpush1.msra.mxu0 %v1384
  %1655 = vmatprep.subr.mxu0 %v1381
  %1656 = vmatpush1.msra.mxu0 %v1380
  %1657 = vmatprep.subr.mxu0 %v1377
  %1658 = vmatpush1.msra.mxu0 %v1376
  %1659 = vmatprep.subr.mxu0 %v1373
  %1660 = vmatpush1.msra.mxu0 %v1372
  %1661 = vmatprep.subr.mxu0 %v1369
  %1662 = vmatpush1.msra.mxu0 %v1368
  %1663 = vmatprep.subr.mxu0 %v1365
  %1664 = vmatpush1.msra.mxu0 %v1364
  %1665 = vmatprep.subr.mxu0 %v1361
  %1666 = vmatpush1.msra.mxu0 %v1360
  %1667 = vmatprep.subr.mxu0 %v1357
  %1668 = vmatpush1.msra.mxu0 %v1356
  %1669 = vmatprep.subr.mxu0 %v1353
  %1670 = vmatpush1.msra.mxu0 %v1352
  %1671 = vmatprep.subr.mxu0 %v1349
  %1672 = vmatpush1.msra.mxu0 %v1348
  %1673 = vmatprep.subr.mxu0 %v1345
  %1674 = vmatpush1.msra.mxu0 %v1344
  %1675 = vmatprep.subr.mxu0 %v1341
  %1676 = vmatpush1.msra.mxu0 %v1340
  %1677 = vmatprep.subr.mxu0 %v1337
  %1678 = vmatpush1.msra.mxu0 %v1336
  %1679 = vmatprep.subr.mxu0 %v1333
  %1680 = vmatpush1.msra.mxu0 %v1332
  %1681 = vmatprep.subr.mxu0 %v1329
  %1682 = vmatpush1.msra.mxu0 %v1328
  %1683 = vmatprep.subr.mxu0 0.0
  %1684 = vmatpush2.msra.mxu0 0.0
  %1685 = vmatprep.subr.mxu0 0.0
  %1686 = vmatpush2.msra.mxu0 0.0
  %1687 = vmatprep.subr.mxu0 0.0
  %1688 = vmatpush2.msra.mxu0 0.0
  %1689 = vmatprep.subr.mxu0 0.0
  %1690 = vmatpush2.msra.mxu0 0.0
  %1691 = vmatprep.subr.mxu0 0.0
  %1692 = vmatpush2.msra.mxu0 0.0
  %1693 = vmatprep.subr.mxu0 0.0
  %1694 = vmatpush2.msra.mxu0 0.0
  %1695 = vmatprep.subr.mxu0 0.0
  %1696 = vmatpush2.msra.mxu0 0.0
  %1697 = vmatprep.subr.mxu0 0.0
  %1698 = vmatpush2.msra.mxu0 0.0
  %1699 = vmatprep.subr.mxu0 0.0
  %1700 = vmatpush2.msra.mxu0 0.0
  %1701 = vmatprep.subr.mxu0 0.0
  %1702 = vmatpush2.msra.mxu0 0.0
  %1703 = vmatprep.subr.mxu0 0.0
  %1704 = vmatpush2.msra.mxu0 0.0
  %1705 = vmatprep.subr.mxu0 0.0
  %1706 = vmatpush2.msra.mxu0 0.0
  %1707 = vmatprep.subr.mxu0 %v1405
  %1708 = vmatpush2.msra.mxu0 %v1404
  %1709 = vmatprep.subr.mxu0 %v1401
  %1710 = vmatpush2.msra.mxu0 %v1400
  %1711 = vmatprep.subr.mxu0 %v1397
  %1712 = vmatpush2.msra.mxu0 %v1396
  %1713 = vmatprep.subr.mxu0 %v1393
  %1714 = vmatpush2.msra.mxu0 %v1392
  %1715 = vmatprep.mubr.f32.mxu0 %v1415
  %1716 = vmatmul.mubr.f32.gmra.mxu0 %v994
  %v1717 = vpop.f32.mrf.mxu0
  %v1718 = vadd.f32 %v1641, %v1717
  %v1719 = vpop.f32.mrf.mxu0
  %v1720 = vadd.f32 %v1643, %v1719
  %1721 = vmatprep.mubr.f32.mxu0 %v1418
  %1722 = vmatmul.mubr.f32.gmra.mxu0 %v998
  %v1723 = vpop.f32.mrf.mxu0
  %v1724 = vadd.f32 %v1647, %v1723
  %v1725 = vpop.f32.mrf.mxu0
  %v1726 = vadd.f32 %v1649, %v1725
  %1727 = vdwg.mxu0
  %v1728 = vmul.f32 %v1564, 0.95
  %v1729 = vmul.f32 %v1566, 0.95
  %v1730 = vmul.f32 %v1718, 0.95
  %v1731 = vmul.f32 %v1720, 0.95
  %v1732 = vmul.f32 %v1570, 0.95
  %v1733 = vmul.f32 %v1572, 0.95
  %v1734 = vmul.f32 %v1724, 0.95
  %v1735 = vmul.f32 %v1726, 0.95
  %v1736 = vadd.f32 %v1406, %v1728
  %v1737 = vadd.f32 %v1407, %v1729
  %v1738 = vadd.f32 %v1408, %v1730
  %v1739 = vadd.f32 %v1409, %v1731
  %v1740 = vadd.f32 %v1410, %v1732
  %v1741 = vadd.f32 %v1411, %v1733
  %v1742 = vadd.f32 %v1412, %v1734
  %v1743 = vadd.f32 %v1413, %v1735
  %v1745 = vsel %vm680, %v1739, 0
  %v1748 = vsel %vm680, %v1743, 0
  %1750 = vmatprep.subr.mxu0 %v1259
  %1751 = vmatpush1.msra.mxu0 %v1258
  %1752 = vmatprep.subr.mxu0 %v1255
  %1753 = vmatpush1.msra.mxu0 %v1254
  %1754 = vmatprep.subr.mxu0 %v1251
  %1755 = vmatpush1.msra.mxu0 %v1250
  %1756 = vmatprep.subr.mxu0 %v1247
  %1757 = vmatpush1.msra.mxu0 %v1246
  %1758 = vmatprep.subr.mxu0 %v1243
  %1759 = vmatpush1.msra.mxu0 %v1242
  %1760 = vmatprep.subr.mxu0 %v1239
  %1761 = vmatpush1.msra.mxu0 %v1238
  %1762 = vmatprep.subr.mxu0 %v1235
  %1763 = vmatpush1.msra.mxu0 %v1234
  %1764 = vmatprep.subr.mxu0 %v1231
  %1765 = vmatpush1.msra.mxu0 %v1230
  %1766 = vmatprep.subr.mxu0 %v1227
  %1767 = vmatpush1.msra.mxu0 %v1226
  %1768 = vmatprep.subr.mxu0 %v1223
  %1769 = vmatpush1.msra.mxu0 %v1222
  %1770 = vmatprep.subr.mxu0 %v1219
  %1771 = vmatpush1.msra.mxu0 %v1218
  %1772 = vmatprep.subr.mxu0 %v1215
  %1773 = vmatpush1.msra.mxu0 %v1214
  %1774 = vmatprep.subr.mxu0 %v1211
  %1775 = vmatpush1.msra.mxu0 %v1210
  %1776 = vmatprep.subr.mxu0 %v1207
  %1777 = vmatpush1.msra.mxu0 %v1206
  %1778 = vmatprep.subr.mxu0 %v1203
  %1779 = vmatpush1.msra.mxu0 %v1202
  %1780 = vmatprep.subr.mxu0 %v1199
  %1781 = vmatpush1.msra.mxu0 %v1198
  %1782 = vmatprep.subr.mxu0 %v1323
  %1783 = vmatpush2.msra.mxu0 %v1322
  %1784 = vmatprep.subr.mxu0 %v1319
  %1785 = vmatpush2.msra.mxu0 %v1318
  %1786 = vmatprep.subr.mxu0 %v1315
  %1787 = vmatpush2.msra.mxu0 %v1314
  %1788 = vmatprep.subr.mxu0 %v1311
  %1789 = vmatpush2.msra.mxu0 %v1310
  %1790 = vmatprep.subr.mxu0 %v1307
  %1791 = vmatpush2.msra.mxu0 %v1306
  %1792 = vmatprep.subr.mxu0 %v1303
  %1793 = vmatpush2.msra.mxu0 %v1302
  %1794 = vmatprep.subr.mxu0 %v1299
  %1795 = vmatpush2.msra.mxu0 %v1298
  %1796 = vmatprep.subr.mxu0 %v1295
  %1797 = vmatpush2.msra.mxu0 %v1294
  %1798 = vmatprep.subr.mxu0 %v1291
  %1799 = vmatpush2.msra.mxu0 %v1290
  %1800 = vmatprep.subr.mxu0 %v1287
  %1801 = vmatpush2.msra.mxu0 %v1286
  %1802 = vmatprep.subr.mxu0 %v1283
  %1803 = vmatpush2.msra.mxu0 %v1282
  %1804 = vmatprep.subr.mxu0 %v1279
  %1805 = vmatpush2.msra.mxu0 %v1278
  %1806 = vmatprep.subr.mxu0 %v1275
  %1807 = vmatpush2.msra.mxu0 %v1274
  %1808 = vmatprep.subr.mxu0 %v1271
  %1809 = vmatpush2.msra.mxu0 %v1270
  %1810 = vmatprep.subr.mxu0 %v1267
  %1811 = vmatpush2.msra.mxu0 %v1266
  %1812 = vmatprep.subr.mxu0 %v1263
  %1813 = vmatpush2.msra.mxu0 %v1262
  %1814 = vmatprep.mubr.f32.mxu0 %v1737
  %1815 = vmatmul.mubr.f32.gmra.mxu0 %v1736
  %v1816 = vpop.f32.mrf.mxu0
  %v1817 = vadd.f32 0.0, %v1816
  %v1818 = vpop.f32.mrf.mxu0
  %v1819 = vadd.f32 0.0, %v1818
  %1820 = vmatprep.mubr.f32.mxu0 %v1741
  %1821 = vmatmul.mubr.f32.gmra.mxu0 %v1740
  %v1822 = vpop.f32.mrf.mxu0
  %v1823 = vadd.f32 0.0, %v1822
  %v1824 = vpop.f32.mrf.mxu0
  %v1825 = vadd.f32 0.0, %v1824
  %1826 = vdwg.mxu0
  %1827 = vmatprep.subr.mxu0 %v1387
  %1828 = vmatpush1.msra.mxu0 %v1386
  %1829 = vmatprep.subr.mxu0 %v1383
  %1830 = vmatpush1.msra.mxu0 %v1382
  %1831 = vmatprep.subr.mxu0 %v1379
  %1832 = vmatpush1.msra.mxu0 %v1378
  %1833 = vmatprep.subr.mxu0 %v1375
  %1834 = vmatpush1.msra.mxu0 %v1374
  %1835 = vmatprep.subr.mxu0 %v1371
  %1836 = vmatpush1.msra.mxu0 %v1370
  %1837 = vmatprep.subr.mxu0 %v1367
  %1838 = vmatpush1.msra.mxu0 %v1366
  %1839 = vmatprep.subr.mxu0 %v1363
  %1840 = vmatpush1.msra.mxu0 %v1362
  %1841 = vmatprep.subr.mxu0 %v1359
  %1842 = vmatpush1.msra.mxu0 %v1358
  %1843 = vmatprep.subr.mxu0 %v1355
  %1844 = vmatpush1.msra.mxu0 %v1354
  %1845 = vmatprep.subr.mxu0 %v1351
  %1846 = vmatpush1.msra.mxu0 %v1350
  %1847 = vmatprep.subr.mxu0 %v1347
  %1848 = vmatpush1.msra.mxu0 %v1346
  %1849 = vmatprep.subr.mxu0 %v1343
  %1850 = vmatpush1.msra.mxu0 %v1342
  %1851 = vmatprep.subr.mxu0 %v1339
  %1852 = vmatpush1.msra.mxu0 %v1338
  %1853 = vmatprep.subr.mxu0 %v1335
  %1854 = vmatpush1.msra.mxu0 %v1334
  %1855 = vmatprep.subr.mxu0 %v1331
  %1856 = vmatpush1.msra.mxu0 %v1330
  %1857 = vmatprep.subr.mxu0 %v1327
  %1858 = vmatpush1.msra.mxu0 %v1326
  %1859 = vmatprep.subr.mxu0 0.0
  %1860 = vmatpush2.msra.mxu0 0.0
  %1861 = vmatprep.subr.mxu0 0.0
  %1862 = vmatpush2.msra.mxu0 0.0
  %1863 = vmatprep.subr.mxu0 0.0
  %1864 = vmatpush2.msra.mxu0 0.0
  %1865 = vmatprep.subr.mxu0 0.0
  %1866 = vmatpush2.msra.mxu0 0.0
  %1867 = vmatprep.subr.mxu0 0.0
  %1868 = vmatpush2.msra.mxu0 0.0
  %1869 = vmatprep.subr.mxu0 0.0
  %1870 = vmatpush2.msra.mxu0 0.0
  %1871 = vmatprep.subr.mxu0 0.0
  %1872 = vmatpush2.msra.mxu0 0.0
  %1873 = vmatprep.subr.mxu0 0.0
  %1874 = vmatpush2.msra.mxu0 0.0
  %1875 = vmatprep.subr.mxu0 0.0
  %1876 = vmatpush2.msra.mxu0 0.0
  %1877 = vmatprep.subr.mxu0 0.0
  %1878 = vmatpush2.msra.mxu0 0.0
  %1879 = vmatprep.subr.mxu0 0.0
  %1880 = vmatpush2.msra.mxu0 0.0
  %1881 = vmatprep.subr.mxu0 0.0
  %1882 = vmatpush2.msra.mxu0 0.0
  %1883 = vmatprep.subr.mxu0 %v1403
  %1884 = vmatpush2.msra.mxu0 %v1402
  %1885 = vmatprep.subr.mxu0 %v1399
  %1886 = vmatpush2.msra.mxu0 %v1398
  %1887 = vmatprep.subr.mxu0 %v1395
  %1888 = vmatpush2.msra.mxu0 %v1394
  %1889 = vmatprep.subr.mxu0 %v1391
  %1890 = vmatpush2.msra.mxu0 %v1390
  %1891 = vmatprep.mubr.f32.mxu0 %v1745
  %1892 = vmatmul.mubr.f32.gmra.mxu0 %v1738
  %v1893 = vpop.f32.mrf.mxu0
  %v1894 = vadd.f32 %v1817, %v1893
  %v1895 = vpop.f32.mrf.mxu0
  %v1896 = vadd.f32 %v1819, %v1895
  %1897 = vmatprep.mubr.f32.mxu0 %v1748
  %1898 = vmatmul.mubr.f32.gmra.mxu0 %v1742
  %v1899 = vpop.f32.mrf.mxu0
  %v1900 = vadd.f32 %v1823, %v1899
  %v1901 = vpop.f32.mrf.mxu0
  %v1902 = vadd.f32 %v1825, %v1901
  %1903 = vdwg.mxu0
  %1904 = vmatprep.subr.mxu0 %v1261
  %1905 = vmatpush1.msra.mxu0 %v1260
  %1906 = vmatprep.subr.mxu0 %v1257
  %1907 = vmatpush1.msra.mxu0 %v1256
  %1908 = vmatprep.subr.mxu0 %v1253
  %1909 = vmatpush1.msra.mxu0 %v1252
  %1910 = vmatprep.subr.mxu0 %v1249
  %1911 = vmatpush1.msra.mxu0 %v1248
  %1912 = vmatprep.subr.mxu0 %v1245
  %1913 = vmatpush1.msra.mxu0 %v1244
  %1914 = vmatprep.subr.mxu0 %v1241
  %1915 = vmatpush1.msra.mxu0 %v1240
  %1916 = vmatprep.subr.mxu0 %v1237
  %1917 = vmatpush1.msra.mxu0 %v1236
  %1918 = vmatprep.subr.mxu0 %v1233
  %1919 = vmatpush1.msra.mxu0 %v1232
  %1920 = vmatprep.subr.mxu0 %v1229
  %1921 = vmatpush1.msra.mxu0 %v1228
  %1922 = vmatprep.subr.mxu0 %v1225
  %1923 = vmatpush1.msra.mxu0 %v1224
  %1924 = vmatprep.subr.mxu0 %v1221
  %1925 = vmatpush1.msra.mxu0 %v1220
  %1926 = vmatprep.subr.mxu0 %v1217
  %1927 = vmatpush1.msra.mxu0 %v1216
  %1928 = vmatprep.subr.mxu0 %v1213
  %1929 = vmatpush1.msra.mxu0 %v1212
  %1930 = vmatprep.subr.mxu0 %v1209
  %1931 = vmatpush1.msra.mxu0 %v1208
  %1932 = vmatprep.subr.mxu0 %v1205
  %1933 = vmatpush1.msra.mxu0 %v1204
  %1934 = vmatprep.subr.mxu0 %v1201
  %1935 = vmatpush1.msra.mxu0 %v1200
  %1936 = vmatprep.subr.mxu0 %v1325
  %1937 = vmatpush2.msra.mxu0 %v1324
  %1938 = vmatprep.subr.mxu0 %v1321
  %1939 = vmatpush2.msra.mxu0 %v1320
  %1940 = vmatprep.subr.mxu0 %v1317
  %1941 = vmatpush2.msra.mxu0 %v1316
  %1942 = vmatprep.subr.mxu0 %v1313
  %1943 = vmatpush2.msra.mxu0 %v1312
  %1944 = vmatprep.subr.mxu0 %v1309
  %1945 = vmatpush2.msra.mxu0 %v1308
  %1946 = vmatprep.subr.mxu0 %v1305
  %1947 = vmatpush2.msra.mxu0 %v1304
  %1948 = vmatprep.subr.mxu0 %v1301
  %1949 = vmatpush2.msra.mxu0 %v1300
  %1950 = vmatprep.subr.mxu0 %v1297
  %1951 = vmatpush2.msra.mxu0 %v1296
  %1952 = vmatprep.subr.mxu0 %v1293
  %1953 = vmatpush2.msra.mxu0 %v1292
  %1954 = vmatprep.subr.mxu0 %v1289
  %1955 = vmatpush2.msra.mxu0 %v1288
  %1956 = vmatprep.subr.mxu0 %v1285
  %1957 = vmatpush2.msra.mxu0 %v1284
  %1958 = vmatprep.subr.mxu0 %v1281
  %1959 = vmatpush2.msra.mxu0 %v1280
  %1960 = vmatprep.subr.mxu0 %v1277
  %1961 = vmatpush2.msra.mxu0 %v1276
  %1962 = vmatprep.subr.mxu0 %v1273
  %1963 = vmatpush2.msra.mxu0 %v1272
  %1964 = vmatprep.subr.mxu0 %v1269
  %1965 = vmatpush2.msra.mxu0 %v1268
  %1966 = vmatprep.subr.mxu0 %v1265
  %1967 = vmatpush2.msra.mxu0 %v1264
  %1968 = vmatprep.mubr.f32.mxu0 %v1737
  %1969 = vmatmul.mubr.f32.gmra.mxu0 %v1736
  %v1970 = vpop.f32.mrf.mxu0
  %v1971 = vadd.f32 0.0, %v1970
  %v1972 = vpop.f32.mrf.mxu0
  %v1973 = vadd.f32 0.0, %v1972
  %1974 = vmatprep.mubr.f32.mxu0 %v1741
  %1975 = vmatmul.mubr.f32.gmra.mxu0 %v1740
  %v1976 = vpop.f32.mrf.mxu0
  %v1977 = vadd.f32 0.0, %v1976
  %v1978 = vpop.f32.mrf.mxu0
  %v1979 = vadd.f32 0.0, %v1978
  %1980 = vdwg.mxu0
  %1981 = vmatprep.subr.mxu0 %v1389
  %1982 = vmatpush1.msra.mxu0 %v1388
  %1983 = vmatprep.subr.mxu0 %v1385
  %1984 = vmatpush1.msra.mxu0 %v1384
  %1985 = vmatprep.subr.mxu0 %v1381
  %1986 = vmatpush1.msra.mxu0 %v1380
  %1987 = vmatprep.subr.mxu0 %v1377
  %1988 = vmatpush1.msra.mxu0 %v1376
  %1989 = vmatprep.subr.mxu0 %v1373
  %1990 = vmatpush1.msra.mxu0 %v1372
  %1991 = vmatprep.subr.mxu0 %v1369
  %1992 = vmatpush1.msra.mxu0 %v1368
  %1993 = vmatprep.subr.mxu0 %v1365
  %1994 = vmatpush1.msra.mxu0 %v1364
  %1995 = vmatprep.subr.mxu0 %v1361
  %1996 = vmatpush1.msra.mxu0 %v1360
  %1997 = vmatprep.subr.mxu0 %v1357
  %1998 = vmatpush1.msra.mxu0 %v1356
  %1999 = vmatprep.subr.mxu0 %v1353
  %2000 = vmatpush1.msra.mxu0 %v1352
  %2001 = vmatprep.subr.mxu0 %v1349
  %2002 = vmatpush1.msra.mxu0 %v1348
  %2003 = vmatprep.subr.mxu0 %v1345
  %2004 = vmatpush1.msra.mxu0 %v1344
  %2005 = vmatprep.subr.mxu0 %v1341
  %2006 = vmatpush1.msra.mxu0 %v1340
  %2007 = vmatprep.subr.mxu0 %v1337
  %2008 = vmatpush1.msra.mxu0 %v1336
  %2009 = vmatprep.subr.mxu0 %v1333
  %2010 = vmatpush1.msra.mxu0 %v1332
  %2011 = vmatprep.subr.mxu0 %v1329
  %2012 = vmatpush1.msra.mxu0 %v1328
  %2013 = vmatprep.subr.mxu0 0.0
  %2014 = vmatpush2.msra.mxu0 0.0
  %2015 = vmatprep.subr.mxu0 0.0
  %2016 = vmatpush2.msra.mxu0 0.0
  %2017 = vmatprep.subr.mxu0 0.0
  %2018 = vmatpush2.msra.mxu0 0.0
  %2019 = vmatprep.subr.mxu0 0.0
  %2020 = vmatpush2.msra.mxu0 0.0
  %2021 = vmatprep.subr.mxu0 0.0
  %2022 = vmatpush2.msra.mxu0 0.0
  %2023 = vmatprep.subr.mxu0 0.0
  %2024 = vmatpush2.msra.mxu0 0.0
  %2025 = vmatprep.subr.mxu0 0.0
  %2026 = vmatpush2.msra.mxu0 0.0
  %2027 = vmatprep.subr.mxu0 0.0
  %2028 = vmatpush2.msra.mxu0 0.0
  %2029 = vmatprep.subr.mxu0 0.0
  %2030 = vmatpush2.msra.mxu0 0.0
  %2031 = vmatprep.subr.mxu0 0.0
  %2032 = vmatpush2.msra.mxu0 0.0
  %2033 = vmatprep.subr.mxu0 0.0
  %2034 = vmatpush2.msra.mxu0 0.0
  %2035 = vmatprep.subr.mxu0 0.0
  %2036 = vmatpush2.msra.mxu0 0.0
  %2037 = vmatprep.subr.mxu0 %v1405
  %2038 = vmatpush2.msra.mxu0 %v1404
  %2039 = vmatprep.subr.mxu0 %v1401
  %2040 = vmatpush2.msra.mxu0 %v1400
  %2041 = vmatprep.subr.mxu0 %v1397
  %2042 = vmatpush2.msra.mxu0 %v1396
  %2043 = vmatprep.subr.mxu0 %v1393
  %2044 = vmatpush2.msra.mxu0 %v1392
  %2045 = vmatprep.mubr.f32.mxu0 %v1745
  %2046 = vmatmul.mubr.f32.gmra.mxu0 %v1738
  %v2047 = vpop.f32.mrf.mxu0
  %v2048 = vadd.f32 %v1971, %v2047
  %v2049 = vpop.f32.mrf.mxu0
  %v2050 = vadd.f32 %v1973, %v2049
  %2051 = vmatprep.mubr.f32.mxu0 %v1748
  %2052 = vmatmul.mubr.f32.gmra.mxu0 %v1742
  %v2053 = vpop.f32.mrf.mxu0
  %v2054 = vadd.f32 %v1977, %v2053
  %v2055 = vpop.f32.mrf.mxu0
  %v2056 = vadd.f32 %v1979, %v2055
  %2057 = vdwg.mxu0
  %v2058 = vmul.f32 %v1894, 0.95
  %v2059 = vmul.f32 %v1896, 0.95
  %v2060 = vmul.f32 %v2048, 0.95
  %v2061 = vmul.f32 %v2050, 0.95
  %v2062 = vmul.f32 %v1900, 0.95
  %v2063 = vmul.f32 %v1902, 0.95
  %v2064 = vmul.f32 %v2054, 0.95
  %v2065 = vmul.f32 %v2056, 0.95
  %v2066 = vadd.f32 %v1406, %v2058
  %v2067 = vadd.f32 %v1407, %v2059
  %v2068 = vadd.f32 %v1408, %v2060
  %v2069 = vadd.f32 %v1409, %v2061
  %v2070 = vadd.f32 %v1410, %v2062
  %v2071 = vadd.f32 %v1411, %v2063
  %v2072 = vadd.f32 %v1412, %v2064
  %v2073 = vadd.f32 %v1413, %v2065
  %v2074 = vld [vmem:[%s7] sm:$0xff]
  %v2075 = vld [vmem:[%s7 + $0x8] sm:$0xff]
  %v2076 = vld [vmem:[%s7 + $0x10] sm:$0xff]
  %v2077 = vld [vmem:[%s7 + $0x18] sm:$0xff]
  %v2078 = vld [vmem:[%s7 + $0x20] sm:$0xff]
  %v2079 = vld [vmem:[%s7 + $0x28] sm:$0xff]
  %v2080 = vld [vmem:[%s7 + $0x30] sm:$0xff]
  %v2081 = vld [vmem:[%s7 + $0x38] sm:$0xff]
  %v2082 = vld [vmem:[%s7 + $0x40] sm:$0xff]
  %v2083 = vld [vmem:[%s7 + $0x48] sm:$0xff]
  %v2084 = vld [vmem:[%s7 + $0x50] sm:$0xff]
  %v2085 = vld [vmem:[%s7 + $0x58] sm:$0xff]
  %v2086 = vld [vmem:[%s7 + $0x60] sm:$0xff]
  %v2087 = vld [vmem:[%s7 + $0x68] sm:$0xff]
  %v2088 = vld [vmem:[%s7 + $0x70] sm:$0xff]
  %v2089 = vld [vmem:[%s7 + $0x78] sm:$0xff]
  %v2090 = vld [vmem:[%s7 + $0x80] sm:$0xff]
  %v2091 = vld [vmem:[%s7 + $0x88] sm:$0xff]
  %v2092 = vld [vmem:[%s7 + $0x90] sm:$0xff]
  %v2093 = vld [vmem:[%s7 + $0x98] sm:$0xff]
  %v2094 = vld [vmem:[%s7 + $0xa0] sm:$0xff]
  %v2095 = vld [vmem:[%s7 + $0xa8] sm:$0xff]
  %v2096 = vld [vmem:[%s7 + $0xb0] sm:$0xff]
  %v2097 = vld [vmem:[%s7 + $0xb8] sm:$0xff]
  %v2098 = vld [vmem:[%s7 + $0xc0] sm:$0xff]
  %v2099 = vld [vmem:[%s7 + $0xc8] sm:$0xff]
  %v2100 = vld [vmem:[%s7 + $0xd0] sm:$0xff]
  %v2101 = vld [vmem:[%s7 + $0xd8] sm:$0xff]
  %v2102 = vld [vmem:[%s7 + $0xe0] sm:$0xff]
  %v2103 = vld [vmem:[%s7 + $0xe8] sm:$0xff]
  %v2104 = vld [vmem:[%s7 + $0xf0] sm:$0xff]
  %v2105 = vld [vmem:[%s7 + $0xf8] sm:$0xff]
  %v2106 = vld [vmem:[%s7 + $0x100] sm:$0xff]
  %v2107 = vld [vmem:[%s7 + $0x108] sm:$0xff]
  %v2108 = vld [vmem:[%s7 + $0x110] sm:$0xff]
  %v2109 = vld [vmem:[%s7 + $0x118] sm:$0xff]
  %v2110 = vld [vmem:[%s7 + $0x120] sm:$0xff]
  %v2111 = vld [vmem:[%s7 + $0x128] sm:$0xff]
  %v2112 = vld [vmem:[%s7 + $0x130] sm:$0xff]
  %v2113 = vld [vmem:[%s7 + $0x138] sm:$0xff]
  %v2114 = vld [vmem:[%s7 + $0x140] sm:$0xff]
  %v2115 = vld [vmem:[%s7 + $0x148] sm:$0xff]
  %v2116 = vld [vmem:[%s7 + $0x150] sm:$0xff]
  %v2117 = vld [vmem:[%s7 + $0x158] sm:$0xff]
  %v2118 = vld [vmem:[%s7 + $0x160] sm:$0xff]
  %v2119 = vld [vmem:[%s7 + $0x168] sm:$0xff]
  %v2120 = vld [vmem:[%s7 + $0x170] sm:$0xff]
  %v2121 = vld [vmem:[%s7 + $0x178] sm:$0xff]
  %v2122 = vld [vmem:[%s7 + $0x180] sm:$0xff]
  %v2123 = vld [vmem:[%s7 + $0x188] sm:$0xff]
  %v2124 = vld [vmem:[%s7 + $0x190] sm:$0xff]
  %v2125 = vld [vmem:[%s7 + $0x198] sm:$0xff]
  %v2126 = vld [vmem:[%s7 + $0x1a0] sm:$0xff]
  %v2127 = vld [vmem:[%s7 + $0x1a8] sm:$0xff]
  %v2128 = vld [vmem:[%s7 + $0x1b0] sm:$0xff]
  %v2129 = vld [vmem:[%s7 + $0x1b8] sm:$0xff]
  %v2130 = vld [vmem:[%s7 + $0x1c0] sm:$0xff]
  %v2131 = vld [vmem:[%s7 + $0x1c8] sm:$0xff]
  %v2132 = vld [vmem:[%s7 + $0x1d0] sm:$0xff]
  %v2133 = vld [vmem:[%s7 + $0x1d8] sm:$0xff]
  %v2134 = vld [vmem:[%s7 + $0x1e0] sm:$0xff]
  %v2135 = vld [vmem:[%s7 + $0x1e8] sm:$0xff]
  %v2136 = vld [vmem:[%s7 + $0x1f0] sm:$0xff]
  %v2137 = vld [vmem:[%s7 + $0x1f8] sm:$0xff]
  %v2138 = vld [vmem:[%s7 + $0x200] sm:$0xff]
  %v2139 = vld [vmem:[%s7 + $0x208] sm:$0xff]
  %v2140 = vld [vmem:[%s7 + $0x210] sm:$0xff]
  %v2141 = vld [vmem:[%s7 + $0x218] sm:$0xff]
  %v2142 = vld [vmem:[%s7 + $0x220] sm:$0xff]
  %v2143 = vld [vmem:[%s7 + $0x228] sm:$0xff]
  %v2144 = vld [vmem:[%s7 + $0x230] sm:$0xff]
  %v2145 = vld [vmem:[%s7 + $0x238] sm:$0xff]
  %v2146 = vld [vmem:[%s7 + $0x240] sm:$0xff]
  %v2147 = vld [vmem:[%s7 + $0x248] sm:$0xff]
  %v2148 = vld [vmem:[%s7 + $0x250] sm:$0xff]
  %v2149 = vld [vmem:[%s7 + $0x258] sm:$0xff]
  %v2150 = vld [vmem:[%s7 + $0x260] sm:$0xff]
  %v2151 = vld [vmem:[%s7 + $0x268] sm:$0xff]
  %v2152 = vld [vmem:[%s7 + $0x270] sm:$0xff]
  %v2153 = vld [vmem:[%s7 + $0x278] sm:$0xff]
  %v2154 = vld [vmem:[%s7 + $0x280] sm:$0xff]
  %v2155 = vld [vmem:[%s7 + $0x288] sm:$0xff]
  %v2156 = vld [vmem:[%s7 + $0x290] sm:$0xff]
  %v2157 = vld [vmem:[%s7 + $0x298] sm:$0xff]
  %v2158 = vld [vmem:[%s7 + $0x2a0] sm:$0xff]
  %v2159 = vld [vmem:[%s7 + $0x2a8] sm:$0xff]
  %v2160 = vld [vmem:[%s7 + $0x2b0] sm:$0xff]
  %v2161 = vld [vmem:[%s7 + $0x2b8] sm:$0xff]
  %v2162 = vld [vmem:[%s7 + $0x2c0] sm:$0xff]
  %v2163 = vld [vmem:[%s7 + $0x2c8] sm:$0xff]
  %v2164 = vld [vmem:[%s7 + $0x2d0] sm:$0xff]
  %v2165 = vld [vmem:[%s7 + $0x2d8] sm:$0xff]
  %v2166 = vld [vmem:[%s7 + $0x2e0] sm:$0xff]
  %v2167 = vld [vmem:[%s7 + $0x2e8] sm:$0xff]
  %v2168 = vld [vmem:[%s7 + $0x2f0] sm:$0xff]
  %v2169 = vld [vmem:[%s7 + $0x2f8] sm:$0xff]
  %v2170 = vld [vmem:[%s7 + $0x300] sm:$0xff]
  %v2171 = vld [vmem:[%s7 + $0x308] sm:$0xff]
  %v2172 = vld [vmem:[%s7 + $0x310] sm:$0xff]
  %v2173 = vld [vmem:[%s7 + $0x318] sm:$0xff]
  %v2174 = vld [vmem:[%s7 + $0x320] sm:$0xff]
  %v2175 = vld [vmem:[%s7 + $0x328] sm:$0xff]
  %v2176 = vld [vmem:[%s7 + $0x330] sm:$0xff]
  %v2177 = vld [vmem:[%s7 + $0x338] sm:$0xff]
  %v2178 = vld [vmem:[%s7 + $0x340] sm:$0xff]
  %v2179 = vld [vmem:[%s7 + $0x348] sm:$0xff]
  %v2180 = vld [vmem:[%s7 + $0x350] sm:$0xff]
  %v2181 = vld [vmem:[%s7 + $0x358] sm:$0xff]
  %v2182 = vld [vmem:[%s7 + $0x360] sm:$0xff]
  %v2183 = vld [vmem:[%s7 + $0x368] sm:$0xff]
  %v2184 = vld [vmem:[%s7 + $0x370] sm:$0xff]
  %v2185 = vld [vmem:[%s7 + $0x378] sm:$0xff]
  %v2186 = vld [vmem:[%s7 + $0x380] sm:$0xff]
  %v2187 = vld [vmem:[%s7 + $0x388] sm:$0xff]
  %v2188 = vld [vmem:[%s7 + $0x390] sm:$0xff]
  %v2189 = vld [vmem:[%s7 + $0x398] sm:$0xff]
  %v2190 = vld [vmem:[%s7 + $0x3a0] sm:$0xff]
  %v2191 = vld [vmem:[%s7 + $0x3a8] sm:$0xff]
  %v2192 = vld [vmem:[%s7 + $0x3b0] sm:$0xff]
  %v2193 = vld [vmem:[%s7 + $0x3b8] sm:$0xff]
  %v2194 = vld [vmem:[%s7 + $0x3c0] sm:$0xff]
  %v2195 = vld [vmem:[%s7 + $0x3c8] sm:$0xff]
  %v2196 = vld [vmem:[%s7 + $0x3d0] sm:$0xff]
  %v2197 = vld [vmem:[%s7 + $0x3d8] sm:$0xff]
  %v2198 = vld [vmem:[%s7 + $0x3e0] sm:$0xff]
  %v2199 = vld [vmem:[%s7 + $0x3e8] sm:$0xff]
  %v2200 = vld [vmem:[%s7 + $0x3f0] sm:$0xff]
  %v2201 = vld [vmem:[%s7 + $0x3f8] sm:$0xff]
  %v2202 = vld [vmem:[%s7 + $0x400] sm:$0xff]
  %v2203 = vld [vmem:[%s7 + $0x408] sm:$0xff]
  %v2204 = vld [vmem:[%s7 + $0x410] sm:$0xff]
  %v2205 = vld [vmem:[%s7 + $0x418] sm:$0xff]
  %v2206 = vld [vmem:[%s7 + $0x420] sm:$0xff]
  %v2207 = vld [vmem:[%s7 + $0x428] sm:$0xff]
  %v2208 = vld [vmem:[%s7 + $0x430] sm:$0xff]
  %v2209 = vld [vmem:[%s7 + $0x438] sm:$0xff]
  %v2210 = vld [vmem:[%s7 + $0x440] sm:$0xff]
  %v2211 = vld [vmem:[%s7 + $0x448] sm:$0xff]
  %v2212 = vld [vmem:[%s7 + $0x450] sm:$0xff]
  %v2213 = vld [vmem:[%s7 + $0x458] sm:$0xff]
  %v2214 = vld [vmem:[%s7 + $0x460] sm:$0xff]
  %v2215 = vld [vmem:[%s7 + $0x468] sm:$0xff]
  %v2216 = vld [vmem:[%s7 + $0x470] sm:$0xff]
  %v2217 = vld [vmem:[%s7 + $0x478] sm:$0xff]
  %v2218 = vld [vmem:[%s7 + $0x480] sm:$0xff]
  %v2219 = vld [vmem:[%s7 + $0x488] sm:$0xff]
  %v2220 = vld [vmem:[%s7 + $0x490] sm:$0xff]
  %v2221 = vld [vmem:[%s7 + $0x498] sm:$0xff]
  %v2222 = vld [vmem:[%s7 + $0x4a0] sm:$0xff]
  %v2223 = vld [vmem:[%s7 + $0x4a8] sm:$0xff]
  %v2224 = vld [vmem:[%s7 + $0x4b0] sm:$0xff]
  %v2225 = vld [vmem:[%s7 + $0x4b8] sm:$0xff]
  %v2226 = vld [vmem:[%s7 + $0x4c0] sm:$0xff]
  %v2227 = vld [vmem:[%s7 + $0x4c8] sm:$0xff]
  %v2228 = vld [vmem:[%s7 + $0x4d0] sm:$0xff]
  %v2229 = vld [vmem:[%s7 + $0x4d8] sm:$0xff]
  %v2230 = vld [vmem:[%s7 + $0x4e0] sm:$0xff]
  %v2231 = vld [vmem:[%s7 + $0x4e8] sm:$0xff]
  %v2232 = vld [vmem:[%s7 + $0x4f0] sm:$0xff]
  %v2233 = vld [vmem:[%s7 + $0x4f8] sm:$0xff]
  %v2234 = vld [vmem:[%s7 + $0x500] sm:$0xff]
  %v2235 = vld [vmem:[%s7 + $0x508] sm:$0xff]
  %v2236 = vld [vmem:[%s7 + $0x510] sm:$0xff]
  %v2237 = vld [vmem:[%s7 + $0x518] sm:$0xff]
  %v2238 = vld [vmem:[%s7 + $0x520] sm:$0xff]
  %v2239 = vld [vmem:[%s7 + $0x528] sm:$0xff]
  %v2240 = vld [vmem:[%s7 + $0x530] sm:$0xff]
  %v2241 = vld [vmem:[%s7 + $0x538] sm:$0xff]
  %v2242 = vld [vmem:[%s7 + $0x540] sm:$0xff]
  %v2243 = vld [vmem:[%s7 + $0x548] sm:$0xff]
  %v2244 = vld [vmem:[%s7 + $0x550] sm:$0xff]
  %v2245 = vld [vmem:[%s7 + $0x558] sm:$0xff]
  %v2246 = vld [vmem:[%s7 + $0x560] sm:$0xff]
  %v2247 = vld [vmem:[%s7 + $0x568] sm:$0xff]
  %v2248 = vld [vmem:[%s7 + $0x570] sm:$0xff]
  %v2249 = vld [vmem:[%s7 + $0x578] sm:$0xff]
  %v2250 = vld [vmem:[%s7 + $0x580] sm:$0xff]
  %v2251 = vld [vmem:[%s7 + $0x588] sm:$0xff]
  %v2252 = vld [vmem:[%s7 + $0x590] sm:$0xff]
  %v2253 = vld [vmem:[%s7 + $0x598] sm:$0xff]
  %v2254 = vld [vmem:[%s7 + $0x5a0] sm:$0xff]
  %v2255 = vld [vmem:[%s7 + $0x5a8] sm:$0xff]
  %v2256 = vld [vmem:[%s7 + $0x5b0] sm:$0xff]
  %v2257 = vld [vmem:[%s7 + $0x5b8] sm:$0xff]
  %v2258 = vld [vmem:[%s7 + $0x5c0] sm:$0xff]
  %v2259 = vld [vmem:[%s7 + $0x5c8] sm:$0xff]
  %v2260 = vld [vmem:[%s7 + $0x5d0] sm:$0xff]
  %v2261 = vld [vmem:[%s7 + $0x5d8] sm:$0xff]
  %v2262 = vld [vmem:[%s7 + $0x5e0] sm:$0xff]
  %v2263 = vld [vmem:[%s7 + $0x5e8] sm:$0xff]
  %v2264 = vld [vmem:[%s7 + $0x5f0] sm:$0xff]
  %v2265 = vld [vmem:[%s7 + $0x5f8] sm:$0xff]
  %v2266 = vld [vmem:[%s7 + $0x600] sm:$0xff]
  %v2267 = vld [vmem:[%s7 + $0x608] sm:$0xff]
  %v2268 = vld [vmem:[%s7 + $0x610] sm:$0xff]
  %v2269 = vld [vmem:[%s7 + $0x618] sm:$0xff]
  %v2270 = vld [vmem:[%s7 + $0x620] sm:$0xff]
  %v2271 = vld [vmem:[%s7 + $0x628] sm:$0xff]
  %v2272 = vld [vmem:[%s7 + $0x630] sm:$0xff]
  %v2273 = vld [vmem:[%s7 + $0x638] sm:$0xff]
  %v2274 = vld [vmem:[%s7 + $0x640] sm:$0xff]
  %v2275 = vld [vmem:[%s7 + $0x648] sm:$0xff]
  %v2276 = vld [vmem:[%s7 + $0x650] sm:$0xff]
  %v2277 = vld [vmem:[%s7 + $0x658] sm:$0xff]
  %v2278 = vld [vmem:[%s7 + $0x660] sm:$0xff]
  %v2279 = vld [vmem:[%s7 + $0x668] sm:$0xff]
  %v2280 = vld [vmem:[%s7 + $0x670] sm:$0xff]
  %v2281 = vld [vmem:[%s7 + $0x678] sm:$0xff]
  %2282 = vmatprep.subr.mxu0 %v2135
  %2283 = vmatpush1.msra.mxu0 %v2134
  %2284 = vmatprep.subr.mxu0 %v2131
  %2285 = vmatpush1.msra.mxu0 %v2130
  %2286 = vmatprep.subr.mxu0 %v2127
  %2287 = vmatpush1.msra.mxu0 %v2126
  %2288 = vmatprep.subr.mxu0 %v2123
  %2289 = vmatpush1.msra.mxu0 %v2122
  %2290 = vmatprep.subr.mxu0 %v2119
  %2291 = vmatpush1.msra.mxu0 %v2118
  %2292 = vmatprep.subr.mxu0 %v2115
  %2293 = vmatpush1.msra.mxu0 %v2114
  %2294 = vmatprep.subr.mxu0 %v2111
  %2295 = vmatpush1.msra.mxu0 %v2110
  %2296 = vmatprep.subr.mxu0 %v2107
  %2297 = vmatpush1.msra.mxu0 %v2106
  %2298 = vmatprep.subr.mxu0 %v2103
  %2299 = vmatpush1.msra.mxu0 %v2102
  %2300 = vmatprep.subr.mxu0 %v2099
  %2301 = vmatpush1.msra.mxu0 %v2098
  %2302 = vmatprep.subr.mxu0 %v2095
  %2303 = vmatpush1.msra.mxu0 %v2094
  %2304 = vmatprep.subr.mxu0 %v2091
  %2305 = vmatpush1.msra.mxu0 %v2090
  %2306 = vmatprep.subr.mxu0 %v2087
  %2307 = vmatpush1.msra.mxu0 %v2086
  %2308 = vmatprep.subr.mxu0 %v2083
  %2309 = vmatpush1.msra.mxu0 %v2082
  %2310 = vmatprep.subr.mxu0 %v2079
  %2311 = vmatpush1.msra.mxu0 %v2078
  %2312 = vmatprep.subr.mxu0 %v2075
  %2313 = vmatpush1.msra.mxu0 %v2074
  %2314 = vmatprep.subr.mxu0 %v2199
  %2315 = vmatpush2.msra.mxu0 %v2198
  %2316 = vmatprep.subr.mxu0 %v2195
  %2317 = vmatpush2.msra.mxu0 %v2194
  %2318 = vmatprep.subr.mxu0 %v2191
  %2319 = vmatpush2.msra.mxu0 %v2190
  %2320 = vmatprep.subr.mxu0 %v2187
  %2321 = vmatpush2.msra.mxu0 %v2186
  %2322 = vmatprep.subr.mxu0 %v2183
  %2323 = vmatpush2.msra.mxu0 %v2182
  %2324 = vmatprep.subr.mxu0 %v2179
  %2325 = vmatpush2.msra.mxu0 %v2178
  %2326 = vmatprep.subr.mxu0 %v2175
  %2327 = vmatpush2.msra.mxu0 %v2174
  %2328 = vmatprep.subr.mxu0 %v2171
  %2329 = vmatpush2.msra.mxu0 %v2170
  %2330 = vmatprep.subr.mxu0 %v2167
  %2331 = vmatpush2.msra.mxu0 %v2166
  %2332 = vmatprep.subr.mxu0 %v2163
  %2333 = vmatpush2.msra.mxu0 %v2162
  %2334 = vmatprep.subr.mxu0 %v2159
  %2335 = vmatpush2.msra.mxu0 %v2158
  %2336 = vmatprep.subr.mxu0 %v2155
  %2337 = vmatpush2.msra.mxu0 %v2154
  %2338 = vmatprep.subr.mxu0 %v2151
  %2339 = vmatpush2.msra.mxu0 %v2150
  %2340 = vmatprep.subr.mxu0 %v2147
  %2341 = vmatpush2.msra.mxu0 %v2146
  %2342 = vmatprep.subr.mxu0 %v2143
  %2343 = vmatpush2.msra.mxu0 %v2142
  %2344 = vmatprep.subr.mxu0 %v2139
  %2345 = vmatpush2.msra.mxu0 %v2138
  %2346 = vmatprep.mubr.f32.mxu0 %v993
  %2347 = vmatmul.mubr.f32.gmra.mxu0 %v992
  %v2348 = vpop.f32.mrf.mxu0
  %v2349 = vadd.f32 0.0, %v2348
  %v2350 = vpop.f32.mrf.mxu0
  %v2351 = vadd.f32 0.0, %v2350
  %2352 = vmatprep.mubr.f32.mxu0 %v997
  %2353 = vmatmul.mubr.f32.gmra.mxu0 %v996
  %v2354 = vpop.f32.mrf.mxu0
  %v2355 = vadd.f32 0.0, %v2354
  %v2356 = vpop.f32.mrf.mxu0
  %v2357 = vadd.f32 0.0, %v2356
  %2358 = vdwg.mxu0
  %2359 = vmatprep.subr.mxu0 %v2263
  %2360 = vmatpush1.msra.mxu0 %v2262
  %2361 = vmatprep.subr.mxu0 %v2259
  %2362 = vmatpush1.msra.mxu0 %v2258
  %2363 = vmatprep.subr.mxu0 %v2255
  %2364 = vmatpush1.msra.mxu0 %v2254
  %2365 = vmatprep.subr.mxu0 %v2251
  %2366 = vmatpush1.msra.mxu0 %v2250
  %2367 = vmatprep.subr.mxu0 %v2247
  %2368 = vmatpush1.msra.mxu0 %v2246
  %2369 = vmatprep.subr.mxu0 %v2243
  %2370 = vmatpush1.msra.mxu0 %v2242
  %2371 = vmatprep.subr.mxu0 %v2239
  %2372 = vmatpush1.msra.mxu0 %v2238
  %2373 = vmatprep.subr.mxu0 %v2235
  %2374 = vmatpush1.msra.mxu0 %v2234
  %2375 = vmatprep.subr.mxu0 %v2231
  %2376 = vmatpush1.msra.mxu0 %v2230
  %2377 = vmatprep.subr.mxu0 %v2227
  %2378 = vmatpush1.msra.mxu0 %v2226
  %2379 = vmatprep.subr.mxu0 %v2223
  %2380 = vmatpush1.msra.mxu0 %v2222
  %2381 = vmatprep.subr.mxu0 %v2219
  %2382 = vmatpush1.msra.mxu0 %v2218
  %2383 = vmatprep.subr.mxu0 %v2215
  %2384 = vmatpush1.msra.mxu0 %v2214
  %2385 = vmatprep.subr.mxu0 %v2211
  %2386 = vmatpush1.msra.mxu0 %v2210
  %2387 = vmatprep.subr.mxu0 %v2207
  %2388 = vmatpush1.msra.mxu0 %v2206
  %2389 = vmatprep.subr.mxu0 %v2203
  %2390 = vmatpush1.msra.mxu0 %v2202
  %2391 = vmatprep.subr.mxu0 0.0
  %2392 = vmatpush2.msra.mxu0 0.0
  %2393 = vmatprep.subr.mxu0 0.0
  %2394 = vmatpush2.msra.mxu0 0.0
  %2395 = vmatprep.subr.mxu0 0.0
  %2396 = vmatpush2.msra.mxu0 0.0
  %2397 = vmatprep.subr.mxu0 0.0
  %2398 = vmatpush2.msra.mxu0 0.0
  %2399 = vmatprep.subr.mxu0 0.0
  %2400 = vmatpush2.msra.mxu0 0.0
  %2401 = vmatprep.subr.mxu0 0.0
  %2402 = vmatpush2.msra.mxu0 0.0
  %2403 = vmatprep.subr.mxu0 0.0
  %2404 = vmatpush2.msra.mxu0 0.0
  %2405 = vmatprep.subr.mxu0 0.0
  %2406 = vmatpush2.msra.mxu0 0.0
  %2407 = vmatprep.subr.mxu0 0.0
  %2408 = vmatpush2.msra.mxu0 0.0
  %2409 = vmatprep.subr.mxu0 0.0
  %2410 = vmatpush2.msra.mxu0 0.0
  %2411 = vmatprep.subr.mxu0 0.0
  %2412 = vmatpush2.msra.mxu0 0.0
  %2413 = vmatprep.subr.mxu0 0.0
  %2414 = vmatpush2.msra.mxu0 0.0
  %2415 = vmatprep.subr.mxu0 %v2279
  %2416 = vmatpush2.msra.mxu0 %v2278
  %2417 = vmatprep.subr.mxu0 %v2275
  %2418 = vmatpush2.msra.mxu0 %v2274
  %2419 = vmatprep.subr.mxu0 %v2271
  %2420 = vmatpush2.msra.mxu0 %v2270
  %2421 = vmatprep.subr.mxu0 %v2267
  %2422 = vmatpush2.msra.mxu0 %v2266
  %2423 = vmatprep.mubr.f32.mxu0 %v1415
  %2424 = vmatmul.mubr.f32.gmra.mxu0 %v994
  %v2425 = vpop.f32.mrf.mxu0
  %v2426 = vadd.f32 %v2349, %v2425
  %v2427 = vpop.f32.mrf.mxu0
  %v2428 = vadd.f32 %v2351, %v2427
  %2429 = vmatprep.mubr.f32.mxu0 %v1418
  %2430 = vmatmul.mubr.f32.gmra.mxu0 %v998
  %v2431 = vpop.f32.mrf.mxu0
  %v2432 = vadd.f32 %v2355, %v2431
  %v2433 = vpop.f32.mrf.mxu0
  %v2434 = vadd.f32 %v2357, %v2433
  %2435 = vdwg.mxu0
  %2436 = vmatprep.subr.mxu0 %v2137
  %2437 = vmatpush1.msra.mxu0 %v2136
  %2438 = vmatprep.subr.mxu0 %v2133
  %2439 = vmatpush1.msra.mxu0 %v2132
  %2440 = vmatprep.subr.mxu0 %v2129
  %2441 = vmatpush1.msra.mxu0 %v2128
  %2442 = vmatprep.subr.mxu0 %v2125
  %2443 = vmatpush1.msra.mxu0 %v2124
  %2444 = vmatprep.subr.mxu0 %v2121
  %2445 = vmatpush1.msra.mxu0 %v2120
  %2446 = vmatprep.subr.mxu0 %v2117
  %2447 = vmatpush1.msra.mxu0 %v2116
  %2448 = vmatprep.subr.mxu0 %v2113
  %2449 = vmatpush1.msra.mxu0 %v2112
  %2450 = vmatprep.subr.mxu0 %v2109
  %2451 = vmatpush1.msra.mxu0 %v2108
  %2452 = vmatprep.subr.mxu0 %v2105
  %2453 = vmatpush1.msra.mxu0 %v2104
  %2454 = vmatprep.subr.mxu0 %v2101
  %2455 = vmatpush1.msra.mxu0 %v2100
  %2456 = vmatprep.subr.mxu0 %v2097
  %2457 = vmatpush1.msra.mxu0 %v2096
  %2458 = vmatprep.subr.mxu0 %v2093
  %2459 = vmatpush1.msra.mxu0 %v2092
  %2460 = vmatprep.subr.mxu0 %v2089
  %2461 = vmatpush1.msra.mxu0 %v2088
  %2462 = vmatprep.subr.mxu0 %v2085
  %2463 = vmatpush1.msra.mxu0 %v2084
  %2464 = vmatprep.subr.mxu0 %v2081
  %2465 = vmatpush1.msra.mxu0 %v2080
  %2466 = vmatprep.subr.mxu0 %v2077
  %2467 = vmatpush1.msra.mxu0 %v2076
  %2468 = vmatprep.subr.mxu0 %v2201
  %2469 = vmatpush2.msra.mxu0 %v2200
  %2470 = vmatprep.subr.mxu0 %v2197
  %2471 = vmatpush2.msra.mxu0 %v2196
  %2472 = vmatprep.subr.mxu0 %v2193
  %2473 = vmatpush2.msra.mxu0 %v2192
  %2474 = vmatprep.subr.mxu0 %v2189
  %2475 = vmatpush2.msra.mxu0 %v2188
  %2476 = vmatprep.subr.mxu0 %v2185
  %2477 = vmatpush2.msra.mxu0 %v2184
  %2478 = vmatprep.subr.mxu0 %v2181
  %2479 = vmatpush2.msra.mxu0 %v2180
  %2480 = vmatprep.subr.mxu0 %v2177
  %2481 = vmatpush2.msra.mxu0 %v2176
  %2482 = vmatprep.subr.mxu0 %v2173
  %2483 = vmatpush2.msra.mxu0 %v2172
  %2484 = vmatprep.subr.mxu0 %v2169
  %2485 = vmatpush2.msra.mxu0 %v2168
  %2486 = vmatprep.subr.mxu0 %v2165
  %2487 = vmatpush2.msra.mxu0 %v2164
  %2488 = vmatprep.subr.mxu0 %v2161
  %2489 = vmatpush2.msra.mxu0 %v2160
  %2490 = vmatprep.subr.mxu0 %v2157
  %2491 = vmatpush2.msra.mxu0 %v2156
  %2492 = vmatprep.subr.mxu0 %v2153
  %2493 = vmatpush2.msra.mxu0 %v2152
  %2494 = vmatprep.subr.mxu0 %v2149
  %2495 = vmatpush2.msra.mxu0 %v2148
  %2496 = vmatprep.subr.mxu0 %v2145
  %2497 = vmatpush2.msra.mxu0 %v2144
  %2498 = vmatprep.subr.mxu0 %v2141
  %2499 = vmatpush2.msra.mxu0 %v2140
  %2500 = vmatprep.mubr.f32.mxu0 %v993
  %2501 = vmatmul.mubr.f32.gmra.mxu0 %v992
  %v2502 = vpop.f32.mrf.mxu0
  %v2503 = vadd.f32 0.0, %v2502
  %v2504 = vpop.f32.mrf.mxu0
  %v2505 = vadd.f32 0.0, %v2504
  %2506 = vmatprep.mubr.f32.mxu0 %v997
  %2507 = vmatmul.mubr.f32.gmra.mxu0 %v996
  %v2508 = vpop.f32.mrf.mxu0
  %v2509 = vadd.f32 0.0, %v2508
  %v2510 = vpop.f32.mrf.mxu0
  %v2511 = vadd.f32 0.0, %v2510
  %2512 = vdwg.mxu0
  %2513 = vmatprep.subr.mxu0 %v2265
  %2514 = vmatpush1.msra.mxu0 %v2264
  %2515 = vmatprep.subr.mxu0 %v2261
  %2516 = vmatpush1.msra.mxu0 %v2260
  %2517 = vmatprep.subr.mxu0 %v2257
  %2518 = vmatpush1.msra.mxu0 %v2256
  %2519 = vmatprep.subr.mxu0 %v2253
  %2520 = vmatpush1.msra.mxu0 %v2252
  %2521 = vmatprep.subr.mxu0 %v2249
  %2522 = vmatpush1.msra.mxu0 %v2248
  %2523 = vmatprep.subr.mxu0 %v2245
  %2524 = vmatpush1.msra.mxu0 %v2244
  %2525 = vmatprep.subr.mxu0 %v2241
  %2526 = vmatpush1.msra.mxu0 %v2240
  %2527 = vmatprep.subr.mxu0 %v2237
  %2528 = vmatpush1.msra.mxu0 %v2236
  %2529 = vmatprep.subr.mxu0 %v2233
  %2530 = vmatpush1.msra.mxu0 %v2232
  %2531 = vmatprep.subr.mxu0 %v2229
  %2532 = vmatpush1.msra.mxu0 %v2228
  %2533 = vmatprep.subr.mxu0 %v2225
  %2534 = vmatpush1.msra.mxu0 %v2224
  %2535 = vmatprep.subr.mxu0 %v2221
  %2536 = vmatpush1.msra.mxu0 %v2220
  %2537 = vmatprep.subr.mxu0 %v2217
  %2538 = vmatpush1.msra.mxu0 %v2216
  %2539 = vmatprep.subr.mxu0 %v2213
  %2540 = vmatpush1.msra.mxu0 %v2212
  %2541 = vmatprep.subr.mxu0 %v2209
  %2542 = vmatpush1.msra.mxu0 %v2208
  %2543 = vmatprep.subr.mxu0 %v2205
  %2544 = vmatpush1.msra.mxu0 %v2204
  %2545 = vmatprep.subr.mxu0 0.0
  %2546 = vmatpush2.msra.mxu0 0.0
  %2547 = vmatprep.subr.mxu0 0.0
  %2548 = vmatpush2.msra.mxu0 0.0
  %2549 = vmatprep.subr.mxu0 0.0
  %2550 = vmatpush2.msra.mxu0 0.0
  %2551 = vmatprep.subr.mxu0 0.0
  %2552 = vmatpush2.msra.mxu0 0.0
  %2553 = vmatprep.subr.mxu0 0.0
  %2554 = vmatpush2.msra.mxu0 0.0
  %2555 = vmatprep.subr.mxu0 0.0
  %2556 = vmatpush2.msra.mxu0 0.0
  %2557 = vmatprep.subr.mxu0 0.0
  %2558 = vmatpush2.msra.mxu0 0.0
  %2559 = vmatprep.subr.mxu0 0.0
  %2560 = vmatpush2.msra.mxu0 0.0
  %2561 = vmatprep.subr.mxu0 0.0
  %2562 = vmatpush2.msra.mxu0 0.0
  %2563 = vmatprep.subr.mxu0 0.0
  %2564 = vmatpush2.msra.mxu0 0.0
  %2565 = vmatprep.subr.mxu0 0.0
  %2566 = vmatpush2.msra.mxu0 0.0
  %2567 = vmatprep.subr.mxu0 0.0
  %2568 = vmatpush2.msra.mxu0 0.0
  %2569 = vmatprep.subr.mxu0 %v2281
  %2570 = vmatpush2.msra.mxu0 %v2280
  %2571 = vmatprep.subr.mxu0 %v2277
  %2572 = vmatpush2.msra.mxu0 %v2276
  %2573 = vmatprep.subr.mxu0 %v2273
  %2574 = vmatpush2.msra.mxu0 %v2272
  %2575 = vmatprep.subr.mxu0 %v2269
  %2576 = vmatpush2.msra.mxu0 %v2268
  %2577 = vmatprep.mubr.f32.mxu0 %v1415
  %2578 = vmatmul.mubr.f32.gmra.mxu0 %v994
  %v2579 = vpop.f32.mrf.mxu0
  %v2580 = vadd.f32 %v2503, %v2579
  %v2581 = vpop.f32.mrf.mxu0
  %v2582 = vadd.f32 %v2505, %v2581
  %2583 = vmatprep.mubr.f32.mxu0 %v1418
  %2584 = vmatmul.mubr.f32.gmra.mxu0 %v998
  %v2585 = vpop.f32.mrf.mxu0
  %v2586 = vadd.f32 %v2509, %v2585
  %v2587 = vpop.f32.mrf.mxu0
  %v2588 = vadd.f32 %v2511, %v2587
  %2589 = vdwg.mxu0
  %v2590 = vmul.f32 %v2426, 0.95
  %v2591 = vmul.f32 %v2428, 0.95
  %v2592 = vmul.f32 %v2580, 0.95
  %v2593 = vmul.f32 %v2582, 0.95
  %v2594 = vmul.f32 %v2432, 0.95
  %v2595 = vmul.f32 %v2434, 0.95
  %v2596 = vmul.f32 %v2586, 0.95
  %v2597 = vmul.f32 %v2588, 0.95
  %v2598 = vadd.f32 %v1406, %v2590
  %v2599 = vadd.f32 %v1407, %v2591
  %v2600 = vadd.f32 %v1408, %v2592
  %v2601 = vadd.f32 %v1409, %v2593
  %v2602 = vadd.f32 %v1410, %v2594
  %v2603 = vadd.f32 %v1411, %v2595
  %v2604 = vadd.f32 %v1412, %v2596
  %v2605 = vadd.f32 %v1413, %v2597
  %v2607 = vsel %vm680, %v2601, 0
  %v2610 = vsel %vm680, %v2605, 0
  %2612 = vmatprep.subr.mxu0 %v2135
  %2613 = vmatpush1.msra.mxu0 %v2134
  %2614 = vmatprep.subr.mxu0 %v2131
  %2615 = vmatpush1.msra.mxu0 %v2130
  %2616 = vmatprep.subr.mxu0 %v2127
  %2617 = vmatpush1.msra.mxu0 %v2126
  %2618 = vmatprep.subr.mxu0 %v2123
  %2619 = vmatpush1.msra.mxu0 %v2122
  %2620 = vmatprep.subr.mxu0 %v2119
  %2621 = vmatpush1.msra.mxu0 %v2118
  %2622 = vmatprep.subr.mxu0 %v2115
  %2623 = vmatpush1.msra.mxu0 %v2114
  %2624 = vmatprep.subr.mxu0 %v2111
  %2625 = vmatpush1.msra.mxu0 %v2110
  %2626 = vmatprep.subr.mxu0 %v2107
  %2627 = vmatpush1.msra.mxu0 %v2106
  %2628 = vmatprep.subr.mxu0 %v2103
  %2629 = vmatpush1.msra.mxu0 %v2102
  %2630 = vmatprep.subr.mxu0 %v2099
  %2631 = vmatpush1.msra.mxu0 %v2098
  %2632 = vmatprep.subr.mxu0 %v2095
  %2633 = vmatpush1.msra.mxu0 %v2094
  %2634 = vmatprep.subr.mxu0 %v2091
  %2635 = vmatpush1.msra.mxu0 %v2090
  %2636 = vmatprep.subr.mxu0 %v2087
  %2637 = vmatpush1.msra.mxu0 %v2086
  %2638 = vmatprep.subr.mxu0 %v2083
  %2639 = vmatpush1.msra.mxu0 %v2082
  %2640 = vmatprep.subr.mxu0 %v2079
  %2641 = vmatpush1.msra.mxu0 %v2078
  %2642 = vmatprep.subr.mxu0 %v2075
  %2643 = vmatpush1.msra.mxu0 %v2074
  %2644 = vmatprep.subr.mxu0 %v2199
  %2645 = vmatpush2.msra.mxu0 %v2198
  %2646 = vmatprep.subr.mxu0 %v2195
  %2647 = vmatpush2.msra.mxu0 %v2194
  %2648 = vmatprep.subr.mxu0 %v2191
  %2649 = vmatpush2.msra.mxu0 %v2190
  %2650 = vmatprep.subr.mxu0 %v2187
  %2651 = vmatpush2.msra.mxu0 %v2186
  %2652 = vmatprep.subr.mxu0 %v2183
  %2653 = vmatpush2.msra.mxu0 %v2182
  %2654 = vmatprep.subr.mxu0 %v2179
  %2655 = vmatpush2.msra.mxu0 %v2178
  %2656 = vmatprep.subr.mxu0 %v2175
  %2657 = vmatpush2.msra.mxu0 %v2174
  %2658 = vmatprep.subr.mxu0 %v2171
  %2659 = vmatpush2.msra.mxu0 %v2170
  %2660 = vmatprep.subr.mxu0 %v2167
  %2661 = vmatpush2.msra.mxu0 %v2166
  %2662 = vmatprep.subr.mxu0 %v2163
  %2663 = vmatpush2.msra.mxu0 %v2162
  %2664 = vmatprep.subr.mxu0 %v2159
  %2665 = vmatpush2.msra.mxu0 %v2158
  %2666 = vmatprep.subr.mxu0 %v2155
  %2667 = vmatpush2.msra.mxu0 %v2154
  %2668 = vmatprep.subr.mxu0 %v2151
  %2669 = vmatpush2.msra.mxu0 %v2150
  %2670 = vmatprep.subr.mxu0 %v2147
  %2671 = vmatpush2.msra.mxu0 %v2146
  %2672 = vmatprep.subr.mxu0 %v2143
  %2673 = vmatpush2.msra.mxu0 %v2142
  %2674 = vmatprep.subr.mxu0 %v2139
  %2675 = vmatpush2.msra.mxu0 %v2138
  %2676 = vmatprep.mubr.f32.mxu0 %v2599
  %2677 = vmatmul.mubr.f32.gmra.mxu0 %v2598
  %v2678 = vpop.f32.mrf.mxu0
  %v2679 = vadd.f32 0.0, %v2678
  %v2680 = vpop.f32.mrf.mxu0
  %v2681 = vadd.f32 0.0, %v2680
  %2682 = vmatprep.mubr.f32.mxu0 %v2603
  %2683 = vmatmul.mubr.f32.gmra.mxu0 %v2602
  %v2684 = vpop.f32.mrf.mxu0
  %v2685 = vadd.f32 0.0, %v2684
  %v2686 = vpop.f32.mrf.mxu0
  %v2687 = vadd.f32 0.0, %v2686
  %2688 = vdwg.mxu0
  %2689 = vmatprep.subr.mxu0 %v2263
  %2690 = vmatpush1.msra.mxu0 %v2262
  %2691 = vmatprep.subr.mxu0 %v2259
  %2692 = vmatpush1.msra.mxu0 %v2258
  %2693 = vmatprep.subr.mxu0 %v2255
  %2694 = vmatpush1.msra.mxu0 %v2254
  %2695 = vmatprep.subr.mxu0 %v2251
  %2696 = vmatpush1.msra.mxu0 %v2250
  %2697 = vmatprep.subr.mxu0 %v2247
  %2698 = vmatpush1.msra.mxu0 %v2246
  %2699 = vmatprep.subr.mxu0 %v2243
  %2700 = vmatpush1.msra.mxu0 %v2242
  %2701 = vmatprep.subr.mxu0 %v2239
  %2702 = vmatpush1.msra.mxu0 %v2238
  %2703 = vmatprep.subr.mxu0 %v2235
  %2704 = vmatpush1.msra.mxu0 %v2234
  %2705 = vmatprep.subr.mxu0 %v2231
  %2706 = vmatpush1.msra.mxu0 %v2230
  %2707 = vmatprep.subr.mxu0 %v2227
  %2708 = vmatpush1.msra.mxu0 %v2226
  %2709 = vmatprep.subr.mxu0 %v2223
  %2710 = vmatpush1.msra.mxu0 %v2222
  %2711 = vmatprep.subr.mxu0 %v2219
  %2712 = vmatpush1.msra.mxu0 %v2218
  %2713 = vmatprep.subr.mxu0 %v2215
  %2714 = vmatpush1.msra.mxu0 %v2214
  %2715 = vmatprep.subr.mxu0 %v2211
  %2716 = vmatpush1.msra.mxu0 %v2210
  %2717 = vmatprep.subr.mxu0 %v2207
  %2718 = vmatpush1.msra.mxu0 %v2206
  %2719 = vmatprep.subr.mxu0 %v2203
  %2720 = vmatpush1.msra.mxu0 %v2202
  %2721 = vmatprep.subr.mxu0 0.0
  %2722 = vmatpush2.msra.mxu0 0.0
  %2723 = vmatprep.subr.mxu0 0.0
  %2724 = vmatpush2.msra.mxu0 0.0
  %2725 = vmatprep.subr.mxu0 0.0
  %2726 = vmatpush2.msra.mxu0 0.0
  %2727 = vmatprep.subr.mxu0 0.0
  %2728 = vmatpush2.msra.mxu0 0.0
  %2729 = vmatprep.subr.mxu0 0.0
  %2730 = vmatpush2.msra.mxu0 0.0
  %2731 = vmatprep.subr.mxu0 0.0
  %2732 = vmatpush2.msra.mxu0 0.0
  %2733 = vmatprep.subr.mxu0 0.0
  %2734 = vmatpush2.msra.mxu0 0.0
  %2735 = vmatprep.subr.mxu0 0.0
  %2736 = vmatpush2.msra.mxu0 0.0
  %2737 = vmatprep.subr.mxu0 0.0
  %2738 = vmatpush2.msra.mxu0 0.0
  %2739 = vmatprep.subr.mxu0 0.0
  %2740 = vmatpush2.msra.mxu0 0.0
  %2741 = vmatprep.subr.mxu0 0.0
  %2742 = vmatpush2.msra.mxu0 0.0
  %2743 = vmatprep.subr.mxu0 0.0
  %2744 = vmatpush2.msra.mxu0 0.0
  %2745 = vmatprep.subr.mxu0 %v2279
  %2746 = vmatpush2.msra.mxu0 %v2278
  %2747 = vmatprep.subr.mxu0 %v2275
  %2748 = vmatpush2.msra.mxu0 %v2274
  %2749 = vmatprep.subr.mxu0 %v2271
  %2750 = vmatpush2.msra.mxu0 %v2270
  %2751 = vmatprep.subr.mxu0 %v2267
  %2752 = vmatpush2.msra.mxu0 %v2266
  %2753 = vmatprep.mubr.f32.mxu0 %v2607
  %2754 = vmatmul.mubr.f32.gmra.mxu0 %v2600
  %v2755 = vpop.f32.mrf.mxu0
  %v2756 = vadd.f32 %v2679, %v2755
  %v2757 = vpop.f32.mrf.mxu0
  %v2758 = vadd.f32 %v2681, %v2757
  %2759 = vmatprep.mubr.f32.mxu0 %v2610
  %2760 = vmatmul.mubr.f32.gmra.mxu0 %v2604
  %v2761 = vpop.f32.mrf.mxu0
  %v2762 = vadd.f32 %v2685, %v2761
  %v2763 = vpop.f32.mrf.mxu0
  %v2764 = vadd.f32 %v2687, %v2763
  %2765 = vdwg.mxu0
  %2766 = vmatprep.subr.mxu0 %v2137
  %2767 = vmatpush1.msra.mxu0 %v2136
  %2768 = vmatprep.subr.mxu0 %v2133
  %2769 = vmatpush1.msra.mxu0 %v2132
  %2770 = vmatprep.subr.mxu0 %v2129
  %2771 = vmatpush1.msra.mxu0 %v2128
  %2772 = vmatprep.subr.mxu0 %v2125
  %2773 = vmatpush1.msra.mxu0 %v2124
  %2774 = vmatprep.subr.mxu0 %v2121
  %2775 = vmatpush1.msra.mxu0 %v2120
  %2776 = vmatprep.subr.mxu0 %v2117
  %2777 = vmatpush1.msra.mxu0 %v2116
  %2778 = vmatprep.subr.mxu0 %v2113
  %2779 = vmatpush1.msra.mxu0 %v2112
  %2780 = vmatprep.subr.mxu0 %v2109
  %2781 = vmatpush1.msra.mxu0 %v2108
  %2782 = vmatprep.subr.mxu0 %v2105
  %2783 = vmatpush1.msra.mxu0 %v2104
  %2784 = vmatprep.subr.mxu0 %v2101
  %2785 = vmatpush1.msra.mxu0 %v2100
  %2786 = vmatprep.subr.mxu0 %v2097
  %2787 = vmatpush1.msra.mxu0 %v2096
  %2788 = vmatprep.subr.mxu0 %v2093
  %2789 = vmatpush1.msra.mxu0 %v2092
  %2790 = vmatprep.subr.mxu0 %v2089
  %2791 = vmatpush1.msra.mxu0 %v2088
  %2792 = vmatprep.subr.mxu0 %v2085
  %2793 = vmatpush1.msra.mxu0 %v2084
  %2794 = vmatprep.subr.mxu0 %v2081
  %2795 = vmatpush1.msra.mxu0 %v2080
  %2796 = vmatprep.subr.mxu0 %v2077
  %2797 = vmatpush1.msra.mxu0 %v2076
  %2798 = vmatprep.subr.mxu0 %v2201
  %2799 = vmatpush2.msra.mxu0 %v2200
  %2800 = vmatprep.subr.mxu0 %v2197
  %2801 = vmatpush2.msra.mxu0 %v2196
  %2802 = vmatprep.subr.mxu0 %v2193
  %2803 = vmatpush2.msra.mxu0 %v2192
  %2804 = vmatprep.subr.mxu0 %v2189
  %2805 = vmatpush2.msra.mxu0 %v2188
  %2806 = vmatprep.subr.mxu0 %v2185
  %2807 = vmatpush2.msra.mxu0 %v2184
  %2808 = vmatprep.subr.mxu0 %v2181
  %2809 = vmatpush2.msra.mxu0 %v2180
  %2810 = vmatprep.subr.mxu0 %v2177
  %2811 = vmatpush2.msra.mxu0 %v2176
  %2812 = vmatprep.subr.mxu0 %v2173
  %2813 = vmatpush2.msra.mxu0 %v2172
  %2814 = vmatprep.subr.mxu0 %v2169
  %2815 = vmatpush2.msra.mxu0 %v2168
  %2816 = vmatprep.subr.mxu0 %v2165
  %2817 = vmatpush2.msra.mxu0 %v2164
  %2818 = vmatprep.subr.mxu0 %v2161
  %2819 = vmatpush2.msra.mxu0 %v2160
  %2820 = vmatprep.subr.mxu0 %v2157
  %2821 = vmatpush2.msra.mxu0 %v2156
  %2822 = vmatprep.subr.mxu0 %v2153
  %2823 = vmatpush2.msra.mxu0 %v2152
  %2824 = vmatprep.subr.mxu0 %v2149
  %2825 = vmatpush2.msra.mxu0 %v2148
  %2826 = vmatprep.subr.mxu0 %v2145
  %2827 = vmatpush2.msra.mxu0 %v2144
  %2828 = vmatprep.subr.mxu0 %v2141
  %2829 = vmatpush2.msra.mxu0 %v2140
  %2830 = vmatprep.mubr.f32.mxu0 %v2599
  %2831 = vmatmul.mubr.f32.gmra.mxu0 %v2598
  %v2832 = vpop.f32.mrf.mxu0
  %v2833 = vadd.f32 0.0, %v2832
  %v2834 = vpop.f32.mrf.mxu0
  %v2835 = vadd.f32 0.0, %v2834
  %2836 = vmatprep.mubr.f32.mxu0 %v2603
  %2837 = vmatmul.mubr.f32.gmra.mxu0 %v2602
  %v2838 = vpop.f32.mrf.mxu0
  %v2839 = vadd.f32 0.0, %v2838
  %v2840 = vpop.f32.mrf.mxu0
  %v2841 = vadd.f32 0.0, %v2840
  %2842 = vdwg.mxu0
  %2843 = vmatprep.subr.mxu0 %v2265
  %2844 = vmatpush1.msra.mxu0 %v2264
  %2845 = vmatprep.subr.mxu0 %v2261
  %2846 = vmatpush1.msra.mxu0 %v2260
  %2847 = vmatprep.subr.mxu0 %v2257
  %2848 = vmatpush1.msra.mxu0 %v2256
  %2849 = vmatprep.subr.mxu0 %v2253
  %2850 = vmatpush1.msra.mxu0 %v2252
  %2851 = vmatprep.subr.mxu0 %v2249
  %2852 = vmatpush1.msra.mxu0 %v2248
  %2853 = vmatprep.subr.mxu0 %v2245
  %2854 = vmatpush1.msra.mxu0 %v2244
  %2855 = vmatprep.subr.mxu0 %v2241
  %2856 = vmatpush1.msra.mxu0 %v2240
  %2857 = vmatprep.subr.mxu0 %v2237
  %2858 = vmatpush1.msra.mxu0 %v2236
  %2859 = vmatprep.subr.mxu0 %v2233
  %2860 = vmatpush1.msra.mxu0 %v2232
  %2861 = vmatprep.subr.mxu0 %v2229
  %2862 = vmatpush1.msra.mxu0 %v2228
  %2863 = vmatprep.subr.mxu0 %v2225
  %2864 = vmatpush1.msra.mxu0 %v2224
  %2865 = vmatprep.subr.mxu0 %v2221
  %2866 = vmatpush1.msra.mxu0 %v2220
  %2867 = vmatprep.subr.mxu0 %v2217
  %2868 = vmatpush1.msra.mxu0 %v2216
  %2869 = vmatprep.subr.mxu0 %v2213
  %2870 = vmatpush1.msra.mxu0 %v2212
  %2871 = vmatprep.subr.mxu0 %v2209
  %2872 = vmatpush1.msra.mxu0 %v2208
  %2873 = vmatprep.subr.mxu0 %v2205
  %2874 = vmatpush1.msra.mxu0 %v2204
  %2875 = vmatprep.subr.mxu0 0.0
  %2876 = vmatpush2.msra.mxu0 0.0
  %2877 = vmatprep.subr.mxu0 0.0
  %2878 = vmatpush2.msra.mxu0 0.0
  %2879 = vmatprep.subr.mxu0 0.0
  %2880 = vmatpush2.msra.mxu0 0.0
  %2881 = vmatprep.subr.mxu0 0.0
  %2882 = vmatpush2.msra.mxu0 0.0
  %2883 = vmatprep.subr.mxu0 0.0
  %2884 = vmatpush2.msra.mxu0 0.0
  %2885 = vmatprep.subr.mxu0 0.0
  %2886 = vmatpush2.msra.mxu0 0.0
  %2887 = vmatprep.subr.mxu0 0.0
  %2888 = vmatpush2.msra.mxu0 0.0
  %2889 = vmatprep.subr.mxu0 0.0
  %2890 = vmatpush2.msra.mxu0 0.0
  %2891 = vmatprep.subr.mxu0 0.0
  %2892 = vmatpush2.msra.mxu0 0.0
  %2893 = vmatprep.subr.mxu0 0.0
  %2894 = vmatpush2.msra.mxu0 0.0
  %2895 = vmatprep.subr.mxu0 0.0
  %2896 = vmatpush2.msra.mxu0 0.0
  %2897 = vmatprep.subr.mxu0 0.0
  %2898 = vmatpush2.msra.mxu0 0.0
  %2899 = vmatprep.subr.mxu0 %v2281
  %2900 = vmatpush2.msra.mxu0 %v2280
  %2901 = vmatprep.subr.mxu0 %v2277
  %2902 = vmatpush2.msra.mxu0 %v2276
  %2903 = vmatprep.subr.mxu0 %v2273
  %2904 = vmatpush2.msra.mxu0 %v2272
  %2905 = vmatprep.subr.mxu0 %v2269
  %2906 = vmatpush2.msra.mxu0 %v2268
  %2907 = vmatprep.mubr.f32.mxu0 %v2607
  %2908 = vmatmul.mubr.f32.gmra.mxu0 %v2600
  %v2909 = vpop.f32.mrf.mxu0
  %v2910 = vadd.f32 %v2833, %v2909
  %v2911 = vpop.f32.mrf.mxu0
  %v2912 = vadd.f32 %v2835, %v2911
  %2913 = vmatprep.mubr.f32.mxu0 %v2610
  %2914 = vmatmul.mubr.f32.gmra.mxu0 %v2604
  %v2915 = vpop.f32.mrf.mxu0
  %v2916 = vadd.f32 %v2839, %v2915
  %v2917 = vpop.f32.mrf.mxu0
  %v2918 = vadd.f32 %v2841, %v2917
  %2919 = vdwg.mxu0
  %v2920 = vmul.f32 %v2756, 0.95
  %v2921 = vmul.f32 %v2758, 0.95
  %v2922 = vmul.f32 %v2910, 0.95
  %v2923 = vmul.f32 %v2912, 0.95
  %v2924 = vmul.f32 %v2762, 0.95
  %v2925 = vmul.f32 %v2764, 0.95
  %v2926 = vmul.f32 %v2916, 0.95
  %v2927 = vmul.f32 %v2918, 0.95
  %v2928 = vadd.f32 %v1406, %v2920
  %v2929 = vadd.f32 %v1407, %v2921
  %v2930 = vadd.f32 %v1408, %v2922
  %v2931 = vadd.f32 %v1409, %v2923
  %v2932 = vadd.f32 %v1410, %v2924
  %v2933 = vadd.f32 %v1411, %v2925
  %v2934 = vadd.f32 %v1412, %v2926
  %v2935 = vadd.f32 %v1413, %v2927
  %v2936 = vld [vmem:[%s59] sm:$0xff]
  %v2937 = vld [vmem:[%s59 + $0x8] sm:$0xff]
  %v2938 = vld [vmem:[%s21] sm:$0xff]
  %v2939 = vld [vmem:[%s21 + $0x8] sm:$0xff]
  %2941 = vset.pattern.permute.xlu0 0
  %2942 = vperm.xlu0 %2941, %v2938
  %v2943 = vpop.permute.xlu0 %2942
  %2946 = vset.pattern.permute.xlu0 0
  %2947 = vperm.xlu0 %2946, %v2939
  %v2948 = vpop.permute.xlu0 %2947
  %v2951 = vsel %vm618, %v2936, 0
  %v2954 = vsel %vm618, %v2937, 0
  %2956 = vmatprep.subr.mxu0 0.0
  %2957 = vmatpush1.msra.mxu0 0.0
  %2958 = vmatprep.subr.mxu0 0.0
  %2959 = vmatpush1.msra.mxu0 0.0
  %2960 = vmatprep.subr.mxu0 0.0
  %2961 = vmatpush1.msra.mxu0 0.0
  %2962 = vmatprep.subr.mxu0 0.0
  %2963 = vmatpush1.msra.mxu0 0.0
  %2964 = vmatprep.subr.mxu0 %v2933
  %2965 = vmatpush1.msra.mxu0 %v2932
  %2966 = vmatprep.subr.mxu0 %v2929
  %2967 = vmatpush1.msra.mxu0 %v2928
  %2968 = vmatprep.subr.mxu0 %v2603
  %2969 = vmatpush1.msra.mxu0 %v2602
  %2970 = vmatprep.subr.mxu0 %v2599
  %2971 = vmatpush1.msra.mxu0 %v2598
  %2972 = vmatprep.subr.mxu0 %v997
  %2973 = vmatpush1.msra.mxu0 %v996
  %2974 = vmatprep.subr.mxu0 %v993
  %2975 = vmatpush1.msra.mxu0 %v992
  %2976 = vmatprep.subr.mxu0 %v2071
  %2977 = vmatpush1.msra.mxu0 %v2070
  %2978 = vmatprep.subr.mxu0 %v2067
  %2979 = vmatpush1.msra.mxu0 %v2066
  %2980 = vmatprep.subr.mxu0 %v1741
  %2981 = vmatpush1.msra.mxu0 %v1740
  %2982 = vmatprep.subr.mxu0 %v1737
  %2983 = vmatpush1.msra.mxu0 %v1736
  %2984 = vmatprep.subr.mxu0 %v997
  %2985 = vmatpush1.msra.mxu0 %v996
  %2986 = vmatprep.subr.mxu0 %v993
  %2987 = vmatpush1.msra.mxu0 %v992
  %2988 = vmatprep.subr.mxu0 0.0
  %2989 = vmatpush2.msra.mxu0 0.0
  %2990 = vmatprep.subr.mxu0 0.0
  %2991 = vmatpush2.msra.mxu0 0.0
  %2992 = vmatprep.subr.mxu0 0.0
  %2993 = vmatpush2.msra.mxu0 0.0
  %2994 = vmatprep.subr.mxu0 0.0
  %2995 = vmatpush2.msra.mxu0 0.0
  %2996 = vmatprep.subr.mxu0 0.0
  %2997 = vmatpush2.msra.mxu0 0.0
  %2998 = vmatprep.subr.mxu0 0.0
  %2999 = vmatpush2.msra.mxu0 0.0
  %3000 = vmatprep.subr.mxu0 0.0
  %3001 = vmatpush2.msra.mxu0 0.0
  %3002 = vmatprep.subr.mxu0 0.0
  %3003 = vmatpush2.msra.mxu0 0.0
  %3004 = vmatprep.subr.mxu0 0.0
  %3005 = vmatpush2.msra.mxu0 0.0
  %3006 = vmatprep.subr.mxu0 0.0
  %3007 = vmatpush2.msra.mxu0 0.0
  %3008 = vmatprep.subr.mxu0 0.0
  %3009 = vmatpush2.msra.mxu0 0.0
  %3010 = vmatprep.subr.mxu0 0.0
  %3011 = vmatpush2.msra.mxu0 0.0
  %3012 = vmatprep.subr.mxu0 0.0
  %3013 = vmatpush2.msra.mxu0 0.0
  %3014 = vmatprep.subr.mxu0 0.0
  %3015 = vmatpush2.msra.mxu0 0.0
  %3016 = vmatprep.subr.mxu0 0.0
  %3017 = vmatpush2.msra.mxu0 0.0
  %3018 = vmatprep.subr.mxu0 0.0
  %3019 = vmatpush2.msra.mxu0 0.0
  %3020 = vmatprep.mubr.f32.mxu0 0.0
  %3021 = vmatmul.mubr.f32.gmra.mxu0 %v2951
  %v3022 = vpop.f32.mrf.mxu0
  %v3023 = vadd.f32 %v2943, %v3022
  %v3024 = vpop.f32.mrf.mxu0
  %v3025 = vadd.f32 %v2943, %v3024
  %3026 = vmatprep.mubr.f32.mxu0 0.0
  %3027 = vmatmul.mubr.f32.gmra.mxu0 %v2954
  %v3028 = vpop.f32.mrf.mxu0
  %v3029 = vadd.f32 %v2948, %v3028
  %v3030 = vpop.f32.mrf.mxu0
  %v3031 = vadd.f32 %v2948, %v3030
  %3032 = vdwg.mxu0
  %3033 = vmatprep.subr.mxu0 0.0
  %3034 = vmatpush1.msra.mxu0 0.0
  %3035 = vmatprep.subr.mxu0 0.0
  %3036 = vmatpush1.msra.mxu0 0.0
  %3037 = vmatprep.subr.mxu0 0.0
  %3038 = vmatpush1.msra.mxu0 0.0
  %3039 = vmatprep.subr.mxu0 0.0
  %3040 = vmatpush1.msra.mxu0 0.0
  %3041 = vmatprep.subr.mxu0 %v2935
  %3042 = vmatpush1.msra.mxu0 %v2934
  %3043 = vmatprep.subr.mxu0 %v2931
  %3044 = vmatpush1.msra.mxu0 %v2930
  %3045 = vmatprep.subr.mxu0 %v2605
  %3046 = vmatpush1.msra.mxu0 %v2604
  %3047 = vmatprep.subr.mxu0 %v2601
  %3048 = vmatpush1.msra.mxu0 %v2600
  %3049 = vmatprep.subr.mxu0 %v999
  %3050 = vmatpush1.msra.mxu0 %v998
  %3051 = vmatprep.subr.mxu0 %v995
  %3052 = vmatpush1.msra.mxu0 %v994
  %3053 = vmatprep.subr.mxu0 %v2073
  %3054 = vmatpush1.msra.mxu0 %v2072
  %3055 = vmatprep.subr.mxu0 %v2069
  %3056 = vmatpush1.msra.mxu0 %v2068
  %3057 = vmatprep.subr.mxu0 %v1743
  %3058 = vmatpush1.msra.mxu0 %v1742
  %3059 = vmatprep.subr.mxu0 %v1739
  %3060 = vmatpush1.msra.mxu0 %v1738
  %3061 = vmatprep.subr.mxu0 %v999
  %3062 = vmatpush1.msra.mxu0 %v998
  %3063 = vmatprep.subr.mxu0 %v995
  %3064 = vmatpush1.msra.mxu0 %v994
  %3065 = vmatprep.subr.mxu0 0.0
  %3066 = vmatpush2.msra.mxu0 0.0
  %3067 = vmatprep.subr.mxu0 0.0
  %3068 = vmatpush2.msra.mxu0 0.0
  %3069 = vmatprep.subr.mxu0 0.0
  %3070 = vmatpush2.msra.mxu0 0.0
  %3071 = vmatprep.subr.mxu0 0.0
  %3072 = vmatpush2.msra.mxu0 0.0
  %3073 = vmatprep.subr.mxu0 0.0
  %3074 = vmatpush2.msra.mxu0 0.0
  %3075 = vmatprep.subr.mxu0 0.0
  %3076 = vmatpush2.msra.mxu0 0.0
  %3077 = vmatprep.subr.mxu0 0.0
  %3078 = vmatpush2.msra.mxu0 0.0
  %3079 = vmatprep.subr.mxu0 0.0
  %3080 = vmatpush2.msra.mxu0 0.0
  %3081 = vmatprep.subr.mxu0 0.0
  %3082 = vmatpush2.msra.mxu0 0.0
  %3083 = vmatprep.subr.mxu0 0.0
  %3084 = vmatpush2.msra.mxu0 0.0
  %3085 = vmatprep.subr.mxu0 0.0
  %3086 = vmatpush2.msra.mxu0 0.0
  %3087 = vmatprep.subr.mxu0 0.0
  %3088 = vmatpush2.msra.mxu0 0.0
  %3089 = vmatprep.subr.mxu0 0.0
  %3090 = vmatpush2.msra.mxu0 0.0
  %3091 = vmatprep.subr.mxu0 0.0
  %3092 = vmatpush2.msra.mxu0 0.0
  %3093 = vmatprep.subr.mxu0 0.0
  %3094 = vmatpush2.msra.mxu0 0.0
  %3095 = vmatprep.subr.mxu0 0.0
  %3096 = vmatpush2.msra.mxu0 0.0
  %3097 = vmatprep.mubr.f32.mxu0 0.0
  %3098 = vmatmul.mubr.f32.gmra.mxu0 %v2951
  %v3099 = vpop.f32.mrf.mxu0
  %v3100 = vadd.f32 %v2943, %v3099
  %v3101 = vpop.f32.mrf.mxu0
  %v3102 = vadd.f32 %v2943, %v3101
  %3103 = vmatprep.mubr.f32.mxu0 0.0
  %3104 = vmatmul.mubr.f32.gmra.mxu0 %v2954
  %v3105 = vpop.f32.mrf.mxu0
  %v3106 = vadd.f32 %v2948, %v3105
  %v3107 = vpop.f32.mrf.mxu0
  %v3108 = vadd.f32 %v2948, %v3107
  %3109 = vdwg.mxu0
  %v3110 = vadd.f32 %v3023, %v651
  %v3111 = vadd.f32 %v3025, %v652
  %v3112 = vadd.f32 %v3100, %v711
  %v3113 = vadd.f32 %v3102, %v708
  %v3114 = vadd.f32 %v3029, %v654
  %v3115 = vadd.f32 %v3031, %v655
  %v3116 = vadd.f32 %v3106, %v712
  %v3117 = vadd.f32 %v3108, %v710
  %v3118 = vld [vmem:[%s45] ss:$2 sm:$0xf]
  %v3120 = vlaneseq
  %v3121 = vshrl.u32 %v3120, 7
  %v3122 = vsub.s32 0, %v3121
  %v3123 = vrot.slane %v3118, %v3122
  %v3124 = vlaneseq
  %v3125 = vshrl.u32 %v3124, 7
  %v3126 = vsub.s32 1, %v3125
  %v3127 = vrot.slane %v3118, %v3126
  %v3128 = vlaneseq
  %v3129 = vshrl.u32 %v3128, 7
  %v3130 = vsub.s32 2, %v3129
  %v3131 = vrot.slane %v3118, %v3130
  %v3132 = vlaneseq
  %v3133 = vshrl.u32 %v3132, 7
  %v3134 = vsub.s32 3, %v3133
  %v3135 = vrot.slane %v3118, %v3134
  %v3140 = vmul.f32 %v3110, %v3123
  %v3141 = vmul.f32 %v3111, %v3127
  %v3142 = vmul.f32 %v3112, %v3131
  %v3143 = vmul.f32 %v3113, %v3135
  %v3144 = vmul.f32 %v3114, %v3123
  %v3145 = vmul.f32 %v3115, %v3127
  %v3146 = vmul.f32 %v3116, %v3131
  %v3147 = vmul.f32 %v3117, %v3135
  %v3148 = vadd.f32 %v3140, %v3141
  %v3149 = vadd.f32 %v3148, %v3142
  %v3150 = vsel %vm680, %v3143, 0.0
  %v3151 = vadd.f32 %v3149, %v3150
  %3152 = vadd.xlane.f32.xlu0 %v3151
  %v3153 = vpop.xlane.xlu0 %3152
  %v3154 = vadd.f32 %v3144, %v3145
  %v3155 = vadd.f32 %v3154, %v3146
  %v3156 = vsel %vm680, %v3147, 0.0
  %v3157 = vadd.f32 %v3155, %v3156
  %3158 = vadd.xlane.f32.xlu0 %v3157
  %v3159 = vpop.xlane.xlu0 %3158
  %v3160 = vadd.f32 %v3153, %v3159
  %v3161 = vrot.slane %v3160, 4
  %v3162 = vadd.f32 %v3160, %v3161
  %v3163 = vrot.slane %v3162, 2
  %v3164 = vadd.f32 %v3162, %v3163
  %v3165 = vrot.slane %v3164, 1
  %v3166 = vadd.f32 %v3164, %v3165
  %v3167 = vmul.f32 %v3166, 0.00030048078
  %v3168 = vmul.f32 %v3140, %v3110
  %v3169 = vmul.f32 %v3141, %v3111
  %v3170 = vmul.f32 %v3142, %v3112
  %v3171 = vmul.f32 %v3143, %v3113
  %v3172 = vmul.f32 %v3144, %v3114
  %v3173 = vmul.f32 %v3145, %v3115
  %v3174 = vmul.f32 %v3146, %v3116
  %v3175 = vmul.f32 %v3147, %v3117
  %v3176 = vadd.f32 %v3168, %v3169
  %v3177 = vadd.f32 %v3176, %v3170
  %v3178 = vsel %vm680, %v3171, 0.0
  %v3179 = vadd.f32 %v3177, %v3178
  %3180 = vadd.xlane.f32.xlu0 %v3179
  %v3181 = vpop.xlane.xlu0 %3180
  %v3182 = vadd.f32 %v3172, %v3173
  %v3183 = vadd.f32 %v3182, %v3174
  %v3184 = vsel %vm680, %v3175, 0.0
  %v3185 = vadd.f32 %v3183, %v3184
  %3186 = vadd.xlane.f32.xlu0 %v3185
  %v3187 = vpop.xlane.xlu0 %3186
  %v3188 = vadd.f32 %v3181, %v3187
  %v3189 = vrot.slane %v3188, 4
  %v3190 = vadd.f32 %v3188, %v3189
  %v3191 = vrot.slane %v3190, 2
  %v3192 = vadd.f32 %v3190, %v3191
  %v3193 = vrot.slane %v3192, 1
  %v3194 = vadd.f32 %v3192, %v3193
  %v3195 = vmul.f32 %v3194, 0.00030048078
  %v3196 = vmul.f32 %v3167, %v3167
  %v3197 = vsub.f32 %v3195, %v3196
  %v3198 = vmax.f32 %v3197, 0.0
  %v3199 = vadd.f32 %v3198, 1e-05
  %v3200 = vrsqrt.pop %v3199
  %v3201 = vmul.f32 %v3167, %v3118
  %v3202 = vmul.f32 %v3200, %v3118
  %s3203 = scalar_lea.vmem %s45, 1
  %v3204 = vld [vmem:[%s3203] ss:$2 sm:$0xf]
  %v3206 = vlaneseq
  %v3207 = vshrl.u32 %v3206, 7
  %v3208 = vsub.s32 0, %v3207
  %v3209 = vrot.slane %v3204, %v3208
  %v3210 = vlaneseq
  %v3211 = vshrl.u32 %v3210, 7
  %v3212 = vsub.s32 1, %v3211
  %v3213 = vrot.slane %v3204, %v3212
  %v3214 = vlaneseq
  %v3215 = vshrl.u32 %v3214, 7
  %v3216 = vsub.s32 2, %v3215
  %v3217 = vrot.slane %v3204, %v3216
  %v3218 = vlaneseq
  %v3219 = vshrl.u32 %v3218, 7
  %v3220 = vsub.s32 3, %v3219
  %v3221 = vrot.slane %v3204, %v3220
  %v3226 = vmul.f32 %v3110, %v3209
  %v3227 = vmul.f32 %v3111, %v3213
  %v3228 = vmul.f32 %v3112, %v3217
  %v3229 = vmul.f32 %v3113, %v3221
  %v3230 = vmul.f32 %v3114, %v3209
  %v3231 = vmul.f32 %v3115, %v3213
  %v3232 = vmul.f32 %v3116, %v3217
  %v3233 = vmul.f32 %v3117, %v3221
  %v3234 = vadd.f32 %v3226, %v3227
  %v3235 = vadd.f32 %v3234, %v3228
  %v3236 = vsel %vm680, %v3229, 0.0
  %v3237 = vadd.f32 %v3235, %v3236
  %3238 = vadd.xlane.f32.xlu0 %v3237
  %v3239 = vpop.xlane.xlu0 %3238
  %v3240 = vadd.f32 %v3230, %v3231
  %v3241 = vadd.f32 %v3240, %v3232
  %v3242 = vsel %vm680, %v3233, 0.0
  %v3243 = vadd.f32 %v3241, %v3242
  %3244 = vadd.xlane.f32.xlu0 %v3243
  %v3245 = vpop.xlane.xlu0 %3244
  %v3246 = vadd.f32 %v3239, %v3245
  %v3247 = vrot.slane %v3246, 4
  %v3248 = vadd.f32 %v3246, %v3247
  %v3249 = vrot.slane %v3248, 2
  %v3250 = vadd.f32 %v3248, %v3249
  %v3251 = vrot.slane %v3250, 1
  %v3252 = vadd.f32 %v3250, %v3251
  %v3253 = vmul.f32 %v3252, 0.00030048078
  %v3254 = vmul.f32 %v3226, %v3110
  %v3255 = vmul.f32 %v3227, %v3111
  %v3256 = vmul.f32 %v3228, %v3112
  %v3257 = vmul.f32 %v3229, %v3113
  %v3258 = vmul.f32 %v3230, %v3114
  %v3259 = vmul.f32 %v3231, %v3115
  %v3260 = vmul.f32 %v3232, %v3116
  %v3261 = vmul.f32 %v3233, %v3117
  %v3262 = vadd.f32 %v3254, %v3255
  %v3263 = vadd.f32 %v3262, %v3256
  %v3264 = vsel %vm680, %v3257, 0.0
  %v3265 = vadd.f32 %v3263, %v3264
  %3266 = vadd.xlane.f32.xlu0 %v3265
  %v3267 = vpop.xlane.xlu0 %3266
  %v3268 = vadd.f32 %v3258, %v3259
  %v3269 = vadd.f32 %v3268, %v3260
  %v3270 = vsel %vm680, %v3261, 0.0
  %v3271 = vadd.f32 %v3269, %v3270
  %3272 = vadd.xlane.f32.xlu0 %v3271
  %v3273 = vpop.xlane.xlu0 %3272
  %v3274 = vadd.f32 %v3267, %v3273
  %v3275 = vrot.slane %v3274, 4
  %v3276 = vadd.f32 %v3274, %v3275
  %v3277 = vrot.slane %v3276, 2
  %v3278 = vadd.f32 %v3276, %v3277
  %v3279 = vrot.slane %v3278, 1
  %v3280 = vadd.f32 %v3278, %v3279
  %v3281 = vmul.f32 %v3280, 0.00030048078
  %v3282 = vmul.f32 %v3253, %v3253
  %v3283 = vsub.f32 %v3281, %v3282
  %v3284 = vmax.f32 %v3283, 0.0
  %v3285 = vadd.f32 %v3284, 1e-05
  %v3286 = vrsqrt.pop %v3285
  %v3287 = vmul.f32 %v3253, %v3204
  %v3288 = vmul.f32 %v3286, %v3204
  %v3289 = vadd.f32 %v3201, %v3287
  %v3290 = vadd.f32 %v3202, %v3288
  %v3292 = vlaneseq
  %v3293 = vshrl.u32 %v3292, 7
  %v3294 = vsub.s32 0, %v3293
  %v3295 = vrot.slane %v3289, %v3294
  %v3296 = vlaneseq
  %v3297 = vshrl.u32 %v3296, 7
  %v3298 = vsub.s32 1, %v3297
  %v3299 = vrot.slane %v3289, %v3298
  %v3300 = vlaneseq
  %v3301 = vshrl.u32 %v3300, 7
  %v3302 = vsub.s32 2, %v3301
  %v3303 = vrot.slane %v3289, %v3302
  %v3304 = vlaneseq
  %v3305 = vshrl.u32 %v3304, 7
  %v3306 = vsub.s32 3, %v3305
  %v3307 = vrot.slane %v3289, %v3306
  %v3312 = vsub.f32 %v3110, %v3295
  %v3313 = vsub.f32 %v3111, %v3299
  %v3314 = vsub.f32 %v3112, %v3303
  %v3315 = vsub.f32 %v3113, %v3307
  %v3316 = vsub.f32 %v3114, %v3295
  %v3317 = vsub.f32 %v3115, %v3299
  %v3318 = vsub.f32 %v3116, %v3303
  %v3319 = vsub.f32 %v3117, %v3307
  %v3321 = vlaneseq
  %v3322 = vshrl.u32 %v3321, 7
  %v3323 = vsub.s32 0, %v3322
  %v3324 = vrot.slane %v3290, %v3323
  %v3325 = vlaneseq
  %v3326 = vshrl.u32 %v3325, 7
  %v3327 = vsub.s32 1, %v3326
  %v3328 = vrot.slane %v3290, %v3327
  %v3329 = vlaneseq
  %v3330 = vshrl.u32 %v3329, 7
  %v3331 = vsub.s32 2, %v3330
  %v3332 = vrot.slane %v3290, %v3331
  %v3333 = vlaneseq
  %v3334 = vshrl.u32 %v3333, 7
  %v3335 = vsub.s32 3, %v3334
  %v3336 = vrot.slane %v3290, %v3335
  %v3341 = vmul.f32 %v3312, %v3324
  %v3342 = vmul.f32 %v3313, %v3328
  %v3343 = vmul.f32 %v3314, %v3332
  %v3344 = vmul.f32 %v3315, %v3336
  %v3345 = vmul.f32 %v3316, %v3324
  %v3346 = vmul.f32 %v3317, %v3328
  %v3347 = vmul.f32 %v3318, %v3332
  %v3348 = vmul.f32 %v3319, %v3336
  %v3349 = vld [vmem:[%s65] sm:$0xff]
  %v3350 = vld [vmem:[%s65 + $0x8] sm:$0xff]
  %v3351 = vld [vmem:[%s65 + $0x10] sm:$0xff]
  %v3352 = vld [vmem:[%s65 + $0x18] sm:$0xff]
  %v3353 = vld [vmem:[%s65 + $0x20] sm:$0xff]
  %v3354 = vld [vmem:[%s65 + $0x28] sm:$0xff]
  %v3355 = vld [vmem:[%s65 + $0x30] sm:$0xff]
  %v3356 = vld [vmem:[%s65 + $0x38] sm:$0xff]
  %v3357 = vmul.f32 %v3341, %v3349
  %v3358 = vmul.f32 %v3342, %v3350
  %v3359 = vmul.f32 %v3343, %v3351
  %v3360 = vmul.f32 %v3344, %v3352
  %v3361 = vmul.f32 %v3345, %v3353
  %v3362 = vmul.f32 %v3346, %v3354
  %v3363 = vmul.f32 %v3347, %v3355
  %v3364 = vmul.f32 %v3348, %v3356
  %v3365 = vld [vmem:[%s27] sm:$0xff]
  %v3366 = vld [vmem:[%s27 + $0x8] sm:$0xff]
  %v3367 = vld [vmem:[%s27 + $0x10] sm:$0xff]
  %v3368 = vld [vmem:[%s27 + $0x18] sm:$0xff]
  %v3369 = vld [vmem:[%s27 + $0x20] sm:$0xff]
  %v3370 = vld [vmem:[%s27 + $0x28] sm:$0xff]
  %v3371 = vld [vmem:[%s27 + $0x30] sm:$0xff]
  %v3372 = vld [vmem:[%s27 + $0x38] sm:$0xff]
  %v3373 = vadd.f32 %v3357, %v3365
  %v3374 = vadd.f32 %v3358, %v3366
  %v3375 = vadd.f32 %v3359, %v3367
  %v3376 = vadd.f32 %v3360, %v3368
  %v3377 = vadd.f32 %v3361, %v3369
  %v3378 = vadd.f32 %v3362, %v3370
  %v3379 = vadd.f32 %v3363, %v3371
  %v3380 = vadd.f32 %v3364, %v3372
  %3385 = vrot.lane.b32.xlu0 %v3373, 96
  %v3386 = vpop.permute.xlu0 %3385
  %3387 = vrot.lane.b32.xlu0 %v3374, 96
  %v3388 = vpop.permute.xlu0 %3387
  %3389 = vrot.lane.b32.xlu0 %v3377, 96
  %v3390 = vpop.permute.xlu0 %3389
  %3391 = vrot.lane.b32.xlu0 %v3378, 96
  %v3392 = vpop.permute.xlu0 %3391
  %v3393 = vsel %vm618, %v3386, %v3388
  %v3394 = vsel %vm618, %v3390, %v3392
  %3401 = vrot.lane.b32.xlu0 %v3373, 64
  %v3402 = vpop.permute.xlu0 %3401
  %3403 = vrot.lane.b32.xlu0 %v3374, 64
  %v3404 = vpop.permute.xlu0 %3403
  %3405 = vrot.lane.b32.xlu0 %v3375, 64
  %v3406 = vpop.permute.xlu0 %3405
  %3407 = vrot.lane.b32.xlu0 %v3377, 64
  %v3408 = vpop.permute.xlu0 %3407
  %3409 = vrot.lane.b32.xlu0 %v3378, 64
  %v3410 = vpop.permute.xlu0 %3409
  %3411 = vrot.lane.b32.xlu0 %v3379, 64
  %v3412 = vpop.permute.xlu0 %3411
  %v3413 = vsel %vm649, %v3402, %v3404
  %v3414 = vsel %vm649, %v3404, %v3406
  %v3415 = vsel %vm649, %v3408, %v3410
  %v3416 = vsel %vm649, %v3410, %v3412
  %3421 = vrot.lane.b32.xlu0 %v3373, 32
  %v3422 = vpop.permute.xlu0 %3421
  %3423 = vrot.lane.b32.xlu0 %v3374, 32
  %v3424 = vpop.permute.xlu0 %3423
  %3425 = vrot.lane.b32.xlu0 %v3375, 32
  %v3426 = vpop.permute.xlu0 %3425
  %3427 = vrot.lane.b32.xlu0 %v3377, 32
  %v3428 = vpop.permute.xlu0 %3427
  %3429 = vrot.lane.b32.xlu0 %v3378, 32
  %v3430 = vpop.permute.xlu0 %3429
  %3431 = vrot.lane.b32.xlu0 %v3379, 32
  %v3432 = vpop.permute.xlu0 %3431
  %v3433 = vsel %vm680, %v3422, %v3424
  %v3434 = vsel %vm680, %v3424, %v3426
  %v3435 = vsel %vm680, %v3428, %v3430
  %v3436 = vsel %vm680, %v3430, %v3432
  %3441 = vrot.lane.b32.xlu0 %v3375, 96
  %v3442 = vpop.permute.xlu0 %3441
  %3443 = vrot.lane.b32.xlu0 %v3379, 96
  %v3444 = vpop.permute.xlu0 %3443
  %v3445 = vsel %vm618, %v3388, %v3442
  %v3446 = vsel %vm618, %v3392, %v3444
  %3453 = vrot.lane.b32.xlu0 %v3376, 64
  %v3454 = vpop.permute.xlu0 %3453
  %3455 = vrot.lane.b32.xlu0 %v3380, 64
  %v3456 = vpop.permute.xlu0 %3455
  %v3457 = vsel %vm649, %v3406, %v3454
  %v3458 = vsel %vm649, %v3412, %v3456
  %v3461 = vld [vmem:[%s55] sm:$0xff]
  %v3462 = vld [vmem:[%s55 + $0x8] sm:$0xff]
  %v3463 = vld [vmem:[%s55 + $0x10] sm:$0xff]
  %v3464 = vld [vmem:[%s55 + $0x18] sm:$0xff]
  %v3465 = vld [vmem:[%s17] sm:$0xff]
  %v3466 = vld [vmem:[%s17 + $0x8] sm:$0xff]
  %v3467 = vld [vmem:[%s17 + $0x10] sm:$0xff]
  %v3468 = vld [vmem:[%s17 + $0x18] sm:$0xff]
  %3470 = vset.pattern.permute.xlu0 0
  %3471 = vperm.xlu0 %3470, %v3465
  %v3472 = vpop.permute.xlu0 %3471
  %3475 = vset.pattern.permute.xlu0 0
  %3476 = vperm.xlu0 %3475, %v3466
  %v3477 = vpop.permute.xlu0 %3476
  %3480 = vset.pattern.permute.xlu0 0
  %3481 = vperm.xlu0 %3480, %v3467
  %v3482 = vpop.permute.xlu0 %3481
  %3485 = vset.pattern.permute.xlu0 0
  %3486 = vperm.xlu0 %3485, %v3468
  %v3487 = vpop.permute.xlu0 %3486
  %v3490 = vsel %vm745, %v3461, 0
  %v3493 = vsel %vm745, %v3462, 0
  %v3496 = vsel %vm745, %v3463, 0
  %v3499 = vsel %vm745, %v3464, 0
  %3501 = vmatprep.subr.mxu0 0.0
  %3502 = vmatpush1.msra.mxu0 0.0
  %3503 = vmatprep.subr.mxu0 0.0
  %3504 = vmatpush1.msra.mxu0 0.0
  %3505 = vmatprep.subr.mxu0 %v3458
  %3506 = vmatpush1.msra.mxu0 %v3416
  %3507 = vmatprep.subr.mxu0 %v3457
  %3508 = vmatpush1.msra.mxu0 %v3414
  %3509 = vmatprep.subr.mxu0 %v3444
  %3510 = vmatpush1.msra.mxu0 %v3446
  %3511 = vmatprep.subr.mxu0 %v3442
  %3512 = vmatpush1.msra.mxu0 %v3445
  %3513 = vmatprep.subr.mxu0 %v3379
  %3514 = vmatpush1.msra.mxu0 %v3378
  %3515 = vmatprep.subr.mxu0 %v3375
  %3516 = vmatpush1.msra.mxu0 %v3374
  %3517 = vmatprep.subr.mxu0 %v3436
  %3518 = vmatpush1.msra.mxu0 %v3435
  %3519 = vmatprep.subr.mxu0 %v3434
  %3520 = vmatpush1.msra.mxu0 %v3433
  %3521 = vmatprep.subr.mxu0 %v3416
  %3522 = vmatpush1.msra.mxu0 %v3415
  %3523 = vmatprep.subr.mxu0 %v3414
  %3524 = vmatpush1.msra.mxu0 %v3413
  %3525 = vmatprep.subr.mxu0 %v3392
  %3526 = vmatpush1.msra.mxu0 %v3394
  %3527 = vmatprep.subr.mxu0 %v3388
  %3528 = vmatpush1.msra.mxu0 %v3393
  %3529 = vmatprep.subr.mxu0 %v3378
  %3530 = vmatpush1.msra.mxu0 %v3377
  %3531 = vmatprep.subr.mxu0 %v3374
  %3532 = vmatpush1.msra.mxu0 %v3373
  %3533 = vmatprep.subr.mxu0 0.0
  %3534 = vmatpush2.msra.mxu0 0.0
  %3535 = vmatprep.subr.mxu0 0.0
  %3536 = vmatpush2.msra.mxu0 0.0
  %3537 = vmatprep.subr.mxu0 0.0
  %3538 = vmatpush2.msra.mxu0 0.0
  %3539 = vmatprep.subr.mxu0 0.0
  %3540 = vmatpush2.msra.mxu0 0.0
  %3541 = vmatprep.subr.mxu0 0.0
  %3542 = vmatpush2.msra.mxu0 0.0
  %3543 = vmatprep.subr.mxu0 0.0
  %3544 = vmatpush2.msra.mxu0 0.0
  %3545 = vmatprep.subr.mxu0 0.0
  %3546 = vmatpush2.msra.mxu0 0.0
  %3547 = vmatprep.subr.mxu0 0.0
  %3548 = vmatpush2.msra.mxu0 0.0
  %3549 = vmatprep.subr.mxu0 0.0
  %3550 = vmatpush2.msra.mxu0 0.0
  %3551 = vmatprep.subr.mxu0 0.0
  %3552 = vmatpush2.msra.mxu0 0.0
  %3553 = vmatprep.subr.mxu0 0.0
  %3554 = vmatpush2.msra.mxu0 0.0
  %3555 = vmatprep.subr.mxu0 0.0
  %3556 = vmatpush2.msra.mxu0 0.0
  %3557 = vmatprep.subr.mxu0 0.0
  %3558 = vmatpush2.msra.mxu0 0.0
  %3559 = vmatprep.subr.mxu0 0.0
  %3560 = vmatpush2.msra.mxu0 0.0
  %3561 = vmatprep.subr.mxu0 0.0
  %3562 = vmatpush2.msra.mxu0 0.0
  %3563 = vmatprep.subr.mxu0 0.0
  %3564 = vmatpush2.msra.mxu0 0.0
  %3565 = vmatprep.mubr.f32.mxu0 0.0
  %3566 = vmatmul.mubr.f32.gmra.mxu0 %v3490
  %v3567 = vpop.f32.mrf.mxu0
  %v3568 = vadd.f32 %v3472, %v3567
  %v3569 = vpop.f32.mrf.mxu0
  %v3570 = vadd.f32 %v3472, %v3569
  %3571 = vmatprep.mubr.f32.mxu0 0.0
  %3572 = vmatmul.mubr.f32.gmra.mxu0 %v3493
  %v3573 = vpop.f32.mrf.mxu0
  %v3574 = vadd.f32 %v3477, %v3573
  %v3575 = vpop.f32.mrf.mxu0
  %v3576 = vadd.f32 %v3477, %v3575
  %3577 = vmatprep.mubr.f32.mxu0 0.0
  %3578 = vmatmul.mubr.f32.gmra.mxu0 %v3496
  %v3579 = vpop.f32.mrf.mxu0
  %v3580 = vadd.f32 %v3482, %v3579
  %v3581 = vpop.f32.mrf.mxu0
  %v3582 = vadd.f32 %v3482, %v3581
  %3583 = vmatprep.mubr.f32.mxu0 0.0
  %3584 = vmatmul.mubr.f32.gmra.mxu0 %v3499
  %v3585 = vpop.f32.mrf.mxu0
  %v3586 = vadd.f32 %v3487, %v3585
  %v3587 = vpop.f32.mrf.mxu0
  %v3588 = vadd.f32 %v3487, %v3587
  %3589 = vdwg.mxu0
  %v3590 = vtanh.pop %v3568
  %v3591 = vtanh.pop %v3570
  %v3592 = vtanh.pop %v3574
  %v3593 = vtanh.pop %v3576
  %v3594 = vxor.u32 %v3580, 2147483648
  %v3595 = vxor.u32 %v3582, 2147483648
  %v3596 = vxor.u32 %v3586, 2147483648
  %v3597 = vxor.u32 %v3588, 2147483648
  %v3598 = vmul.f32 %v3594, 1.442695
  %v3599 = vpow.pop %v3598
  %v3600 = vmul.f32 %v3595, 1.442695
  %v3601 = vpow.pop %v3600
  %v3602 = vmul.f32 %v3596, 1.442695
  %v3603 = vpow.pop %v3602
  %v3604 = vmul.f32 %v3597, 1.442695
  %v3605 = vpow.pop %v3604
  %v3606 = vadd.f32 %v3599, 1.0
  %v3607 = vadd.f32 %v3601, 1.0
  %v3608 = vadd.f32 %v3603, 1.0
  %v3609 = vadd.f32 %v3605, 1.0
  %v3610 = vrcp.pop %v3606
  %v3611 = vmul.f32 1.0, %v3610
  %v3612 = vrcp.pop %v3607
  %v3613 = vmul.f32 1.0, %v3612
  %v3614 = vrcp.pop %v3608
  %v3615 = vmul.f32 1.0, %v3614
  %v3616 = vrcp.pop %v3609
  %v3617 = vmul.f32 1.0, %v3616
  %v3618 = vmul.f32 %v3590, %v3611
  %v3619 = vmul.f32 %v3591, %v3613
  %v3620 = vmul.f32 %v3592, %v3615
  %v3621 = vmul.f32 %v3593, %v3617
  %3624 = vrot.lane.b32.xlu0 %v3618, 96
  %v3625 = vpop.permute.xlu0 %3624
  %3626 = vrot.lane.b32.xlu0 %v3620, 96
  %v3627 = vpop.permute.xlu0 %3626
  %3630 = vrot.lane.b32.xlu0 %v3618, 64
  %v3631 = vpop.permute.xlu0 %3630
  %3632 = vrot.lane.b32.xlu0 %v3620, 64
  %v3633 = vpop.permute.xlu0 %3632
  %3636 = vrot.lane.b32.xlu0 %v3618, 32
  %v3637 = vpop.permute.xlu0 %3636
  %3638 = vrot.lane.b32.xlu0 %v3620, 32
  %v3639 = vpop.permute.xlu0 %3638
  %3644 = vrot.lane.b32.xlu0 %v3619, 96
  %v3645 = vpop.permute.xlu0 %3644
  %3646 = vrot.lane.b32.xlu0 %v3621, 96
  %v3647 = vpop.permute.xlu0 %3646
  %3650 = vrot.lane.b32.xlu0 %v3619, 64
  %v3651 = vpop.permute.xlu0 %3650
  %3652 = vrot.lane.b32.xlu0 %v3621, 64
  %v3653 = vpop.permute.xlu0 %3652
  %v3656 = vld [vmem:[%s77] sm:$0xff]
  %v3657 = vld [vmem:[%s77 + $0x8] sm:$0xff]
  %v3658 = vld [vmem:[%s77 + $0x10] sm:$0xff]
  %v3659 = vld [vmem:[%s77 + $0x18] sm:$0xff]
  %v3661 = vsel %vm745, %v3656, 0
  %v3664 = vsel %vm745, %v3657, 0
  %v3667 = vsel %vm745, %v3658, 0
  %v3670 = vsel %vm745, %v3659, 0
  %3672 = vmatprep.subr.mxu0 0.0
  %3673 = vmatpush1.msra.mxu0 0.0
  %3674 = vmatprep.subr.mxu0 0.0
  %3675 = vmatpush1.msra.mxu0 0.0
  %3676 = vmatprep.subr.mxu0 0.0
  %3677 = vmatpush1.msra.mxu0 %v3653
  %3678 = vmatprep.subr.mxu0 0.0
  %3679 = vmatpush1.msra.mxu0 %v3651
  %3680 = vmatprep.subr.mxu0 0.0
  %3681 = vmatpush1.msra.mxu0 %v3647
  %3682 = vmatprep.subr.mxu0 0.0
  %3683 = vmatpush1.msra.mxu0 %v3645
  %3684 = vmatprep.subr.mxu0 0.0
  %3685 = vmatpush1.msra.mxu0 %v3621
  %3686 = vmatprep.subr.mxu0 0.0
  %3687 = vmatpush1.msra.mxu0 %v3619
  %3688 = vmatprep.subr.mxu0 0.0
  %3689 = vmatpush1.msra.mxu0 %v3639
  %3690 = vmatprep.subr.mxu0 0.0
  %3691 = vmatpush1.msra.mxu0 %v3637
  %3692 = vmatprep.subr.mxu0 0.0
  %3693 = vmatpush1.msra.mxu0 %v3633
  %3694 = vmatprep.subr.mxu0 0.0
  %3695 = vmatpush1.msra.mxu0 %v3631
  %3696 = vmatprep.subr.mxu0 0.0
  %3697 = vmatpush1.msra.mxu0 %v3627
  %3698 = vmatprep.subr.mxu0 0.0
  %3699 = vmatpush1.msra.mxu0 %v3625
  %3700 = vmatprep.subr.mxu0 0.0
  %3701 = vmatpush1.msra.mxu0 %v3620
  %3702 = vmatprep.subr.mxu0 0.0
  %3703 = vmatpush1.msra.mxu0 %v3618
  %3704 = vmatprep.subr.mxu0 0.0
  %3705 = vmatpush2.msra.mxu0 0.0
  %3706 = vmatprep.subr.mxu0 0.0
  %3707 = vmatpush2.msra.mxu0 0.0
  %3708 = vmatprep.subr.mxu0 0.0
  %3709 = vmatpush2.msra.mxu0 0.0
  %3710 = vmatprep.subr.mxu0 0.0
  %3711 = vmatpush2.msra.mxu0 0.0
  %3712 = vmatprep.subr.mxu0 0.0
  %3713 = vmatpush2.msra.mxu0 0.0
  %3714 = vmatprep.subr.mxu0 0.0
  %3715 = vmatpush2.msra.mxu0 0.0
  %3716 = vmatprep.subr.mxu0 0.0
  %3717 = vmatpush2.msra.mxu0 0.0
  %3718 = vmatprep.subr.mxu0 0.0
  %3719 = vmatpush2.msra.mxu0 0.0
  %3720 = vmatprep.subr.mxu0 0.0
  %3721 = vmatpush2.msra.mxu0 0.0
  %3722 = vmatprep.subr.mxu0 0.0
  %3723 = vmatpush2.msra.mxu0 0.0
  %3724 = vmatprep.subr.mxu0 0.0
  %3725 = vmatpush2.msra.mxu0 0.0
  %3726 = vmatprep.subr.mxu0 0.0
  %3727 = vmatpush2.msra.mxu0 0.0
  %3728 = vmatprep.subr.mxu0 0.0
  %3729 = vmatpush2.msra.mxu0 0.0
  %3730 = vmatprep.subr.mxu0 0.0
  %3731 = vmatpush2.msra.mxu0 0.0
  %3732 = vmatprep.subr.mxu0 0.0
  %3733 = vmatpush2.msra.mxu0 0.0
  %3734 = vmatprep.subr.mxu0 0.0
  %3735 = vmatpush2.msra.mxu0 0.0
  %3736 = vmatprep.mubr.f32.mxu0 0.0
  %3737 = vmatmul.mubr.f32.gmra.mxu0 %v3661
  %v3738 = vpop.f32.mrf.mxu0
  %v3739 = vadd.f32 0.0, %v3738
  %v3740 = vpop.f32.mrf.mxu0
  %3741 = vmatprep.mubr.f32.mxu0 0.0
  %3742 = vmatmul.mubr.f32.gmra.mxu0 %v3664
  %v3743 = vpop.f32.mrf.mxu0
  %v3744 = vadd.f32 0.0, %v3743
  %v3745 = vpop.f32.mrf.mxu0
  %3746 = vmatprep.mubr.f32.mxu0 0.0
  %3747 = vmatmul.mubr.f32.gmra.mxu0 %v3667
  %v3748 = vpop.f32.mrf.mxu0
  %v3749 = vadd.f32 0.0, %v3748
  %v3750 = vpop.f32.mrf.mxu0
  %3751 = vmatprep.mubr.f32.mxu0 0.0
  %3752 = vmatmul.mubr.f32.gmra.mxu0 %v3670
  %v3753 = vpop.f32.mrf.mxu0
  %v3754 = vadd.f32 0.0, %v3753
  %v3755 = vpop.f32.mrf.mxu0
  %3756 = vdwg.mxu0
  %v3757 = vadd.f32 %v1194, %v3739
  %v3758 = vadd.f32 %v1195, %v3744
  %v3759 = vadd.f32 %v1196, %v3749
  %v3760 = vadd.f32 %v1197, %v3754
  %v3761 = vld [vmem:[%s39] sm:$0xff]
  %v3762 = vld [vmem:[%s39 + $0x8] sm:$0xff]
  %v3763 = vld [vmem:[%s39 + $0x10] sm:$0xff]
  %v3764 = vld [vmem:[%s39 + $0x18] sm:$0xff]
  %3766 = vset.pattern.permute.xlu0 0
  %3767 = vperm.xlu0 %3766, %v3761
  %v3768 = vpop.permute.xlu0 %3767
  %3771 = vset.pattern.permute.xlu0 0
  %3772 = vperm.xlu0 %3771, %v3762
  %v3773 = vpop.permute.xlu0 %3772
  %3776 = vset.pattern.permute.xlu0 0
  %3777 = vperm.xlu0 %3776, %v3763
  %v3778 = vpop.permute.xlu0 %3777
  %3781 = vset.pattern.permute.xlu0 0
  %3782 = vperm.xlu0 %3781, %v3764
  %v3783 = vpop.permute.xlu0 %3782
  %v3785 = vadd.f32 %v3757, %v3768
  %v3786 = vadd.f32 %v3758, %v3773
  %v3787 = vadd.f32 %v3759, %v3778
  %v3788 = vadd.f32 %v3760, %v3783
  %v3789 = vld [vmem:[%s5] sm:$0xff]
  %v3790 = vld [vmem:[%s5 + $0x8] sm:$0xff]
  %v3791 = vld [vmem:[%s5 + $0x20] sm:$0xff]
  %v3792 = vld [vmem:[%s5 + $0x28] sm:$0xff]
  %v3793 = vld [vmem:[%s5 + $0x40] sm:$0xff]
  %v3794 = vld [vmem:[%s5 + $0x48] sm:$0xff]
  %v3795 = vld [vmem:[%s5 + $0x60] sm:$0xff]
  %v3796 = vld [vmem:[%s5 + $0x68] sm:$0xff]
  %v3797 = vld [vmem:[%s5 + $0x80] sm:$0xff]
  %v3798 = vld [vmem:[%s5 + $0x88] sm:$0xff]
  %v3799 = vld [vmem:[%s5 + $0xa0] sm:$0xff]
  %v3800 = vld [vmem:[%s5 + $0xa8] sm:$0xff]
  %v3801 = vld [vmem:[%s5 + $0xc0] sm:$0xff]
  %v3802 = vld [vmem:[%s5 + $0xc8] sm:$0xff]
  %v3803 = vld [vmem:[%s5 + $0xe0] sm:$0xff]
  %v3804 = vld [vmem:[%s5 + $0xe8] sm:$0xff]
  %v3805 = vld [vmem:[%s5 + $0x100] sm:$0xff]
  %v3806 = vld [vmem:[%s5 + $0x108] sm:$0xff]
  %v3807 = vld [vmem:[%s5 + $0x120] sm:$0xff]
  %v3808 = vld [vmem:[%s5 + $0x128] sm:$0xff]
  %v3809 = vld [vmem:[%s5 + $0x140] sm:$0xff]
  %v3810 = vld [vmem:[%s5 + $0x148] sm:$0xff]
  %v3811 = vld [vmem:[%s5 + $0x160] sm:$0xff]
  %v3812 = vld [vmem:[%s5 + $0x168] sm:$0xff]
  %v3813 = vld [vmem:[%s5 + $0x180] sm:$0xff]
  %v3814 = vld [vmem:[%s5 + $0x188] sm:$0xff]
  %v3815 = vld [vmem:[%s5 + $0x1a0] sm:$0xff]
  %v3816 = vld [vmem:[%s5 + $0x1a8] sm:$0xff]
  %v3817 = vld [vmem:[%s5 + $0x1c0] sm:$0xff]
  %v3818 = vld [vmem:[%s5 + $0x1c8] sm:$0xff]
  %v3819 = vld [vmem:[%s5 + $0x1e0] sm:$0xff]
  %v3820 = vld [vmem:[%s5 + $0x1e8] sm:$0xff]
  %v3821 = vld [vmem:[%s5 + $0x200] sm:$0xff]
  %v3822 = vld [vmem:[%s5 + $0x208] sm:$0xff]
  %v3823 = vld [vmem:[%s5 + $0x220] sm:$0xff]
  %v3824 = vld [vmem:[%s5 + $0x228] sm:$0xff]
  %v3825 = vld [vmem:[%s5 + $0x240] sm:$0xff]
  %v3826 = vld [vmem:[%s5 + $0x248] sm:$0xff]
  %v3827 = vld [vmem:[%s5 + $0x260] sm:$0xff]
  %v3828 = vld [vmem:[%s5 + $0x268] sm:$0xff]
  %v3829 = vld [vmem:[%s5 + $0x280] sm:$0xff]
  %v3830 = vld [vmem:[%s5 + $0x288] sm:$0xff]
  %v3831 = vld [vmem:[%s5 + $0x2a0] sm:$0xff]
  %v3832 = vld [vmem:[%s5 + $0x2a8] sm:$0xff]
  %v3833 = vld [vmem:[%s5 + $0x2c0] sm:$0xff]
  %v3834 = vld [vmem:[%s5 + $0x2c8] sm:$0xff]
  %v3835 = vld [vmem:[%s5 + $0x2e0] sm:$0xff]
  %v3836 = vld [vmem:[%s5 + $0x2e8] sm:$0xff]
  %v3837 = vld [vmem:[%s5 + $0x300] sm:$0xff]
  %v3838 = vld [vmem:[%s5 + $0x308] sm:$0xff]
  %v3839 = vld [vmem:[%s5 + $0x320] sm:$0xff]
  %v3840 = vld [vmem:[%s5 + $0x328] sm:$0xff]
  %v3841 = vld [vmem:[%s5 + $0x340] sm:$0xff]
  %v3842 = vld [vmem:[%s5 + $0x348] sm:$0xff]
  %v3843 = vld [vmem:[%s5 + $0x360] sm:$0xff]
  %v3844 = vld [vmem:[%s5 + $0x368] sm:$0xff]
  %v3845 = vmul.f32 %v3618, 0.05
  %v3846 = vmul.f32 %v3619, 0.05
  %v3847 = vmul.f32 %v3620, 0.05
  %v3848 = vmul.f32 %v3621, 0.05
  %v3849 = vsel %vm618, %v3619, 0
  %v3851 = vsel %vm618, %v3621, 0
  %3853 = vmatprep.subr.mxu0 %v3820
  %3854 = vmatpush1.msra.mxu0 %v3819
  %3855 = vmatprep.subr.mxu0 %v3818
  %3856 = vmatpush1.msra.mxu0 %v3817
  %3857 = vmatprep.subr.mxu0 %v3816
  %3858 = vmatpush1.msra.mxu0 %v3815
  %3859 = vmatprep.subr.mxu0 %v3814
  %3860 = vmatpush1.msra.mxu0 %v3813
  %3861 = vmatprep.subr.mxu0 %v3812
  %3862 = vmatpush1.msra.mxu0 %v3811
  %3863 = vmatprep.subr.mxu0 %v3810
  %3864 = vmatpush1.msra.mxu0 %v3809
  %3865 = vmatprep.subr.mxu0 %v3808
  %3866 = vmatpush1.msra.mxu0 %v3807
  %3867 = vmatprep.subr.mxu0 %v3806
  %3868 = vmatpush1.msra.mxu0 %v3805
  %3869 = vmatprep.subr.mxu0 %v3804
  %3870 = vmatpush1.msra.mxu0 %v3803
  %3871 = vmatprep.subr.mxu0 %v3802
  %3872 = vmatpush1.msra.mxu0 %v3801
  %3873 = vmatprep.subr.mxu0 %v3800
  %3874 = vmatpush1.msra.mxu0 %v3799
  %3875 = vmatprep.subr.mxu0 %v3798
  %3876 = vmatpush1.msra.mxu0 %v3797
  %3877 = vmatprep.subr.mxu0 %v3796
  %3878 = vmatpush1.msra.mxu0 %v3795
  %3879 = vmatprep.subr.mxu0 %v3794
  %3880 = vmatpush1.msra.mxu0 %v3793
  %3881 = vmatprep.subr.mxu0 %v3792
  %3882 = vmatpush1.msra.mxu0 %v3791
  %3883 = vmatprep.subr.mxu0 %v3790
  %3884 = vmatpush1.msra.mxu0 %v3789
  %3885 = vmatprep.subr.mxu0 0.0
  %3886 = vmatpush2.msra.mxu0 0.0
  %3887 = vmatprep.subr.mxu0 0.0
  %3888 = vmatpush2.msra.mxu0 0.0
  %3889 = vmatprep.subr.mxu0 0.0
  %3890 = vmatpush2.msra.mxu0 0.0
  %3891 = vmatprep.subr.mxu0 0.0
  %3892 = vmatpush2.msra.mxu0 0.0
  %3893 = vmatprep.subr.mxu0 %v3844
  %3894 = vmatpush2.msra.mxu0 %v3843
  %3895 = vmatprep.subr.mxu0 %v3842
  %3896 = vmatpush2.msra.mxu0 %v3841
  %3897 = vmatprep.subr.mxu0 %v3840
  %3898 = vmatpush2.msra.mxu0 %v3839
  %3899 = vmatprep.subr.mxu0 %v3838
  %3900 = vmatpush2.msra.mxu0 %v3837
  %3901 = vmatprep.subr.mxu0 %v3836
  %3902 = vmatpush2.msra.mxu0 %v3835
  %3903 = vmatprep.subr.mxu0 %v3834
  %3904 = vmatpush2.msra.mxu0 %v3833
  %3905 = vmatprep.subr.mxu0 %v3832
  %3906 = vmatpush2.msra.mxu0 %v3831
  %3907 = vmatprep.subr.mxu0 %v3830
  %3908 = vmatpush2.msra.mxu0 %v3829
  %3909 = vmatprep.subr.mxu0 %v3828
  %3910 = vmatpush2.msra.mxu0 %v3827
  %3911 = vmatprep.subr.mxu0 %v3826
  %3912 = vmatpush2.msra.mxu0 %v3825
  %3913 = vmatprep.subr.mxu0 %v3824
  %3914 = vmatpush2.msra.mxu0 %v3823
  %3915 = vmatprep.subr.mxu0 %v3822
  %3916 = vmatpush2.msra.mxu0 %v3821
  %3917 = vmatprep.mubr.f32.mxu0 %v3849
  %3918 = vmatmul.mubr.f32.gmra.mxu0 %v3618
  %v3919 = vpop.f32.mrf.mxu0
  %v3920 = vadd.f32 0.0, %v3919
  %v3921 = vpop.f32.mrf.mxu0
  %v3922 = vadd.f32 0.0, %v3921
  %3923 = vmatprep.mubr.f32.mxu0 %v3851
  %3924 = vmatmul.mubr.f32.gmra.mxu0 %v3620
  %v3925 = vpop.f32.mrf.mxu0
  %v3926 = vadd.f32 0.0, %v3925
  %v3927 = vpop.f32.mrf.mxu0
  %v3928 = vadd.f32 0.0, %v3927
  %3929 = vdwg.mxu0
  %v3930 = vmul.f32 %v3920, 0.95
  %v3931 = vmul.f32 %v3922, 0.95
  %v3932 = vmul.f32 %v3926, 0.95
  %v3933 = vmul.f32 %v3928, 0.95
  %v3934 = vadd.f32 %v3845, %v3930
  %v3935 = vadd.f32 %v3846, %v3931
  %v3936 = vadd.f32 %v3847, %v3932
  %v3937 = vadd.f32 %v3848, %v3933
  %v3939 = vsel %vm618, %v3935, 0
  %v3942 = vsel %vm618, %v3937, 0
  %3944 = vmatprep.subr.mxu0 %v3820
  %3945 = vmatpush1.msra.mxu0 %v3819
  %3946 = vmatprep.subr.mxu0 %v3818
  %3947 = vmatpush1.msra.mxu0 %v3817
  %3948 = vmatprep.subr.mxu0 %v3816
  %3949 = vmatpush1.msra.mxu0 %v3815
  %3950 = vmatprep.subr.mxu0 %v3814
  %3951 = vmatpush1.msra.mxu0 %v3813
  %3952 = vmatprep.subr.mxu0 %v3812
  %3953 = vmatpush1.msra.mxu0 %v3811
  %3954 = vmatprep.subr.mxu0 %v3810
  %3955 = vmatpush1.msra.mxu0 %v3809
  %3956 = vmatprep.subr.mxu0 %v3808
  %3957 = vmatpush1.msra.mxu0 %v3807
  %3958 = vmatprep.subr.mxu0 %v3806
  %3959 = vmatpush1.msra.mxu0 %v3805
  %3960 = vmatprep.subr.mxu0 %v3804
  %3961 = vmatpush1.msra.mxu0 %v3803
  %3962 = vmatprep.subr.mxu0 %v3802
  %3963 = vmatpush1.msra.mxu0 %v3801
  %3964 = vmatprep.subr.mxu0 %v3800
  %3965 = vmatpush1.msra.mxu0 %v3799
  %3966 = vmatprep.subr.mxu0 %v3798
  %3967 = vmatpush1.msra.mxu0 %v3797
  %3968 = vmatprep.subr.mxu0 %v3796
  %3969 = vmatpush1.msra.mxu0 %v3795
  %3970 = vmatprep.subr.mxu0 %v3794
  %3971 = vmatpush1.msra.mxu0 %v3793
  %3972 = vmatprep.subr.mxu0 %v3792
  %3973 = vmatpush1.msra.mxu0 %v3791
  %3974 = vmatprep.subr.mxu0 %v3790
  %3975 = vmatpush1.msra.mxu0 %v3789
  %3976 = vmatprep.subr.mxu0 0.0
  %3977 = vmatpush2.msra.mxu0 0.0
  %3978 = vmatprep.subr.mxu0 0.0
  %3979 = vmatpush2.msra.mxu0 0.0
  %3980 = vmatprep.subr.mxu0 0.0
  %3981 = vmatpush2.msra.mxu0 0.0
  %3982 = vmatprep.subr.mxu0 0.0
  %3983 = vmatpush2.msra.mxu0 0.0
  %3984 = vmatprep.subr.mxu0 %v3844
  %3985 = vmatpush2.msra.mxu0 %v3843
  %3986 = vmatprep.subr.mxu0 %v3842
  %3987 = vmatpush2.msra.mxu0 %v3841
  %3988 = vmatprep.subr.mxu0 %v3840
  %3989 = vmatpush2.msra.mxu0 %v3839
  %3990 = vmatprep.subr.mxu0 %v3838
  %3991 = vmatpush2.msra.mxu0 %v3837
  %3992 = vmatprep.subr.mxu0 %v3836
  %3993 = vmatpush2.msra.mxu0 %v3835
  %3994 = vmatprep.subr.mxu0 %v3834
  %3995 = vmatpush2.msra.mxu0 %v3833
  %3996 = vmatprep.subr.mxu0 %v3832
  %3997 = vmatpush2.msra.mxu0 %v3831
  %3998 = vmatprep.subr.mxu0 %v3830
  %3999 = vmatpush2.msra.mxu0 %v3829
  %4000 = vmatprep.subr.mxu0 %v3828
  %4001 = vmatpush2.msra.mxu0 %v3827
  %4002 = vmatprep.subr.mxu0 %v3826
  %4003 = vmatpush2.msra.mxu0 %v3825
  %4004 = vmatprep.subr.mxu0 %v3824
  %4005 = vmatpush2.msra.mxu0 %v3823
  %4006 = vmatprep.subr.mxu0 %v3822
  %4007 = vmatpush2.msra.mxu0 %v3821
  %4008 = vmatprep.mubr.f32.mxu0 %v3939
  %4009 = vmatmul.mubr.f32.gmra.mxu0 %v3934
  %v4010 = vpop.f32.mrf.mxu0
  %v4011 = vadd.f32 0.0, %v4010
  %v4012 = vpop.f32.mrf.mxu0
  %v4013 = vadd.f32 0.0, %v4012
  %4014 = vmatprep.mubr.f32.mxu0 %v3942
  %4015 = vmatmul.mubr.f32.gmra.mxu0 %v3936
  %v4016 = vpop.f32.mrf.mxu0
  %v4017 = vadd.f32 0.0, %v4016
  %v4018 = vpop.f32.mrf.mxu0
  %v4019 = vadd.f32 0.0, %v4018
  %4020 = vdwg.mxu0
  %v4021 = vmul.f32 %v4011, 0.95
  %v4022 = vmul.f32 %v4013, 0.95
  %v4023 = vmul.f32 %v4017, 0.95
  %v4024 = vmul.f32 %v4019, 0.95
  %v4025 = vadd.f32 %v3845, %v4021
  %v4026 = vadd.f32 %v3846, %v4022
  %v4027 = vadd.f32 %v3847, %v4023
  %v4028 = vadd.f32 %v3848, %v4024
  %v4029 = vld [vmem:[%s7] sm:$0xff]
  %v4030 = vld [vmem:[%s7 + $0x8] sm:$0xff]
  %v4031 = vld [vmem:[%s7 + $0x20] sm:$0xff]
  %v4032 = vld [vmem:[%s7 + $0x28] sm:$0xff]
  %v4033 = vld [vmem:[%s7 + $0x40] sm:$0xff]
  %v4034 = vld [vmem:[%s7 + $0x48] sm:$0xff]
  %v4035 = vld [vmem:[%s7 + $0x60] sm:$0xff]
  %v4036 = vld [vmem:[%s7 + $0x68] sm:$0xff]
  %v4037 = vld [vmem:[%s7 + $0x80] sm:$0xff]
  %v4038 = vld [vmem:[%s7 + $0x88] sm:$0xff]
  %v4039 = vld [vmem:[%s7 + $0xa0] sm:$0xff]
  %v4040 = vld [vmem:[%s7 + $0xa8] sm:$0xff]
  %v4041 = vld [vmem:[%s7 + $0xc0] sm:$0xff]
  %v4042 = vld [vmem:[%s7 + $0xc8] sm:$0xff]
  %v4043 = vld [vmem:[%s7 + $0xe0] sm:$0xff]
  %v4044 = vld [vmem:[%s7 + $0xe8] sm:$0xff]
  %v4045 = vld [vmem:[%s7 + $0x100] sm:$0xff]
  %v4046 = vld [vmem:[%s7 + $0x108] sm:$0xff]
  %v4047 = vld [vmem:[%s7 + $0x120] sm:$0xff]
  %v4048 = vld [vmem:[%s7 + $0x128] sm:$0xff]
  %v4049 = vld [vmem:[%s7 + $0x140] sm:$0xff]
  %v4050 = vld [vmem:[%s7 + $0x148] sm:$0xff]
  %v4051 = vld [vmem:[%s7 + $0x160] sm:$0xff]
  %v4052 = vld [vmem:[%s7 + $0x168] sm:$0xff]
  %v4053 = vld [vmem:[%s7 + $0x180] sm:$0xff]
  %v4054 = vld [vmem:[%s7 + $0x188] sm:$0xff]
  %v4055 = vld [vmem:[%s7 + $0x1a0] sm:$0xff]
  %v4056 = vld [vmem:[%s7 + $0x1a8] sm:$0xff]
  %v4057 = vld [vmem:[%s7 + $0x1c0] sm:$0xff]
  %v4058 = vld [vmem:[%s7 + $0x1c8] sm:$0xff]
  %v4059 = vld [vmem:[%s7 + $0x1e0] sm:$0xff]
  %v4060 = vld [vmem:[%s7 + $0x1e8] sm:$0xff]
  %v4061 = vld [vmem:[%s7 + $0x200] sm:$0xff]
  %v4062 = vld [vmem:[%s7 + $0x208] sm:$0xff]
  %v4063 = vld [vmem:[%s7 + $0x220] sm:$0xff]
  %v4064 = vld [vmem:[%s7 + $0x228] sm:$0xff]
  %v4065 = vld [vmem:[%s7 + $0x240] sm:$0xff]
  %v4066 = vld [vmem:[%s7 + $0x248] sm:$0xff]
  %v4067 = vld [vmem:[%s7 + $0x260] sm:$0xff]
  %v4068 = vld [vmem:[%s7 + $0x268] sm:$0xff]
  %v4069 = vld [vmem:[%s7 + $0x280] sm:$0xff]
  %v4070 = vld [vmem:[%s7 + $0x288] sm:$0xff]
  %v4071 = vld [vmem:[%s7 + $0x2a0] sm:$0xff]
  %v4072 = vld [vmem:[%s7 + $0x2a8] sm:$0xff]
  %v4073 = vld [vmem:[%s7 + $0x2c0] sm:$0xff]
  %v4074 = vld [vmem:[%s7 + $0x2c8] sm:$0xff]
  %v4075 = vld [vmem:[%s7 + $0x2e0] sm:$0xff]
  %v4076 = vld [vmem:[%s7 + $0x2e8] sm:$0xff]
  %v4077 = vld [vmem:[%s7 + $0x300] sm:$0xff]
  %v4078 = vld [vmem:[%s7 + $0x308] sm:$0xff]
  %v4079 = vld [vmem:[%s7 + $0x320] sm:$0xff]
  %v4080 = vld [vmem:[%s7 + $0x328] sm:$0xff]
  %v4081 = vld [vmem:[%s7 + $0x340] sm:$0xff]
  %v4082 = vld [vmem:[%s7 + $0x348] sm:$0xff]
  %v4083 = vld [vmem:[%s7 + $0x360] sm:$0xff]
  %v4084 = vld [vmem:[%s7 + $0x368] sm:$0xff]
  %4085 = vmatprep.subr.mxu0 %v4060
  %4086 = vmatpush1.msra.mxu0 %v4059
  %4087 = vmatprep.subr.mxu0 %v4058
  %4088 = vmatpush1.msra.mxu0 %v4057
  %4089 = vmatprep.subr.mxu0 %v4056
  %4090 = vmatpush1.msra.mxu0 %v4055
  %4091 = vmatprep.subr.mxu0 %v4054
  %4092 = vmatpush1.msra.mxu0 %v4053
  %4093 = vmatprep.subr.mxu0 %v4052
  %4094 = vmatpush1.msra.mxu0 %v4051
  %4095 = vmatprep.subr.mxu0 %v4050
  %4096 = vmatpush1.msra.mxu0 %v4049
  %4097 = vmatprep.subr.mxu0 %v4048
  %4098 = vmatpush1.msra.mxu0 %v4047
  %4099 = vmatprep.subr.mxu0 %v4046
  %4100 = vmatpush1.msra.mxu0 %v4045
  %4101 = vmatprep.subr.mxu0 %v4044
  %4102 = vmatpush1.msra.mxu0 %v4043
  %4103 = vmatprep.subr.mxu0 %v4042
  %4104 = vmatpush1.msra.mxu0 %v4041
  %4105 = vmatprep.subr.mxu0 %v4040
  %4106 = vmatpush1.msra.mxu0 %v4039
  %4107 = vmatprep.subr.mxu0 %v4038
  %4108 = vmatpush1.msra.mxu0 %v4037
  %4109 = vmatprep.subr.mxu0 %v4036
  %4110 = vmatpush1.msra.mxu0 %v4035
  %4111 = vmatprep.subr.mxu0 %v4034
  %4112 = vmatpush1.msra.mxu0 %v4033
  %4113 = vmatprep.subr.mxu0 %v4032
  %4114 = vmatpush1.msra.mxu0 %v4031
  %4115 = vmatprep.subr.mxu0 %v4030
  %4116 = vmatpush1.msra.mxu0 %v4029
  %4117 = vmatprep.subr.mxu0 0.0
  %4118 = vmatpush2.msra.mxu0 0.0
  %4119 = vmatprep.subr.mxu0 0.0
  %4120 = vmatpush2.msra.mxu0 0.0
  %4121 = vmatprep.subr.mxu0 0.0
  %4122 = vmatpush2.msra.mxu0 0.0
  %4123 = vmatprep.subr.mxu0 0.0
  %4124 = vmatpush2.msra.mxu0 0.0
  %4125 = vmatprep.subr.mxu0 %v4084
  %4126 = vmatpush2.msra.mxu0 %v4083
  %4127 = vmatprep.subr.mxu0 %v4082
  %4128 = vmatpush2.msra.mxu0 %v4081
  %4129 = vmatprep.subr.mxu0 %v4080
  %4130 = vmatpush2.msra.mxu0 %v4079
  %4131 = vmatprep.subr.mxu0 %v4078
  %4132 = vmatpush2.msra.mxu0 %v4077
  %4133 = vmatprep.subr.mxu0 %v4076
  %4134 = vmatpush2.msra.mxu0 %v4075
  %4135 = vmatprep.subr.mxu0 %v4074
  %4136 = vmatpush2.msra.mxu0 %v4073
  %4137 = vmatprep.subr.mxu0 %v4072
  %4138 = vmatpush2.msra.mxu0 %v4071
  %4139 = vmatprep.subr.mxu0 %v4070
  %4140 = vmatpush2.msra.mxu0 %v4069
  %4141 = vmatprep.subr.mxu0 %v4068
  %4142 = vmatpush2.msra.mxu0 %v4067
  %4143 = vmatprep.subr.mxu0 %v4066
  %4144 = vmatpush2.msra.mxu0 %v4065
  %4145 = vmatprep.subr.mxu0 %v4064
  %4146 = vmatpush2.msra.mxu0 %v4063
  %4147 = vmatprep.subr.mxu0 %v4062
  %4148 = vmatpush2.msra.mxu0 %v4061
  %4149 = vmatprep.mubr.f32.mxu0 %v3849
  %4150 = vmatmul.mubr.f32.gmra.mxu0 %v3618
  %v4151 = vpop.f32.mrf.mxu0
  %v4152 = vadd.f32 0.0, %v4151
  %v4153 = vpop.f32.mrf.mxu0
  %v4154 = vadd.f32 0.0, %v4153
  %4155 = vmatprep.mubr.f32.mxu0 %v3851
  %4156 = vmatmul.mubr.f32.gmra.mxu0 %v3620
  %v4157 = vpop.f32.mrf.mxu0
  %v4158 = vadd.f32 0.0, %v4157
  %v4159 = vpop.f32.mrf.mxu0
  %v4160 = vadd.f32 0.0, %v4159
  %4161 = vdwg.mxu0
  %v4162 = vmul.f32 %v4152, 0.95
  %v4163 = vmul.f32 %v4154, 0.95
  %v4164 = vmul.f32 %v4158, 0.95
  %v4165 = vmul.f32 %v4160, 0.95
  %v4166 = vadd.f32 %v3845, %v4162
  %v4167 = vadd.f32 %v3846, %v4163
  %v4168 = vadd.f32 %v3847, %v4164
  %v4169 = vadd.f32 %v3848, %v4165
  %v4171 = vsel %vm618, %v4167, 0
  %v4174 = vsel %vm618, %v4169, 0
  %4176 = vmatprep.subr.mxu0 %v4060
  %4177 = vmatpush1.msra.mxu0 %v4059
  %4178 = vmatprep.subr.mxu0 %v4058
  %4179 = vmatpush1.msra.mxu0 %v4057
  %4180 = vmatprep.subr.mxu0 %v4056
  %4181 = vmatpush1.msra.mxu0 %v4055
  %4182 = vmatprep.subr.mxu0 %v4054
  %4183 = vmatpush1.msra.mxu0 %v4053
  %4184 = vmatprep.subr.mxu0 %v4052
  %4185 = vmatpush1.msra.mxu0 %v4051
  %4186 = vmatprep.subr.mxu0 %v4050
  %4187 = vmatpush1.msra.mxu0 %v4049
  %4188 = vmatprep.subr.mxu0 %v4048
  %4189 = vmatpush1.msra.mxu0 %v4047
  %4190 = vmatprep.subr.mxu0 %v4046
  %4191 = vmatpush1.msra.mxu0 %v4045
  %4192 = vmatprep.subr.mxu0 %v4044
  %4193 = vmatpush1.msra.mxu0 %v4043
  %4194 = vmatprep.subr.mxu0 %v4042
  %4195 = vmatpush1.msra.mxu0 %v4041
  %4196 = vmatprep.subr.mxu0 %v4040
  %4197 = vmatpush1.msra.mxu0 %v4039
  %4198 = vmatprep.subr.mxu0 %v4038
  %4199 = vmatpush1.msra.mxu0 %v4037
  %4200 = vmatprep.subr.mxu0 %v4036
  %4201 = vmatpush1.msra.mxu0 %v4035
  %4202 = vmatprep.subr.mxu0 %v4034
  %4203 = vmatpush1.msra.mxu0 %v4033
  %4204 = vmatprep.subr.mxu0 %v4032
  %4205 = vmatpush1.msra.mxu0 %v4031
  %4206 = vmatprep.subr.mxu0 %v4030
  %4207 = vmatpush1.msra.mxu0 %v4029
  %4208 = vmatprep.subr.mxu0 0.0
  %4209 = vmatpush2.msra.mxu0 0.0
  %4210 = vmatprep.subr.mxu0 0.0
  %4211 = vmatpush2.msra.mxu0 0.0
  %4212 = vmatprep.subr.mxu0 0.0
  %4213 = vmatpush2.msra.mxu0 0.0
  %4214 = vmatprep.subr.mxu0 0.0
  %4215 = vmatpush2.msra.mxu0 0.0
  %4216 = vmatprep.subr.mxu0 %v4084
  %4217 = vmatpush2.msra.mxu0 %v4083
  %4218 = vmatprep.subr.mxu0 %v4082
  %4219 = vmatpush2.msra.mxu0 %v4081
  %4220 = vmatprep.subr.mxu0 %v4080
  %4221 = vmatpush2.msra.mxu0 %v4079
  %4222 = vmatprep.subr.mxu0 %v4078
  %4223 = vmatpush2.msra.mxu0 %v4077
  %4224 = vmatprep.subr.mxu0 %v4076
  %4225 = vmatpush2.msra.mxu0 %v4075
  %4226 = vmatprep.subr.mxu0 %v4074
  %4227 = vmatpush2.msra.mxu0 %v4073
  %4228 = vmatprep.subr.mxu0 %v4072
  %4229 = vmatpush2.msra.mxu0 %v4071
  %4230 = vmatprep.subr.mxu0 %v4070
  %4231 = vmatpush2.msra.mxu0 %v4069
  %4232 = vmatprep.subr.mxu0 %v4068
  %4233 = vmatpush2.msra.mxu0 %v4067
  %4234 = vmatprep.subr.mxu0 %v4066
  %4235 = vmatpush2.msra.mxu0 %v4065
  %4236 = vmatprep.subr.mxu0 %v4064
  %4237 = vmatpush2.msra.mxu0 %v4063
  %4238 = vmatprep.subr.mxu0 %v4062
  %4239 = vmatpush2.msra.mxu0 %v4061
  %4240 = vmatprep.mubr.f32.mxu0 %v4171
  %4241 = vmatmul.mubr.f32.gmra.mxu0 %v4166
  %v4242 = vpop.f32.mrf.mxu0
  %v4243 = vadd.f32 0.0, %v4242
  %v4244 = vpop.f32.mrf.mxu0
  %v4245 = vadd.f32 0.0, %v4244
  %4246 = vmatprep.mubr.f32.mxu0 %v4174
  %4247 = vmatmul.mubr.f32.gmra.mxu0 %v4168
  %v4248 = vpop.f32.mrf.mxu0
  %v4249 = vadd.f32 0.0, %v4248
  %v4250 = vpop.f32.mrf.mxu0
  %v4251 = vadd.f32 0.0, %v4250
  %4252 = vdwg.mxu0
  %v4253 = vmul.f32 %v4243, 0.95
  %v4254 = vmul.f32 %v4245, 0.95
  %v4255 = vmul.f32 %v4249, 0.95
  %v4256 = vmul.f32 %v4251, 0.95
  %v4257 = vadd.f32 %v3845, %v4253
  %v4258 = vadd.f32 %v3846, %v4254
  %v4259 = vadd.f32 %v3847, %v4255
  %v4260 = vadd.f32 %v3848, %v4256
  %v4261 = vld [vmem:[%s61] sm:$0xff]
  %v4262 = vld [vmem:[%s61 + $0x8] sm:$0xff]
  %v4263 = vld [vmem:[%s23] sm:$0xff]
  %v4264 = vld [vmem:[%s23 + $0x8] sm:$0xff]
  %4266 = vset.pattern.permute.xlu0 0
  %4267 = vperm.xlu0 %4266, %v4263
  %v4268 = vpop.permute.xlu0 %4267
  %4271 = vset.pattern.permute.xlu0 0
  %4272 = vperm.xlu0 %4271, %v4264
  %v4273 = vpop.permute.xlu0 %4272
  %v4276 = vsel %vm618, %v4261, 0
  %v4279 = vsel %vm618, %v4262, 0
  %4281 = vmatprep.subr.mxu0 0.0
  %4282 = vmatpush1.msra.mxu0 0.0
  %4283 = vmatprep.subr.mxu0 0.0
  %4284 = vmatpush1.msra.mxu0 0.0
  %4285 = vmatprep.subr.mxu0 0.0
  %4286 = vmatpush1.msra.mxu0 0.0
  %4287 = vmatprep.subr.mxu0 0.0
  %4288 = vmatpush1.msra.mxu0 0.0
  %4289 = vmatprep.subr.mxu0 %v4260
  %4290 = vmatpush1.msra.mxu0 %v4259
  %4291 = vmatprep.subr.mxu0 %v4258
  %4292 = vmatpush1.msra.mxu0 %v4257
  %4293 = vmatprep.subr.mxu0 %v4169
  %4294 = vmatpush1.msra.mxu0 %v4168
  %4295 = vmatprep.subr.mxu0 %v4167
  %4296 = vmatpush1.msra.mxu0 %v4166
  %4297 = vmatprep.subr.mxu0 %v3621
  %4298 = vmatpush1.msra.mxu0 %v3620
  %4299 = vmatprep.subr.mxu0 %v3619
  %4300 = vmatpush1.msra.mxu0 %v3618
  %4301 = vmatprep.subr.mxu0 %v4028
  %4302 = vmatpush1.msra.mxu0 %v4027
  %4303 = vmatprep.subr.mxu0 %v4026
  %4304 = vmatpush1.msra.mxu0 %v4025
  %4305 = vmatprep.subr.mxu0 %v3937
  %4306 = vmatpush1.msra.mxu0 %v3936
  %4307 = vmatprep.subr.mxu0 %v3935
  %4308 = vmatpush1.msra.mxu0 %v3934
  %4309 = vmatprep.subr.mxu0 %v3621
  %4310 = vmatpush1.msra.mxu0 %v3620
  %4311 = vmatprep.subr.mxu0 %v3619
  %4312 = vmatpush1.msra.mxu0 %v3618
  %4313 = vmatprep.subr.mxu0 0.0
  %4314 = vmatpush2.msra.mxu0 0.0
  %4315 = vmatprep.subr.mxu0 0.0
  %4316 = vmatpush2.msra.mxu0 0.0
  %4317 = vmatprep.subr.mxu0 0.0
  %4318 = vmatpush2.msra.mxu0 0.0
  %4319 = vmatprep.subr.mxu0 0.0
  %4320 = vmatpush2.msra.mxu0 0.0
  %4321 = vmatprep.subr.mxu0 0.0
  %4322 = vmatpush2.msra.mxu0 0.0
  %4323 = vmatprep.subr.mxu0 0.0
  %4324 = vmatpush2.msra.mxu0 0.0
  %4325 = vmatprep.subr.mxu0 0.0
  %4326 = vmatpush2.msra.mxu0 0.0
  %4327 = vmatprep.subr.mxu0 0.0
  %4328 = vmatpush2.msra.mxu0 0.0
  %4329 = vmatprep.subr.mxu0 0.0
  %4330 = vmatpush2.msra.mxu0 0.0
  %4331 = vmatprep.subr.mxu0 0.0
  %4332 = vmatpush2.msra.mxu0 0.0
  %4333 = vmatprep.subr.mxu0 0.0
  %4334 = vmatpush2.msra.mxu0 0.0
  %4335 = vmatprep.subr.mxu0 0.0
  %4336 = vmatpush2.msra.mxu0 0.0
  %4337 = vmatprep.subr.mxu0 0.0
  %4338 = vmatpush2.msra.mxu0 0.0
  %4339 = vmatprep.subr.mxu0 0.0
  %4340 = vmatpush2.msra.mxu0 0.0
  %4341 = vmatprep.subr.mxu0 0.0
  %4342 = vmatpush2.msra.mxu0 0.0
  %4343 = vmatprep.subr.mxu0 0.0
  %4344 = vmatpush2.msra.mxu0 0.0
  %4345 = vmatprep.mubr.f32.mxu0 0.0
  %4346 = vmatmul.mubr.f32.gmra.mxu0 %v4276
  %v4347 = vpop.f32.mrf.mxu0
  %v4348 = vadd.f32 %v4268, %v4347
  %v4349 = vpop.f32.mrf.mxu0
  %v4350 = vadd.f32 %v4268, %v4349
  %4351 = vmatprep.mubr.f32.mxu0 0.0
  %4352 = vmatmul.mubr.f32.gmra.mxu0 %v4279
  %v4353 = vpop.f32.mrf.mxu0
  %v4354 = vadd.f32 %v4273, %v4353
  %v4355 = vpop.f32.mrf.mxu0
  %v4356 = vadd.f32 %v4273, %v4355
  %4357 = vdwg.mxu0
  %v4358 = vadd.f32 %v4348, %v3414
  %v4359 = vadd.f32 %v4350, %v3457
  %v4360 = vadd.f32 %v4354, %v3416
  %v4361 = vadd.f32 %v4356, %v3458
  %v4362 = vld [vmem:[%s45] ss:$2 sm:$0x3]
  %v4364 = vlaneseq
  %v4365 = vshrl.u32 %v4364, 7
  %v4366 = vsub.s32 0, %v4365
  %v4367 = vrot.slane %v4362, %v4366
  %v4368 = vlaneseq
  %v4369 = vshrl.u32 %v4368, 7
  %v4370 = vsub.s32 1, %v4369
  %v4371 = vrot.slane %v4362, %v4370
  %v4374 = vmul.f32 %v4358, %v4367
  %v4375 = vmul.f32 %v4359, %v4371
  %v4376 = vmul.f32 %v4360, %v4367
  %v4377 = vmul.f32 %v4361, %v4371
  %v4378 = vsel %vm618, %v4375, 0.0
  %v4379 = vadd.f32 %v4374, %v4378
  %4380 = vadd.xlane.f32.xlu0 %v4379
  %v4381 = vpop.xlane.xlu0 %4380
  %v4382 = vsel %vm618, %v4377, 0.0
  %v4383 = vadd.f32 %v4376, %v4382
  %4384 = vadd.xlane.f32.xlu0 %v4383
  %v4385 = vpop.xlane.xlu0 %4384
  %v4386 = vadd.f32 %v4381, %v4385
  %v4387 = vrot.slane %v4386, 4
  %v4388 = vadd.f32 %v4386, %v4387
  %v4389 = vrot.slane %v4388, 2
  %v4390 = vadd.f32 %v4388, %v4389
  %v4391 = vrot.slane %v4390, 1
  %v4392 = vadd.f32 %v4390, %v4391
  %v4393 = vmul.f32 %v4392, 0.00055803574
  %v4394 = vmul.f32 %v4374, %v4358
  %v4395 = vmul.f32 %v4375, %v4359
  %v4396 = vmul.f32 %v4376, %v4360
  %v4397 = vmul.f32 %v4377, %v4361
  %v4398 = vsel %vm618, %v4395, 0.0
  %v4399 = vadd.f32 %v4394, %v4398
  %4400 = vadd.xlane.f32.xlu0 %v4399
  %v4401 = vpop.xlane.xlu0 %4400
  %v4402 = vsel %vm618, %v4397, 0.0
  %v4403 = vadd.f32 %v4396, %v4402
  %4404 = vadd.xlane.f32.xlu0 %v4403
  %v4405 = vpop.xlane.xlu0 %4404
  %v4406 = vadd.f32 %v4401, %v4405
  %v4407 = vrot.slane %v4406, 4
  %v4408 = vadd.f32 %v4406, %v4407
  %v4409 = vrot.slane %v4408, 2
  %v4410 = vadd.f32 %v4408, %v4409
  %v4411 = vrot.slane %v4410, 1
  %v4412 = vadd.f32 %v4410, %v4411
  %v4413 = vmul.f32 %v4412, 0.00055803574
  %v4414 = vmul.f32 %v4393, %v4393
  %v4415 = vsub.f32 %v4413, %v4414
  %v4416 = vmax.f32 %v4415, 0.0
  %v4417 = vadd.f32 %v4416, 1e-05
  %v4418 = vrsqrt.pop %v4417
  %v4419 = vmul.f32 %v4393, %v4362
  %v4420 = vmul.f32 %v4418, %v4362
  %v4421 = vld [vmem:[%s3203] ss:$2 sm:$0x3]
  %v4423 = vlaneseq
  %v4424 = vshrl.u32 %v4423, 7
  %v4425 = vsub.s32 0, %v4424
  %v4426 = vrot.slane %v4421, %v4425
  %v4427 = vlaneseq
  %v4428 = vshrl.u32 %v4427, 7
  %v4429 = vsub.s32 1, %v4428
  %v4430 = vrot.slane %v4421, %v4429
  %v4433 = vmul.f32 %v4358, %v4426
  %v4434 = vmul.f32 %v4359, %v4430
  %v4435 = vmul.f32 %v4360, %v4426
  %v4436 = vmul.f32 %v4361, %v4430
  %v4437 = vsel %vm618, %v4434, 0.0
  %v4438 = vadd.f32 %v4433, %v4437
  %4439 = vadd.xlane.f32.xlu0 %v4438
  %v4440 = vpop.xlane.xlu0 %4439
  %v4441 = vsel %vm618, %v4436, 0.0
  %v4442 = vadd.f32 %v4435, %v4441
  %4443 = vadd.xlane.f32.xlu0 %v4442
  %v4444 = vpop.xlane.xlu0 %4443
  %v4445 = vadd.f32 %v4440, %v4444
  %v4446 = vrot.slane %v4445, 4
  %v4447 = vadd.f32 %v4445, %v4446
  %v4448 = vrot.slane %v4447, 2
  %v4449 = vadd.f32 %v4447, %v4448
  %v4450 = vrot.slane %v4449, 1
  %v4451 = vadd.f32 %v4449, %v4450
  %v4452 = vmul.f32 %v4451, 0.00055803574
  %v4453 = vmul.f32 %v4433, %v4358
  %v4454 = vmul.f32 %v4434, %v4359
  %v4455 = vmul.f32 %v4435, %v4360
  %v4456 = vmul.f32 %v4436, %v4361
  %v4457 = vsel %vm618, %v4454, 0.0
  %v4458 = vadd.f32 %v4453, %v4457
  %4459 = vadd.xlane.f32.xlu0 %v4458
  %v4460 = vpop.xlane.xlu0 %4459
  %v4461 = vsel %vm618, %v4456, 0.0
  %v4462 = vadd.f32 %v4455, %v4461
  %4463 = vadd.xlane.f32.xlu0 %v4462
  %v4464 = vpop.xlane.xlu0 %4463
  %v4465 = vadd.f32 %v4460, %v4464
  %v4466 = vrot.slane %v4465, 4
  %v4467 = vadd.f32 %v4465, %v4466
  %v4468 = vrot.slane %v4467, 2
  %v4469 = vadd.f32 %v4467, %v4468
  %v4470 = vrot.slane %v4469, 1
  %v4471 = vadd.f32 %v4469, %v4470
  %v4472 = vmul.f32 %v4471, 0.00055803574
  %v4473 = vmul.f32 %v4452, %v4452
  %v4474 = vsub.f32 %v4472, %v4473
  %v4475 = vmax.f32 %v4474, 0.0
  %v4476 = vadd.f32 %v4475, 1e-05
  %v4477 = vrsqrt.pop %v4476
  %v4478 = vmul.f32 %v4452, %v4421
  %v4479 = vmul.f32 %v4477, %v4421
  %v4480 = vadd.f32 %v4419, %v4478
  %v4481 = vadd.f32 %v4420, %v4479
  %v4483 = vlaneseq
  %v4484 = vshrl.u32 %v4483, 7
  %v4485 = vsub.s32 0, %v4484
  %v4486 = vrot.slane %v4480, %v4485
  %v4487 = vlaneseq
  %v4488 = vshrl.u32 %v4487, 7
  %v4489 = vsub.s32 1, %v4488
  %v4490 = vrot.slane %v4480, %v4489
  %v4493 = vsub.f32 %v4358, %v4486
  %v4494 = vsub.f32 %v4359, %v4490
  %v4495 = vsub.f32 %v4360, %v4486
  %v4496 = vsub.f32 %v4361, %v4490
  %v4498 = vlaneseq
  %v4499 = vshrl.u32 %v4498, 7
  %v4500 = vsub.s32 0, %v4499
  %v4501 = vrot.slane %v4481, %v4500
  %v4502 = vlaneseq
  %v4503 = vshrl.u32 %v4502, 7
  %v4504 = vsub.s32 1, %v4503
  %v4505 = vrot.slane %v4481, %v4504
  %v4508 = vmul.f32 %v4493, %v4501
  %v4509 = vmul.f32 %v4494, %v4505
  %v4510 = vmul.f32 %v4495, %v4501
  %v4511 = vmul.f32 %v4496, %v4505
  %v4512 = vld [vmem:[%s67] sm:$0xff]
  %v4513 = vld [vmem:[%s67 + $0x8] sm:$0xff]
  %v4514 = vld [vmem:[%s67 + $0x10] sm:$0xff]
  %v4515 = vld [vmem:[%s67 + $0x18] sm:$0xff]
  %v4516 = vmul.f32 %v4508, %v4512
  %v4517 = vmul.f32 %v4509, %v4513
  %v4518 = vmul.f32 %v4510, %v4514
  %v4519 = vmul.f32 %v4511, %v4515
  %v4520 = vld [vmem:[%s29] sm:$0xff]
  %v4521 = vld [vmem:[%s29 + $0x8] sm:$0xff]
  %v4522 = vld [vmem:[%s29 + $0x10] sm:$0xff]
  %v4523 = vld [vmem:[%s29 + $0x18] sm:$0xff]
  %v4524 = vadd.f32 %v4516, %v4520
  %v4525 = vadd.f32 %v4517, %v4521
  %v4526 = vadd.f32 %v4518, %v4522
  %v4527 = vadd.f32 %v4519, %v4523
  %4530 = vrot.lane.b32.xlu0 %v4524, 96
  %v4531 = vpop.permute.xlu0 %4530
  %4532 = vrot.lane.b32.xlu0 %v4526, 96
  %v4533 = vpop.permute.xlu0 %4532
  %4536 = vrot.lane.b32.xlu0 %v4524, 64
  %v4537 = vpop.permute.xlu0 %4536
  %4538 = vrot.lane.b32.xlu0 %v4526, 64
  %v4539 = vpop.permute.xlu0 %4538
  %4542 = vrot.lane.b32.xlu0 %v4524, 32
  %v4543 = vpop.permute.xlu0 %4542
  %4544 = vrot.lane.b32.xlu0 %v4526, 32
  %v4545 = vpop.permute.xlu0 %4544
  %4550 = vrot.lane.b32.xlu0 %v4525, 96
  %v4551 = vpop.permute.xlu0 %4550
  %4552 = vrot.lane.b32.xlu0 %v4527, 96
  %v4553 = vpop.permute.xlu0 %4552
  %4556 = vrot.lane.b32.xlu0 %v4525, 64
  %v4557 = vpop.permute.xlu0 %4556
  %4558 = vrot.lane.b32.xlu0 %v4527, 64
  %v4559 = vpop.permute.xlu0 %4558
  %v4562 = vld [vmem:[%s57] sm:$0xff]
  %v4563 = vld [vmem:[%s57 + $0x8] sm:$0xff]
  %v4564 = vld [vmem:[%s57 + $0x10] sm:$0xff]
  %v4565 = vld [vmem:[%s57 + $0x18] sm:$0xff]
  %v4566 = vld [vmem:[%s19] sm:$0xff]
  %v4567 = vld [vmem:[%s19 + $0x8] sm:$0xff]
  %v4568 = vld [vmem:[%s19 + $0x10] sm:$0xff]
  %v4569 = vld [vmem:[%s19 + $0x18] sm:$0xff]
  %4571 = vset.pattern.permute.xlu0 0
  %4572 = vperm.xlu0 %4571, %v4566
  %v4573 = vpop.permute.xlu0 %4572
  %4576 = vset.pattern.permute.xlu0 0
  %4577 = vperm.xlu0 %4576, %v4567
  %v4578 = vpop.permute.xlu0 %4577
  %4581 = vset.pattern.permute.xlu0 0
  %4582 = vperm.xlu0 %4581, %v4568
  %v4583 = vpop.permute.xlu0 %4582
  %4586 = vset.pattern.permute.xlu0 0
  %4587 = vperm.xlu0 %4586, %v4569
  %v4588 = vpop.permute.xlu0 %4587
  %v4591 = vsel %vm745, %v4562, 0
  %v4594 = vsel %vm745, %v4563, 0
  %v4597 = vsel %vm745, %v4564, 0
  %v4600 = vsel %vm745, %v4565, 0
  %4602 = vmatprep.subr.mxu0 0.0
  %4603 = vmatpush1.msra.mxu0 0.0
  %4604 = vmatprep.subr.mxu0 0.0
  %4605 = vmatpush1.msra.mxu0 0.0
  %4606 = vmatprep.subr.mxu0 0.0
  %4607 = vmatpush1.msra.mxu0 %v4559
  %4608 = vmatprep.subr.mxu0 0.0
  %4609 = vmatpush1.msra.mxu0 %v4557
  %4610 = vmatprep.subr.mxu0 0.0
  %4611 = vmatpush1.msra.mxu0 %v4553
  %4612 = vmatprep.subr.mxu0 0.0
  %4613 = vmatpush1.msra.mxu0 %v4551
  %4614 = vmatprep.subr.mxu0 0.0
  %4615 = vmatpush1.msra.mxu0 %v4527
  %4616 = vmatprep.subr.mxu0 0.0
  %4617 = vmatpush1.msra.mxu0 %v4525
  %4618 = vmatprep.subr.mxu0 0.0
  %4619 = vmatpush1.msra.mxu0 %v4545
  %4620 = vmatprep.subr.mxu0 0.0
  %4621 = vmatpush1.msra.mxu0 %v4543
  %4622 = vmatprep.subr.mxu0 0.0
  %4623 = vmatpush1.msra.mxu0 %v4539
  %4624 = vmatprep.subr.mxu0 0.0
  %4625 = vmatpush1.msra.mxu0 %v4537
  %4626 = vmatprep.subr.mxu0 0.0
  %4627 = vmatpush1.msra.mxu0 %v4533
  %4628 = vmatprep.subr.mxu0 0.0
  %4629 = vmatpush1.msra.mxu0 %v4531
  %4630 = vmatprep.subr.mxu0 0.0
  %4631 = vmatpush1.msra.mxu0 %v4526
  %4632 = vmatprep.subr.mxu0 0.0
  %4633 = vmatpush1.msra.mxu0 %v4524
  %4634 = vmatprep.subr.mxu0 0.0
  %4635 = vmatpush2.msra.mxu0 0.0
  %4636 = vmatprep.subr.mxu0 0.0
  %4637 = vmatpush2.msra.mxu0 0.0
  %4638 = vmatprep.subr.mxu0 0.0
  %4639 = vmatpush2.msra.mxu0 0.0
  %4640 = vmatprep.subr.mxu0 0.0
  %4641 = vmatpush2.msra.mxu0 0.0
  %4642 = vmatprep.subr.mxu0 0.0
  %4643 = vmatpush2.msra.mxu0 0.0
  %4644 = vmatprep.subr.mxu0 0.0
  %4645 = vmatpush2.msra.mxu0 0.0
  %4646 = vmatprep.subr.mxu0 0.0
  %4647 = vmatpush2.msra.mxu0 0.0
  %4648 = vmatprep.subr.mxu0 0.0
  %4649 = vmatpush2.msra.mxu0 0.0
  %4650 = vmatprep.subr.mxu0 0.0
  %4651 = vmatpush2.msra.mxu0 0.0
  %4652 = vmatprep.subr.mxu0 0.0
  %4653 = vmatpush2.msra.mxu0 0.0
  %4654 = vmatprep.subr.mxu0 0.0
  %4655 = vmatpush2.msra.mxu0 0.0
  %4656 = vmatprep.subr.mxu0 0.0
  %4657 = vmatpush2.msra.mxu0 0.0
  %4658 = vmatprep.subr.mxu0 0.0
  %4659 = vmatpush2.msra.mxu0 0.0
  %4660 = vmatprep.subr.mxu0 0.0
  %4661 = vmatpush2.msra.mxu0 0.0
  %4662 = vmatprep.subr.mxu0 0.0
  %4663 = vmatpush2.msra.mxu0 0.0
  %4664 = vmatprep.subr.mxu0 0.0
  %4665 = vmatpush2.msra.mxu0 0.0
  %4666 = vmatprep.mubr.f32.mxu0 0.0
  %4667 = vmatmul.mubr.f32.gmra.mxu0 %v4591
  %v4668 = vpop.f32.mrf.mxu0
  %v4669 = vadd.f32 %v4573, %v4668
  %v4670 = vpop.f32.mrf.mxu0
  %4671 = vmatprep.mubr.f32.mxu0 0.0
  %4672 = vmatmul.mubr.f32.gmra.mxu0 %v4594
  %v4673 = vpop.f32.mrf.mxu0
  %v4674 = vadd.f32 %v4578, %v4673
  %v4675 = vpop.f32.mrf.mxu0
  %4676 = vmatprep.mubr.f32.mxu0 0.0
  %4677 = vmatmul.mubr.f32.gmra.mxu0 %v4597
  %v4678 = vpop.f32.mrf.mxu0
  %v4679 = vadd.f32 %v4583, %v4678
  %v4680 = vpop.f32.mrf.mxu0
  %4681 = vmatprep.mubr.f32.mxu0 0.0
  %4682 = vmatmul.mubr.f32.gmra.mxu0 %v4600
  %v4683 = vpop.f32.mrf.mxu0
  %v4684 = vadd.f32 %v4588, %v4683
  %v4685 = vpop.f32.mrf.mxu0
  %4686 = vdwg.mxu0
  %v4687 = vtanh.pop %v4669
  %v4688 = vtanh.pop %v4674
  %v4689 = vxor.u32 %v4679, 2147483648
  %v4690 = vxor.u32 %v4684, 2147483648
  %v4691 = vmul.f32 %v4689, 1.442695
  %v4692 = vpow.pop %v4691
  %v4693 = vmul.f32 %v4690, 1.442695
  %v4694 = vpow.pop %v4693
  %v4695 = vadd.f32 %v4692, 1.0
  %v4696 = vadd.f32 %v4694, 1.0
  %v4697 = vrcp.pop %v4695
  %v4698 = vmul.f32 1.0, %v4697
  %v4699 = vrcp.pop %v4696
  %v4700 = vmul.f32 1.0, %v4699
  %v4701 = vmul.f32 %v4687, %v4698
  %v4702 = vmul.f32 %v4688, %v4700
  %v4703 = vld [vmem:[%s79] sm:$0xff]
  %v4704 = vld [vmem:[%s79 + $0x8] sm:$0xff]
  %v4705 = vld [vmem:[%s79 + $0x10] sm:$0xff]
  %v4706 = vld [vmem:[%s79 + $0x18] sm:$0xff]
  %vm4707 = vcmask 130048
  %v4709 = vsel %vm4707, %v4703, 0
  %v4712 = vsel %vm4707, %v4704, 0
  %v4715 = vsel %vm4707, %v4705, 0
  %v4718 = vsel %vm4707, %v4706, 0
  %4720 = vmatprep.subr.mxu0 0.0
  %4721 = vmatpush1.msra.mxu0 0.0
  %4722 = vmatprep.subr.mxu0 0.0
  %4723 = vmatpush1.msra.mxu0 0.0
  %4724 = vmatprep.subr.mxu0 0.0
  %4725 = vmatpush1.msra.mxu0 0.0
  %4726 = vmatprep.subr.mxu0 0.0
  %4727 = vmatpush1.msra.mxu0 0.0
  %4728 = vmatprep.subr.mxu0 0.0
  %4729 = vmatpush1.msra.mxu0 0.0
  %4730 = vmatprep.subr.mxu0 0.0
  %4731 = vmatpush1.msra.mxu0 0.0
  %4732 = vmatprep.subr.mxu0 0.0
  %4733 = vmatpush1.msra.mxu0 0.0
  %4734 = vmatprep.subr.mxu0 0.0
  %4735 = vmatpush1.msra.mxu0 0.0
  %4736 = vmatprep.subr.mxu0 0.0
  %4737 = vmatpush1.msra.mxu0 0.0
  %4738 = vmatprep.subr.mxu0 0.0
  %4739 = vmatpush1.msra.mxu0 0.0
  %4740 = vmatprep.subr.mxu0 0.0
  %4741 = vmatpush1.msra.mxu0 0.0
  %4742 = vmatprep.subr.mxu0 0.0
  %4743 = vmatpush1.msra.mxu0 0.0
  %4744 = vmatprep.subr.mxu0 0.0
  %4745 = vmatpush1.msra.mxu0 0.0
  %4746 = vmatprep.subr.mxu0 0.0
  %4747 = vmatpush1.msra.mxu0 0.0
  %4748 = vmatprep.subr.mxu0 0.0
  %4749 = vmatpush1.msra.mxu0 %v4702
  %4750 = vmatprep.subr.mxu0 0.0
  %4751 = vmatpush1.msra.mxu0 %v4701
  %4752 = vmatprep.subr.mxu0 0.0
  %4753 = vmatpush2.msra.mxu0 0.0
  %4754 = vmatprep.subr.mxu0 0.0
  %4755 = vmatpush2.msra.mxu0 0.0
  %4756 = vmatprep.subr.mxu0 0.0
  %4757 = vmatpush2.msra.mxu0 0.0
  %4758 = vmatprep.subr.mxu0 0.0
  %4759 = vmatpush2.msra.mxu0 0.0
  %4760 = vmatprep.subr.mxu0 0.0
  %4761 = vmatpush2.msra.mxu0 0.0
  %4762 = vmatprep.subr.mxu0 0.0
  %4763 = vmatpush2.msra.mxu0 0.0
  %4764 = vmatprep.subr.mxu0 0.0
  %4765 = vmatpush2.msra.mxu0 0.0
  %4766 = vmatprep.subr.mxu0 0.0
  %4767 = vmatpush2.msra.mxu0 0.0
  %4768 = vmatprep.subr.mxu0 0.0
  %4769 = vmatpush2.msra.mxu0 0.0
  %4770 = vmatprep.subr.mxu0 0.0
  %4771 = vmatpush2.msra.mxu0 0.0
  %4772 = vmatprep.subr.mxu0 0.0
  %4773 = vmatpush2.msra.mxu0 0.0
  %4774 = vmatprep.subr.mxu0 0.0
  %4775 = vmatpush2.msra.mxu0 0.0
  %4776 = vmatprep.subr.mxu0 0.0
  %4777 = vmatpush2.msra.mxu0 0.0
  %4778 = vmatprep.subr.mxu0 0.0
  %4779 = vmatpush2.msra.mxu0 0.0
  %4780 = vmatprep.subr.mxu0 0.0
  %4781 = vmatpush2.msra.mxu0 0.0
  %4782 = vmatprep.subr.mxu0 0.0
  %4783 = vmatpush2.msra.mxu0 0.0
  %4784 = vmatprep.mubr.f32.mxu0 0.0
  %4785 = vmatmul.mubr.f32.gmra.mxu0 %v4709
  %v4786 = vpop.f32.mrf.mxu0
  %v4787 = vadd.f32 0.0, %v4786
  %v4788 = vpop.f32.mrf.mxu0
  %4789 = vmatprep.mubr.f32.mxu0 0.0
  %4790 = vmatmul.mubr.f32.gmra.mxu0 %v4712
  %v4791 = vpop.f32.mrf.mxu0
  %v4792 = vadd.f32 0.0, %v4791
  %v4793 = vpop.f32.mrf.mxu0
  %4794 = vmatprep.mubr.f32.mxu0 0.0
  %4795 = vmatmul.mubr.f32.gmra.mxu0 %v4715
  %v4796 = vpop.f32.mrf.mxu0
  %v4797 = vadd.f32 0.0, %v4796
  %v4798 = vpop.f32.mrf.mxu0
  %4799 = vmatprep.mubr.f32.mxu0 0.0
  %4800 = vmatmul.mubr.f32.gmra.mxu0 %v4718
  %v4801 = vpop.f32.mrf.mxu0
  %v4802 = vadd.f32 0.0, %v4801
  %v4803 = vpop.f32.mrf.mxu0
  %4804 = vdwg.mxu0
  %v4805 = vadd.f32 %v3785, %v4787
  %v4806 = vadd.f32 %v3786, %v4792
  %v4807 = vadd.f32 %v3787, %v4797
  %v4808 = vadd.f32 %v3788, %v4802
  %v4809 = vld [vmem:[%s41] sm:$0xff]
  %v4810 = vld [vmem:[%s41 + $0x8] sm:$0xff]
  %v4811 = vld [vmem:[%s41 + $0x10] sm:$0xff]
  %v4812 = vld [vmem:[%s41 + $0x18] sm:$0xff]
  %4814 = vset.pattern.permute.xlu0 0
  %4815 = vperm.xlu0 %4814, %v4809
  %v4816 = vpop.permute.xlu0 %4815
  %4819 = vset.pattern.permute.xlu0 0
  %4820 = vperm.xlu0 %4819, %v4810
  %v4821 = vpop.permute.xlu0 %4820
  %4824 = vset.pattern.permute.xlu0 0
  %4825 = vperm.xlu0 %4824, %v4811
  %v4826 = vpop.permute.xlu0 %4825
  %4829 = vset.pattern.permute.xlu0 0
  %4830 = vperm.xlu0 %4829, %v4812
  %v4831 = vpop.permute.xlu0 %4830
  %v4833 = vadd.f32 %v4805, %v4816
  %v4834 = vadd.f32 %v4806, %v4821
  %v4835 = vadd.f32 %v4807, %v4826
  %v4836 = vadd.f32 %v4808, %v4831
  %v4837 = vld [vmem:[%s5] sm:$0xff]
  %v4838 = vld [vmem:[%s5 + $0x20] sm:$0xff]
  %v4839 = vld [vmem:[%s5 + $0x40] sm:$0xff]
  %v4840 = vld [vmem:[%s5 + $0x60] sm:$0xff]
  %v4841 = vmul.f32 %v4701, 0.05
  %v4842 = vmul.f32 %v4702, 0.05
  %v4844 = vsel %vm680, %v4701, 0
  %v4847 = vsel %vm680, %v4702, 0
  %4849 = vmatprep.subr.mxu0 0.0
  %4850 = vmatpush1.msra.mxu0 0.0
  %4851 = vmatprep.subr.mxu0 0.0
  %4852 = vmatpush1.msra.mxu0 0.0
  %4853 = vmatprep.subr.mxu0 0.0
  %4854 = vmatpush1.msra.mxu0 0.0
  %4855 = vmatprep.subr.mxu0 0.0
  %4856 = vmatpush1.msra.mxu0 0.0
  %4857 = vmatprep.subr.mxu0 0.0
  %4858 = vmatpush1.msra.mxu0 0.0
  %4859 = vmatprep.subr.mxu0 0.0
  %4860 = vmatpush1.msra.mxu0 0.0
  %4861 = vmatprep.subr.mxu0 0.0
  %4862 = vmatpush1.msra.mxu0 0.0
  %4863 = vmatprep.subr.mxu0 0.0
  %4864 = vmatpush1.msra.mxu0 0.0
  %4865 = vmatprep.subr.mxu0 0.0
  %4866 = vmatpush1.msra.mxu0 0.0
  %4867 = vmatprep.subr.mxu0 0.0
  %4868 = vmatpush1.msra.mxu0 0.0
  %4869 = vmatprep.subr.mxu0 0.0
  %4870 = vmatpush1.msra.mxu0 0.0
  %4871 = vmatprep.subr.mxu0 0.0
  %4872 = vmatpush1.msra.mxu0 0.0
  %4873 = vmatprep.subr.mxu0 0.0
  %4874 = vmatpush1.msra.mxu0 %v4840
  %4875 = vmatprep.subr.mxu0 0.0
  %4876 = vmatpush1.msra.mxu0 %v4839
  %4877 = vmatprep.subr.mxu0 0.0
  %4878 = vmatpush1.msra.mxu0 %v4838
  %4879 = vmatprep.subr.mxu0 0.0
  %4880 = vmatpush1.msra.mxu0 %v4837
  %4881 = vmatprep.subr.mxu0 0.0
  %4882 = vmatpush2.msra.mxu0 0.0
  %4883 = vmatprep.subr.mxu0 0.0
  %4884 = vmatpush2.msra.mxu0 0.0
  %4885 = vmatprep.subr.mxu0 0.0
  %4886 = vmatpush2.msra.mxu0 0.0
  %4887 = vmatprep.subr.mxu0 0.0
  %4888 = vmatpush2.msra.mxu0 0.0
  %4889 = vmatprep.subr.mxu0 0.0
  %4890 = vmatpush2.msra.mxu0 0.0
  %4891 = vmatprep.subr.mxu0 0.0
  %4892 = vmatpush2.msra.mxu0 0.0
  %4893 = vmatprep.subr.mxu0 0.0
  %4894 = vmatpush2.msra.mxu0 0.0
  %4895 = vmatprep.subr.mxu0 0.0
  %4896 = vmatpush2.msra.mxu0 0.0
  %4897 = vmatprep.subr.mxu0 0.0
  %4898 = vmatpush2.msra.mxu0 0.0
  %4899 = vmatprep.subr.mxu0 0.0
  %4900 = vmatpush2.msra.mxu0 0.0
  %4901 = vmatprep.subr.mxu0 0.0
  %4902 = vmatpush2.msra.mxu0 0.0
  %4903 = vmatprep.subr.mxu0 0.0
  %4904 = vmatpush2.msra.mxu0 0.0
  %4905 = vmatprep.subr.mxu0 0.0
  %4906 = vmatpush2.msra.mxu0 0.0
  %4907 = vmatprep.subr.mxu0 0.0
  %4908 = vmatpush2.msra.mxu0 0.0
  %4909 = vmatprep.subr.mxu0 0.0
  %4910 = vmatpush2.msra.mxu0 0.0
  %4911 = vmatprep.subr.mxu0 0.0
  %4912 = vmatpush2.msra.mxu0 0.0
  %4913 = vmatprep.mubr.f32.mxu0 0.0
  %4914 = vmatmul.mubr.f32.gmra.mxu0 %v4844
  %v4915 = vpop.f32.mrf.mxu0
  %v4916 = vadd.f32 0.0, %v4915
  %v4917 = vpop.f32.mrf.mxu0
  %4918 = vmatprep.mubr.f32.mxu0 0.0
  %4919 = vmatmul.mubr.f32.gmra.mxu0 %v4847
  %v4920 = vpop.f32.mrf.mxu0
  %v4921 = vadd.f32 0.0, %v4920
  %v4922 = vpop.f32.mrf.mxu0
  %4923 = vdwg.mxu0
  %v4924 = vmul.f32 %v4916, 0.95
  %v4925 = vmul.f32 %v4921, 0.95
  %v4926 = vadd.f32 %v4841, %v4924
  %v4927 = vadd.f32 %v4842, %v4925
  %v4929 = vsel %vm680, %v4926, 0
  %v4932 = vsel %vm680, %v4927, 0
  %4934 = vmatprep.subr.mxu0 0.0
  %4935 = vmatpush1.msra.mxu0 0.0
  %4936 = vmatprep.subr.mxu0 0.0
  %4937 = vmatpush1.msra.mxu0 0.0
  %4938 = vmatprep.subr.mxu0 0.0
  %4939 = vmatpush1.msra.mxu0 0.0
  %4940 = vmatprep.subr.mxu0 0.0
  %4941 = vmatpush1.msra.mxu0 0.0
  %4942 = vmatprep.subr.mxu0 0.0
  %4943 = vmatpush1.msra.mxu0 0.0
  %4944 = vmatprep.subr.mxu0 0.0
  %4945 = vmatpush1.msra.mxu0 0.0
  %4946 = vmatprep.subr.mxu0 0.0
  %4947 = vmatpush1.msra.mxu0 0.0
  %4948 = vmatprep.subr.mxu0 0.0
  %4949 = vmatpush1.msra.mxu0 0.0
  %4950 = vmatprep.subr.mxu0 0.0
  %4951 = vmatpush1.msra.mxu0 0.0
  %4952 = vmatprep.subr.mxu0 0.0
  %4953 = vmatpush1.msra.mxu0 0.0
  %4954 = vmatprep.subr.mxu0 0.0
  %4955 = vmatpush1.msra.mxu0 0.0
  %4956 = vmatprep.subr.mxu0 0.0
  %4957 = vmatpush1.msra.mxu0 0.0
  %4958 = vmatprep.subr.mxu0 0.0
  %4959 = vmatpush1.msra.mxu0 %v4840
  %4960 = vmatprep.subr.mxu0 0.0
  %4961 = vmatpush1.msra.mxu0 %v4839
  %4962 = vmatprep.subr.mxu0 0.0
  %4963 = vmatpush1.msra.mxu0 %v4838
  %4964 = vmatprep.subr.mxu0 0.0
  %4965 = vmatpush1.msra.mxu0 %v4837
  %4966 = vmatprep.subr.mxu0 0.0
  %4967 = vmatpush2.msra.mxu0 0.0
  %4968 = vmatprep.subr.mxu0 0.0
  %4969 = vmatpush2.msra.mxu0 0.0
  %4970 = vmatprep.subr.mxu0 0.0
  %4971 = vmatpush2.msra.mxu0 0.0
  %4972 = vmatprep.subr.mxu0 0.0
  %4973 = vmatpush2.msra.mxu0 0.0
  %4974 = vmatprep.subr.mxu0 0.0
  %4975 = vmatpush2.msra.mxu0 0.0
  %4976 = vmatprep.subr.mxu0 0.0
  %4977 = vmatpush2.msra.mxu0 0.0
  %4978 = vmatprep.subr.mxu0 0.0
  %4979 = vmatpush2.msra.mxu0 0.0
  %4980 = vmatprep.subr.mxu0 0.0
  %4981 = vmatpush2.msra.mxu0 0.0
  %4982 = vmatprep.subr.mxu0 0.0
  %4983 = vmatpush2.msra.mxu0 0.0
  %4984 = vmatprep.subr.mxu0 0.0
  %4985 = vmatpush2.msra.mxu0 0.0
  %4986 = vmatprep.subr.mxu0 0.0
  %4987 = vmatpush2.msra.mxu0 0.0
  %4988 = vmatprep.subr.mxu0 0.0
  %4989 = vmatpush2.msra.mxu0 0.0
  %4990 = vmatprep.subr.mxu0 0.0
  %4991 = vmatpush2.msra.mxu0 0.0
  %4992 = vmatprep.subr.mxu0 0.0
  %4993 = vmatpush2.msra.mxu0 0.0
  %4994 = vmatprep.subr.mxu0 0.0
  %4995 = vmatpush2.msra.mxu0 0.0
  %4996 = vmatprep.subr.mxu0 0.0
  %4997 = vmatpush2.msra.mxu0 0.0
  %4998 = vmatprep.mubr.f32.mxu0 0.0
  %4999 = vmatmul.mubr.f32.gmra.mxu0 %v4929
  %v5000 = vpop.f32.mrf.mxu0
  %v5001 = vadd.f32 0.0, %v5000
  %v5002 = vpop.f32.mrf.mxu0
  %5003 = vmatprep.mubr.f32.mxu0 0.0
  %5004 = vmatmul.mubr.f32.gmra.mxu0 %v4932
  %v5005 = vpop.f32.mrf.mxu0
  %v5006 = vadd.f32 0.0, %v5005
  %v5007 = vpop.f32.mrf.mxu0
  %5008 = vdwg.mxu0
  %v5009 = vmul.f32 %v5001, 0.95
  %v5010 = vmul.f32 %v5006, 0.95
  %v5011 = vadd.f32 %v4841, %v5009
  %v5012 = vadd.f32 %v4842, %v5010
  %v5013 = vld [vmem:[%s7] sm:$0xff]
  %v5014 = vld [vmem:[%s7 + $0x20] sm:$0xff]
  %v5015 = vld [vmem:[%s7 + $0x40] sm:$0xff]
  %v5016 = vld [vmem:[%s7 + $0x60] sm:$0xff]
  %5017 = vmatprep.subr.mxu0 0.0
  %5018 = vmatpush1.msra.mxu0 0.0
  %5019 = vmatprep.subr.mxu0 0.0
  %5020 = vmatpush1.msra.mxu0 0.0
  %5021 = vmatprep.subr.mxu0 0.0
  %5022 = vmatpush1.msra.mxu0 0.0
  %5023 = vmatprep.subr.mxu0 0.0
  %5024 = vmatpush1.msra.mxu0 0.0
  %5025 = vmatprep.subr.mxu0 0.0
  %5026 = vmatpush1.msra.mxu0 0.0
  %5027 = vmatprep.subr.mxu0 0.0
  %5028 = vmatpush1.msra.mxu0 0.0
  %5029 = vmatprep.subr.mxu0 0.0
  %5030 = vmatpush1.msra.mxu0 0.0
  %5031 = vmatprep.subr.mxu0 0.0
  %5032 = vmatpush1.msra.mxu0 0.0
  %5033 = vmatprep.subr.mxu0 0.0
  %5034 = vmatpush1.msra.mxu0 0.0
  %5035 = vmatprep.subr.mxu0 0.0
  %5036 = vmatpush1.msra.mxu0 0.0
  %5037 = vmatprep.subr.mxu0 0.0
  %5038 = vmatpush1.msra.mxu0 0.0
  %5039 = vmatprep.subr.mxu0 0.0
  %5040 = vmatpush1.msra.mxu0 0.0
  %5041 = vmatprep.subr.mxu0 0.0
  %5042 = vmatpush1.msra.mxu0 %v5016
  %5043 = vmatprep.subr.mxu0 0.0
  %5044 = vmatpush1.msra.mxu0 %v5015
  %5045 = vmatprep.subr.mxu0 0.0
  %5046 = vmatpush1.msra.mxu0 %v5014
  %5047 = vmatprep.subr.mxu0 0.0
  %5048 = vmatpush1.msra.mxu0 %v5013
  %5049 = vmatprep.subr.mxu0 0.0
  %5050 = vmatpush2.msra.mxu0 0.0
  %5051 = vmatprep.subr.mxu0 0.0
  %5052 = vmatpush2.msra.mxu0 0.0
  %5053 = vmatprep.subr.mxu0 0.0
  %5054 = vmatpush2.msra.mxu0 0.0
  %5055 = vmatprep.subr.mxu0 0.0
  %5056 = vmatpush2.msra.mxu0 0.0
  %5057 = vmatprep.subr.mxu0 0.0
  %5058 = vmatpush2.msra.mxu0 0.0
  %5059 = vmatprep.subr.mxu0 0.0
  %5060 = vmatpush2.msra.mxu0 0.0
  %5061 = vmatprep.subr.mxu0 0.0
  %5062 = vmatpush2.msra.mxu0 0.0
  %5063 = vmatprep.subr.mxu0 0.0
  %5064 = vmatpush2.msra.mxu0 0.0
  %5065 = vmatprep.subr.mxu0 0.0
  %5066 = vmatpush2.msra.mxu0 0.0
  %5067 = vmatprep.subr.mxu0 0.0
  %5068 = vmatpush2.msra.mxu0 0.0
  %5069 = vmatprep.subr.mxu0 0.0
  %5070 = vmatpush2.msra.mxu0 0.0
  %5071 = vmatprep.subr.mxu0 0.0
  %5072 = vmatpush2.msra.mxu0 0.0
  %5073 = vmatprep.subr.mxu0 0.0
  %5074 = vmatpush2.msra.mxu0 0.0
  %5075 = vmatprep.subr.mxu0 0.0
  %5076 = vmatpush2.msra.mxu0 0.0
  %5077 = vmatprep.subr.mxu0 0.0
  %5078 = vmatpush2.msra.mxu0 0.0
  %5079 = vmatprep.subr.mxu0 0.0
  %5080 = vmatpush2.msra.mxu0 0.0
  %5081 = vmatprep.mubr.f32.mxu0 0.0
  %5082 = vmatmul.mubr.f32.gmra.mxu0 %v4844
  %v5083 = vpop.f32.mrf.mxu0
  %v5084 = vadd.f32 0.0, %v5083
  %v5085 = vpop.f32.mrf.mxu0
  %5086 = vmatprep.mubr.f32.mxu0 0.0
  %5087 = vmatmul.mubr.f32.gmra.mxu0 %v4847
  %v5088 = vpop.f32.mrf.mxu0
  %v5089 = vadd.f32 0.0, %v5088
  %v5090 = vpop.f32.mrf.mxu0
  %5091 = vdwg.mxu0
  %v5092 = vmul.f32 %v5084, 0.95
  %v5093 = vmul.f32 %v5089, 0.95
  %v5094 = vadd.f32 %v4841, %v5092
  %v5095 = vadd.f32 %v4842, %v5093
  %v5097 = vsel %vm680, %v5094, 0
  %v5100 = vsel %vm680, %v5095, 0
  %5102 = vmatprep.subr.mxu0 0.0
  %5103 = vmatpush1.msra.mxu0 0.0
  %5104 = vmatprep.subr.mxu0 0.0
  %5105 = vmatpush1.msra.mxu0 0.0
  %5106 = vmatprep.subr.mxu0 0.0
  %5107 = vmatpush1.msra.mxu0 0.0
  %5108 = vmatprep.subr.mxu0 0.0
  %5109 = vmatpush1.msra.mxu0 0.0
  %5110 = vmatprep.subr.mxu0 0.0
  %5111 = vmatpush1.msra.mxu0 0.0
  %5112 = vmatprep.subr.mxu0 0.0
  %5113 = vmatpush1.msra.mxu0 0.0
  %5114 = vmatprep.subr.mxu0 0.0
  %5115 = vmatpush1.msra.mxu0 0.0
  %5116 = vmatprep.subr.mxu0 0.0
  %5117 = vmatpush1.msra.mxu0 0.0
  %5118 = vmatprep.subr.mxu0 0.0
  %5119 = vmatpush1.msra.mxu0 0.0
  %5120 = vmatprep.subr.mxu0 0.0
  %5121 = vmatpush1.msra.mxu0 0.0
  %5122 = vmatprep.subr.mxu0 0.0
  %5123 = vmatpush1.msra.mxu0 0.0
  %5124 = vmatprep.subr.mxu0 0.0
  %5125 = vmatpush1.msra.mxu0 0.0
  %5126 = vmatprep.subr.mxu0 0.0
  %5127 = vmatpush1.msra.mxu0 %v5016
  %5128 = vmatprep.subr.mxu0 0.0
  %5129 = vmatpush1.msra.mxu0 %v5015
  %5130 = vmatprep.subr.mxu0 0.0
  %5131 = vmatpush1.msra.mxu0 %v5014
  %5132 = vmatprep.subr.mxu0 0.0
  %5133 = vmatpush1.msra.mxu0 %v5013
  %5134 = vmatprep.subr.mxu0 0.0
  %5135 = vmatpush2.msra.mxu0 0.0
  %5136 = vmatprep.subr.mxu0 0.0
  %5137 = vmatpush2.msra.mxu0 0.0
  %5138 = vmatprep.subr.mxu0 0.0
  %5139 = vmatpush2.msra.mxu0 0.0
  %5140 = vmatprep.subr.mxu0 0.0
  %5141 = vmatpush2.msra.mxu0 0.0
  %5142 = vmatprep.subr.mxu0 0.0
  %5143 = vmatpush2.msra.mxu0 0.0
  %5144 = vmatprep.subr.mxu0 0.0
  %5145 = vmatpush2.msra.mxu0 0.0
  %5146 = vmatprep.subr.mxu0 0.0
  %5147 = vmatpush2.msra.mxu0 0.0
  %5148 = vmatprep.subr.mxu0 0.0
  %5149 = vmatpush2.msra.mxu0 0.0
  %5150 = vmatprep.subr.mxu0 0.0
  %5151 = vmatpush2.msra.mxu0 0.0
  %5152 = vmatprep.subr.mxu0 0.0
  %5153 = vmatpush2.msra.mxu0 0.0
  %5154 = vmatprep.subr.mxu0 0.0
  %5155 = vmatpush2.msra.mxu0 0.0
  %5156 = vmatprep.subr.mxu0 0.0
  %5157 = vmatpush2.msra.mxu0 0.0
  %5158 = vmatprep.subr.mxu0 0.0
  %5159 = vmatpush2.msra.mxu0 0.0
  %5160 = vmatprep.subr.mxu0 0.0
  %5161 = vmatpush2.msra.mxu0 0.0
  %5162 = vmatprep.subr.mxu0 0.0
  %5163 = vmatpush2.msra.mxu0 0.0
  %5164 = vmatprep.subr.mxu0 0.0
  %5165 = vmatpush2.msra.mxu0 0.0
  %5166 = vmatprep.mubr.f32.mxu0 0.0
  %5167 = vmatmul.mubr.f32.gmra.mxu0 %v5097
  %v5168 = vpop.f32.mrf.mxu0
  %v5169 = vadd.f32 0.0, %v5168
  %v5170 = vpop.f32.mrf.mxu0
  %5171 = vmatprep.mubr.f32.mxu0 0.0
  %5172 = vmatmul.mubr.f32.gmra.mxu0 %v5100
  %v5173 = vpop.f32.mrf.mxu0
  %v5174 = vadd.f32 0.0, %v5173
  %v5175 = vpop.f32.mrf.mxu0
  %5176 = vdwg.mxu0
  %v5177 = vmul.f32 %v5169, 0.95
  %v5178 = vmul.f32 %v5174, 0.95
  %v5179 = vadd.f32 %v4841, %v5177
  %v5180 = vadd.f32 %v4842, %v5178
  %v5181 = vld [vmem:[%s63] sm:$0xff]
  %v5182 = vld [vmem:[%s63 + $0x8] sm:$0xff]
  %v5183 = vld [vmem:[%s25] sm:$0xff]
  %v5184 = vld [vmem:[%s25 + $0x8] sm:$0xff]
  %5186 = vset.pattern.permute.xlu0 0
  %5187 = vperm.xlu0 %5186, %v5183
  %v5188 = vpop.permute.xlu0 %5187
  %5191 = vset.pattern.permute.xlu0 0
  %5192 = vperm.xlu0 %5191, %v5184
  %v5193 = vpop.permute.xlu0 %5192
  %v5196 = vsel %vm618, %v5181, 0
  %v5199 = vsel %vm618, %v5182, 0
  %5201 = vmatprep.subr.mxu0 0.0
  %5202 = vmatpush1.msra.mxu0 0.0
  %5203 = vmatprep.subr.mxu0 0.0
  %5204 = vmatpush1.msra.mxu0 0.0
  %5205 = vmatprep.subr.mxu0 0.0
  %5206 = vmatpush1.msra.mxu0 0.0
  %5207 = vmatprep.subr.mxu0 0.0
  %5208 = vmatpush1.msra.mxu0 0.0
  %5209 = vmatprep.subr.mxu0 0.0
  %5210 = vmatpush1.msra.mxu0 %v5180
  %5211 = vmatprep.subr.mxu0 0.0
  %5212 = vmatpush1.msra.mxu0 %v5179
  %5213 = vmatprep.subr.mxu0 0.0
  %5214 = vmatpush1.msra.mxu0 %v5095
  %5215 = vmatprep.subr.mxu0 0.0
  %5216 = vmatpush1.msra.mxu0 %v5094
  %5217 = vmatprep.subr.mxu0 0.0
  %5218 = vmatpush1.msra.mxu0 %v4702
  %5219 = vmatprep.subr.mxu0 0.0
  %5220 = vmatpush1.msra.mxu0 %v4701
  %5221 = vmatprep.subr.mxu0 0.0
  %5222 = vmatpush1.msra.mxu0 %v5012
  %5223 = vmatprep.subr.mxu0 0.0
  %5224 = vmatpush1.msra.mxu0 %v5011
  %5225 = vmatprep.subr.mxu0 0.0
  %5226 = vmatpush1.msra.mxu0 %v4927
  %5227 = vmatprep.subr.mxu0 0.0
  %5228 = vmatpush1.msra.mxu0 %v4926
  %5229 = vmatprep.subr.mxu0 0.0
  %5230 = vmatpush1.msra.mxu0 %v4702
  %5231 = vmatprep.subr.mxu0 0.0
  %5232 = vmatpush1.msra.mxu0 %v4701
  %5233 = vmatprep.subr.mxu0 0.0
  %5234 = vmatpush2.msra.mxu0 0.0
  %5235 = vmatprep.subr.mxu0 0.0
  %5236 = vmatpush2.msra.mxu0 0.0
  %5237 = vmatprep.subr.mxu0 0.0
  %5238 = vmatpush2.msra.mxu0 0.0
  %5239 = vmatprep.subr.mxu0 0.0
  %5240 = vmatpush2.msra.mxu0 0.0
  %5241 = vmatprep.subr.mxu0 0.0
  %5242 = vmatpush2.msra.mxu0 0.0
  %5243 = vmatprep.subr.mxu0 0.0
  %5244 = vmatpush2.msra.mxu0 0.0
  %5245 = vmatprep.subr.mxu0 0.0
  %5246 = vmatpush2.msra.mxu0 0.0
  %5247 = vmatprep.subr.mxu0 0.0
  %5248 = vmatpush2.msra.mxu0 0.0
  %5249 = vmatprep.subr.mxu0 0.0
  %5250 = vmatpush2.msra.mxu0 0.0
  %5251 = vmatprep.subr.mxu0 0.0
  %5252 = vmatpush2.msra.mxu0 0.0
  %5253 = vmatprep.subr.mxu0 0.0
  %5254 = vmatpush2.msra.mxu0 0.0
  %5255 = vmatprep.subr.mxu0 0.0
  %5256 = vmatpush2.msra.mxu0 0.0
  %5257 = vmatprep.subr.mxu0 0.0
  %5258 = vmatpush2.msra.mxu0 0.0
  %5259 = vmatprep.subr.mxu0 0.0
  %5260 = vmatpush2.msra.mxu0 0.0
  %5261 = vmatprep.subr.mxu0 0.0
  %5262 = vmatpush2.msra.mxu0 0.0
  %5263 = vmatprep.subr.mxu0 0.0
  %5264 = vmatpush2.msra.mxu0 0.0
  %5265 = vmatprep.mubr.f32.mxu0 0.0
  %5266 = vmatmul.mubr.f32.gmra.mxu0 %v5196
  %v5267 = vpop.f32.mrf.mxu0
  %v5268 = vadd.f32 %v5188, %v5267
  %v5269 = vpop.f32.mrf.mxu0
  %5270 = vmatprep.mubr.f32.mxu0 0.0
  %5271 = vmatmul.mubr.f32.gmra.mxu0 %v5199
  %v5272 = vpop.f32.mrf.mxu0
  %v5273 = vadd.f32 %v5193, %v5272
  %v5274 = vpop.f32.mrf.mxu0
  %5275 = vdwg.mxu0
  %v5276 = vadd.f32 %v5268, %v4557
  %v5277 = vadd.f32 %v5273, %v4559
  %v5278 = vld [vmem:[%s45] sm:$0x1]
  %v5279 = vlaneseq
  %v5280 = vshrl.u32 %v5279, 7
  %v5281 = vsub.s32 0, %v5280
  %v5282 = vrot.slane %v5278, %v5281
  %v5283 = vmul.f32 %v5276, %v5282
  %v5284 = vmul.f32 %v5277, %v5282
  %v5285 = vsel %vm680, %v5283, 0.0
  %5286 = vadd.xlane.f32.xlu0 %v5285
  %v5287 = vpop.xlane.xlu0 %5286
  %v5288 = vsel %vm680, %v5284, 0.0
  %5289 = vadd.xlane.f32.xlu0 %v5288
  %v5290 = vpop.xlane.xlu0 %5289
  %v5291 = vadd.f32 %v5287, %v5290
  %v5292 = vrot.slane %v5291, 4
  %v5293 = vadd.f32 %v5291, %v5292
  %v5294 = vrot.slane %v5293, 2
  %v5295 = vadd.f32 %v5293, %v5294
  %v5296 = vrot.slane %v5295, 1
  %v5297 = vadd.f32 %v5295, %v5296
  %v5298 = vmul.f32 %v5297, 0.00390625
  %v5299 = vmul.f32 %v5283, %v5276
  %v5300 = vmul.f32 %v5284, %v5277
  %v5301 = vsel %vm680, %v5299, 0.0
  %5302 = vadd.xlane.f32.xlu0 %v5301
  %v5303 = vpop.xlane.xlu0 %5302
  %v5304 = vsel %vm680, %v5300, 0.0
  %5305 = vadd.xlane.f32.xlu0 %v5304
  %v5306 = vpop.xlane.xlu0 %5305
  %v5307 = vadd.f32 %v5303, %v5306
  %v5308 = vrot.slane %v5307, 4
  %v5309 = vadd.f32 %v5307, %v5308
  %v5310 = vrot.slane %v5309, 2
  %v5311 = vadd.f32 %v5309, %v5310
  %v5312 = vrot.slane %v5311, 1
  %v5313 = vadd.f32 %v5311, %v5312
  %v5314 = vmul.f32 %v5313, 0.00390625
  %v5315 = vmul.f32 %v5298, %v5298
  %v5316 = vsub.f32 %v5314, %v5315
  %v5317 = vmax.f32 %v5316, 0.0
  %v5318 = vadd.f32 %v5317, 1e-05
  %v5319 = vrsqrt.pop %v5318
  %v5320 = vmul.f32 %v5298, %v5278
  %v5321 = vmul.f32 %v5319, %v5278
  %v5322 = vld [vmem:[%s45 + $0x1] sm:$0x1]
  %v5323 = vlaneseq
  %v5324 = vshrl.u32 %v5323, 7
  %v5325 = vsub.s32 0, %v5324
  %v5326 = vrot.slane %v5322, %v5325
  %v5327 = vmul.f32 %v5276, %v5326
  %v5328 = vmul.f32 %v5277, %v5326
  %v5329 = vsel %vm680, %v5327, 0.0
  %5330 = vadd.xlane.f32.xlu0 %v5329
  %v5331 = vpop.xlane.xlu0 %5330
  %v5332 = vsel %vm680, %v5328, 0.0
  %5333 = vadd.xlane.f32.xlu0 %v5332
  %v5334 = vpop.xlane.xlu0 %5333
  %v5335 = vadd.f32 %v5331, %v5334
  %v5336 = vrot.slane %v5335, 4
  %v5337 = vadd.f32 %v5335, %v5336
  %v5338 = vrot.slane %v5337, 2
  %v5339 = vadd.f32 %v5337, %v5338
  %v5340 = vrot.slane %v5339, 1
  %v5341 = vadd.f32 %v5339, %v5340
  %v5342 = vmul.f32 %v5341, 0.00390625
  %v5343 = vmul.f32 %v5327, %v5276
  %v5344 = vmul.f32 %v5328, %v5277
  %v5345 = vsel %vm680, %v5343, 0.0
  %5346 = vadd.xlane.f32.xlu0 %v5345
  %v5347 = vpop.xlane.xlu0 %5346
  %v5348 = vsel %vm680, %v5344, 0.0
  %5349 = vadd.xlane.f32.xlu0 %v5348
  %v5350 = vpop.xlane.xlu0 %5349
  %v5351 = vadd.f32 %v5347, %v5350
  %v5352 = vrot.slane %v5351, 4
  %v5353 = vadd.f32 %v5351, %v5352
  %v5354 = vrot.slane %v5353, 2
  %v5355 = vadd.f32 %v5353, %v5354
  %v5356 = vrot.slane %v5355, 1
  %v5357 = vadd.f32 %v5355, %v5356
  %v5358 = vmul.f32 %v5357, 0.00390625
  %v5359 = vmul.f32 %v5342, %v5342
  %v5360 = vsub.f32 %v5358, %v5359
  %v5361 = vmax.f32 %v5360, 0.0
  %v5362 = vadd.f32 %v5361, 1e-05
  %v5363 = vrsqrt.pop %v5362
  %v5364 = vmul.f32 %v5342, %v5322
  %v5365 = vmul.f32 %v5363, %v5322
  %v5366 = vadd.f32 %v5320, %v5364
  %v5367 = vadd.f32 %v5321, %v5365
  %v5368 = vlaneseq
  %v5369 = vshrl.u32 %v5368, 7
  %v5370 = vsub.s32 0, %v5369
  %v5371 = vrot.slane %v5366, %v5370
  %v5372 = vsub.f32 %v5276, %v5371
  %v5373 = vsub.f32 %v5277, %v5371
  %v5374 = vlaneseq
  %v5375 = vshrl.u32 %v5374, 7
  %v5376 = vsub.s32 0, %v5375
  %v5377 = vrot.slane %v5367, %v5376
  %v5378 = vmul.f32 %v5372, %v5377
  %v5379 = vmul.f32 %v5373, %v5377
  %v5380 = vld [vmem:[%s69] sm:$0xff]
  %v5381 = vld [vmem:[%s69 + $0x8] sm:$0xff]
  %v5382 = vmul.f32 %v5378, %v5380
  %v5383 = vmul.f32 %v5379, %v5381
  %v5384 = vld [vmem:[%s31] sm:$0xff]
  %v5385 = vld [vmem:[%s31 + $0x8] sm:$0xff]
  %v5386 = vadd.f32 %v5382, %v5384
  %v5387 = vadd.f32 %v5383, %v5385
  %v5388 = vld [vmem:[%s73] sm:$0xff]
  %v5389 = vld [vmem:[%s73 + $0x8] sm:$0xff]
  %v5390 = vld [vmem:[%s73 + $0x10] sm:$0xff]
  %v5391 = vld [vmem:[%s73 + $0x18] sm:$0xff]
  %v5393 = vsel %vm4707, %v5388, 0
  %v5396 = vsel %vm4707, %v5389, 0
  %v5399 = vsel %vm4707, %v5390, 0
  %v5402 = vsel %vm4707, %v5391, 0
  %5404 = vmatprep.subr.mxu0 0.0
  %5405 = vmatpush1.msra.mxu0 0.0
  %5406 = vmatprep.subr.mxu0 0.0
  %5407 = vmatpush1.msra.mxu0 0.0
  %5408 = vmatprep.subr.mxu0 0.0
  %5409 = vmatpush1.msra.mxu0 0.0
  %5410 = vmatprep.subr.mxu0 0.0
  %5411 = vmatpush1.msra.mxu0 0.0
  %5412 = vmatprep.subr.mxu0 0.0
  %5413 = vmatpush1.msra.mxu0 0.0
  %5414 = vmatprep.subr.mxu0 0.0
  %5415 = vmatpush1.msra.mxu0 0.0
  %5416 = vmatprep.subr.mxu0 0.0
  %5417 = vmatpush1.msra.mxu0 0.0
  %5418 = vmatprep.subr.mxu0 0.0
  %5419 = vmatpush1.msra.mxu0 0.0
  %5420 = vmatprep.subr.mxu0 0.0
  %5421 = vmatpush1.msra.mxu0 0.0
  %5422 = vmatprep.subr.mxu0 0.0
  %5423 = vmatpush1.msra.mxu0 0.0
  %5424 = vmatprep.subr.mxu0 0.0
  %5425 = vmatpush1.msra.mxu0 0.0
  %5426 = vmatprep.subr.mxu0 0.0
  %5427 = vmatpush1.msra.mxu0 0.0
  %5428 = vmatprep.subr.mxu0 0.0
  %5429 = vmatpush1.msra.mxu0 0.0
  %5430 = vmatprep.subr.mxu0 0.0
  %5431 = vmatpush1.msra.mxu0 0.0
  %5432 = vmatprep.subr.mxu0 0.0
  %5433 = vmatpush1.msra.mxu0 %v5387
  %5434 = vmatprep.subr.mxu0 0.0
  %5435 = vmatpush1.msra.mxu0 %v5386
  %5436 = vmatprep.subr.mxu0 0.0
  %5437 = vmatpush2.msra.mxu0 0.0
  %5438 = vmatprep.subr.mxu0 0.0
  %5439 = vmatpush2.msra.mxu0 0.0
  %5440 = vmatprep.subr.mxu0 0.0
  %5441 = vmatpush2.msra.mxu0 0.0
  %5442 = vmatprep.subr.mxu0 0.0
  %5443 = vmatpush2.msra.mxu0 0.0
  %5444 = vmatprep.subr.mxu0 0.0
  %5445 = vmatpush2.msra.mxu0 0.0
  %5446 = vmatprep.subr.mxu0 0.0
  %5447 = vmatpush2.msra.mxu0 0.0
  %5448 = vmatprep.subr.mxu0 0.0
  %5449 = vmatpush2.msra.mxu0 0.0
  %5450 = vmatprep.subr.mxu0 0.0
  %5451 = vmatpush2.msra.mxu0 0.0
  %5452 = vmatprep.subr.mxu0 0.0
  %5453 = vmatpush2.msra.mxu0 0.0
  %5454 = vmatprep.subr.mxu0 0.0
  %5455 = vmatpush2.msra.mxu0 0.0
  %5456 = vmatprep.subr.mxu0 0.0
  %5457 = vmatpush2.msra.mxu0 0.0
  %5458 = vmatprep.subr.mxu0 0.0
  %5459 = vmatpush2.msra.mxu0 0.0
  %5460 = vmatprep.subr.mxu0 0.0
  %5461 = vmatpush2.msra.mxu0 0.0
  %5462 = vmatprep.subr.mxu0 0.0
  %5463 = vmatpush2.msra.mxu0 0.0
  %5464 = vmatprep.subr.mxu0 0.0
  %5465 = vmatpush2.msra.mxu0 0.0
  %5466 = vmatprep.subr.mxu0 0.0
  %5467 = vmatpush2.msra.mxu0 0.0
  %5468 = vmatprep.mubr.f32.mxu0 0.0
  %5469 = vmatmul.mubr.f32.gmra.mxu0 %v5393
  %v5470 = vpop.f32.mrf.mxu0
  %v5471 = vadd.f32 0.0, %v5470
  %v5472 = vpop.f32.mrf.mxu0
  %5473 = vmatprep.mubr.f32.mxu0 0.0
  %5474 = vmatmul.mubr.f32.gmra.mxu0 %v5396
  %v5475 = vpop.f32.mrf.mxu0
  %v5476 = vadd.f32 0.0, %v5475
  %v5477 = vpop.f32.mrf.mxu0
  %5478 = vmatprep.mubr.f32.mxu0 0.0
  %5479 = vmatmul.mubr.f32.gmra.mxu0 %v5399
  %v5480 = vpop.f32.mrf.mxu0
  %v5481 = vadd.f32 0.0, %v5480
  %v5482 = vpop.f32.mrf.mxu0
  %5483 = vmatprep.mubr.f32.mxu0 0.0
  %5484 = vmatmul.mubr.f32.gmra.mxu0 %v5402
  %v5485 = vpop.f32.mrf.mxu0
  %v5486 = vadd.f32 0.0, %v5485
  %v5487 = vpop.f32.mrf.mxu0
  %5488 = vdwg.mxu0
  %v5489 = vadd.f32 %v4833, %v5471
  %v5490 = vadd.f32 %v4834, %v5476
  %v5491 = vadd.f32 %v4835, %v5481
  %v5492 = vadd.f32 %v4836, %v5486
  %v5493 = vld [vmem:[%s35] sm:$0xff]
  %v5494 = vld [vmem:[%s35 + $0x8] sm:$0xff]
  %v5495 = vld [vmem:[%s35 + $0x10] sm:$0xff]
  %v5496 = vld [vmem:[%s35 + $0x18] sm:$0xff]
  %5498 = vset.pattern.permute.xlu0 0
  %5499 = vperm.xlu0 %5498, %v5493
  %v5500 = vpop.permute.xlu0 %5499
  %5503 = vset.pattern.permute.xlu0 0
  %5504 = vperm.xlu0 %5503, %v5494
  %v5505 = vpop.permute.xlu0 %5504
  %5508 = vset.pattern.permute.xlu0 0
  %5509 = vperm.xlu0 %5508, %v5495
  %v5510 = vpop.permute.xlu0 %5509
  %5513 = vset.pattern.permute.xlu0 0
  %5514 = vperm.xlu0 %5513, %v5496
  %v5515 = vpop.permute.xlu0 %5514
  %v5517 = vadd.f32 %v5489, %v5500
  %v5518 = vadd.f32 %v5490, %v5505
  %v5519 = vadd.f32 %v5491, %v5510
  %v5520 = vadd.f32 %v5492, %v5515
  %v5521 = vmax.f32 %v5517, 0.0
  %v5522 = vmax.f32 %v5518, 0.0
  %v5523 = vmax.f32 %v5519, 0.0
  %v5524 = vmax.f32 %v5520, 0.0
  %v5525 = vld [vmem:[%s49] sm:$0xff]
  %v5526 = vld [vmem:[%s49 + $0x8] sm:$0xff]
  %v5527 = vld [vmem:[%s49 + $0x10] sm:$0xff]
  %v5528 = vld [vmem:[%s49 + $0x18] sm:$0xff]
  %v5529 = vld [vmem:[%s11] sm:$0xff]
  %v5530 = vld [vmem:[%s11 + $0x8] sm:$0xff]
  %v5531 = vld [vmem:[%s11 + $0x10] sm:$0xff]
  %v5532 = vld [vmem:[%s11 + $0x18] sm:$0xff]
  %5534 = vset.pattern.permute.xlu0 0
  %5535 = vperm.xlu0 %5534, %v5529
  %v5536 = vpop.permute.xlu0 %5535
  %5539 = vset.pattern.permute.xlu0 0
  %5540 = vperm.xlu0 %5539, %v5530
  %v5541 = vpop.permute.xlu0 %5540
  %5544 = vset.pattern.permute.xlu0 0
  %5545 = vperm.xlu0 %5544, %v5531
  %v5546 = vpop.permute.xlu0 %5545
  %5549 = vset.pattern.permute.xlu0 0
  %5550 = vperm.xlu0 %5549, %v5532
  %v5551 = vpop.permute.xlu0 %5550
  %v5554 = vsel %vm680, %v5525, 0
  %v5557 = vsel %vm680, %v5526, 0
  %v5560 = vsel %vm680, %v5527, 0
  %v5563 = vsel %vm680, %v5528, 0
  %5565 = vmatprep.subr.mxu0 0.0
  %5566 = vmatpush1.msra.mxu0 0.0
  %5567 = vmatprep.subr.mxu0 0.0
  %5568 = vmatpush1.msra.mxu0 0.0
  %5569 = vmatprep.subr.mxu0 0.0
  %5570 = vmatpush1.msra.mxu0 0.0
  %5571 = vmatprep.subr.mxu0 0.0
  %5572 = vmatpush1.msra.mxu0 0.0
  %5573 = vmatprep.subr.mxu0 0.0
  %5574 = vmatpush1.msra.mxu0 0.0
  %5575 = vmatprep.subr.mxu0 0.0
  %5576 = vmatpush1.msra.mxu0 0.0
  %5577 = vmatprep.subr.mxu0 0.0
  %5578 = vmatpush1.msra.mxu0 0.0
  %5579 = vmatprep.subr.mxu0 0.0
  %5580 = vmatpush1.msra.mxu0 0.0
  %5581 = vmatprep.subr.mxu0 0.0
  %5582 = vmatpush1.msra.mxu0 0.0
  %5583 = vmatprep.subr.mxu0 0.0
  %5584 = vmatpush1.msra.mxu0 0.0
  %5585 = vmatprep.subr.mxu0 0.0
  %5586 = vmatpush1.msra.mxu0 0.0
  %5587 = vmatprep.subr.mxu0 0.0
  %5588 = vmatpush1.msra.mxu0 0.0
  %5589 = vmatprep.subr.mxu0 0.0
  %5590 = vmatpush1.msra.mxu0 %v5524
  %5591 = vmatprep.subr.mxu0 0.0
  %5592 = vmatpush1.msra.mxu0 %v5523
  %5593 = vmatprep.subr.mxu0 0.0
  %5594 = vmatpush1.msra.mxu0 %v5522
  %5595 = vmatprep.subr.mxu0 0.0
  %5596 = vmatpush1.msra.mxu0 %v5521
  %5597 = vmatprep.subr.mxu0 0.0
  %5598 = vmatpush2.msra.mxu0 0.0
  %5599 = vmatprep.subr.mxu0 0.0
  %5600 = vmatpush2.msra.mxu0 0.0
  %5601 = vmatprep.subr.mxu0 0.0
  %5602 = vmatpush2.msra.mxu0 0.0
  %5603 = vmatprep.subr.mxu0 0.0
  %5604 = vmatpush2.msra.mxu0 0.0
  %5605 = vmatprep.subr.mxu0 0.0
  %5606 = vmatpush2.msra.mxu0 0.0
  %5607 = vmatprep.subr.mxu0 0.0
  %5608 = vmatpush2.msra.mxu0 0.0
  %5609 = vmatprep.subr.mxu0 0.0
  %5610 = vmatpush2.msra.mxu0 0.0
  %5611 = vmatprep.subr.mxu0 0.0
  %5612 = vmatpush2.msra.mxu0 0.0
  %5613 = vmatprep.subr.mxu0 0.0
  %5614 = vmatpush2.msra.mxu0 0.0
  %5615 = vmatprep.subr.mxu0 0.0
  %5616 = vmatpush2.msra.mxu0 0.0
  %5617 = vmatprep.subr.mxu0 0.0
  %5618 = vmatpush2.msra.mxu0 0.0
  %5619 = vmatprep.subr.mxu0 0.0
  %5620 = vmatpush2.msra.mxu0 0.0
  %5621 = vmatprep.subr.mxu0 0.0
  %5622 = vmatpush2.msra.mxu0 0.0
  %5623 = vmatprep.subr.mxu0 0.0
  %5624 = vmatpush2.msra.mxu0 0.0
  %5625 = vmatprep.subr.mxu0 0.0
  %5626 = vmatpush2.msra.mxu0 0.0
  %5627 = vmatprep.subr.mxu0 0.0
  %5628 = vmatpush2.msra.mxu0 0.0
  %5629 = vmatprep.mubr.f32.mxu0 0.0
  %5630 = vmatmul.mubr.f32.gmra.mxu0 %v5554
  %v5631 = vpop.f32.mrf.mxu0
  %v5632 = vadd.f32 %v5536, %v5631
  %v5633 = vpop.f32.mrf.mxu0
  %5634 = vmatprep.mubr.f32.mxu0 0.0
  %5635 = vmatmul.mubr.f32.gmra.mxu0 %v5557
  %v5636 = vpop.f32.mrf.mxu0
  %v5637 = vadd.f32 %v5541, %v5636
  %v5638 = vpop.f32.mrf.mxu0
  %5639 = vmatprep.mubr.f32.mxu0 0.0
  %5640 = vmatmul.mubr.f32.gmra.mxu0 %v5560
  %v5641 = vpop.f32.mrf.mxu0
  %v5642 = vadd.f32 %v5546, %v5641
  %v5643 = vpop.f32.mrf.mxu0
  %5644 = vmatprep.mubr.f32.mxu0 0.0
  %5645 = vmatmul.mubr.f32.gmra.mxu0 %v5563
  %v5646 = vpop.f32.mrf.mxu0
  %v5647 = vadd.f32 %v5551, %v5646
  %v5648 = vpop.f32.mrf.mxu0
  %5649 = vdwg.mxu0
  %v5650 = vmax.f32 %v5632, 0.0
  %v5651 = vmax.f32 %v5637, 0.0
  %v5652 = vmax.f32 %v5642, 0.0
  %v5653 = vmax.f32 %v5647, 0.0
  %v5654 = vld [vmem:[%s51] sm:$0xff]
  %v5655 = vld [vmem:[%s51 + $0x8] sm:$0xf]
  %v5656 = vld [vmem:[%s13] sm:$0xff]
  %v5657 = vld [vmem:[%s13 + $0x8] sm:$0xf]
  %5659 = vset.pattern.permute.xlu0 0
  %5660 = vperm.xlu0 %5659, %v5656
  %v5661 = vpop.permute.xlu0 %5660
  %5664 = vset.pattern.permute.xlu0 0
  %5665 = vperm.xlu0 %5664, %v5657
  %v5666 = vpop.permute.xlu0 %5665
  %v5669 = vsel %vm680, %v5654, 0
  %v5672 = vsel %vm680, %v5655, 0
  %5674 = vmatprep.subr.mxu0 0.0
  %5675 = vmatpush1.msra.mxu0 0.0
  %5676 = vmatprep.subr.mxu0 0.0
  %5677 = vmatpush1.msra.mxu0 0.0
  %5678 = vmatprep.subr.mxu0 0.0
  %5679 = vmatpush1.msra.mxu0 0.0
  %5680 = vmatprep.subr.mxu0 0.0
  %5681 = vmatpush1.msra.mxu0 0.0
  %5682 = vmatprep.subr.mxu0 0.0
  %5683 = vmatpush1.msra.mxu0 0.0
  %5684 = vmatprep.subr.mxu0 0.0
  %5685 = vmatpush1.msra.mxu0 0.0
  %5686 = vmatprep.subr.mxu0 0.0
  %5687 = vmatpush1.msra.mxu0 0.0
  %5688 = vmatprep.subr.mxu0 0.0
  %5689 = vmatpush1.msra.mxu0 0.0
  %5690 = vmatprep.subr.mxu0 0.0
  %5691 = vmatpush1.msra.mxu0 0.0
  %5692 = vmatprep.subr.mxu0 0.0
  %5693 = vmatpush1.msra.mxu0 0.0
  %5694 = vmatprep.subr.mxu0 0.0
  %5695 = vmatpush1.msra.mxu0 0.0
  %5696 = vmatprep.subr.mxu0 0.0
  %5697 = vmatpush1.msra.mxu0 0.0
  %5698 = vmatprep.subr.mxu0 0.0
  %5699 = vmatpush1.msra.mxu0 %v5653
  %5700 = vmatprep.subr.mxu0 0.0
  %5701 = vmatpush1.msra.mxu0 %v5652
  %5702 = vmatprep.subr.mxu0 0.0
  %5703 = vmatpush1.msra.mxu0 %v5651
  %5704 = vmatprep.subr.mxu0 0.0
  %5705 = vmatpush1.msra.mxu0 %v5650
  %5706 = vmatprep.subr.mxu0 0.0
  %5707 = vmatpush2.msra.mxu0 0.0
  %5708 = vmatprep.subr.mxu0 0.0
  %5709 = vmatpush2.msra.mxu0 0.0
  %5710 = vmatprep.subr.mxu0 0.0
  %5711 = vmatpush2.msra.mxu0 0.0
  %5712 = vmatprep.subr.mxu0 0.0
  %5713 = vmatpush2.msra.mxu0 0.0
  %5714 = vmatprep.subr.mxu0 0.0
  %5715 = vmatpush2.msra.mxu0 0.0
  %5716 = vmatprep.subr.mxu0 0.0
  %5717 = vmatpush2.msra.mxu0 0.0
  %5718 = vmatprep.subr.mxu0 0.0
  %5719 = vmatpush2.msra.mxu0 0.0
  %5720 = vmatprep.subr.mxu0 0.0
  %5721 = vmatpush2.msra.mxu0 0.0
  %5722 = vmatprep.subr.mxu0 0.0
  %5723 = vmatpush2.msra.mxu0 0.0
  %5724 = vmatprep.subr.mxu0 0.0
  %5725 = vmatpush2.msra.mxu0 0.0
  %5726 = vmatprep.subr.mxu0 0.0
  %5727 = vmatpush2.msra.mxu0 0.0
  %5728 = vmatprep.subr.mxu0 0.0
  %5729 = vmatpush2.msra.mxu0 0.0
  %5730 = vmatprep.subr.mxu0 0.0
  %5731 = vmatpush2.msra.mxu0 0.0
  %5732 = vmatprep.subr.mxu0 0.0
  %5733 = vmatpush2.msra.mxu0 0.0
  %5734 = vmatprep.subr.mxu0 0.0
  %5735 = vmatpush2.msra.mxu0 0.0
  %5736 = vmatprep.subr.mxu0 0.0
  %5737 = vmatpush2.msra.mxu0 0.0
  %5738 = vmatprep.mubr.f32.mxu0 0.0
  %5739 = vmatmul.mubr.f32.gmra.mxu0 %v5669
  %v5740 = vpop.f32.mrf.mxu0
  %v5741 = vadd.f32 %v5661, %v5740
  %v5742 = vpop.f32.mrf.mxu0
  %5743 = vmatprep.mubr.f32.mxu0 0.0
  %5744 = vmatmul.mubr.f32.gmra.mxu0 %v5672
  %v5745 = vpop.f32.mrf.mxu0
  %v5746 = vadd.f32 %v5666, %v5745
  %v5747 = vpop.f32.mrf.mxu0
  %5748 = vdwg.mxu0
  %v5749 = vld [vmem:[%s47] sm:$0xff]
  %v5750 = vld [vmem:[%s47 + $0x8] sm:$0xff]
  %v5751 = vld [vmem:[%s9] sm:$0x1]
  %v5753 = vlaneseq
  %v5754 = vshrl.u32 %v5753, 7
  %v5755 = vsub.s32 0, %v5754
  %v5756 = vrot.slane %v5751, %v5755
  %v5759 = vsel %vm4707, %v5741, 0
  %v5762 = vsel %vm4707, %v5746, 0
  %5764 = vmatprep.subr.mxu0 0.0
  %5765 = vmatpush1.msra.mxu0 0.0
  %5766 = vmatprep.subr.mxu0 0.0
  %5767 = vmatpush1.msra.mxu0 0.0
  %5768 = vmatprep.subr.mxu0 0.0
  %5769 = vmatpush1.msra.mxu0 0.0
  %5770 = vmatprep.subr.mxu0 0.0
  %5771 = vmatpush1.msra.mxu0 0.0
  %5772 = vmatprep.subr.mxu0 0.0
  %5773 = vmatpush1.msra.mxu0 0.0
  %5774 = vmatprep.subr.mxu0 0.0
  %5775 = vmatpush1.msra.mxu0 0.0
  %5776 = vmatprep.subr.mxu0 0.0
  %5777 = vmatpush1.msra.mxu0 0.0
  %5778 = vmatprep.subr.mxu0 0.0
  %5779 = vmatpush1.msra.mxu0 0.0
  %5780 = vmatprep.subr.mxu0 0.0
  %5781 = vmatpush1.msra.mxu0 0.0
  %5782 = vmatprep.subr.mxu0 0.0
  %5783 = vmatpush1.msra.mxu0 0.0
  %5784 = vmatprep.subr.mxu0 0.0
  %5785 = vmatpush1.msra.mxu0 0.0
  %5786 = vmatprep.subr.mxu0 0.0
  %5787 = vmatpush1.msra.mxu0 0.0
  %5788 = vmatprep.subr.mxu0 0.0
  %5789 = vmatpush1.msra.mxu0 0.0
  %5790 = vmatprep.subr.mxu0 0.0
  %5791 = vmatpush1.msra.mxu0 0.0
  %5792 = vmatprep.subr.mxu0 0.0
  %5793 = vmatpush1.msra.mxu0 %v5750
  %5794 = vmatprep.subr.mxu0 0.0
  %5795 = vmatpush1.msra.mxu0 %v5749
  %5796 = vmatprep.subr.mxu0 0.0
  %5797 = vmatpush2.msra.mxu0 0.0
  %5798 = vmatprep.subr.mxu0 0.0
  %5799 = vmatpush2.msra.mxu0 0.0
  %5800 = vmatprep.subr.mxu0 0.0
  %5801 = vmatpush2.msra.mxu0 0.0
  %5802 = vmatprep.subr.mxu0 0.0
  %5803 = vmatpush2.msra.mxu0 0.0
  %5804 = vmatprep.subr.mxu0 0.0
  %5805 = vmatpush2.msra.mxu0 0.0
  %5806 = vmatprep.subr.mxu0 0.0
  %5807 = vmatpush2.msra.mxu0 0.0
  %5808 = vmatprep.subr.mxu0 0.0
  %5809 = vmatpush2.msra.mxu0 0.0
  %5810 = vmatprep.subr.mxu0 0.0
  %5811 = vmatpush2.msra.mxu0 0.0
  %5812 = vmatprep.subr.mxu0 0.0
  %5813 = vmatpush2.msra.mxu0 0.0
  %5814 = vmatprep.subr.mxu0 0.0
  %5815 = vmatpush2.msra.mxu0 0.0
  %5816 = vmatprep.subr.mxu0 0.0
  %5817 = vmatpush2.msra.mxu0 0.0
  %5818 = vmatprep.subr.mxu0 0.0
  %5819 = vmatpush2.msra.mxu0 0.0
  %5820 = vmatprep.subr.mxu0 0.0
  %5821 = vmatpush2.msra.mxu0 0.0
  %5822 = vmatprep.subr.mxu0 0.0
  %5823 = vmatpush2.msra.mxu0 0.0
  %5824 = vmatprep.subr.mxu0 0.0
  %5825 = vmatpush2.msra.mxu0 0.0
  %5826 = vmatprep.subr.mxu0 0.0
  %5827 = vmatpush2.msra.mxu0 0.0
  %5828 = vmatprep.mubr.f32.mxu0 0.0
  %5829 = vmatmul.mubr.f32.gmra.mxu0 %v5759
  %v5830 = vpop.f32.mrf.mxu0
  %v5831 = vadd.f32 %v5756, %v5830
  %v5832 = vpop.f32.mrf.mxu0
  %5833 = vmatprep.mubr.f32.mxu0 0.0
  %5834 = vmatmul.mubr.f32.gmra.mxu0 %v5762
  %v5835 = vpop.f32.mrf.mxu0
  %v5836 = vadd.f32 %v5756, %v5835
  %v5837 = vpop.f32.mrf.mxu0
  %5838 = vdwg.mxu0
  %vm5839 = vcmask 64512
  %5840 = vst.msk [vmem:[%s83] sm:$0xff] %vm5839, %v5831
  %vm5841 = vcmask 60416
  %5842 = vst.msk [vmem:[%s83 + $0x8] sm:$0xf] %vm5841, %v5836
  %v5843 = vld [vmem:[%s47] sm:$0xff]
  %v5844 = vld [vmem:[%s47 + $0x8] sm:$0xff]
  %v5845 = vld [vmem:[%s9] sm:$0x1]
  %v5847 = vlaneseq
  %v5848 = vshrl.u32 %v5847, 7
  %v5849 = vsub.s32 0, %v5848
  %v5850 = vrot.slane %v5845, %v5849
  %5852 = vrot.lane.b32.xlu0 %v5741, 112
  %v5853 = vpop.permute.xlu0 %5852
  %5854 = vrot.lane.b32.xlu0 %v5746, 112
  %v5855 = vpop.permute.xlu0 %5854
  %v5856 = vsel %vm4707, %v5853, 0
  %v5858 = vsel %vm4707, %v5855, 0
  %5860 = vmatprep.subr.mxu0 0.0
  %5861 = vmatpush1.msra.mxu0 0.0
  %5862 = vmatprep.subr.mxu0 0.0
  %5863 = vmatpush1.msra.mxu0 0.0
  %5864 = vmatprep.subr.mxu0 0.0
  %5865 = vmatpush1.msra.mxu0 0.0
  %5866 = vmatprep.subr.mxu0 0.0
  %5867 = vmatpush1.msra.mxu0 0.0
  %5868 = vmatprep.subr.mxu0 0.0
  %5869 = vmatpush1.msra.mxu0 0.0
  %5870 = vmatprep.subr.mxu0 0.0
  %5871 = vmatpush1.msra.mxu0 0.0
  %5872 = vmatprep.subr.mxu0 0.0
  %5873 = vmatpush1.msra.mxu0 0.0
  %5874 = vmatprep.subr.mxu0 0.0
  %5875 = vmatpush1.msra.mxu0 0.0
  %5876 = vmatprep.subr.mxu0 0.0
  %5877 = vmatpush1.msra.mxu0 0.0
  %5878 = vmatprep.subr.mxu0 0.0
  %5879 = vmatpush1.msra.mxu0 0.0
  %5880 = vmatprep.subr.mxu0 0.0
  %5881 = vmatpush1.msra.mxu0 0.0
  %5882 = vmatprep.subr.mxu0 0.0
  %5883 = vmatpush1.msra.mxu0 0.0
  %5884 = vmatprep.subr.mxu0 0.0
  %5885 = vmatpush1.msra.mxu0 0.0
  %5886 = vmatprep.subr.mxu0 0.0
  %5887 = vmatpush1.msra.mxu0 0.0
  %5888 = vmatprep.subr.mxu0 0.0
  %5889 = vmatpush1.msra.mxu0 %v5844
  %5890 = vmatprep.subr.mxu0 0.0
  %5891 = vmatpush1.msra.mxu0 %v5843
  %5892 = vmatprep.subr.mxu0 0.0
  %5893 = vmatpush2.msra.mxu0 0.0
  %5894 = vmatprep.subr.mxu0 0.0
  %5895 = vmatpush2.msra.mxu0 0.0
  %5896 = vmatprep.subr.mxu0 0.0
  %5897 = vmatpush2.msra.mxu0 0.0
  %5898 = vmatprep.subr.mxu0 0.0
  %5899 = vmatpush2.msra.mxu0 0.0
  %5900 = vmatprep.subr.mxu0 0.0
  %5901 = vmatpush2.msra.mxu0 0.0
  %5902 = vmatprep.subr.mxu0 0.0
  %5903 = vmatpush2.msra.mxu0 0.0
  %5904 = vmatprep.subr.mxu0 0.0
  %5905 = vmatpush2.msra.mxu0 0.0
  %5906 = vmatprep.subr.mxu0 0.0
  %5907 = vmatpush2.msra.mxu0 0.0
  %5908 = vmatprep.subr.mxu0 0.0
  %5909 = vmatpush2.msra.mxu0 0.0
  %5910 = vmatprep.subr.mxu0 0.0
  %5911 = vmatpush2.msra.mxu0 0.0
  %5912 = vmatprep.subr.mxu0 0.0
  %5913 = vmatpush2.msra.mxu0 0.0
  %5914 = vmatprep.subr.mxu0 0.0
  %5915 = vmatpush2.msra.mxu0 0.0
  %5916 = vmatprep.subr.mxu0 0.0
  %5917 = vmatpush2.msra.mxu0 0.0
  %5918 = vmatprep.subr.mxu0 0.0
  %5919 = vmatpush2.msra.mxu0 0.0
  %5920 = vmatprep.subr.mxu0 0.0
  %5921 = vmatpush2.msra.mxu0 0.0
  %5922 = vmatprep.subr.mxu0 0.0
  %5923 = vmatpush2.msra.mxu0 0.0
  %5924 = vmatprep.mubr.f32.mxu0 0.0
  %5925 = vmatmul.mubr.f32.gmra.mxu0 %v5856
  %v5926 = vpop.f32.mrf.mxu0
  %v5927 = vadd.f32 %v5850, %v5926
  %v5928 = vpop.f32.mrf.mxu0
  %5929 = vmatprep.mubr.f32.mxu0 0.0
  %5930 = vmatmul.mubr.f32.gmra.mxu0 %v5858
  %v5931 = vpop.f32.mrf.mxu0
  %v5932 = vadd.f32 %v5850, %v5931
  %v5933 = vpop.f32.mrf.mxu0
  %5934 = vdwg.mxu0
  %s5935 = scalar_lea.vmem %s83, 16
  %5936 = vst.msk [vmem:[%s5935] sm:$0xff] %vm5839, %v5927
  %5937 = vst.msk [vmem:[%s5935 + $0x8] sm:$0xf] %vm5841, %v5932
  // Predicated region
  $region166: #{mtgnn_forward.3} parent=0 // pred_check
    _
  $region167: #{mtgnn_forward.3} parent=0 // pred_check_branch
    %5939 = sbr.rel (0) target = $region169
  $region168: #{mtgnn_forward.3} parent=0 // pred_region
    _
  $region169: #{mtgnn_forward.3} parent=0 // pred_fallthru
    _
  // Predicated region
  $region170: #{mtgnn_forward.3} parent=0 // pred_check
    _
  $region171: #{mtgnn_forward.3} parent=0 // pred_check_branch
    %5941 = sbr.rel (0) target = $region173
  $region172: #{mtgnn_forward.3} parent=0 // pred_region
    _
  $region173: #{mtgnn_forward.3} parent=0 // pred_fallthru
    _

</llo_original>
